<compile_context>
chip_gen: v5e
topology: v5e:2x2
jax: 0.10.0
libtpu: 0.0.40
codegen_flags: <defaults>
</compile_context>

<pallas_src>
import jax
import jax.numpy as jnp
from jax.experimental import pallas as pl
from jax.experimental.pallas import tpu as pltpu

LRELU_SLOPE = 0.1       # HiFi-GAN resblock slope
F32 = jnp.float32


# --------------------------------------------------------------------------------------
# Host-side parameter preparation (done once): conv weights -> [Cout, K*Cin] (tap-major),
# biases -> [Cout, 1], transpose-conv weights -> per-phase polyphase matrices.
# --------------------------------------------------------------------------------------
def _conv_w(w):
    Cout, Cin, K = w.shape
    return jnp.asarray(w, F32).transpose(0, 2, 1).reshape(Cout, K * Cin)


def _bias(b):
    return jnp.asarray(b, F32).reshape(-1, 1)


def prepare_params(params):
    flow_w, flow_m = [], []
    for p in params["flow"]:
        wn = p["wn"]
        flow_w.append({
            "pre_w": _conv_w(p["pre_w"]), "pre_b": _bias(p["pre_b"]),
            "post_w": _conv_w(p["post_w"]), "post_b": _bias(p["post_b"]),
            "wn": {"in_w": [_conv_w(w) for w in wn["in_w"]],
                   "in_b": [_bias(b) for b in wn["in_b"]],
                   "rs_w": [_conv_w(w) for w in wn["rs_w"]],
                   "rs_b": [_bias(b) for b in wn["rs_b"]]},
        })
        flow_m.append({"n_layers": len(wn["in_w"]),
                       "wn_K": [int(w.shape[2]) for w in wn["in_w"]],
                       "wn_dil": [int(d) for d in wn["dilations"]]})

    dec = params["dec"]
    ups_w, ups_m = [], []
    for up in dec["ups"]:
        w = jnp.asarray(up["w"], F32)                      # [Cin, Cout, K]
        Cin, Cout, K = w.shape
        s, pad = int(up["stride"]), int(up["pad"])
        assert K >= s and K - 2 * pad == s, "polyphase path assumes T_out == stride * T"
        pw, pm = [], []
        for r in range(s):                                 # output phase r = t mod s
            k0 = (r + pad) % s
            taps = list(range(k0, K, s))
            d = (r + pad - k0) // s                        # y_r[q] = sum_j x[q+d-j] * w[k0+j*s]
            pw.append(jnp.concatenate([w[:, :, k].T for k in taps], axis=1))  # [Cout, Kr*Cin]
            pm.append({"d": d, "Kr": len(taps)})
        ups_w.append({"w": pw, "b": _bias(up["b"])})
        ups_m.append({"stride": s, "phases": pm})

    res_w, res_m = [], []
    for stage in dec["resblocks"]:
        sw, sm = [], []
        for rb in stage:
            sw.append({"w": [_conv_w(w) for w in rb["w"]],
                       "b": [_bias(b) for b in rb["b"]]})
            sm.append({"K": [int(w.shape[2]) for w in rb["w"]],
                       "dil": [int(d) for d in rb["dilations"]]})
        res_w.append(sw)
        res_m.append(sm)

    wtree = {"flow": flow_w,
             "dec": {"pre_w": _conv_w(dec["pre_w"]), "pre_b": _bias(dec["pre_b"]),
                     "ups": ups_w, "res": res_w, "post_w": _conv_w(dec["post_w"])}}
    meta = {"flow": flow_m,
            "dec": {"pre_K": int(dec["pre_w"].shape[2]), "ups": ups_m,
                    "res": res_m, "post_K": int(dec["post_w"].shape[2])}}
    return wtree, meta


# --------------------------------------------------------------------------------------
# In-kernel building blocks (all operate on VMEM-resident values, [C, T] time-on-lanes)
# --------------------------------------------------------------------------------------
def _kconv(x, w_mat, b, K, dilation=1, pre_slope=None):
    """1-D 'same' conv (odd K).  x:[Cin,T], w_mat:[Cout,K*Cin] tap-major, b:[Cout,1]|None."""
    Cin, T = x.shape
    if pre_slope is not None:                              # leaky applied ONCE, before taps
        x = jnp.where(x > 0, x, pre_slope * x)
    if K == 1:
        y = jnp.dot(w_mat, x, preferred_element_type=F32)
    else:
        pad = dilation * (K - 1) // 2
        zp = jnp.zeros((Cin, pad), F32)
        xp = jnp.concatenate([zp, x, zp], axis=1)          # lane-axis zero pad (in VMEM)
        y = None
        for k in range(K):
            wk = w_mat[:, k * Cin:(k + 1) * Cin]           # [Cout, Cin]
            xk = xp[:, k * dilation:k * dilation + T]      # shifted lane slice
            t = jnp.dot(wk, xk, preferred_element_type=F32)
            y = t if y is None else y + t
    if b is not None:
        y = y + b
    return y


def _kconv_transpose(x, phase_w, b, meta_up, pre_slope):
    """Polyphase ConvTranspose1d (T_out = stride*T).  x:[Cin,T]."""
    Cin, T = x.shape
    s = meta_up["stride"]
    x = jnp.where(x > 0, x, pre_slope * x)                 # leaky before the upsample conv
    T_out = s * T
    rows = jax.lax.broadcasted_iota(jnp.int32, (T, T_out), 0)
    cols = jax.lax.broadcasted_iota(jnp.int32, (T, T_out), 1)
    y = None
    for r in range(s):
        pm = meta_up["phases"][r]
        d, Kr = pm["d"], pm["Kr"]
        pw = phase_w[r]                                    # [Cout, Kr*Cin]
        yr = None
        for j in range(Kr):
            wj = pw[:, j * Cin:(j + 1) * Cin]
            o = d - j                                      # uses x[:, q + o] (zero if OOB)
            if o == 0:
                xs = x
            elif o > 0:
                xs = jnp.concatenate([x[:, o:], jnp.zeros((Cin, o), F32)], axis=1)
            else:
                xs = jnp.concatenate([jnp.zeros((Cin, -o), F32), x[:, :T + o]], axis=1)
            t = jnp.dot(wj, xs, preferred_element_type=F32)
            yr = t if yr is None else yr + t
        if yr is None:
            continue
        sel = (cols == rows * s + r).astype(F32)           # scatter phase r to lanes r, r+s, ...
        t = jnp.dot(yr, sel, preferred_element_type=F32)
        y = t if y is None else y + t
    return y + b


def _kwn(x, mask, ww, wm):
    """WaveNet (p_dropout=0, g=None) with the gate + mask fused as conv epilogues."""
    H = x.shape[0]
    out = jnp.zeros_like(x)
    n = wm["n_layers"]
    for i in range(n):
        xi = _kconv(x, ww["in_w"][i], ww["in_b"][i], wm["wn_K"][i], wm["wn_dil"][i])
        acts = jnp.tanh(xi[:H]) * jax.nn.sigmoid(xi[H:]) * mask     # fused gated activation
        rs = _kconv(acts, ww["rs_w"][i], ww["rs_b"][i], 1)
        if i < n - 1:
            x = (x + rs[:H]) * mask
            out = out + rs[H:]
        else:
            out = out + rs
    return out * mask


def _ksplit_flip(x, half):
    """Channel Flip then split into halves via tiny selection matmuls (no unaligned
    sublane slicing / negative strides)."""
    C = x.shape[0]
    i = jax.lax.broadcasted_iota(jnp.int32, (half, C), 0)
    j = jax.lax.broadcasted_iota(jnp.int32, (half, C), 1)
    p0 = (j == C - 1 - i).astype(F32)                      # flipped rows 0..half-1
    p1 = (j == half - 1 - i).astype(F32)                   # flipped rows half..C-1
    return (jnp.dot(p0, x, preferred_element_type=F32),
            jnp.dot(p1, x, preferred_element_type=F32))


def _kmerge(x0, x1):
    half = x0.shape[0]
    C = 2 * half
    i = jax.lax.broadcasted_iota(jnp.int32, (C, half), 0)
    j = jax.lax.broadcasted_iota(jnp.int32, (C, half), 1)
    e0 = (i == j).astype(F32)
    e1 = (i == j + half).astype(F32)
    return (jnp.dot(e0, x0, preferred_element_type=F32)
            + jnp.dot(e1, x1, preferred_element_type=F32))


def _make_kernel(treedef, meta, n_leaves, half):
    def kernel(z_ref, mask_ref, *rest):
        o_ref = rest[n_leaves]
        w = jax.tree_util.tree_unflatten(treedef, [rest[i][...] for i in range(n_leaves)])
        x = z_ref[0]                                       # [C, T], time on lanes
        mask = mask_ref[0]                                 # [1, T]

        # ---------------- VITS flow (ResidualCouplingBlock, reverse) ----------------
        for ci in reversed(range(len(w["flow"]))):
            p, pm = w["flow"][ci], meta["flow"][ci]
            x0, x1 = _ksplit_flip(x, half)                 # Flip + split
            h = _kconv(x0, p["pre_w"], p["pre_b"], 1) * mask
            h = _kwn(h, mask, p["wn"], pm)
            m = _kconv(h, p["post_w"], p["post_b"], 1) * mask     # mean_only=True
            x1 = (x1 - m) * mask
            x = _kmerge(x0, x1)

        # ---------------- HiFi-GAN generator (gen.dec, g=None) ----------------
        x = x * mask                                       # dec(z * y_mask)
        dw, dm = w["dec"], meta["dec"]
        x = _kconv(x, dw["pre_w"], dw["pre_b"], dm["pre_K"])
        for ui in range(len(dw["ups"])):
            x = _kconv_transpose(x, dw["ups"][ui]["w"], dw["ups"][ui]["b"],
                                 dm["ups"][ui], pre_slope=LRELU_SLOPE)
            xs = None
            for rb_w, rb_m in zip(dw["res"][ui], dm["res"][ui]):
                xr = x
                for wi, bi, Ki, di in zip(rb_w["w"], rb_w["b"], rb_m["K"], rb_m["dil"]):
                    xr = _kconv(xr, wi, bi, Ki, dilation=di, pre_slope=LRELU_SLOPE) + xr
                xs = xr if xs is None else xs + xr
            x = xs * (1.0 / float(len(dw["res"][ui])))
        # final leaky_relu (PyTorch default slope 0.01) + conv_post (bias=False) + tanh
        x = _kconv(x, dw["post_w"], None, dm["post_K"], pre_slope=0.01)
        o_ref[0] = jnp.tanh(x)

    return kernel


# --------------------------------------------------------------------------------------
# Builder: one fused pallas_call, batch-parallel grid, weights resident via constant maps
# --------------------------------------------------------------------------------------
def build_vits_decoder(params, B, C, T):
    wtree, meta = prepare_params(params)
    leaves, treedef = jax.tree_util.tree_flatten(wtree)
    T_out = T
    for um in meta["dec"]["ups"]:
        T_out *= um["stride"]

    kernel = _make_kernel(treedef, meta, len(leaves), C // 2)

    in_specs = [pl.BlockSpec((1, C, T), lambda b: (b, 0, 0)),
                pl.BlockSpec((1, 1, T), lambda b: (b, 0, 0))]
    for leaf in leaves:                                    # full-array weight blocks, resident
        in_specs.append(pl.BlockSpec(leaf.shape, lambda b, nd=leaf.ndim: (0,) * nd))

    call = pl.pallas_call(
        kernel,
        grid=(B,),
        in_specs=in_specs,
        out_specs=pl.BlockSpec((1, 1, T_out), lambda b: (b, 0, 0)),
        out_shape=jax.ShapeDtypeStruct((B, 1, T_out), jnp.float32),
        compiler_params=pltpu.CompilerParams(dimension_semantics=("parallel",)),
    )

    @jax.jit
    def run(z, y_mask):
        return call(z.astype(F32), y_mask.astype(F32), *leaves)

    return run


# --------------------------------------------------------------------------------------
# Pure-XLA reference (for correctness check only)
# --------------------------------------------------------------------------------------
def _reference_forward(z, y_mask, params):
    HI = jax.lax.Precision.HIGHEST

    def conv1d(x, w, b=None, dilation=1, pre_slope=None):
        if pre_slope is not None:
            x = jnp.where(x > 0, x, pre_slope * x)
        K = w.shape[2]
        pad = dilation * (K - 1) // 2
        y = jax.lax.conv_general_dilated(
            x, w, (1,), [(pad, pad)], rhs_dilation=(dilation,),
            dimension_numbers=("NCH", "OIH", "NCH"), precision=HI)
        return y if b is None else y + b[None, :, None]

    def convT(x, w, b, stride, padding, pre_slope=None):
        if pre_slope is not None:
            x = jnp.where(x > 0, x, pre_slope * x)
        K = w.shape[2]
        wt = jnp.flip(w, 2).transpose(1, 0, 2)
        y = jax.lax.conv_general_dilated(
            x, wt, (1,), [(K - 1 - padding, K - 1 - padding)], lhs_dilation=(stride,),
            dimension_numbers=("NCH", "OIH", "NCH"), precision=HI)
        return y + b[None, :, None]

    def wn(x, mask, wnp):
        H = x.shape[1]
        out = jnp.zeros_like(x)
        n = len(wnp["in_w"])
        for i in range(n):
            xi = conv1d(x, wnp["in_w"][i], wnp["in_b"][i], dilation=wnp["dilations"][i])
            acts = jnp.tanh(xi[:, :H]) * jax.nn.sigmoid(xi[:, H:]) * mask
            rs = conv1d(acts, wnp["rs_w"][i], wnp["rs_b"][i])
            if i < n - 1:
                x = (x + rs[:, :H]) * mask
                out = out + rs[:, H:]
            else:
                out = out + rs
        return out * mask

    x = z
    for p in reversed(params["flow"]):
        x = x[:, ::-1, :]
        half = x.shape[1] // 2
        x0, x1 = x[:, :half], x[:, half:]
        h = conv1d(x0, p["pre_w"], p["pre_b"]) * y_mask
        h = wn(h, y_mask, p["wn"])
        m = conv1d(h, p["post_w"], p["post_b"]) * y_mask
        x = jnp.concatenate([x0, (x1 - m) * y_mask], axis=1)

    dec = params["dec"]
    x = x * y_mask
    x = conv1d(x, dec["pre_w"], dec["pre_b"])
    for i, up in enumerate(dec["ups"]):
        x = convT(x, up["w"], up["b"], up["stride"], up["pad"], pre_slope=LRELU_SLOPE)
        xs = None
        for rb in dec["resblocks"][i]:
            xr = x
            for w_, b_, d_ in zip(rb["w"], rb["b"], rb["dilations"]):
                xr = conv1d(xr, w_, b_, dilation=d_, pre_slope=LRELU_SLOPE) + xr
            xs = xr if xs is None else xs + xr
        x = xs / len(dec["resblocks"][i])
    x = conv1d(x, dec["post_w"], None, pre_slope=0.01)
    return jnp.tanh(x)


# --------------------------------------------------------------------------------------
# Deterministic synthetic parameters (same structure / shapes as before)
# --------------------------------------------------------------------------------------
def make_params(key, inter_ch=8, hidden=16, n_flows=2, wn_layers=2, wn_kernel=5,
                up_init_ch=16, up_rates=(2, 2), up_kernels=(4, 4),
                rb_kernel=3, rb_dilations=(1, 3)):
    keys = iter(jax.random.split(key, 512))

    def w(shape, fan_in):
        return (1.0 / jnp.sqrt(float(fan_in))) * jax.random.normal(next(keys), shape, F32)

    half = inter_ch // 2
    couplings = []
    for _ in range(n_flows):
        wn = {"in_w": [], "in_b": [], "rs_w": [], "rs_b": [], "dilations": []}
        for i in range(wn_layers):
            wn["in_w"].append(w((2 * hidden, hidden, wn_kernel), hidden * wn_kernel))
            wn["in_b"].append(w((2 * hidden,), hidden))
            rs_out = 2 * hidden if i < wn_layers - 1 else hidden
            wn["rs_w"].append(w((rs_out, hidden, 1), hidden))
            wn["rs_b"].append(w((rs_out,), hidden))
            wn["dilations"].append(1)
        couplings.append({
            "pre_w": w((hidden, half, 1), half), "pre_b": w((hidden,), half),
            "post_w": w((half, hidden, 1), hidden), "post_b": w((half,), hidden),
            "wn": wn,
        })

    dec = {"pre_w": w((up_init_ch, inter_ch, 7), inter_ch * 7),
           "pre_b": w((up_init_ch,), inter_ch),
           "ups": [], "resblocks": []}
    ch = up_init_ch
    for r, k in zip(up_rates, up_kernels):
        ch_out = ch // 2
        dec["ups"].append({"w": w((ch, ch_out, k), ch * k), "b": w((ch_out,), ch),
                           "stride": r, "pad": (k - r) // 2})
        rb = {"w": [w((ch_out, ch_out, rb_kernel), ch_out * rb_kernel) for _ in rb_dilations],
              "b": [w((ch_out,), ch_out) for _ in rb_dilations],
              "dilations": list(rb_dilations)}
        dec["resblocks"].append([rb])
        ch = ch_out
    dec["post_w"] = w((1, ch, 7), ch * 7)                  # conv_post: bias=False
    return {"flow": couplings, "dec": dec}


# --------------------------------------------------------------------------------------
if __name__ == "__main__":
    key = jax.random.PRNGKey(0)
    k_p, k_z = jax.random.split(key)

    B, C, T = 2, 8, 16                                     # [batch, inter_channels, frames]
    params = make_params(k_p, inter_ch=C)

    z = jax.random.normal(k_z, (B, C, T), F32)
    y_mask = jnp.ones((B, 1, T), F32).at[1, 0, 12:].set(0.0)   # ragged second batch element

    decoder = build_vits_decoder(params, B, C, T)
    out = jax.block_until_ready(decoder(z, y_mask))        # -> [B, 1, T * prod(up_rates)]
    assert out.shape == (B, 1, T * 4), out.shape

    ref = jax.block_until_ready(_reference_forward(z, y_mask, params))
    err = float(jnp.max(jnp.abs(out - ref)))
    assert jnp.allclose(out, ref, atol=5e-3, rtol=5e-3), f"max |diff| = {err}"

    print("KERNEL_OK")
</pallas_src>

<mosaic_0001>
module attributes {stable_mosaic.version = 11 : i64} {
  func.func @kernel(%arg0: i32, %arg1: memref<1x8x16xf32, #tpu.memory_space<vmem>>, %arg2: memref<1x1x16xf32, #tpu.memory_space<vmem>>, %arg3: memref<1x28xf32, #tpu.memory_space<vmem>>, %arg4: memref<16x1xf32, #tpu.memory_space<vmem>>, %arg5: memref<16x56xf32, #tpu.memory_space<vmem>>, %arg6: memref<8x1xf32, #tpu.memory_space<vmem>>, %arg7: memref<8x1xf32, #tpu.memory_space<vmem>>, %arg8: memref<8x24xf32, #tpu.memory_space<vmem>>, %arg9: memref<8x24xf32, #tpu.memory_space<vmem>>, %arg10: memref<4x1xf32, #tpu.memory_space<vmem>>, %arg11: memref<4x1xf32, #tpu.memory_space<vmem>>, %arg12: memref<4x12xf32, #tpu.memory_space<vmem>>, %arg13: memref<4x12xf32, #tpu.memory_space<vmem>>, %arg14: memref<8x1xf32, #tpu.memory_space<vmem>>, %arg15: memref<8x32xf32, #tpu.memory_space<vmem>>, %arg16: memref<8x32xf32, #tpu.memory_space<vmem>>, %arg17: memref<4x1xf32, #tpu.memory_space<vmem>>, %arg18: memref<4x16xf32, #tpu.memory_space<vmem>>, %arg19: memref<4x16xf32, #tpu.memory_space<vmem>>, %arg20: memref<4x1xf32, #tpu.memory_space<vmem>>, %arg21: memref<4x16xf32, #tpu.memory_space<vmem>>, %arg22: memref<16x1xf32, #tpu.memory_space<vmem>>, %arg23: memref<16x4xf32, #tpu.memory_space<vmem>>, %arg24: memref<32x1xf32, #tpu.memory_space<vmem>>, %arg25: memref<32x1xf32, #tpu.memory_space<vmem>>, %arg26: memref<32x80xf32, #tpu.memory_space<vmem>>, %arg27: memref<32x80xf32, #tpu.memory_space<vmem>>, %arg28: memref<32x1xf32, #tpu.memory_space<vmem>>, %arg29: memref<16x1xf32, #tpu.memory_space<vmem>>, %arg30: memref<32x16xf32, #tpu.memory_space<vmem>>, %arg31: memref<16x16xf32, #tpu.memory_space<vmem>>, %arg32: memref<4x1xf32, #tpu.memory_space<vmem>>, %arg33: memref<4x16xf32, #tpu.memory_space<vmem>>, %arg34: memref<16x1xf32, #tpu.memory_space<vmem>>, %arg35: memref<16x4xf32, #tpu.memory_space<vmem>>, %arg36: memref<32x1xf32, #tpu.memory_space<vmem>>, %arg37: memref<32x1xf32, #tpu.memory_space<vmem>>, %arg38: memref<32x80xf32, #tpu.memory_space<vmem>>, %arg39: memref<32x80xf32, #tpu.memory_space<vmem>>, %arg40: memref<32x1xf32, #tpu.memory_space<vmem>>, %arg41: memref<16x1xf32, #tpu.memory_space<vmem>>, %arg42: memref<32x16xf32, #tpu.memory_space<vmem>>, %arg43: memref<16x16xf32, #tpu.memory_space<vmem>>, %arg44: memref<1x1x64xf32, #tpu.memory_space<vmem>>) attributes {dimension_semantics = [#tpu.dimension_semantics<parallel>], iteration_bounds = array<i64: 2>, scalar_prefetch = 0 : i64, scratch_operands = 0 : i64, tpu.core_type = #tpu.core_type<tc>, window_params = [{transform_indices = @transform_0, window_bounds = array<i64: 1, 8, 16>}, {transform_indices = @transform_1, window_bounds = array<i64: 1, 1, 16>}, {pipeline_mode = #tpu.pipeline_mode<synchronous>, transform_indices = @transform_2, window_bounds = array<i64: 1, 28>}, {pipeline_mode = #tpu.pipeline_mode<synchronous>, transform_indices = @transform_3, window_bounds = array<i64: 16, 1>}, {pipeline_mode = #tpu.pipeline_mode<synchronous>, transform_indices = @transform_4, window_bounds = array<i64: 16, 56>}, {pipeline_mode = #tpu.pipeline_mode<synchronous>, transform_indices = @transform_5, window_bounds = array<i64: 8, 1>}, {pipeline_mode = #tpu.pipeline_mode<synchronous>, transform_indices = @transform_6, window_bounds = array<i64: 8, 1>}, {pipeline_mode = #tpu.pipeline_mode<synchronous>, transform_indices = @transform_7, window_bounds = array<i64: 8, 24>}, {pipeline_mode = #tpu.pipeline_mode<synchronous>, transform_indices = @transform_8, window_bounds = array<i64: 8, 24>}, {pipeline_mode = #tpu.pipeline_mode<synchronous>, transform_indices = @transform_9, window_bounds = array<i64: 4, 1>}, {pipeline_mode = #tpu.pipeline_mode<synchronous>, transform_indices = @transform_10, window_bounds = array<i64: 4, 1>}, {pipeline_mode = #tpu.pipeline_mode<synchronous>, transform_indices = @transform_11, window_bounds = array<i64: 4, 12>}, {pipeline_mode = #tpu.pipeline_mode<synchronous>, transform_indices = @transform_12, window_bounds = array<i64: 4, 12>}, {pipeline_mode = #tpu.pipeline_mode<synchronous>, transform_indices = @transform_13, window_bounds = array<i64: 8, 1>}, {pipeline_mode = #tpu.pipeline_mode<synchronous>, transform_indices = @transform_14, window_bounds = array<i64: 8, 32>}, {pipeline_mode = #tpu.pipeline_mode<synchronous>, transform_indices = @transform_15, window_bounds = array<i64: 8, 32>}, {pipeline_mode = #tpu.pipeline_mode<synchronous>, transform_indices = @transform_16, window_bounds = array<i64: 4, 1>}, {pipeline_mode = #tpu.pipeline_mode<synchronous>, transform_indices = @transform_17, window_bounds = array<i64: 4, 16>}, {pipeline_mode = #tpu.pipeline_mode<synchronous>, transform_indices = @transform_18, window_bounds = array<i64: 4, 16>}, {pipeline_mode = #tpu.pipeline_mode<synchronous>, transform_indices = @transform_19, window_bounds = array<i64: 4, 1>}, {pipeline_mode = #tpu.pipeline_mode<synchronous>, transform_indices = @transform_20, window_bounds = array<i64: 4, 16>}, {pipeline_mode = #tpu.pipeline_mode<synchronous>, transform_indices = @transform_21, window_bounds = array<i64: 16, 1>}, {pipeline_mode = #tpu.pipeline_mode<synchronous>, transform_indices = @transform_22, window_bounds = array<i64: 16, 4>}, {pipeline_mode = #tpu.pipeline_mode<synchronous>, transform_indices = @transform_23, window_bounds = array<i64: 32, 1>}, {pipeline_mode = #tpu.pipeline_mode<synchronous>, transform_indices = @transform_24, window_bounds = array<i64: 32, 1>}, {pipeline_mode = #tpu.pipeline_mode<synchronous>, transform_indices = @transform_25, window_bounds = array<i64: 32, 80>}, {pipeline_mode = #tpu.pipeline_mode<synchronous>, transform_indices = @transform_26, window_bounds = array<i64: 32, 80>}, {pipeline_mode = #tpu.pipeline_mode<synchronous>, transform_indices = @transform_27, window_bounds = array<i64: 32, 1>}, {pipeline_mode = #tpu.pipeline_mode<synchronous>, transform_indices = @transform_28, window_bounds = array<i64: 16, 1>}, {pipeline_mode = #tpu.pipeline_mode<synchronous>, transform_indices = @transform_29, window_bounds = array<i64: 32, 16>}, {pipeline_mode = #tpu.pipeline_mode<synchronous>, transform_indices = @transform_30, window_bounds = array<i64: 16, 16>}, {pipeline_mode = #tpu.pipeline_mode<synchronous>, transform_indices = @transform_31, window_bounds = array<i64: 4, 1>}, {pipeline_mode = #tpu.pipeline_mode<synchronous>, transform_indices = @transform_32, window_bounds = array<i64: 4, 16>}, {pipeline_mode = #tpu.pipeline_mode<synchronous>, transform_indices = @transform_33, window_bounds = array<i64: 16, 1>}, {pipeline_mode = #tpu.pipeline_mode<synchronous>, transform_indices = @transform_34, window_bounds = array<i64: 16, 4>}, {pipeline_mode = #tpu.pipeline_mode<synchronous>, transform_indices = @transform_35, window_bounds = array<i64: 32, 1>}, {pipeline_mode = #tpu.pipeline_mode<synchronous>, transform_indices = @transform_36, window_bounds = array<i64: 32, 1>}, {pipeline_mode = #tpu.pipeline_mode<synchronous>, transform_indices = @transform_37, window_bounds = array<i64: 32, 80>}, {pipeline_mode = #tpu.pipeline_mode<synchronous>, transform_indices = @transform_38, window_bounds = array<i64: 32, 80>}, {pipeline_mode = #tpu.pipeline_mode<synchronous>, transform_indices = @transform_39, window_bounds = array<i64: 32, 1>}, {pipeline_mode = #tpu.pipeline_mode<synchronous>, transform_indices = @transform_40, window_bounds = array<i64: 16, 1>}, {pipeline_mode = #tpu.pipeline_mode<synchronous>, transform_indices = @transform_41, window_bounds = array<i64: 32, 16>}, {pipeline_mode = #tpu.pipeline_mode<synchronous>, transform_indices = @transform_42, window_bounds = array<i64: 16, 16>}, {transform_indices = @transform_43, window_bounds = array<i64: 1, 1, 64>}]} {
    %c0 = arith.constant 0 : index
    %c0_0 = arith.constant 0 : index
    %0 = vector.load %arg3[%c0, %c0_0] : memref<1x28xf32, #tpu.memory_space<vmem>>, vector<1x28xf32>
    %c0_1 = arith.constant 0 : index
    %c0_2 = arith.constant 0 : index
    %1 = vector.load %arg4[%c0_1, %c0_2] : memref<16x1xf32, #tpu.memory_space<vmem>>, vector<16x1xf32>
    %c0_3 = arith.constant 0 : index
    %c0_4 = arith.constant 0 : index
    %2 = vector.load %arg5[%c0_3, %c0_4] : memref<16x56xf32, #tpu.memory_space<vmem>>, vector<16x56xf32>
    %c0_5 = arith.constant 0 : index
    %c0_6 = arith.constant 0 : index
    %3 = vector.load %arg6[%c0_5, %c0_6] : memref<8x1xf32, #tpu.memory_space<vmem>>, vector<8x1xf32>
    %c0_7 = arith.constant 0 : index
    %c0_8 = arith.constant 0 : index
    %4 = vector.load %arg7[%c0_7, %c0_8] : memref<8x1xf32, #tpu.memory_space<vmem>>, vector<8x1xf32>
    %c0_9 = arith.constant 0 : index
    %c0_10 = arith.constant 0 : index
    %5 = vector.load %arg8[%c0_9, %c0_10] : memref<8x24xf32, #tpu.memory_space<vmem>>, vector<8x24xf32>
    %c0_11 = arith.constant 0 : index
    %c0_12 = arith.constant 0 : index
    %6 = vector.load %arg9[%c0_11, %c0_12] : memref<8x24xf32, #tpu.memory_space<vmem>>, vector<8x24xf32>
    %c0_13 = arith.constant 0 : index
    %c0_14 = arith.constant 0 : index
    %7 = vector.load %arg10[%c0_13, %c0_14] : memref<4x1xf32, #tpu.memory_space<vmem>>, vector<4x1xf32>
    %c0_15 = arith.constant 0 : index
    %c0_16 = arith.constant 0 : index
    %8 = vector.load %arg11[%c0_15, %c0_16] : memref<4x1xf32, #tpu.memory_space<vmem>>, vector<4x1xf32>
    %c0_17 = arith.constant 0 : index
    %c0_18 = arith.constant 0 : index
    %9 = vector.load %arg12[%c0_17, %c0_18] : memref<4x12xf32, #tpu.memory_space<vmem>>, vector<4x12xf32>
    %c0_19 = arith.constant 0 : index
    %c0_20 = arith.constant 0 : index
    %10 = vector.load %arg13[%c0_19, %c0_20] : memref<4x12xf32, #tpu.memory_space<vmem>>, vector<4x12xf32>
    %c0_21 = arith.constant 0 : index
    %c0_22 = arith.constant 0 : index
    %11 = vector.load %arg14[%c0_21, %c0_22] : memref<8x1xf32, #tpu.memory_space<vmem>>, vector<8x1xf32>
    %c0_23 = arith.constant 0 : index
    %c0_24 = arith.constant 0 : index
    %12 = vector.load %arg15[%c0_23, %c0_24] : memref<8x32xf32, #tpu.memory_space<vmem>>, vector<8x32xf32>
    %c0_25 = arith.constant 0 : index
    %c0_26 = arith.constant 0 : index
    %13 = vector.load %arg16[%c0_25, %c0_26] : memref<8x32xf32, #tpu.memory_space<vmem>>, vector<8x32xf32>
    %c0_27 = arith.constant 0 : index
    %c0_28 = arith.constant 0 : index
    %14 = vector.load %arg17[%c0_27, %c0_28] : memref<4x1xf32, #tpu.memory_space<vmem>>, vector<4x1xf32>
    %c0_29 = arith.constant 0 : index
    %c0_30 = arith.constant 0 : index
    %15 = vector.load %arg18[%c0_29, %c0_30] : memref<4x16xf32, #tpu.memory_space<vmem>>, vector<4x16xf32>
    %c0_31 = arith.constant 0 : index
    %c0_32 = arith.constant 0 : index
    %16 = vector.load %arg19[%c0_31, %c0_32] : memref<4x16xf32, #tpu.memory_space<vmem>>, vector<4x16xf32>
    %c0_33 = arith.constant 0 : index
    %c0_34 = arith.constant 0 : index
    %17 = vector.load %arg20[%c0_33, %c0_34] : memref<4x1xf32, #tpu.memory_space<vmem>>, vector<4x1xf32>
    %c0_35 = arith.constant 0 : index
    %c0_36 = arith.constant 0 : index
    %18 = vector.load %arg21[%c0_35, %c0_36] : memref<4x16xf32, #tpu.memory_space<vmem>>, vector<4x16xf32>
    %c0_37 = arith.constant 0 : index
    %c0_38 = arith.constant 0 : index
    %19 = vector.load %arg22[%c0_37, %c0_38] : memref<16x1xf32, #tpu.memory_space<vmem>>, vector<16x1xf32>
    %c0_39 = arith.constant 0 : index
    %c0_40 = arith.constant 0 : index
    %20 = vector.load %arg23[%c0_39, %c0_40] : memref<16x4xf32, #tpu.memory_space<vmem>>, vector<16x4xf32>
    %c0_41 = arith.constant 0 : index
    %c0_42 = arith.constant 0 : index
    %21 = vector.load %arg24[%c0_41, %c0_42] : memref<32x1xf32, #tpu.memory_space<vmem>>, vector<32x1xf32>
    %c0_43 = arith.constant 0 : index
    %c0_44 = arith.constant 0 : index
    %22 = vector.load %arg25[%c0_43, %c0_44] : memref<32x1xf32, #tpu.memory_space<vmem>>, vector<32x1xf32>
    %c0_45 = arith.constant 0 : index
    %c0_46 = arith.constant 0 : index
    %23 = vector.load %arg26[%c0_45, %c0_46] : memref<32x80xf32, #tpu.memory_space<vmem>>, vector<32x80xf32>
    %c0_47 = arith.constant 0 : index
    %c0_48 = arith.constant 0 : index
    %24 = vector.load %arg27[%c0_47, %c0_48] : memref<32x80xf32, #tpu.memory_space<vmem>>, vector<32x80xf32>
    %c0_49 = arith.constant 0 : index
    %c0_50 = arith.constant 0 : index
    %25 = vector.load %arg28[%c0_49, %c0_50] : memref<32x1xf32, #tpu.memory_space<vmem>>, vector<32x1xf32>
    %c0_51 = arith.constant 0 : index
    %c0_52 = arith.constant 0 : index
    %26 = vector.load %arg29[%c0_51, %c0_52] : memref<16x1xf32, #tpu.memory_space<vmem>>, vector<16x1xf32>
    %c0_53 = arith.constant 0 : index
    %c0_54 = arith.constant 0 : index
    %27 = vector.load %arg30[%c0_53, %c0_54] : memref<32x16xf32, #tpu.memory_space<vmem>>, vector<32x16xf32>
    %c0_55 = arith.constant 0 : index
    %c0_56 = arith.constant 0 : index
    %28 = vector.load %arg31[%c0_55, %c0_56] : memref<16x16xf32, #tpu.memory_space<vmem>>, vector<16x16xf32>
    %c0_57 = arith.constant 0 : index
    %c0_58 = arith.constant 0 : index
    %29 = vector.load %arg32[%c0_57, %c0_58] : memref<4x1xf32, #tpu.memory_space<vmem>>, vector<4x1xf32>
    %c0_59 = arith.constant 0 : index
    %c0_60 = arith.constant 0 : index
    %30 = vector.load %arg33[%c0_59, %c0_60] : memref<4x16xf32, #tpu.memory_space<vmem>>, vector<4x16xf32>
    %c0_61 = arith.constant 0 : index
    %c0_62 = arith.constant 0 : index
    %31 = vector.load %arg34[%c0_61, %c0_62] : memref<16x1xf32, #tpu.memory_space<vmem>>, vector<16x1xf32>
    %c0_63 = arith.constant 0 : index
    %c0_64 = arith.constant 0 : index
    %32 = vector.load %arg35[%c0_63, %c0_64] : memref<16x4xf32, #tpu.memory_space<vmem>>, vector<16x4xf32>
    %c0_65 = arith.constant 0 : index
    %c0_66 = arith.constant 0 : index
    %33 = vector.load %arg36[%c0_65, %c0_66] : memref<32x1xf32, #tpu.memory_space<vmem>>, vector<32x1xf32>
    %c0_67 = arith.constant 0 : index
    %c0_68 = arith.constant 0 : index
    %34 = vector.load %arg37[%c0_67, %c0_68] : memref<32x1xf32, #tpu.memory_space<vmem>>, vector<32x1xf32>
    %c0_69 = arith.constant 0 : index
    %c0_70 = arith.constant 0 : index
    %35 = vector.load %arg38[%c0_69, %c0_70] : memref<32x80xf32, #tpu.memory_space<vmem>>, vector<32x80xf32>
    %c0_71 = arith.constant 0 : index
    %c0_72 = arith.constant 0 : index
    %36 = vector.load %arg39[%c0_71, %c0_72] : memref<32x80xf32, #tpu.memory_space<vmem>>, vector<32x80xf32>
    %c0_73 = arith.constant 0 : index
    %c0_74 = arith.constant 0 : index
    %37 = vector.load %arg40[%c0_73, %c0_74] : memref<32x1xf32, #tpu.memory_space<vmem>>, vector<32x1xf32>
    %c0_75 = arith.constant 0 : index
    %c0_76 = arith.constant 0 : index
    %38 = vector.load %arg41[%c0_75, %c0_76] : memref<16x1xf32, #tpu.memory_space<vmem>>, vector<16x1xf32>
    %c0_77 = arith.constant 0 : index
    %c0_78 = arith.constant 0 : index
    %39 = vector.load %arg42[%c0_77, %c0_78] : memref<32x16xf32, #tpu.memory_space<vmem>>, vector<32x16xf32>
    %c0_79 = arith.constant 0 : index
    %c0_80 = arith.constant 0 : index
    %40 = vector.load %arg43[%c0_79, %c0_80] : memref<16x16xf32, #tpu.memory_space<vmem>>, vector<16x16xf32>
    %c0_81 = arith.constant 0 : index
    %c0_82 = arith.constant 0 : index
    %c0_83 = arith.constant 0 : index
    %41 = vector.load %arg1[%c0_81, %c0_82, %c0_83] : memref<1x8x16xf32, #tpu.memory_space<vmem>>, vector<1x8x16xf32>
    %42 = vector.shape_cast %41 : vector<1x8x16xf32> to vector<8x16xf32>
    %c0_84 = arith.constant 0 : index
    %c0_85 = arith.constant 0 : index
    %c0_86 = arith.constant 0 : index
    %43 = vector.load %arg2[%c0_84, %c0_85, %c0_86] : memref<1x1x16xf32, #tpu.memory_space<vmem>>, vector<1x1x16xf32>
    %44 = vector.shape_cast %43 : vector<1x1x16xf32> to vector<1x16xf32>
    %45 = tpu.iota {dimensions = array<i32: 0>} : vector<4x8xi32>
    %46 = tpu.iota {dimensions = array<i32: 1>} : vector<4x8xi32>
    %c7_i32 = arith.constant 7 : i32
    %47 = vector.broadcast %c7_i32 : i32 to vector<4x8xi32>
    %48 = arith.subi %47, %45 : vector<4x8xi32>
    %49 = arith.cmpi eq, %46, %48 : vector<4x8xi32>
    %50 = arith.extui %49 : vector<4x8xi1> to vector<4x8xi32>
    %51 = arith.sitofp %50 : vector<4x8xi32> to vector<4x8xf32>
    %c3_i32 = arith.constant 3 : i32
    %52 = vector.broadcast %c3_i32 : i32 to vector<4x8xi32>
    %53 = arith.subi %52, %45 : vector<4x8xi32>
    %54 = arith.cmpi eq, %46, %53 : vector<4x8xi32>
    %55 = arith.extui %54 : vector<4x8xi1> to vector<4x8xi32>
    %56 = arith.sitofp %55 : vector<4x8xi32> to vector<4x8xf32>
    %cst = arith.constant dense<0.000000e+00> : vector<4x16xf32>
    %57 = tpu.matmul %51, %42, %cst {dimension_numbers = #tpu.dot_dimension_numbers<[1], [0], [0], [1], [0, 0, 1, 1], [], []>} : vector<4x8xf32>, vector<8x16xf32>, vector<4x16xf32> -> vector<4x16xf32>
    %cst_87 = arith.constant dense<0.000000e+00> : vector<4x16xf32>
    %58 = tpu.matmul %56, %42, %cst_87 {dimension_numbers = #tpu.dot_dimension_numbers<[1], [0], [0], [1], [0, 0, 1, 1], [], []>} : vector<4x8xf32>, vector<8x16xf32>, vector<4x16xf32> -> vector<4x16xf32>
    %cst_88 = arith.constant dense<0.000000e+00> : vector<16x16xf32>
    %59 = tpu.matmul %32, %57, %cst_88 {dimension_numbers = #tpu.dot_dimension_numbers<[1], [0], [0], [1], [0, 0, 1, 1], [], []>} : vector<16x4xf32>, vector<4x16xf32>, vector<16x16xf32> -> vector<16x16xf32>
    %60 = vector.broadcast %31 : vector<16x1xf32> to vector<16x16xf32>
    %61 = arith.addf %59, %60 : vector<16x16xf32>
    %62 = vector.broadcast %44 : vector<1x16xf32> to vector<16x16xf32>
    %63 = arith.mulf %61, %62 : vector<16x16xf32>
    %cst_89 = arith.constant 0.000000e+00 : f32
    %64 = vector.broadcast %cst_89 : f32 to vector<16x16xf32>
    %cst_90 = arith.constant 0.000000e+00 : f32
    %65 = vector.broadcast %cst_90 : f32 to vector<16x2xf32>
    %66 = tpu.concatenate %65, %63, %65 in 1 : vector<16x2xf32>, vector<16x16xf32>, vector<16x2xf32> -> vector<16x20xf32>
    %67 = vector.extract_strided_slice %35 {offsets = [0, 0], sizes = [32, 16], strides = [1, 1]} : vector<32x80xf32> to vector<32x16xf32>
    %68 = vector.extract_strided_slice %66 {offsets = [0, 0], sizes = [16, 16], strides = [1, 1]} : vector<16x20xf32> to vector<16x16xf32>
    %cst_91 = arith.constant dense<0.000000e+00> : vector<32x16xf32>
    %69 = tpu.matmul %67, %68, %cst_91 {dimension_numbers = #tpu.dot_dimension_numbers<[1], [0], [0], [1], [0, 0, 1, 1], [], []>} : vector<32x16xf32>, vector<16x16xf32>, vector<32x16xf32> -> vector<32x16xf32>
    %70 = vector.extract_strided_slice %35 {offsets = [0, 16], sizes = [32, 16], strides = [1, 1]} : vector<32x80xf32> to vector<32x16xf32>
    %71 = vector.extract_strided_slice %66 {offsets = [0, 1], sizes = [16, 16], strides = [1, 1]} : vector<16x20xf32> to vector<16x16xf32>
    %cst_92 = arith.constant dense<0.000000e+00> : vector<32x16xf32>
    %72 = tpu.matmul %70, %71, %cst_92 {dimension_numbers = #tpu.dot_dimension_numbers<[1], [0], [0], [1], [0, 0, 1, 1], [], []>} : vector<32x16xf32>, vector<16x16xf32>, vector<32x16xf32> -> vector<32x16xf32>
    %73 = arith.addf %69, %72 : vector<32x16xf32>
    %74 = vector.extract_strided_slice %35 {offsets = [0, 32], sizes = [32, 16], strides = [1, 1]} : vector<32x80xf32> to vector<32x16xf32>
    %75 = vector.extract_strided_slice %66 {offsets = [0, 2], sizes = [16, 16], strides = [1, 1]} : vector<16x20xf32> to vector<16x16xf32>
    %cst_93 = arith.constant dense<0.000000e+00> : vector<32x16xf32>
    %76 = tpu.matmul %74, %75, %cst_93 {dimension_numbers = #tpu.dot_dimension_numbers<[1], [0], [0], [1], [0, 0, 1, 1], [], []>} : vector<32x16xf32>, vector<16x16xf32>, vector<32x16xf32> -> vector<32x16xf32>
    %77 = arith.addf %73, %76 : vector<32x16xf32>
    %78 = vector.extract_strided_slice %35 {offsets = [0, 48], sizes = [32, 16], strides = [1, 1]} : vector<32x80xf32> to vector<32x16xf32>
    %79 = vector.extract_strided_slice %66 {offsets = [0, 3], sizes = [16, 16], strides = [1, 1]} : vector<16x20xf32> to vector<16x16xf32>
    %cst_94 = arith.constant dense<0.000000e+00> : vector<32x16xf32>
    %80 = tpu.matmul %78, %79, %cst_94 {dimension_numbers = #tpu.dot_dimension_numbers<[1], [0], [0], [1], [0, 0, 1, 1], [], []>} : vector<32x16xf32>, vector<16x16xf32>, vector<32x16xf32> -> vector<32x16xf32>
    %81 = arith.addf %77, %80 : vector<32x16xf32>
    %82 = vector.extract_strided_slice %35 {offsets = [0, 64], sizes = [32, 16], strides = [1, 1]} : vector<32x80xf32> to vector<32x16xf32>
    %83 = vector.extract_strided_slice %66 {offsets = [0, 4], sizes = [16, 16], strides = [1, 1]} : vector<16x20xf32> to vector<16x16xf32>
    %cst_95 = arith.constant dense<0.000000e+00> : vector<32x16xf32>
    %84 = tpu.matmul %82, %83, %cst_95 {dimension_numbers = #tpu.dot_dimension_numbers<[1], [0], [0], [1], [0, 0, 1, 1], [], []>} : vector<32x16xf32>, vector<16x16xf32>, vector<32x16xf32> -> vector<32x16xf32>
    %85 = arith.addf %81, %84 : vector<32x16xf32>
    %86 = vector.broadcast %33 : vector<32x1xf32> to vector<32x16xf32>
    %87 = arith.addf %85, %86 : vector<32x16xf32>
    %88 = vector.extract_strided_slice %87 {offsets = [0, 0], sizes = [16, 16], strides = [1, 1]} : vector<32x16xf32> to vector<16x16xf32>
    %89 = math.tanh %88 : vector<16x16xf32>
    %90 = vector.extract_strided_slice %87 {offsets = [16, 0], sizes = [16, 16], strides = [1, 1]} : vector<32x16xf32> to vector<16x16xf32>
    %91 = arith.negf %90 : vector<16x16xf32>
    %92 = math.exp %91 : vector<16x16xf32>
    %cst_96 = arith.constant 1.000000e+00 : f32
    %93 = vector.broadcast %cst_96 : f32 to vector<16x16xf32>
    %94 = arith.addf %93, %92 : vector<16x16xf32>
    %95 = arith.divf %93, %94 : vector<16x16xf32>
    %96 = arith.mulf %89, %95 : vector<16x16xf32>
    %97 = vector.broadcast %44 : vector<1x16xf32> to vector<16x16xf32>
    %98 = arith.mulf %96, %97 : vector<16x16xf32>
    %cst_97 = arith.constant dense<0.000000e+00> : vector<32x16xf32>
    %99 = tpu.matmul %39, %98, %cst_97 {dimension_numbers = #tpu.dot_dimension_numbers<[1], [0], [0], [1], [0, 0, 1, 1], [], []>} : vector<32x16xf32>, vector<16x16xf32>, vector<32x16xf32> -> vector<32x16xf32>
    %100 = vector.broadcast %37 : vector<32x1xf32> to vector<32x16xf32>
    %101 = arith.addf %99, %100 : vector<32x16xf32>
    %102 = vector.extract_strided_slice %101 {offsets = [0, 0], sizes = [16, 16], strides = [1, 1]} : vector<32x16xf32> to vector<16x16xf32>
    %103 = arith.addf %63, %102 : vector<16x16xf32>
    %104 = vector.broadcast %44 : vector<1x16xf32> to vector<16x16xf32>
    %105 = arith.mulf %103, %104 : vector<16x16xf32>
    %106 = vector.extract_strided_slice %101 {offsets = [16, 0], sizes = [16, 16], strides = [1, 1]} : vector<32x16xf32> to vector<16x16xf32>
    %107 = arith.addf %64, %106 : vector<16x16xf32>
    %cst_98 = arith.constant 0.000000e+00 : f32
    %108 = vector.broadcast %cst_98 : f32 to vector<16x2xf32>
    %109 = tpu.concatenate %108, %105, %108 in 1 : vector<16x2xf32>, vector<16x16xf32>, vector<16x2xf32> -> vector<16x20xf32>
    %110 = vector.extract_strided_slice %36 {offsets = [0, 0], sizes = [32, 16], strides = [1, 1]} : vector<32x80xf32> to vector<32x16xf32>
    %111 = vector.extract_strided_slice %109 {offsets = [0, 0], sizes = [16, 16], strides = [1, 1]} : vector<16x20xf32> to vector<16x16xf32>
    %cst_99 = arith.constant dense<0.000000e+00> : vector<32x16xf32>
    %112 = tpu.matmul %110, %111, %cst_99 {dimension_numbers = #tpu.dot_dimension_numbers<[1], [0], [0], [1], [0, 0, 1, 1], [], []>} : vector<32x16xf32>, vector<16x16xf32>, vector<32x16xf32> -> vector<32x16xf32>
    %113 = vector.extract_strided_slice %36 {offsets = [0, 16], sizes = [32, 16], strides = [1, 1]} : vector<32x80xf32> to vector<32x16xf32>
    %114 = vector.extract_strided_slice %109 {offsets = [0, 1], sizes = [16, 16], strides = [1, 1]} : vector<16x20xf32> to vector<16x16xf32>
    %cst_100 = arith.constant dense<0.000000e+00> : vector<32x16xf32>
    %115 = tpu.matmul %113, %114, %cst_100 {dimension_numbers = #tpu.dot_dimension_numbers<[1], [0], [0], [1], [0, 0, 1, 1], [], []>} : vector<32x16xf32>, vector<16x16xf32>, vector<32x16xf32> -> vector<32x16xf32>
    %116 = arith.addf %112, %115 : vector<32x16xf32>
    %117 = vector.extract_strided_slice %36 {offsets = [0, 32], sizes = [32, 16], strides = [1, 1]} : vector<32x80xf32> to vector<32x16xf32>
    %118 = vector.extract_strided_slice %109 {offsets = [0, 2], sizes = [16, 16], strides = [1, 1]} : vector<16x20xf32> to vector<16x16xf32>
    %cst_101 = arith.constant dense<0.000000e+00> : vector<32x16xf32>
    %119 = tpu.matmul %117, %118, %cst_101 {dimension_numbers = #tpu.dot_dimension_numbers<[1], [0], [0], [1], [0, 0, 1, 1], [], []>} : vector<32x16xf32>, vector<16x16xf32>, vector<32x16xf32> -> vector<32x16xf32>
    %120 = arith.addf %116, %119 : vector<32x16xf32>
    %121 = vector.extract_strided_slice %36 {offsets = [0, 48], sizes = [32, 16], strides = [1, 1]} : vector<32x80xf32> to vector<32x16xf32>
    %122 = vector.extract_strided_slice %109 {offsets = [0, 3], sizes = [16, 16], strides = [1, 1]} : vector<16x20xf32> to vector<16x16xf32>
    %cst_102 = arith.constant dense<0.000000e+00> : vector<32x16xf32>
    %123 = tpu.matmul %121, %122, %cst_102 {dimension_numbers = #tpu.dot_dimension_numbers<[1], [0], [0], [1], [0, 0, 1, 1], [], []>} : vector<32x16xf32>, vector<16x16xf32>, vector<32x16xf32> -> vector<32x16xf32>
    %124 = arith.addf %120, %123 : vector<32x16xf32>
    %125 = vector.extract_strided_slice %36 {offsets = [0, 64], sizes = [32, 16], strides = [1, 1]} : vector<32x80xf32> to vector<32x16xf32>
    %126 = vector.extract_strided_slice %109 {offsets = [0, 4], sizes = [16, 16], strides = [1, 1]} : vector<16x20xf32> to vector<16x16xf32>
    %cst_103 = arith.constant dense<0.000000e+00> : vector<32x16xf32>
    %127 = tpu.matmul %125, %126, %cst_103 {dimension_numbers = #tpu.dot_dimension_numbers<[1], [0], [0], [1], [0, 0, 1, 1], [], []>} : vector<32x16xf32>, vector<16x16xf32>, vector<32x16xf32> -> vector<32x16xf32>
    %128 = arith.addf %124, %127 : vector<32x16xf32>
    %129 = vector.broadcast %34 : vector<32x1xf32> to vector<32x16xf32>
    %130 = arith.addf %128, %129 : vector<32x16xf32>
    %131 = vector.extract_strided_slice %130 {offsets = [0, 0], sizes = [16, 16], strides = [1, 1]} : vector<32x16xf32> to vector<16x16xf32>
    %132 = math.tanh %131 : vector<16x16xf32>
    %133 = vector.extract_strided_slice %130 {offsets = [16, 0], sizes = [16, 16], strides = [1, 1]} : vector<32x16xf32> to vector<16x16xf32>
    %134 = arith.negf %133 : vector<16x16xf32>
    %135 = math.exp %134 : vector<16x16xf32>
    %cst_104 = arith.constant 1.000000e+00 : f32
    %136 = vector.broadcast %cst_104 : f32 to vector<16x16xf32>
    %137 = arith.addf %136, %135 : vector<16x16xf32>
    %138 = arith.divf %136, %137 : vector<16x16xf32>
    %139 = arith.mulf %132, %138 : vector<16x16xf32>
    %140 = vector.broadcast %44 : vector<1x16xf32> to vector<16x16xf32>
    %141 = arith.mulf %139, %140 : vector<16x16xf32>
    %cst_105 = arith.constant dense<0.000000e+00> : vector<16x16xf32>
    %142 = tpu.matmul %40, %141, %cst_105 {dimension_numbers = #tpu.dot_dimension_numbers<[1], [0], [0], [1], [0, 0, 1, 1], [], []>} : vector<16x16xf32>, vector<16x16xf32>, vector<16x16xf32> -> vector<16x16xf32>
    %143 = vector.broadcast %38 : vector<16x1xf32> to vector<16x16xf32>
    %144 = arith.addf %142, %143 : vector<16x16xf32>
    %145 = arith.addf %107, %144 : vector<16x16xf32>
    %146 = vector.broadcast %44 : vector<1x16xf32> to vector<16x16xf32>
    %147 = arith.mulf %145, %146 : vector<16x16xf32>
    %cst_106 = arith.constant dense<0.000000e+00> : vector<4x16xf32>
    %148 = tpu.matmul %30, %147, %cst_106 {dimension_numbers = #tpu.dot_dimension_numbers<[1], [0], [0], [1], [0, 0, 1, 1], [], []>} : vector<4x16xf32>, vector<16x16xf32>, vector<4x16xf32> -> vector<4x16xf32>
    %149 = vector.broadcast %29 : vector<4x1xf32> to vector<4x16xf32>
    %150 = arith.addf %148, %149 : vector<4x16xf32>
    %151 = vector.broadcast %44 : vector<1x16xf32> to vector<4x16xf32>
    %152 = arith.mulf %150, %151 : vector<4x16xf32>
    %153 = arith.subf %58, %152 : vector<4x16xf32>
    %154 = vector.broadcast %44 : vector<1x16xf32> to vector<4x16xf32>
    %155 = arith.mulf %153, %154 : vector<4x16xf32>
    %156 = tpu.iota {dimensions = array<i32: 0>} : vector<8x4xi32>
    %157 = tpu.iota {dimensions = array<i32: 1>} : vector<8x4xi32>
    %158 = arith.cmpi eq, %156, %157 : vector<8x4xi32>
    %159 = arith.extui %158 : vector<8x4xi1> to vector<8x4xi32>
    %160 = arith.sitofp %159 : vector<8x4xi32> to vector<8x4xf32>
    %c4_i32 = arith.constant 4 : i32
    %161 = vector.broadcast %c4_i32 : i32 to vector<8x4xi32>
    %162 = arith.addi %157, %161 : vector<8x4xi32>
    %163 = arith.cmpi eq, %156, %162 : vector<8x4xi32>
    %164 = arith.extui %163 : vector<8x4xi1> to vector<8x4xi32>
    %165 = arith.sitofp %164 : vector<8x4xi32> to vector<8x4xf32>
    %cst_107 = arith.constant dense<0.000000e+00> : vector<8x16xf32>
    %166 = tpu.matmul %160, %57, %cst_107 {dimension_numbers = #tpu.dot_dimension_numbers<[1], [0], [0], [1], [0, 0, 1, 1], [], []>} : vector<8x4xf32>, vector<4x16xf32>, vector<8x16xf32> -> vector<8x16xf32>
    %cst_108 = arith.constant dense<0.000000e+00> : vector<8x16xf32>
    %167 = tpu.matmul %165, %155, %cst_108 {dimension_numbers = #tpu.dot_dimension_numbers<[1], [0], [0], [1], [0, 0, 1, 1], [], []>} : vector<8x4xf32>, vector<4x16xf32>, vector<8x16xf32> -> vector<8x16xf32>
    %168 = arith.addf %166, %167 : vector<8x16xf32>
    %169 = tpu.iota {dimensions = array<i32: 0>} : vector<4x8xi32>
    %170 = tpu.iota {dimensions = array<i32: 1>} : vector<4x8xi32>
    %c7_i32_109 = arith.constant 7 : i32
    %171 = vector.broadcast %c7_i32_109 : i32 to vector<4x8xi32>
    %172 = arith.subi %171, %169 : vector<4x8xi32>
    %173 = arith.cmpi eq, %170, %172 : vector<4x8xi32>
    %174 = arith.extui %173 : vector<4x8xi1> to vector<4x8xi32>
    %175 = arith.sitofp %174 : vector<4x8xi32> to vector<4x8xf32>
    %c3_i32_110 = arith.constant 3 : i32
    %176 = vector.broadcast %c3_i32_110 : i32 to vector<4x8xi32>
    %177 = arith.subi %176, %169 : vector<4x8xi32>
    %178 = arith.cmpi eq, %170, %177 : vector<4x8xi32>
    %179 = arith.extui %178 : vector<4x8xi1> to vector<4x8xi32>
    %180 = arith.sitofp %179 : vector<4x8xi32> to vector<4x8xf32>
    %cst_111 = arith.constant dense<0.000000e+00> : vector<4x16xf32>
    %181 = tpu.matmul %175, %168, %cst_111 {dimension_numbers = #tpu.dot_dimension_numbers<[1], [0], [0], [1], [0, 0, 1, 1], [], []>} : vector<4x8xf32>, vector<8x16xf32>, vector<4x16xf32> -> vector<4x16xf32>
    %cst_112 = arith.constant dense<0.000000e+00> : vector<4x16xf32>
    %182 = tpu.matmul %180, %168, %cst_112 {dimension_numbers = #tpu.dot_dimension_numbers<[1], [0], [0], [1], [0, 0, 1, 1], [], []>} : vector<4x8xf32>, vector<8x16xf32>, vector<4x16xf32> -> vector<4x16xf32>
    %cst_113 = arith.constant dense<0.000000e+00> : vector<16x16xf32>
    %183 = tpu.matmul %20, %181, %cst_113 {dimension_numbers = #tpu.dot_dimension_numbers<[1], [0], [0], [1], [0, 0, 1, 1], [], []>} : vector<16x4xf32>, vector<4x16xf32>, vector<16x16xf32> -> vector<16x16xf32>
    %184 = vector.broadcast %19 : vector<16x1xf32> to vector<16x16xf32>
    %185 = arith.addf %183, %184 : vector<16x16xf32>
    %186 = vector.broadcast %44 : vector<1x16xf32> to vector<16x16xf32>
    %187 = arith.mulf %185, %186 : vector<16x16xf32>
    %cst_114 = arith.constant 0.000000e+00 : f32
    %188 = vector.broadcast %cst_114 : f32 to vector<16x16xf32>
    %cst_115 = arith.constant 0.000000e+00 : f32
    %189 = vector.broadcast %cst_115 : f32 to vector<16x2xf32>
    %190 = tpu.concatenate %189, %187, %189 in 1 : vector<16x2xf32>, vector<16x16xf32>, vector<16x2xf32> -> vector<16x20xf32>
    %191 = vector.extract_strided_slice %23 {offsets = [0, 0], sizes = [32, 16], strides = [1, 1]} : vector<32x80xf32> to vector<32x16xf32>
    %192 = vector.extract_strided_slice %190 {offsets = [0, 0], sizes = [16, 16], strides = [1, 1]} : vector<16x20xf32> to vector<16x16xf32>
    %cst_116 = arith.constant dense<0.000000e+00> : vector<32x16xf32>
    %193 = tpu.matmul %191, %192, %cst_116 {dimension_numbers = #tpu.dot_dimension_numbers<[1], [0], [0], [1], [0, 0, 1, 1], [], []>} : vector<32x16xf32>, vector<16x16xf32>, vector<32x16xf32> -> vector<32x16xf32>
    %194 = vector.extract_strided_slice %23 {offsets = [0, 16], sizes = [32, 16], strides = [1, 1]} : vector<32x80xf32> to vector<32x16xf32>
    %195 = vector.extract_strided_slice %190 {offsets = [0, 1], sizes = [16, 16], strides = [1, 1]} : vector<16x20xf32> to vector<16x16xf32>
    %cst_117 = arith.constant dense<0.000000e+00> : vector<32x16xf32>
    %196 = tpu.matmul %194, %195, %cst_117 {dimension_numbers = #tpu.dot_dimension_numbers<[1], [0], [0], [1], [0, 0, 1, 1], [], []>} : vector<32x16xf32>, vector<16x16xf32>, vector<32x16xf32> -> vector<32x16xf32>
    %197 = arith.addf %193, %196 : vector<32x16xf32>
    %198 = vector.extract_strided_slice %23 {offsets = [0, 32], sizes = [32, 16], strides = [1, 1]} : vector<32x80xf32> to vector<32x16xf32>
    %199 = vector.extract_strided_slice %190 {offsets = [0, 2], sizes = [16, 16], strides = [1, 1]} : vector<16x20xf32> to vector<16x16xf32>
    %cst_118 = arith.constant dense<0.000000e+00> : vector<32x16xf32>
    %200 = tpu.matmul %198, %199, %cst_118 {dimension_numbers = #tpu.dot_dimension_numbers<[1], [0], [0], [1], [0, 0, 1, 1], [], []>} : vector<32x16xf32>, vector<16x16xf32>, vector<32x16xf32> -> vector<32x16xf32>
    %201 = arith.addf %197, %200 : vector<32x16xf32>
    %202 = vector.extract_strided_slice %23 {offsets = [0, 48], sizes = [32, 16], strides = [1, 1]} : vector<32x80xf32> to vector<32x16xf32>
    %203 = vector.extract_strided_slice %190 {offsets = [0, 3], sizes = [16, 16], strides = [1, 1]} : vector<16x20xf32> to vector<16x16xf32>
    %cst_119 = arith.constant dense<0.000000e+00> : vector<32x16xf32>
    %204 = tpu.matmul %202, %203, %cst_119 {dimension_numbers = #tpu.dot_dimension_numbers<[1], [0], [0], [1], [0, 0, 1, 1], [], []>} : vector<32x16xf32>, vector<16x16xf32>, vector<32x16xf32> -> vector<32x16xf32>
    %205 = arith.addf %201, %204 : vector<32x16xf32>
    %206 = vector.extract_strided_slice %23 {offsets = [0, 64], sizes = [32, 16], strides = [1, 1]} : vector<32x80xf32> to vector<32x16xf32>
    %207 = vector.extract_strided_slice %190 {offsets = [0, 4], sizes = [16, 16], strides = [1, 1]} : vector<16x20xf32> to vector<16x16xf32>
    %cst_120 = arith.constant dense<0.000000e+00> : vector<32x16xf32>
    %208 = tpu.matmul %206, %207, %cst_120 {dimension_numbers = #tpu.dot_dimension_numbers<[1], [0], [0], [1], [0, 0, 1, 1], [], []>} : vector<32x16xf32>, vector<16x16xf32>, vector<32x16xf32> -> vector<32x16xf32>
    %209 = arith.addf %205, %208 : vector<32x16xf32>
    %210 = vector.broadcast %21 : vector<32x1xf32> to vector<32x16xf32>
    %211 = arith.addf %209, %210 : vector<32x16xf32>
    %212 = vector.extract_strided_slice %211 {offsets = [0, 0], sizes = [16, 16], strides = [1, 1]} : vector<32x16xf32> to vector<16x16xf32>
    %213 = math.tanh %212 : vector<16x16xf32>
    %214 = vector.extract_strided_slice %211 {offsets = [16, 0], sizes = [16, 16], strides = [1, 1]} : vector<32x16xf32> to vector<16x16xf32>
    %215 = arith.negf %214 : vector<16x16xf32>
    %216 = math.exp %215 : vector<16x16xf32>
    %cst_121 = arith.constant 1.000000e+00 : f32
    %217 = vector.broadcast %cst_121 : f32 to vector<16x16xf32>
    %218 = arith.addf %217, %216 : vector<16x16xf32>
    %219 = arith.divf %217, %218 : vector<16x16xf32>
    %220 = arith.mulf %213, %219 : vector<16x16xf32>
    %221 = vector.broadcast %44 : vector<1x16xf32> to vector<16x16xf32>
    %222 = arith.mulf %220, %221 : vector<16x16xf32>
    %cst_122 = arith.constant dense<0.000000e+00> : vector<32x16xf32>
    %223 = tpu.matmul %27, %222, %cst_122 {dimension_numbers = #tpu.dot_dimension_numbers<[1], [0], [0], [1], [0, 0, 1, 1], [], []>} : vector<32x16xf32>, vector<16x16xf32>, vector<32x16xf32> -> vector<32x16xf32>
    %224 = vector.broadcast %25 : vector<32x1xf32> to vector<32x16xf32>
    %225 = arith.addf %223, %224 : vector<32x16xf32>
    %226 = vector.extract_strided_slice %225 {offsets = [0, 0], sizes = [16, 16], strides = [1, 1]} : vector<32x16xf32> to vector<16x16xf32>
    %227 = arith.addf %187, %226 : vector<16x16xf32>
    %228 = vector.broadcast %44 : vector<1x16xf32> to vector<16x16xf32>
    %229 = arith.mulf %227, %228 : vector<16x16xf32>
    %230 = vector.extract_strided_slice %225 {offsets = [16, 0], sizes = [16, 16], strides = [1, 1]} : vector<32x16xf32> to vector<16x16xf32>
    %231 = arith.addf %188, %230 : vector<16x16xf32>
    %cst_123 = arith.constant 0.000000e+00 : f32
    %232 = vector.broadcast %cst_123 : f32 to vector<16x2xf32>
    %233 = tpu.concatenate %232, %229, %232 in 1 : vector<16x2xf32>, vector<16x16xf32>, vector<16x2xf32> -> vector<16x20xf32>
    %234 = vector.extract_strided_slice %24 {offsets = [0, 0], sizes = [32, 16], strides = [1, 1]} : vector<32x80xf32> to vector<32x16xf32>
    %235 = vector.extract_strided_slice %233 {offsets = [0, 0], sizes = [16, 16], strides = [1, 1]} : vector<16x20xf32> to vector<16x16xf32>
    %cst_124 = arith.constant dense<0.000000e+00> : vector<32x16xf32>
    %236 = tpu.matmul %234, %235, %cst_124 {dimension_numbers = #tpu.dot_dimension_numbers<[1], [0], [0], [1], [0, 0, 1, 1], [], []>} : vector<32x16xf32>, vector<16x16xf32>, vector<32x16xf32> -> vector<32x16xf32>
    %237 = vector.extract_strided_slice %24 {offsets = [0, 16], sizes = [32, 16], strides = [1, 1]} : vector<32x80xf32> to vector<32x16xf32>
    %238 = vector.extract_strided_slice %233 {offsets = [0, 1], sizes = [16, 16], strides = [1, 1]} : vector<16x20xf32> to vector<16x16xf32>
    %cst_125 = arith.constant dense<0.000000e+00> : vector<32x16xf32>
    %239 = tpu.matmul %237, %238, %cst_125 {dimension_numbers = #tpu.dot_dimension_numbers<[1], [0], [0], [1], [0, 0, 1, 1], [], []>} : vector<32x16xf32>, vector<16x16xf32>, vector<32x16xf32> -> vector<32x16xf32>
    %240 = arith.addf %236, %239 : vector<32x16xf32>
    %241 = vector.extract_strided_slice %24 {offsets = [0, 32], sizes = [32, 16], strides = [1, 1]} : vector<32x80xf32> to vector<32x16xf32>
    %242 = vector.extract_strided_slice %233 {offsets = [0, 2], sizes = [16, 16], strides = [1, 1]} : vector<16x20xf32> to vector<16x16xf32>
    %cst_126 = arith.constant dense<0.000000e+00> : vector<32x16xf32>
    %243 = tpu.matmul %241, %242, %cst_126 {dimension_numbers = #tpu.dot_dimension_numbers<[1], [0], [0], [1], [0, 0, 1, 1], [], []>} : vector<32x16xf32>, vector<16x16xf32>, vector<32x16xf32> -> vector<32x16xf32>
    %244 = arith.addf %240, %243 : vector<32x16xf32>
    %245 = vector.extract_strided_slice %24 {offsets = [0, 48], sizes = [32, 16], strides = [1, 1]} : vector<32x80xf32> to vector<32x16xf32>
    %246 = vector.extract_strided_slice %233 {offsets = [0, 3], sizes = [16, 16], strides = [1, 1]} : vector<16x20xf32> to vector<16x16xf32>
    %cst_127 = arith.constant dense<0.000000e+00> : vector<32x16xf32>
    %247 = tpu.matmul %245, %246, %cst_127 {dimension_numbers = #tpu.dot_dimension_numbers<[1], [0], [0], [1], [0, 0, 1, 1], [], []>} : vector<32x16xf32>, vector<16x16xf32>, vector<32x16xf32> -> vector<32x16xf32>
    %248 = arith.addf %244, %247 : vector<32x16xf32>
    %249 = vector.extract_strided_slice %24 {offsets = [0, 64], sizes = [32, 16], strides = [1, 1]} : vector<32x80xf32> to vector<32x16xf32>
    %250 = vector.extract_strided_slice %233 {offsets = [0, 4], sizes = [16, 16], strides = [1, 1]} : vector<16x20xf32> to vector<16x16xf32>
    %cst_128 = arith.constant dense<0.000000e+00> : vector<32x16xf32>
    %251 = tpu.matmul %249, %250, %cst_128 {dimension_numbers = #tpu.dot_dimension_numbers<[1], [0], [0], [1], [0, 0, 1, 1], [], []>} : vector<32x16xf32>, vector<16x16xf32>, vector<32x16xf32> -> vector<32x16xf32>
    %252 = arith.addf %248, %251 : vector<32x16xf32>
    %253 = vector.broadcast %22 : vector<32x1xf32> to vector<32x16xf32>
    %254 = arith.addf %252, %253 : vector<32x16xf32>
    %255 = vector.extract_strided_slice %254 {offsets = [0, 0], sizes = [16, 16], strides = [1, 1]} : vector<32x16xf32> to vector<16x16xf32>
    %256 = math.tanh %255 : vector<16x16xf32>
    %257 = vector.extract_strided_slice %254 {offsets = [16, 0], sizes = [16, 16], strides = [1, 1]} : vector<32x16xf32> to vector<16x16xf32>
    %258 = arith.negf %257 : vector<16x16xf32>
    %259 = math.exp %258 : vector<16x16xf32>
    %cst_129 = arith.constant 1.000000e+00 : f32
    %260 = vector.broadcast %cst_129 : f32 to vector<16x16xf32>
    %261 = arith.addf %260, %259 : vector<16x16xf32>
    %262 = arith.divf %260, %261 : vector<16x16xf32>
    %263 = arith.mulf %256, %262 : vector<16x16xf32>
    %264 = vector.broadcast %44 : vector<1x16xf32> to vector<16x16xf32>
    %265 = arith.mulf %263, %264 : vector<16x16xf32>
    %cst_130 = arith.constant dense<0.000000e+00> : vector<16x16xf32>
    %266 = tpu.matmul %28, %265, %cst_130 {dimension_numbers = #tpu.dot_dimension_numbers<[1], [0], [0], [1], [0, 0, 1, 1], [], []>} : vector<16x16xf32>, vector<16x16xf32>, vector<16x16xf32> -> vector<16x16xf32>
    %267 = vector.broadcast %26 : vector<16x1xf32> to vector<16x16xf32>
    %268 = arith.addf %266, %267 : vector<16x16xf32>
    %269 = arith.addf %231, %268 : vector<16x16xf32>
    %270 = vector.broadcast %44 : vector<1x16xf32> to vector<16x16xf32>
    %271 = arith.mulf %269, %270 : vector<16x16xf32>
    %cst_131 = arith.constant dense<0.000000e+00> : vector<4x16xf32>
    %272 = tpu.matmul %18, %271, %cst_131 {dimension_numbers = #tpu.dot_dimension_numbers<[1], [0], [0], [1], [0, 0, 1, 1], [], []>} : vector<4x16xf32>, vector<16x16xf32>, vector<4x16xf32> -> vector<4x16xf32>
    %273 = vector.broadcast %17 : vector<4x1xf32> to vector<4x16xf32>
    %274 = arith.addf %272, %273 : vector<4x16xf32>
    %275 = vector.broadcast %44 : vector<1x16xf32> to vector<4x16xf32>
    %276 = arith.mulf %274, %275 : vector<4x16xf32>
    %277 = arith.subf %182, %276 : vector<4x16xf32>
    %278 = vector.broadcast %44 : vector<1x16xf32> to vector<4x16xf32>
    %279 = arith.mulf %277, %278 : vector<4x16xf32>
    %280 = tpu.iota {dimensions = array<i32: 0>} : vector<8x4xi32>
    %281 = tpu.iota {dimensions = array<i32: 1>} : vector<8x4xi32>
    %282 = arith.cmpi eq, %280, %281 : vector<8x4xi32>
    %283 = arith.extui %282 : vector<8x4xi1> to vector<8x4xi32>
    %284 = arith.sitofp %283 : vector<8x4xi32> to vector<8x4xf32>
    %c4_i32_132 = arith.constant 4 : i32
    %285 = vector.broadcast %c4_i32_132 : i32 to vector<8x4xi32>
    %286 = arith.addi %281, %285 : vector<8x4xi32>
    %287 = arith.cmpi eq, %280, %286 : vector<8x4xi32>
    %288 = arith.extui %287 : vector<8x4xi1> to vector<8x4xi32>
    %289 = arith.sitofp %288 : vector<8x4xi32> to vector<8x4xf32>
    %cst_133 = arith.constant dense<0.000000e+00> : vector<8x16xf32>
    %290 = tpu.matmul %284, %181, %cst_133 {dimension_numbers = #tpu.dot_dimension_numbers<[1], [0], [0], [1], [0, 0, 1, 1], [], []>} : vector<8x4xf32>, vector<4x16xf32>, vector<8x16xf32> -> vector<8x16xf32>
    %cst_134 = arith.constant dense<0.000000e+00> : vector<8x16xf32>
    %291 = tpu.matmul %289, %279, %cst_134 {dimension_numbers = #tpu.dot_dimension_numbers<[1], [0], [0], [1], [0, 0, 1, 1], [], []>} : vector<8x4xf32>, vector<4x16xf32>, vector<8x16xf32> -> vector<8x16xf32>
    %292 = arith.addf %290, %291 : vector<8x16xf32>
    %293 = vector.broadcast %44 : vector<1x16xf32> to vector<8x16xf32>
    %294 = arith.mulf %292, %293 : vector<8x16xf32>
    %cst_135 = arith.constant 0.000000e+00 : f32
    %295 = vector.broadcast %cst_135 : f32 to vector<8x3xf32>
    %296 = tpu.concatenate %295, %294, %295 in 1 : vector<8x3xf32>, vector<8x16xf32>, vector<8x3xf32> -> vector<8x22xf32>
    %297 = vector.extract_strided_slice %2 {offsets = [0, 0], sizes = [16, 8], strides = [1, 1]} : vector<16x56xf32> to vector<16x8xf32>
    %298 = vector.extract_strided_slice %296 {offsets = [0, 0], sizes = [8, 16], strides = [1, 1]} : vector<8x22xf32> to vector<8x16xf32>
    %cst_136 = arith.constant dense<0.000000e+00> : vector<16x16xf32>
    %299 = tpu.matmul %297, %298, %cst_136 {dimension_numbers = #tpu.dot_dimension_numbers<[1], [0], [0], [1], [0, 0, 1, 1], [], []>} : vector<16x8xf32>, vector<8x16xf32>, vector<16x16xf32> -> vector<16x16xf32>
    %300 = vector.extract_strided_slice %2 {offsets = [0, 8], sizes = [16, 8], strides = [1, 1]} : vector<16x56xf32> to vector<16x8xf32>
    %301 = vector.extract_strided_slice %296 {offsets = [0, 1], sizes = [8, 16], strides = [1, 1]} : vector<8x22xf32> to vector<8x16xf32>
    %cst_137 = arith.constant dense<0.000000e+00> : vector<16x16xf32>
    %302 = tpu.matmul %300, %301, %cst_137 {dimension_numbers = #tpu.dot_dimension_numbers<[1], [0], [0], [1], [0, 0, 1, 1], [], []>} : vector<16x8xf32>, vector<8x16xf32>, vector<16x16xf32> -> vector<16x16xf32>
    %303 = arith.addf %299, %302 : vector<16x16xf32>
    %304 = vector.extract_strided_slice %2 {offsets = [0, 16], sizes = [16, 8], strides = [1, 1]} : vector<16x56xf32> to vector<16x8xf32>
    %305 = vector.extract_strided_slice %296 {offsets = [0, 2], sizes = [8, 16], strides = [1, 1]} : vector<8x22xf32> to vector<8x16xf32>
    %cst_138 = arith.constant dense<0.000000e+00> : vector<16x16xf32>
    %306 = tpu.matmul %304, %305, %cst_138 {dimension_numbers = #tpu.dot_dimension_numbers<[1], [0], [0], [1], [0, 0, 1, 1], [], []>} : vector<16x8xf32>, vector<8x16xf32>, vector<16x16xf32> -> vector<16x16xf32>
    %307 = arith.addf %303, %306 : vector<16x16xf32>
    %308 = vector.extract_strided_slice %2 {offsets = [0, 24], sizes = [16, 8], strides = [1, 1]} : vector<16x56xf32> to vector<16x8xf32>
    %309 = vector.extract_strided_slice %296 {offsets = [0, 3], sizes = [8, 16], strides = [1, 1]} : vector<8x22xf32> to vector<8x16xf32>
    %cst_139 = arith.constant dense<0.000000e+00> : vector<16x16xf32>
    %310 = tpu.matmul %308, %309, %cst_139 {dimension_numbers = #tpu.dot_dimension_numbers<[1], [0], [0], [1], [0, 0, 1, 1], [], []>} : vector<16x8xf32>, vector<8x16xf32>, vector<16x16xf32> -> vector<16x16xf32>
    %311 = arith.addf %307, %310 : vector<16x16xf32>
    %312 = vector.extract_strided_slice %2 {offsets = [0, 32], sizes = [16, 8], strides = [1, 1]} : vector<16x56xf32> to vector<16x8xf32>
    %313 = vector.extract_strided_slice %296 {offsets = [0, 4], sizes = [8, 16], strides = [1, 1]} : vector<8x22xf32> to vector<8x16xf32>
    %cst_140 = arith.constant dense<0.000000e+00> : vector<16x16xf32>
    %314 = tpu.matmul %312, %313, %cst_140 {dimension_numbers = #tpu.dot_dimension_numbers<[1], [0], [0], [1], [0, 0, 1, 1], [], []>} : vector<16x8xf32>, vector<8x16xf32>, vector<16x16xf32> -> vector<16x16xf32>
    %315 = arith.addf %311, %314 : vector<16x16xf32>
    %316 = vector.extract_strided_slice %2 {offsets = [0, 40], sizes = [16, 8], strides = [1, 1]} : vector<16x56xf32> to vector<16x8xf32>
    %317 = vector.extract_strided_slice %296 {offsets = [0, 5], sizes = [8, 16], strides = [1, 1]} : vector<8x22xf32> to vector<8x16xf32>
    %cst_141 = arith.constant dense<0.000000e+00> : vector<16x16xf32>
    %318 = tpu.matmul %316, %317, %cst_141 {dimension_numbers = #tpu.dot_dimension_numbers<[1], [0], [0], [1], [0, 0, 1, 1], [], []>} : vector<16x8xf32>, vector<8x16xf32>, vector<16x16xf32> -> vector<16x16xf32>
    %319 = arith.addf %315, %318 : vector<16x16xf32>
    %320 = vector.extract_strided_slice %2 {offsets = [0, 48], sizes = [16, 8], strides = [1, 1]} : vector<16x56xf32> to vector<16x8xf32>
    %321 = vector.extract_strided_slice %296 {offsets = [0, 6], sizes = [8, 16], strides = [1, 1]} : vector<8x22xf32> to vector<8x16xf32>
    %cst_142 = arith.constant dense<0.000000e+00> : vector<16x16xf32>
    %322 = tpu.matmul %320, %321, %cst_142 {dimension_numbers = #tpu.dot_dimension_numbers<[1], [0], [0], [1], [0, 0, 1, 1], [], []>} : vector<16x8xf32>, vector<8x16xf32>, vector<16x16xf32> -> vector<16x16xf32>
    %323 = arith.addf %319, %322 : vector<16x16xf32>
    %324 = vector.broadcast %1 : vector<16x1xf32> to vector<16x16xf32>
    %325 = arith.addf %323, %324 : vector<16x16xf32>
    %cst_143 = arith.constant 0.000000e+00 : f32
    %326 = vector.broadcast %cst_143 : f32 to vector<16x16xf32>
    %327 = arith.cmpf ogt, %325, %326 : vector<16x16xf32>
    %cst_144 = arith.constant 1.000000e-01 : f32
    %328 = vector.broadcast %cst_144 : f32 to vector<16x16xf32>
    %329 = arith.mulf %328, %325 : vector<16x16xf32>
    %330 = arith.select %327, %325, %329 : vector<16x16xi1>, vector<16x16xf32>
    %331 = tpu.iota {dimensions = array<i32: 0>} : vector<16x32xi32>
    %332 = tpu.iota {dimensions = array<i32: 1>} : vector<16x32xi32>
    %333 = vector.extract_strided_slice %12 {offsets = [0, 0], sizes = [8, 16], strides = [1, 1]} : vector<8x32xf32> to vector<8x16xf32>
    %cst_145 = arith.constant dense<0.000000e+00> : vector<8x16xf32>
    %334 = tpu.matmul %333, %330, %cst_145 {dimension_numbers = #tpu.dot_dimension_numbers<[1], [0], [0], [1], [0, 0, 1, 1], [], []>} : vector<8x16xf32>, vector<16x16xf32>, vector<8x16xf32> -> vector<8x16xf32>
    %335 = vector.extract_strided_slice %12 {offsets = [0, 16], sizes = [8, 16], strides = [1, 1]} : vector<8x32xf32> to vector<8x16xf32>
    %cst_146 = arith.constant 0.000000e+00 : f32
    %336 = vector.broadcast %cst_146 : f32 to vector<16x1xf32>
    %337 = vector.extract_strided_slice %330 {offsets = [0, 0], sizes = [16, 15], strides = [1, 1]} : vector<16x16xf32> to vector<16x15xf32>
    %338 = tpu.concatenate %336, %337 in 1 : vector<16x1xf32>, vector<16x15xf32> -> vector<16x16xf32>
    %cst_147 = arith.constant dense<0.000000e+00> : vector<8x16xf32>
    %339 = tpu.matmul %335, %338, %cst_147 {dimension_numbers = #tpu.dot_dimension_numbers<[1], [0], [0], [1], [0, 0, 1, 1], [], []>} : vector<8x16xf32>, vector<16x16xf32>, vector<8x16xf32> -> vector<8x16xf32>
    %340 = arith.addf %334, %339 : vector<8x16xf32>
    %c2_i32 = arith.constant 2 : i32
    %341 = vector.broadcast %c2_i32 : i32 to vector<16x32xi32>
    %342 = arith.muli %331, %341 : vector<16x32xi32>
    %c0_i32 = arith.constant 0 : i32
    %343 = vector.broadcast %c0_i32 : i32 to vector<16x32xi32>
    %344 = arith.addi %342, %343 : vector<16x32xi32>
    %345 = arith.cmpi eq, %332, %344 : vector<16x32xi32>
    %346 = arith.extui %345 : vector<16x32xi1> to vector<16x32xi32>
    %347 = arith.sitofp %346 : vector<16x32xi32> to vector<16x32xf32>
    %cst_148 = arith.constant dense<0.000000e+00> : vector<8x32xf32>
    %348 = tpu.matmul %340, %347, %cst_148 {dimension_numbers = #tpu.dot_dimension_numbers<[1], [0], [0], [1], [0, 0, 1, 1], [], []>} : vector<8x16xf32>, vector<16x32xf32>, vector<8x32xf32> -> vector<8x32xf32>
    %349 = vector.extract_strided_slice %13 {offsets = [0, 0], sizes = [8, 16], strides = [1, 1]} : vector<8x32xf32> to vector<8x16xf32>
    %350 = vector.extract_strided_slice %330 {offsets = [0, 1], sizes = [16, 15], strides = [1, 1]} : vector<16x16xf32> to vector<16x15xf32>
    %cst_149 = arith.constant 0.000000e+00 : f32
    %351 = vector.broadcast %cst_149 : f32 to vector<16x1xf32>
    %352 = tpu.concatenate %350, %351 in 1 : vector<16x15xf32>, vector<16x1xf32> -> vector<16x16xf32>
    %cst_150 = arith.constant dense<0.000000e+00> : vector<8x16xf32>
    %353 = tpu.matmul %349, %352, %cst_150 {dimension_numbers = #tpu.dot_dimension_numbers<[1], [0], [0], [1], [0, 0, 1, 1], [], []>} : vector<8x16xf32>, vector<16x16xf32>, vector<8x16xf32> -> vector<8x16xf32>
    %354 = vector.extract_strided_slice %13 {offsets = [0, 16], sizes = [8, 16], strides = [1, 1]} : vector<8x32xf32> to vector<8x16xf32>
    %cst_151 = arith.constant dense<0.000000e+00> : vector<8x16xf32>
    %355 = tpu.matmul %354, %330, %cst_151 {dimension_numbers = #tpu.dot_dimension_numbers<[1], [0], [0], [1], [0, 0, 1, 1], [], []>} : vector<8x16xf32>, vector<16x16xf32>, vector<8x16xf32> -> vector<8x16xf32>
    %356 = arith.addf %353, %355 : vector<8x16xf32>
    %c2_i32_152 = arith.constant 2 : i32
    %357 = vector.broadcast %c2_i32_152 : i32 to vector<16x32xi32>
    %358 = arith.muli %331, %357 : vector<16x32xi32>
    %c1_i32 = arith.constant 1 : i32
    %359 = vector.broadcast %c1_i32 : i32 to vector<16x32xi32>
    %360 = arith.addi %358, %359 : vector<16x32xi32>
    %361 = arith.cmpi eq, %332, %360 : vector<16x32xi32>
    %362 = arith.extui %361 : vector<16x32xi1> to vector<16x32xi32>
    %363 = arith.sitofp %362 : vector<16x32xi32> to vector<16x32xf32>
    %cst_153 = arith.constant dense<0.000000e+00> : vector<8x32xf32>
    %364 = tpu.matmul %356, %363, %cst_153 {dimension_numbers = #tpu.dot_dimension_numbers<[1], [0], [0], [1], [0, 0, 1, 1], [], []>} : vector<8x16xf32>, vector<16x32xf32>, vector<8x32xf32> -> vector<8x32xf32>
    %365 = arith.addf %348, %364 : vector<8x32xf32>
    %366 = vector.broadcast %11 : vector<8x1xf32> to vector<8x32xf32>
    %367 = arith.addf %365, %366 : vector<8x32xf32>
    %cst_154 = arith.constant 0.000000e+00 : f32
    %368 = vector.broadcast %cst_154 : f32 to vector<8x32xf32>
    %369 = arith.cmpf ogt, %367, %368 : vector<8x32xf32>
    %cst_155 = arith.constant 1.000000e-01 : f32
    %370 = vector.broadcast %cst_155 : f32 to vector<8x32xf32>
    %371 = arith.mulf %370, %367 : vector<8x32xf32>
    %372 = arith.select %369, %367, %371 : vector<8x32xi1>, vector<8x32xf32>
    %cst_156 = arith.constant 0.000000e+00 : f32
    %373 = vector.broadcast %cst_156 : f32 to vector<8x1xf32>
    %374 = tpu.concatenate %373, %372, %373 in 1 : vector<8x1xf32>, vector<8x32xf32>, vector<8x1xf32> -> vector<8x34xf32>
    %375 = vector.extract_strided_slice %5 {offsets = [0, 0], sizes = [8, 8], strides = [1, 1]} : vector<8x24xf32> to vector<8x8xf32>
    %376 = vector.extract_strided_slice %374 {offsets = [0, 0], sizes = [8, 32], strides = [1, 1]} : vector<8x34xf32> to vector<8x32xf32>
    %cst_157 = arith.constant dense<0.000000e+00> : vector<8x32xf32>
    %377 = tpu.matmul %375, %376, %cst_157 {dimension_numbers = #tpu.dot_dimension_numbers<[1], [0], [0], [1], [0, 0, 1, 1], [], []>} : vector<8x8xf32>, vector<8x32xf32>, vector<8x32xf32> -> vector<8x32xf32>
    %378 = vector.extract_strided_slice %5 {offsets = [0, 8], sizes = [8, 8], strides = [1, 1]} : vector<8x24xf32> to vector<8x8xf32>
    %379 = vector.extract_strided_slice %374 {offsets = [0, 1], sizes = [8, 32], strides = [1, 1]} : vector<8x34xf32> to vector<8x32xf32>
    %cst_158 = arith.constant dense<0.000000e+00> : vector<8x32xf32>
    %380 = tpu.matmul %378, %379, %cst_158 {dimension_numbers = #tpu.dot_dimension_numbers<[1], [0], [0], [1], [0, 0, 1, 1], [], []>} : vector<8x8xf32>, vector<8x32xf32>, vector<8x32xf32> -> vector<8x32xf32>
    %381 = arith.addf %377, %380 : vector<8x32xf32>
    %382 = vector.extract_strided_slice %5 {offsets = [0, 16], sizes = [8, 8], strides = [1, 1]} : vector<8x24xf32> to vector<8x8xf32>
    %383 = vector.extract_strided_slice %374 {offsets = [0, 2], sizes = [8, 32], strides = [1, 1]} : vector<8x34xf32> to vector<8x32xf32>
    %cst_159 = arith.constant dense<0.000000e+00> : vector<8x32xf32>
    %384 = tpu.matmul %382, %383, %cst_159 {dimension_numbers = #tpu.dot_dimension_numbers<[1], [0], [0], [1], [0, 0, 1, 1], [], []>} : vector<8x8xf32>, vector<8x32xf32>, vector<8x32xf32> -> vector<8x32xf32>
    %385 = arith.addf %381, %384 : vector<8x32xf32>
    %386 = vector.broadcast %3 : vector<8x1xf32> to vector<8x32xf32>
    %387 = arith.addf %385, %386 : vector<8x32xf32>
    %388 = arith.addf %387, %367 : vector<8x32xf32>
    %cst_160 = arith.constant 0.000000e+00 : f32
    %389 = vector.broadcast %cst_160 : f32 to vector<8x32xf32>
    %390 = arith.cmpf ogt, %388, %389 : vector<8x32xf32>
    %cst_161 = arith.constant 1.000000e-01 : f32
    %391 = vector.broadcast %cst_161 : f32 to vector<8x32xf32>
    %392 = arith.mulf %391, %388 : vector<8x32xf32>
    %393 = arith.select %390, %388, %392 : vector<8x32xi1>, vector<8x32xf32>
    %cst_162 = arith.constant 0.000000e+00 : f32
    %394 = vector.broadcast %cst_162 : f32 to vector<8x3xf32>
    %395 = tpu.concatenate %394, %393, %394 in 1 : vector<8x3xf32>, vector<8x32xf32>, vector<8x3xf32> -> vector<8x38xf32>
    %396 = vector.extract_strided_slice %6 {offsets = [0, 0], sizes = [8, 8], strides = [1, 1]} : vector<8x24xf32> to vector<8x8xf32>
    %397 = vector.extract_strided_slice %395 {offsets = [0, 0], sizes = [8, 32], strides = [1, 1]} : vector<8x38xf32> to vector<8x32xf32>
    %cst_163 = arith.constant dense<0.000000e+00> : vector<8x32xf32>
    %398 = tpu.matmul %396, %397, %cst_163 {dimension_numbers = #tpu.dot_dimension_numbers<[1], [0], [0], [1], [0, 0, 1, 1], [], []>} : vector<8x8xf32>, vector<8x32xf32>, vector<8x32xf32> -> vector<8x32xf32>
    %399 = vector.extract_strided_slice %6 {offsets = [0, 8], sizes = [8, 8], strides = [1, 1]} : vector<8x24xf32> to vector<8x8xf32>
    %400 = vector.extract_strided_slice %395 {offsets = [0, 3], sizes = [8, 32], strides = [1, 1]} : vector<8x38xf32> to vector<8x32xf32>
    %cst_164 = arith.constant dense<0.000000e+00> : vector<8x32xf32>
    %401 = tpu.matmul %399, %400, %cst_164 {dimension_numbers = #tpu.dot_dimension_numbers<[1], [0], [0], [1], [0, 0, 1, 1], [], []>} : vector<8x8xf32>, vector<8x32xf32>, vector<8x32xf32> -> vector<8x32xf32>
    %402 = arith.addf %398, %401 : vector<8x32xf32>
    %403 = vector.extract_strided_slice %6 {offsets = [0, 16], sizes = [8, 8], strides = [1, 1]} : vector<8x24xf32> to vector<8x8xf32>
    %404 = vector.extract_strided_slice %395 {offsets = [0, 6], sizes = [8, 32], strides = [1, 1]} : vector<8x38xf32> to vector<8x32xf32>
    %cst_165 = arith.constant dense<0.000000e+00> : vector<8x32xf32>
    %405 = tpu.matmul %403, %404, %cst_165 {dimension_numbers = #tpu.dot_dimension_numbers<[1], [0], [0], [1], [0, 0, 1, 1], [], []>} : vector<8x8xf32>, vector<8x32xf32>, vector<8x32xf32> -> vector<8x32xf32>
    %406 = arith.addf %402, %405 : vector<8x32xf32>
    %407 = vector.broadcast %4 : vector<8x1xf32> to vector<8x32xf32>
    %408 = arith.addf %406, %407 : vector<8x32xf32>
    %409 = arith.addf %408, %388 : vector<8x32xf32>
    %cst_166 = arith.constant 1.000000e+00 : f32
    %410 = vector.broadcast %cst_166 : f32 to vector<8x32xf32>
    %411 = arith.mulf %409, %410 : vector<8x32xf32>
    %cst_167 = arith.constant 0.000000e+00 : f32
    %412 = vector.broadcast %cst_167 : f32 to vector<8x32xf32>
    %413 = arith.cmpf ogt, %411, %412 : vector<8x32xf32>
    %cst_168 = arith.constant 1.000000e-01 : f32
    %414 = vector.broadcast %cst_168 : f32 to vector<8x32xf32>
    %415 = arith.mulf %414, %411 : vector<8x32xf32>
    %416 = arith.select %413, %411, %415 : vector<8x32xi1>, vector<8x32xf32>
    %417 = tpu.iota {dimensions = array<i32: 0>} : vector<32x64xi32>
    %418 = tpu.iota {dimensions = array<i32: 1>} : vector<32x64xi32>
    %419 = vector.extract_strided_slice %15 {offsets = [0, 0], sizes = [4, 8], strides = [1, 1]} : vector<4x16xf32> to vector<4x8xf32>
    %cst_169 = arith.constant dense<0.000000e+00> : vector<4x32xf32>
    %420 = tpu.matmul %419, %416, %cst_169 {dimension_numbers = #tpu.dot_dimension_numbers<[1], [0], [0], [1], [0, 0, 1, 1], [], []>} : vector<4x8xf32>, vector<8x32xf32>, vector<4x32xf32> -> vector<4x32xf32>
    %421 = vector.extract_strided_slice %15 {offsets = [0, 8], sizes = [4, 8], strides = [1, 1]} : vector<4x16xf32> to vector<4x8xf32>
    %cst_170 = arith.constant 0.000000e+00 : f32
    %422 = vector.broadcast %cst_170 : f32 to vector<8x1xf32>
    %423 = vector.extract_strided_slice %416 {offsets = [0, 0], sizes = [8, 31], strides = [1, 1]} : vector<8x32xf32> to vector<8x31xf32>
    %424 = tpu.concatenate %422, %423 in 1 : vector<8x1xf32>, vector<8x31xf32> -> vector<8x32xf32>
    %cst_171 = arith.constant dense<0.000000e+00> : vector<4x32xf32>
    %425 = tpu.matmul %421, %424, %cst_171 {dimension_numbers = #tpu.dot_dimension_numbers<[1], [0], [0], [1], [0, 0, 1, 1], [], []>} : vector<4x8xf32>, vector<8x32xf32>, vector<4x32xf32> -> vector<4x32xf32>
    %426 = arith.addf %420, %425 : vector<4x32xf32>
    %c2_i32_172 = arith.constant 2 : i32
    %427 = vector.broadcast %c2_i32_172 : i32 to vector<32x64xi32>
    %428 = arith.muli %417, %427 : vector<32x64xi32>
    %c0_i32_173 = arith.constant 0 : i32
    %429 = vector.broadcast %c0_i32_173 : i32 to vector<32x64xi32>
    %430 = arith.addi %428, %429 : vector<32x64xi32>
    %431 = arith.cmpi eq, %418, %430 : vector<32x64xi32>
    %432 = arith.extui %431 : vector<32x64xi1> to vector<32x64xi32>
    %433 = arith.sitofp %432 : vector<32x64xi32> to vector<32x64xf32>
    %cst_174 = arith.constant dense<0.000000e+00> : vector<4x64xf32>
    %434 = tpu.matmul %426, %433, %cst_174 {dimension_numbers = #tpu.dot_dimension_numbers<[1], [0], [0], [1], [0, 0, 1, 1], [], []>} : vector<4x32xf32>, vector<32x64xf32>, vector<4x64xf32> -> vector<4x64xf32>
    %435 = vector.extract_strided_slice %16 {offsets = [0, 0], sizes = [4, 8], strides = [1, 1]} : vector<4x16xf32> to vector<4x8xf32>
    %436 = vector.extract_strided_slice %416 {offsets = [0, 1], sizes = [8, 31], strides = [1, 1]} : vector<8x32xf32> to vector<8x31xf32>
    %cst_175 = arith.constant 0.000000e+00 : f32
    %437 = vector.broadcast %cst_175 : f32 to vector<8x1xf32>
    %438 = tpu.concatenate %436, %437 in 1 : vector<8x31xf32>, vector<8x1xf32> -> vector<8x32xf32>
    %cst_176 = arith.constant dense<0.000000e+00> : vector<4x32xf32>
    %439 = tpu.matmul %435, %438, %cst_176 {dimension_numbers = #tpu.dot_dimension_numbers<[1], [0], [0], [1], [0, 0, 1, 1], [], []>} : vector<4x8xf32>, vector<8x32xf32>, vector<4x32xf32> -> vector<4x32xf32>
    %440 = vector.extract_strided_slice %16 {offsets = [0, 8], sizes = [4, 8], strides = [1, 1]} : vector<4x16xf32> to vector<4x8xf32>
    %cst_177 = arith.constant dense<0.000000e+00> : vector<4x32xf32>
    %441 = tpu.matmul %440, %416, %cst_177 {dimension_numbers = #tpu.dot_dimension_numbers<[1], [0], [0], [1], [0, 0, 1, 1], [], []>} : vector<4x8xf32>, vector<8x32xf32>, vector<4x32xf32> -> vector<4x32xf32>
    %442 = arith.addf %439, %441 : vector<4x32xf32>
    %c2_i32_178 = arith.constant 2 : i32
    %443 = vector.broadcast %c2_i32_178 : i32 to vector<32x64xi32>
    %444 = arith.muli %417, %443 : vector<32x64xi32>
    %c1_i32_179 = arith.constant 1 : i32
    %445 = vector.broadcast %c1_i32_179 : i32 to vector<32x64xi32>
    %446 = arith.addi %444, %445 : vector<32x64xi32>
    %447 = arith.cmpi eq, %418, %446 : vector<32x64xi32>
    %448 = arith.extui %447 : vector<32x64xi1> to vector<32x64xi32>
    %449 = arith.sitofp %448 : vector<32x64xi32> to vector<32x64xf32>
    %cst_180 = arith.constant dense<0.000000e+00> : vector<4x64xf32>
    %450 = tpu.matmul %442, %449, %cst_180 {dimension_numbers = #tpu.dot_dimension_numbers<[1], [0], [0], [1], [0, 0, 1, 1], [], []>} : vector<4x32xf32>, vector<32x64xf32>, vector<4x64xf32> -> vector<4x64xf32>
    %451 = arith.addf %434, %450 : vector<4x64xf32>
    %452 = vector.broadcast %14 : vector<4x1xf32> to vector<4x64xf32>
    %453 = arith.addf %451, %452 : vector<4x64xf32>
    %cst_181 = arith.constant 0.000000e+00 : f32
    %454 = vector.broadcast %cst_181 : f32 to vector<4x64xf32>
    %455 = arith.cmpf ogt, %453, %454 : vector<4x64xf32>
    %cst_182 = arith.constant 1.000000e-01 : f32
    %456 = vector.broadcast %cst_182 : f32 to vector<4x64xf32>
    %457 = arith.mulf %456, %453 : vector<4x64xf32>
    %458 = arith.select %455, %453, %457 : vector<4x64xi1>, vector<4x64xf32>
    %cst_183 = arith.constant 0.000000e+00 : f32
    %459 = vector.broadcast %cst_183 : f32 to vector<4x1xf32>
    %460 = tpu.concatenate %459, %458, %459 in 1 : vector<4x1xf32>, vector<4x64xf32>, vector<4x1xf32> -> vector<4x66xf32>
    %461 = vector.extract_strided_slice %9 {offsets = [0, 0], sizes = [4, 4], strides = [1, 1]} : vector<4x12xf32> to vector<4x4xf32>
    %462 = vector.extract_strided_slice %460 {offsets = [0, 0], sizes = [4, 64], strides = [1, 1]} : vector<4x66xf32> to vector<4x64xf32>
    %cst_184 = arith.constant dense<0.000000e+00> : vector<4x64xf32>
    %463 = tpu.matmul %461, %462, %cst_184 {dimension_numbers = #tpu.dot_dimension_numbers<[1], [0], [0], [1], [0, 0, 1, 1], [], []>} : vector<4x4xf32>, vector<4x64xf32>, vector<4x64xf32> -> vector<4x64xf32>
    %464 = vector.extract_strided_slice %9 {offsets = [0, 4], sizes = [4, 4], strides = [1, 1]} : vector<4x12xf32> to vector<4x4xf32>
    %465 = vector.extract_strided_slice %460 {offsets = [0, 1], sizes = [4, 64], strides = [1, 1]} : vector<4x66xf32> to vector<4x64xf32>
    %cst_185 = arith.constant dense<0.000000e+00> : vector<4x64xf32>
    %466 = tpu.matmul %464, %465, %cst_185 {dimension_numbers = #tpu.dot_dimension_numbers<[1], [0], [0], [1], [0, 0, 1, 1], [], []>} : vector<4x4xf32>, vector<4x64xf32>, vector<4x64xf32> -> vector<4x64xf32>
    %467 = arith.addf %463, %466 : vector<4x64xf32>
    %468 = vector.extract_strided_slice %9 {offsets = [0, 8], sizes = [4, 4], strides = [1, 1]} : vector<4x12xf32> to vector<4x4xf32>
    %469 = vector.extract_strided_slice %460 {offsets = [0, 2], sizes = [4, 64], strides = [1, 1]} : vector<4x66xf32> to vector<4x64xf32>
    %cst_186 = arith.constant dense<0.000000e+00> : vector<4x64xf32>
    %470 = tpu.matmul %468, %469, %cst_186 {dimension_numbers = #tpu.dot_dimension_numbers<[1], [0], [0], [1], [0, 0, 1, 1], [], []>} : vector<4x4xf32>, vector<4x64xf32>, vector<4x64xf32> -> vector<4x64xf32>
    %471 = arith.addf %467, %470 : vector<4x64xf32>
    %472 = vector.broadcast %7 : vector<4x1xf32> to vector<4x64xf32>
    %473 = arith.addf %471, %472 : vector<4x64xf32>
    %474 = arith.addf %473, %453 : vector<4x64xf32>
    %cst_187 = arith.constant 0.000000e+00 : f32
    %475 = vector.broadcast %cst_187 : f32 to vector<4x64xf32>
    %476 = arith.cmpf ogt, %474, %475 : vector<4x64xf32>
    %cst_188 = arith.constant 1.000000e-01 : f32
    %477 = vector.broadcast %cst_188 : f32 to vector<4x64xf32>
    %478 = arith.mulf %477, %474 : vector<4x64xf32>
    %479 = arith.select %476, %474, %478 : vector<4x64xi1>, vector<4x64xf32>
    %cst_189 = arith.constant 0.000000e+00 : f32
    %480 = vector.broadcast %cst_189 : f32 to vector<4x3xf32>
    %481 = tpu.concatenate %480, %479, %480 in 1 : vector<4x3xf32>, vector<4x64xf32>, vector<4x3xf32> -> vector<4x70xf32>
    %482 = vector.extract_strided_slice %10 {offsets = [0, 0], sizes = [4, 4], strides = [1, 1]} : vector<4x12xf32> to vector<4x4xf32>
    %483 = vector.extract_strided_slice %481 {offsets = [0, 0], sizes = [4, 64], strides = [1, 1]} : vector<4x70xf32> to vector<4x64xf32>
    %cst_190 = arith.constant dense<0.000000e+00> : vector<4x64xf32>
    %484 = tpu.matmul %482, %483, %cst_190 {dimension_numbers = #tpu.dot_dimension_numbers<[1], [0], [0], [1], [0, 0, 1, 1], [], []>} : vector<4x4xf32>, vector<4x64xf32>, vector<4x64xf32> -> vector<4x64xf32>
    %485 = vector.extract_strided_slice %10 {offsets = [0, 4], sizes = [4, 4], strides = [1, 1]} : vector<4x12xf32> to vector<4x4xf32>
    %486 = vector.extract_strided_slice %481 {offsets = [0, 3], sizes = [4, 64], strides = [1, 1]} : vector<4x70xf32> to vector<4x64xf32>
    %cst_191 = arith.constant dense<0.000000e+00> : vector<4x64xf32>
    %487 = tpu.matmul %485, %486, %cst_191 {dimension_numbers = #tpu.dot_dimension_numbers<[1], [0], [0], [1], [0, 0, 1, 1], [], []>} : vector<4x4xf32>, vector<4x64xf32>, vector<4x64xf32> -> vector<4x64xf32>
    %488 = arith.addf %484, %487 : vector<4x64xf32>
    %489 = vector.extract_strided_slice %10 {offsets = [0, 8], sizes = [4, 4], strides = [1, 1]} : vector<4x12xf32> to vector<4x4xf32>
    %490 = vector.extract_strided_slice %481 {offsets = [0, 6], sizes = [4, 64], strides = [1, 1]} : vector<4x70xf32> to vector<4x64xf32>
    %cst_192 = arith.constant dense<0.000000e+00> : vector<4x64xf32>
    %491 = tpu.matmul %489, %490, %cst_192 {dimension_numbers = #tpu.dot_dimension_numbers<[1], [0], [0], [1], [0, 0, 1, 1], [], []>} : vector<4x4xf32>, vector<4x64xf32>, vector<4x64xf32> -> vector<4x64xf32>
    %492 = arith.addf %488, %491 : vector<4x64xf32>
    %493 = vector.broadcast %8 : vector<4x1xf32> to vector<4x64xf32>
    %494 = arith.addf %492, %493 : vector<4x64xf32>
    %495 = arith.addf %494, %474 : vector<4x64xf32>
    %cst_193 = arith.constant 1.000000e+00 : f32
    %496 = vector.broadcast %cst_193 : f32 to vector<4x64xf32>
    %497 = arith.mulf %495, %496 : vector<4x64xf32>
    %cst_194 = arith.constant 0.000000e+00 : f32
    %498 = vector.broadcast %cst_194 : f32 to vector<4x64xf32>
    %499 = arith.cmpf ogt, %497, %498 : vector<4x64xf32>
    %cst_195 = arith.constant 0.00999999977 : f32
    %500 = vector.broadcast %cst_195 : f32 to vector<4x64xf32>
    %501 = arith.mulf %500, %497 : vector<4x64xf32>
    %502 = arith.select %499, %497, %501 : vector<4x64xi1>, vector<4x64xf32>
    %cst_196 = arith.constant 0.000000e+00 : f32
    %503 = vector.broadcast %cst_196 : f32 to vector<4x3xf32>
    %504 = tpu.concatenate %503, %502, %503 in 1 : vector<4x3xf32>, vector<4x64xf32>, vector<4x3xf32> -> vector<4x70xf32>
    %505 = vector.extract_strided_slice %0 {offsets = [0, 0], sizes = [1, 4], strides = [1, 1]} : vector<1x28xf32> to vector<1x4xf32>
    %506 = vector.extract_strided_slice %504 {offsets = [0, 0], sizes = [4, 64], strides = [1, 1]} : vector<4x70xf32> to vector<4x64xf32>
    %cst_197 = arith.constant dense<0.000000e+00> : vector<1x64xf32>
    %507 = tpu.matmul %505, %506, %cst_197 {dimension_numbers = #tpu.dot_dimension_numbers<[1], [0], [0], [1], [0, 0, 1, 1], [], []>} : vector<1x4xf32>, vector<4x64xf32>, vector<1x64xf32> -> vector<1x64xf32>
    %508 = vector.extract_strided_slice %0 {offsets = [0, 4], sizes = [1, 4], strides = [1, 1]} : vector<1x28xf32> to vector<1x4xf32>
    %509 = vector.extract_strided_slice %504 {offsets = [0, 1], sizes = [4, 64], strides = [1, 1]} : vector<4x70xf32> to vector<4x64xf32>
    %cst_198 = arith.constant dense<0.000000e+00> : vector<1x64xf32>
    %510 = tpu.matmul %508, %509, %cst_198 {dimension_numbers = #tpu.dot_dimension_numbers<[1], [0], [0], [1], [0, 0, 1, 1], [], []>} : vector<1x4xf32>, vector<4x64xf32>, vector<1x64xf32> -> vector<1x64xf32>
    %511 = arith.addf %507, %510 : vector<1x64xf32>
    %512 = vector.extract_strided_slice %0 {offsets = [0, 8], sizes = [1, 4], strides = [1, 1]} : vector<1x28xf32> to vector<1x4xf32>
    %513 = vector.extract_strided_slice %504 {offsets = [0, 2], sizes = [4, 64], strides = [1, 1]} : vector<4x70xf32> to vector<4x64xf32>
    %cst_199 = arith.constant dense<0.000000e+00> : vector<1x64xf32>
    %514 = tpu.matmul %512, %513, %cst_199 {dimension_numbers = #tpu.dot_dimension_numbers<[1], [0], [0], [1], [0, 0, 1, 1], [], []>} : vector<1x4xf32>, vector<4x64xf32>, vector<1x64xf32> -> vector<1x64xf32>
    %515 = arith.addf %511, %514 : vector<1x64xf32>
    %516 = vector.extract_strided_slice %0 {offsets = [0, 12], sizes = [1, 4], strides = [1, 1]} : vector<1x28xf32> to vector<1x4xf32>
    %517 = vector.extract_strided_slice %504 {offsets = [0, 3], sizes = [4, 64], strides = [1, 1]} : vector<4x70xf32> to vector<4x64xf32>
    %cst_200 = arith.constant dense<0.000000e+00> : vector<1x64xf32>
    %518 = tpu.matmul %516, %517, %cst_200 {dimension_numbers = #tpu.dot_dimension_numbers<[1], [0], [0], [1], [0, 0, 1, 1], [], []>} : vector<1x4xf32>, vector<4x64xf32>, vector<1x64xf32> -> vector<1x64xf32>
    %519 = arith.addf %515, %518 : vector<1x64xf32>
    %520 = vector.extract_strided_slice %0 {offsets = [0, 16], sizes = [1, 4], strides = [1, 1]} : vector<1x28xf32> to vector<1x4xf32>
    %521 = vector.extract_strided_slice %504 {offsets = [0, 4], sizes = [4, 64], strides = [1, 1]} : vector<4x70xf32> to vector<4x64xf32>
    %cst_201 = arith.constant dense<0.000000e+00> : vector<1x64xf32>
    %522 = tpu.matmul %520, %521, %cst_201 {dimension_numbers = #tpu.dot_dimension_numbers<[1], [0], [0], [1], [0, 0, 1, 1], [], []>} : vector<1x4xf32>, vector<4x64xf32>, vector<1x64xf32> -> vector<1x64xf32>
    %523 = arith.addf %519, %522 : vector<1x64xf32>
    %524 = vector.extract_strided_slice %0 {offsets = [0, 20], sizes = [1, 4], strides = [1, 1]} : vector<1x28xf32> to vector<1x4xf32>
    %525 = vector.extract_strided_slice %504 {offsets = [0, 5], sizes = [4, 64], strides = [1, 1]} : vector<4x70xf32> to vector<4x64xf32>
    %cst_202 = arith.constant dense<0.000000e+00> : vector<1x64xf32>
    %526 = tpu.matmul %524, %525, %cst_202 {dimension_numbers = #tpu.dot_dimension_numbers<[1], [0], [0], [1], [0, 0, 1, 1], [], []>} : vector<1x4xf32>, vector<4x64xf32>, vector<1x64xf32> -> vector<1x64xf32>
    %527 = arith.addf %523, %526 : vector<1x64xf32>
    %528 = vector.extract_strided_slice %0 {offsets = [0, 24], sizes = [1, 4], strides = [1, 1]} : vector<1x28xf32> to vector<1x4xf32>
    %529 = vector.extract_strided_slice %504 {offsets = [0, 6], sizes = [4, 64], strides = [1, 1]} : vector<4x70xf32> to vector<4x64xf32>
    %cst_203 = arith.constant dense<0.000000e+00> : vector<1x64xf32>
    %530 = tpu.matmul %528, %529, %cst_203 {dimension_numbers = #tpu.dot_dimension_numbers<[1], [0], [0], [1], [0, 0, 1, 1], [], []>} : vector<1x4xf32>, vector<4x64xf32>, vector<1x64xf32> -> vector<1x64xf32>
    %531 = arith.addf %527, %530 : vector<1x64xf32>
    %532 = math.tanh %531 : vector<1x64xf32>
    %c0_204 = arith.constant 0 : index
    %c0_205 = arith.constant 0 : index
    %c0_206 = arith.constant 0 : index
    %533 = vector.load %arg44[%c0_204, %c0_205, %c0_206] : memref<1x1x64xf32, #tpu.memory_space<vmem>>, vector<1x1x64xf32>
    %534 = vector.shape_cast %533 : vector<1x1x64xf32> to vector<1x64xf32>
    %535 = vector.shape_cast %532 : vector<1x64xf32> to vector<1x1x64xf32>
    tpu.vector_store %arg44[%c0_204, %c0_205, %c0_206], %535 {strides = array<i32>} : memref<1x1x64xf32, #tpu.memory_space<vmem>>, vector<1x1x64xf32>,
    return
  }
  func.func @transform_0(%arg0: i32) -> (i32, i32, i32) {
    %c0_i32 = arith.constant 0 : i32
    %c0_i32_0 = arith.constant 0 : i32
    %c0_i32_1 = arith.constant 0 : i32
    return %arg0, %c0_i32, %c0_i32_0 : i32, i32, i32
  }
  func.func @transform_1(%arg0: i32) -> (i32, i32, i32) {
    %c0_i32 = arith.constant 0 : i32
    %c0_i32_0 = arith.constant 0 : i32
    %c0_i32_1 = arith.constant 0 : i32
    return %arg0, %c0_i32, %c0_i32_0 : i32, i32, i32
  }
  func.func @transform_2(%arg0: i32) -> (i32, i32) {
    %c0_i32 = arith.constant 0 : i32
    %c0_i32_0 = arith.constant 0 : i32
    %c0_i32_1 = arith.constant 0 : i32
    return %c0_i32, %c0_i32_0 : i32, i32
  }
  func.func @transform_3(%arg0: i32) -> (i32, i32) {
    %c0_i32 = arith.constant 0 : i32
    %c0_i32_0 = arith.constant 0 : i32
    %c0_i32_1 = arith.constant 0 : i32
    return %c0_i32, %c0_i32_0 : i32, i32
  }
  func.func @transform_4(%arg0: i32) -> (i32, i32) {
    %c0_i32 = arith.constant 0 : i32
    %c0_i32_0 = arith.constant 0 : i32
    %c0_i32_1 = arith.constant 0 : i32
    return %c0_i32, %c0_i32_0 : i32, i32
  }
  func.func @transform_5(%arg0: i32) -> (i32, i32) {
    %c0_i32 = arith.constant 0 : i32
    %c0_i32_0 = arith.constant 0 : i32
    %c0_i32_1 = arith.constant 0 : i32
    return %c0_i32, %c0_i32_0 : i32, i32
  }
  func.func @transform_6(%arg0: i32) -> (i32, i32) {
    %c0_i32 = arith.constant 0 : i32
    %c0_i32_0 = arith.constant 0 : i32
    %c0_i32_1 = arith.constant 0 : i32
    return %c0_i32, %c0_i32_0 : i32, i32
  }
  func.func @transform_7(%arg0: i32) -> (i32, i32) {
    %c0_i32 = arith.constant 0 : i32
    %c0_i32_0 = arith.constant 0 : i32
    %c0_i32_1 = arith.constant 0 : i32
    return %c0_i32, %c0_i32_0 : i32, i32
  }
  func.func @transform_8(%arg0: i32) -> (i32, i32) {
    %c0_i32 = arith.constant 0 : i32
    %c0_i32_0 = arith.constant 0 : i32
    %c0_i32_1 = arith.constant 0 : i32
    return %c0_i32, %c0_i32_0 : i32, i32
  }
  func.func @transform_9(%arg0: i32) -> (i32, i32) {
    %c0_i32 = arith.constant 0 : i32
    %c0_i32_0 = arith.constant 0 : i32
    %c0_i32_1 = arith.constant 0 : i32
    return %c0_i32, %c0_i32_0 : i32, i32
  }
  func.func @transform_10(%arg0: i32) -> (i32, i32) {
    %c0_i32 = arith.constant 0 : i32
    %c0_i32_0 = arith.constant 0 : i32
    %c0_i32_1 = arith.constant 0 : i32
    return %c0_i32, %c0_i32_0 : i32, i32
  }
  func.func @transform_11(%arg0: i32) -> (i32, i32) {
    %c0_i32 = arith.constant 0 : i32
    %c0_i32_0 = arith.constant 0 : i32
    %c0_i32_1 = arith.constant 0 : i32
    return %c0_i32, %c0_i32_0 : i32, i32
  }
  func.func @transform_12(%arg0: i32) -> (i32, i32) {
    %c0_i32 = arith.constant 0 : i32
    %c0_i32_0 = arith.constant 0 : i32
    %c0_i32_1 = arith.constant 0 : i32
    return %c0_i32, %c0_i32_0 : i32, i32
  }
  func.func @transform_13(%arg0: i32) -> (i32, i32) {
    %c0_i32 = arith.constant 0 : i32
    %c0_i32_0 = arith.constant 0 : i32
    %c0_i32_1 = arith.constant 0 : i32
    return %c0_i32, %c0_i32_0 : i32, i32
  }
  func.func @transform_14(%arg0: i32) -> (i32, i32) {
    %c0_i32 = arith.constant 0 : i32
    %c0_i32_0 = arith.constant 0 : i32
    %c0_i32_1 = arith.constant 0 : i32
    return %c0_i32, %c0_i32_0 : i32, i32
  }
  func.func @transform_15(%arg0: i32) -> (i32, i32) {
    %c0_i32 = arith.constant 0 : i32
    %c0_i32_0 = arith.constant 0 : i32
    %c0_i32_1 = arith.constant 0 : i32
    return %c0_i32, %c0_i32_0 : i32, i32
  }
  func.func @transform_16(%arg0: i32) -> (i32, i32) {
    %c0_i32 = arith.constant 0 : i32
    %c0_i32_0 = arith.constant 0 : i32
    %c0_i32_1 = arith.constant 0 : i32
    return %c0_i32, %c0_i32_0 : i32, i32
  }
  func.func @transform_17(%arg0: i32) -> (i32, i32) {
    %c0_i32 = arith.constant 0 : i32
    %c0_i32_0 = arith.constant 0 : i32
    %c0_i32_1 = arith.constant 0 : i32
    return %c0_i32, %c0_i32_0 : i32, i32
  }
  func.func @transform_18(%arg0: i32) -> (i32, i32) {
    %c0_i32 = arith.constant 0 : i32
    %c0_i32_0 = arith.constant 0 : i32
    %c0_i32_1 = arith.constant 0 : i32
    return %c0_i32, %c0_i32_0 : i32, i32
  }
  func.func @transform_19(%arg0: i32) -> (i32, i32) {
    %c0_i32 = arith.constant 0 : i32
    %c0_i32_0 = arith.constant 0 : i32
    %c0_i32_1 = arith.constant 0 : i32
    return %c0_i32, %c0_i32_0 : i32, i32
  }
  func.func @transform_20(%arg0: i32) -> (i32, i32) {
    %c0_i32 = arith.constant 0 : i32
    %c0_i32_0 = arith.constant 0 : i32
    %c0_i32_1 = arith.constant 0 : i32
    return %c0_i32, %c0_i32_0 : i32, i32
  }
  func.func @transform_21(%arg0: i32) -> (i32, i32) {
    %c0_i32 = arith.constant 0 : i32
    %c0_i32_0 = arith.constant 0 : i32
    %c0_i32_1 = arith.constant 0 : i32
    return %c0_i32, %c0_i32_0 : i32, i32
  }
  func.func @transform_22(%arg0: i32) -> (i32, i32) {
    %c0_i32 = arith.constant 0 : i32
    %c0_i32_0 = arith.constant 0 : i32
    %c0_i32_1 = arith.constant 0 : i32
    return %c0_i32, %c0_i32_0 : i32, i32
  }
  func.func @transform_23(%arg0: i32) -> (i32, i32) {
    %c0_i32 = arith.constant 0 : i32
    %c0_i32_0 = arith.constant 0 : i32
    %c0_i32_1 = arith.constant 0 : i32
    return %c0_i32, %c0_i32_0 : i32, i32
  }
  func.func @transform_24(%arg0: i32) -> (i32, i32) {
    %c0_i32 = arith.constant 0 : i32
    %c0_i32_0 = arith.constant 0 : i32
    %c0_i32_1 = arith.constant 0 : i32
    return %c0_i32, %c0_i32_0 : i32, i32
  }
  func.func @transform_25(%arg0: i32) -> (i32, i32) {
    %c0_i32 = arith.constant 0 : i32
    %c0_i32_0 = arith.constant 0 : i32
    %c0_i32_1 = arith.constant 0 : i32
    return %c0_i32, %c0_i32_0 : i32, i32
  }
  func.func @transform_26(%arg0: i32) -> (i32, i32) {
    %c0_i32 = arith.constant 0 : i32
    %c0_i32_0 = arith.constant 0 : i32
    %c0_i32_1 = arith.constant 0 : i32
    return %c0_i32, %c0_i32_0 : i32, i32
  }
  func.func @transform_27(%arg0: i32) -> (i32, i32) {
    %c0_i32 = arith.constant 0 : i32
    %c0_i32_0 = arith.constant 0 : i32
    %c0_i32_1 = arith.constant 0 : i32
    return %c0_i32, %c0_i32_0 : i32, i32
  }
  func.func @transform_28(%arg0: i32) -> (i32, i32) {
    %c0_i32 = arith.constant 0 : i32
    %c0_i32_0 = arith.constant 0 : i32
    %c0_i32_1 = arith.constant 0 : i32
    return %c0_i32, %c0_i32_0 : i32, i32
  }
  func.func @transform_29(%arg0: i32) -> (i32, i32) {
    %c0_i32 = arith.constant 0 : i32
    %c0_i32_0 = arith.constant 0 : i32
    %c0_i32_1 = arith.constant 0 : i32
    return %c0_i32, %c0_i32_0 : i32, i32
  }
  func.func @transform_30(%arg0: i32) -> (i32, i32) {
    %c0_i32 = arith.constant 0 : i32
    %c0_i32_0 = arith.constant 0 : i32
    %c0_i32_1 = arith.constant 0 : i32
    return %c0_i32, %c0_i32_0 : i32, i32
  }
  func.func @transform_31(%arg0: i32) -> (i32, i32) {
    %c0_i32 = arith.constant 0 : i32
    %c0_i32_0 = arith.constant 0 : i32
    %c0_i32_1 = arith.constant 0 : i32
    return %c0_i32, %c0_i32_0 : i32, i32
  }
  func.func @transform_32(%arg0: i32) -> (i32, i32) {
    %c0_i32 = arith.constant 0 : i32
    %c0_i32_0 = arith.constant 0 : i32
    %c0_i32_1 = arith.constant 0 : i32
    return %c0_i32, %c0_i32_0 : i32, i32
  }
  func.func @transform_33(%arg0: i32) -> (i32, i32) {
    %c0_i32 = arith.constant 0 : i32
    %c0_i32_0 = arith.constant 0 : i32
    %c0_i32_1 = arith.constant 0 : i32
    return %c0_i32, %c0_i32_0 : i32, i32
  }
  func.func @transform_34(%arg0: i32) -> (i32, i32) {
    %c0_i32 = arith.constant 0 : i32
    %c0_i32_0 = arith.constant 0 : i32
    %c0_i32_1 = arith.constant 0 : i32
    return %c0_i32, %c0_i32_0 : i32, i32
  }
  func.func @transform_35(%arg0: i32) -> (i32, i32) {
    %c0_i32 = arith.constant 0 : i32
    %c0_i32_0 = arith.constant 0 : i32
    %c0_i32_1 = arith.constant 0 : i32
    return %c0_i32, %c0_i32_0 : i32, i32
  }
  func.func @transform_36(%arg0: i32) -> (i32, i32) {
    %c0_i32 = arith.constant 0 : i32
    %c0_i32_0 = arith.constant 0 : i32
    %c0_i32_1 = arith.constant 0 : i32
    return %c0_i32, %c0_i32_0 : i32, i32
  }
  func.func @transform_37(%arg0: i32) -> (i32, i32) {
    %c0_i32 = arith.constant 0 : i32
    %c0_i32_0 = arith.constant 0 : i32
    %c0_i32_1 = arith.constant 0 : i32
    return %c0_i32, %c0_i32_0 : i32, i32
  }
  func.func @transform_38(%arg0: i32) -> (i32, i32) {
    %c0_i32 = arith.constant 0 : i32
    %c0_i32_0 = arith.constant 0 : i32
    %c0_i32_1 = arith.constant 0 : i32
    return %c0_i32, %c0_i32_0 : i32, i32
  }
  func.func @transform_39(%arg0: i32) -> (i32, i32) {
    %c0_i32 = arith.constant 0 : i32
    %c0_i32_0 = arith.constant 0 : i32
    %c0_i32_1 = arith.constant 0 : i32
    return %c0_i32, %c0_i32_0 : i32, i32
  }
  func.func @transform_40(%arg0: i32) -> (i32, i32) {
    %c0_i32 = arith.constant 0 : i32
    %c0_i32_0 = arith.constant 0 : i32
    %c0_i32_1 = arith.constant 0 : i32
    return %c0_i32, %c0_i32_0 : i32, i32
  }
  func.func @transform_41(%arg0: i32) -> (i32, i32) {
    %c0_i32 = arith.constant 0 : i32
    %c0_i32_0 = arith.constant 0 : i32
    %c0_i32_1 = arith.constant 0 : i32
    return %c0_i32, %c0_i32_0 : i32, i32
  }
  func.func @transform_42(%arg0: i32) -> (i32, i32) {
    %c0_i32 = arith.constant 0 : i32
    %c0_i32_0 = arith.constant 0 : i32
    %c0_i32_1 = arith.constant 0 : i32
    return %c0_i32, %c0_i32_0 : i32, i32
  }
  func.func @transform_43(%arg0: i32) -> (i32, i32, i32) {
    %c0_i32 = arith.constant 0 : i32
    %c0_i32_0 = arith.constant 0 : i32
    %c0_i32_1 = arith.constant 0 : i32
    return %arg0, %c0_i32, %c0_i32_0 : i32, i32, i32
  }
}

</mosaic_0001>

<llo_original>
// kernel: run.1
$region0: #{run.1}
  #allocation0 [shape = 'u32[]', space=smem, size = 0x4, offset = 0x4, fixed_abs, tag = 'smem constant byte address 0x4 - core index']
  #allocation1 [shape = 'u32[72,128]{1,0:T(1,128)}', space=vmem, size = 0x9000, scoped, tag = 'internal scratch']
  %s0 = inlined_call_operand.smem [shape: u32[44], index: -1, kind: input, shape index: {}]
  %s1 = sld [smem:[%s0]]
  %s2 = scalar_lea.smem %s0, 1
  %s3 = sld [smem:[%s2]]
  %s4 = scalar_lea.smem %s0, 2
  %s5 = sld [smem:[%s4]]
  %s6 = scalar_lea.smem %s0, 3
  %s7 = sld [smem:[%s6]]
  %s8 = scalar_lea.smem %s0, 4
  %s9 = sld [smem:[%s8]]
  %s10 = scalar_lea.smem %s0, 5
  %s11 = sld [smem:[%s10]]
  %s12 = scalar_lea.smem %s0, 6
  %s13 = sld [smem:[%s12]]
  %s14 = scalar_lea.smem %s0, 7
  %s15 = sld [smem:[%s14]]
  %s16 = scalar_lea.smem %s0, 8
  %s17 = sld [smem:[%s16]]
  %s18 = scalar_lea.smem %s0, 9
  %s19 = sld [smem:[%s18]]
  %s20 = scalar_lea.smem %s0, 10
  %s21 = sld [smem:[%s20]]
  %s22 = scalar_lea.smem %s0, 11
  %s23 = sld [smem:[%s22]]
  %s24 = scalar_lea.smem %s0, 12
  %s25 = sld [smem:[%s24]]
  %s26 = scalar_lea.smem %s0, 13
  %s27 = sld [smem:[%s26]]
  %s28 = scalar_lea.smem %s0, 14
  %s29 = sld [smem:[%s28]]
  %s30 = scalar_lea.smem %s0, 15
  %s31 = sld [smem:[%s30]]
  %s32 = scalar_lea.smem %s0, 16
  %s33 = sld [smem:[%s32]]
  %s34 = scalar_lea.smem %s0, 17
  %s35 = sld [smem:[%s34]]
  %s36 = scalar_lea.smem %s0, 18
  %s37 = sld [smem:[%s36]]
  %s38 = scalar_lea.smem %s0, 19
  %s39 = sld [smem:[%s38]]
  %s40 = scalar_lea.smem %s0, 20
  %s41 = sld [smem:[%s40]]
  %s42 = scalar_lea.smem %s0, 21
  %s43 = sld [smem:[%s42]]
  %s44 = scalar_lea.smem %s0, 22
  %s45 = sld [smem:[%s44]]
  %s46 = scalar_lea.smem %s0, 23
  %s47 = sld [smem:[%s46]]
  %s48 = scalar_lea.smem %s0, 24
  %s49 = sld [smem:[%s48]]
  %s50 = scalar_lea.smem %s0, 25
  %s51 = sld [smem:[%s50]]
  %s52 = scalar_lea.smem %s0, 26
  %s53 = sld [smem:[%s52]]
  %s54 = scalar_lea.smem %s0, 27
  %s55 = sld [smem:[%s54]]
  %s56 = scalar_lea.smem %s0, 28
  %s57 = sld [smem:[%s56]]
  %s58 = scalar_lea.smem %s0, 29
  %s59 = sld [smem:[%s58]]
  %s60 = scalar_lea.smem %s0, 30
  %s61 = sld [smem:[%s60]]
  %s62 = scalar_lea.smem %s0, 31
  %s63 = sld [smem:[%s62]]
  %s64 = scalar_lea.smem %s0, 32
  %s65 = sld [smem:[%s64]]
  %s66 = scalar_lea.smem %s0, 33
  %s67 = sld [smem:[%s66]]
  %s68 = scalar_lea.smem %s0, 34
  %s69 = sld [smem:[%s68]]
  %s70 = scalar_lea.smem %s0, 35
  %s71 = sld [smem:[%s70]]
  %s72 = scalar_lea.smem %s0, 36
  %s73 = sld [smem:[%s72]]
  %s74 = scalar_lea.smem %s0, 37
  %s75 = sld [smem:[%s74]]
  %s76 = scalar_lea.smem %s0, 38
  %s77 = sld [smem:[%s76]]
  %s78 = scalar_lea.smem %s0, 39
  %s79 = sld [smem:[%s78]]
  %s80 = scalar_lea.smem %s0, 40
  %s81 = sld [smem:[%s80]]
  %s82 = scalar_lea.smem %s0, 41
  %s83 = sld [smem:[%s82]]
  %s84 = scalar_lea.smem %s0, 42
  %s85 = sld [smem:[%s84]]
  %s86 = scalar_lea.smem %s0, 43
  %s87 = sld [smem:[%s86]]
  %s88 = sld [smem:[#allocation0]]
  $region365: #{run.1} parent=0
    _
  %s90 = ssub.s32 1, %s88
  %s91 = scalar_select 0, %s90, %s88
  $region1: #{run.1} parent=0
    #allocation2 [shape = 'u8[8192]{0}', space=vmem, size = 0x2000, scoped, tag = 'input window, operand 0']
    #allocation3 [shape = 's32[2]{0}', space=sflag, size = 0x8, scoped, tag = 'scoped memory for run.1']
    #allocation4 [shape = 's32[2]{0}', space=sflag, size = 0x8, scoped, tag = 'scoped memory for run.1']
    #allocation5 [shape = 'u8[1024]{0}', space=vmem, size = 0x400, scoped, tag = 'input window, operand 1']
    #allocation6 [shape = 's32[2]{0}', space=sflag, size = 0x8, scoped, tag = 'scoped memory for run.1']
    #allocation7 [shape = 'u8[8192]{0}', space=vmem, size = 0x2000, scoped, tag = 'input window, operand 3, single buffered']
    #allocation8 [shape = 'u8[8192]{0}', space=vmem, size = 0x2000, scoped, tag = 'input window, operand 4, single buffered']
    #allocation9 [shape = 's32[1]{0}', space=sflag, size = 0x4, scoped, tag = 'scoped memory for run.1']
    #allocation10 [shape = 'u8[4096]{0}', space=vmem, size = 0x1000, scoped, tag = 'input window, operand 5, single buffered']
    #allocation11 [shape = 'u8[4096]{0}', space=vmem, size = 0x1000, scoped, tag = 'input window, operand 6, single buffered']
    #allocation12 [shape = 's32[1]{0}', space=sflag, size = 0x4, scoped, tag = 'scoped memory for run.1']
    #allocation13 [shape = 'u8[4096]{0}', space=vmem, size = 0x1000, scoped, tag = 'input window, operand 7, single buffered']
    #allocation14 [shape = 'u8[4096]{0}', space=vmem, size = 0x1000, scoped, tag = 'input window, operand 8, single buffered']
    #allocation15 [shape = 's32[1]{0}', space=sflag, size = 0x4, scoped, tag = 'scoped memory for run.1']
    #allocation16 [shape = 'u8[2048]{0}', space=vmem, size = 0x800, scoped, tag = 'input window, operand 9, single buffered']
    #allocation17 [shape = 'u8[2048]{0}', space=vmem, size = 0x800, scoped, tag = 'input window, operand 10, single buffered']
    #allocation18 [shape = 's32[1]{0}', space=sflag, size = 0x4, scoped, tag = 'scoped memory for run.1']
    #allocation19 [shape = 'u8[2048]{0}', space=vmem, size = 0x800, scoped, tag = 'input window, operand 11, single buffered']
    #allocation20 [shape = 'u8[2048]{0}', space=vmem, size = 0x800, scoped, tag = 'input window, operand 12, single buffered']
    #allocation21 [shape = 's32[1]{0}', space=sflag, size = 0x4, scoped, tag = 'scoped memory for run.1']
    #allocation22 [shape = 'u8[4096]{0}', space=vmem, size = 0x1000, scoped, tag = 'input window, operand 13, single buffered']
    #allocation23 [shape = 'u8[4096]{0}', space=vmem, size = 0x1000, scoped, tag = 'input window, operand 14, single buffered']
    #allocation24 [shape = 's32[1]{0}', space=sflag, size = 0x4, scoped, tag = 'scoped memory for run.1']
    #allocation25 [shape = 'u8[4096]{0}', space=vmem, size = 0x1000, scoped, tag = 'input window, operand 15, single buffered']
    #allocation26 [shape = 'u8[2048]{0}', space=vmem, size = 0x800, scoped, tag = 'input window, operand 16, single buffered']
    #allocation27 [shape = 's32[1]{0}', space=sflag, size = 0x4, scoped, tag = 'scoped memory for run.1']
    #allocation28 [shape = 'u8[2048]{0}', space=vmem, size = 0x800, scoped, tag = 'input window, operand 17, single buffered']
    #allocation29 [shape = 'u8[2048]{0}', space=vmem, size = 0x800, scoped, tag = 'input window, operand 18, single buffered']
    #allocation30 [shape = 's32[1]{0}', space=sflag, size = 0x4, scoped, tag = 'scoped memory for run.1']
    #allocation31 [shape = 'u8[2048]{0}', space=vmem, size = 0x800, scoped, tag = 'input window, operand 19, single buffered']
    #allocation32 [shape = 'u8[2048]{0}', space=vmem, size = 0x800, scoped, tag = 'input window, operand 20, single buffered']
    #allocation33 [shape = 's32[1]{0}', space=sflag, size = 0x4, scoped, tag = 'scoped memory for run.1']
    #allocation34 [shape = 'u8[8192]{0}', space=vmem, size = 0x2000, scoped, tag = 'input window, operand 21, single buffered']
    #allocation35 [shape = 'u8[8192]{0}', space=vmem, size = 0x2000, scoped, tag = 'input window, operand 22, single buffered']
    #allocation36 [shape = 's32[1]{0}', space=sflag, size = 0x4, scoped, tag = 'scoped memory for run.1']
    #allocation37 [shape = 'u8[16384]{0}', space=vmem, size = 0x4000, scoped, tag = 'input window, operand 23, single buffered']
    #allocation38 [shape = 'u8[16384]{0}', space=vmem, size = 0x4000, scoped, tag = 'input window, operand 24, single buffered']
    #allocation39 [shape = 's32[1]{0}', space=sflag, size = 0x4, scoped, tag = 'scoped memory for run.1']
    #allocation40 [shape = 'u8[16384]{0}', space=vmem, size = 0x4000, scoped, tag = 'input window, operand 25, single buffered']
    #allocation41 [shape = 'u8[16384]{0}', space=vmem, size = 0x4000, scoped, tag = 'input window, operand 26, single buffered']
    #allocation42 [shape = 's32[1]{0}', space=sflag, size = 0x4, scoped, tag = 'scoped memory for run.1']
    #allocation43 [shape = 'u8[16384]{0}', space=vmem, size = 0x4000, scoped, tag = 'input window, operand 27, single buffered']
    #allocation44 [shape = 'u8[8192]{0}', space=vmem, size = 0x2000, scoped, tag = 'input window, operand 28, single buffered']
    #allocation45 [shape = 's32[1]{0}', space=sflag, size = 0x4, scoped, tag = 'scoped memory for run.1']
    #allocation46 [shape = 'u8[16384]{0}', space=vmem, size = 0x4000, scoped, tag = 'input window, operand 29, single buffered']
    #allocation47 [shape = 'u8[8192]{0}', space=vmem, size = 0x2000, scoped, tag = 'input window, operand 30, single buffered']
    #allocation48 [shape = 's32[1]{0}', space=sflag, size = 0x4, scoped, tag = 'scoped memory for run.1']
    #allocation49 [shape = 'u8[2048]{0}', space=vmem, size = 0x800, scoped, tag = 'input window, operand 31, single buffered']
    #allocation50 [shape = 'u8[8192]{0}', space=vmem, size = 0x2000, scoped, tag = 'input window, operand 33, single buffered']
    #allocation51 [shape = 's32[1]{0}', space=sflag, size = 0x4, scoped, tag = 'scoped memory for run.1']
    #allocation52 [shape = 'u8[8192]{0}', space=vmem, size = 0x2000, scoped, tag = 'input window, operand 34, single buffered']
    #allocation53 [shape = 'u8[16384]{0}', space=vmem, size = 0x4000, scoped, tag = 'input window, operand 35, single buffered']
    #allocation54 [shape = 's32[1]{0}', space=sflag, size = 0x4, scoped, tag = 'scoped memory for run.1']
    #allocation55 [shape = 'u8[16384]{0}', space=vmem, size = 0x4000, scoped, tag = 'input window, operand 36, single buffered']
    #allocation56 [shape = 'u8[16384]{0}', space=vmem, size = 0x4000, scoped, tag = 'input window, operand 37, single buffered']
    #allocation57 [shape = 's32[1]{0}', space=sflag, size = 0x4, scoped, tag = 'scoped memory for run.1']
    #allocation58 [shape = 'u8[16384]{0}', space=vmem, size = 0x4000, scoped, tag = 'input window, operand 38, single buffered']
    #allocation59 [shape = 'u8[16384]{0}', space=vmem, size = 0x4000, scoped, tag = 'input window, operand 39, single buffered']
    #allocation60 [shape = 's32[1]{0}', space=sflag, size = 0x4, scoped, tag = 'scoped memory for run.1']
    #allocation61 [shape = 'u8[8192]{0}', space=vmem, size = 0x2000, scoped, tag = 'input window, operand 40, single buffered']
    #allocation62 [shape = 'u8[8192]{0}', space=vmem, size = 0x2000, scoped, tag = 'input window, operand 42, single buffered']
    #allocation63 [shape = 's32[1]{0}', space=sflag, size = 0x4, scoped, tag = 'scoped memory for run.1']
    #allocation64 [shape = 'u8[1024]{0}', space=vmem, size = 0x400, scoped, tag = 'output window, operand 0']
    %92 = vsyncpa [#allocation3], 0
    %s93 = scalar_lea.sflag [#allocation3], 1
    %94 = vsyncpa %s93, 0
    %95 = vsyncpa [#allocation6], 0
    %s96 = scalar_lea.sflag [#allocation6], 1
    %97 = vsyncpa %s96, 0
    %98 = vsyncpa [#allocation9], 0
    %99 = vsyncpa [#allocation12], 0
    %100 = vsyncpa [#allocation15], 0
    %101 = vsyncpa [#allocation18], 0
    %102 = vsyncpa [#allocation21], 0
    %103 = vsyncpa [#allocation24], 0
    %104 = vsyncpa [#allocation27], 0
    %105 = vsyncpa [#allocation30], 0
    %106 = vsyncpa [#allocation33], 0
    %107 = vsyncpa [#allocation36], 0
    %108 = vsyncpa [#allocation39], 0
    %109 = vsyncpa [#allocation42], 0
    %110 = vsyncpa [#allocation45], 0
    %111 = vsyncpa [#allocation48], 0
    %112 = vsyncpa [#allocation51], 0
    %113 = vsyncpa [#allocation54], 0
    %114 = vsyncpa [#allocation57], 0
    %115 = vsyncpa [#allocation60], 0
    %116 = vsyncpa [#allocation63], 0
    %117 = vsyncpa [#allocation4], 0
    %s118 = scalar_lea.sflag [#allocation4], 1
    %119 = vsyncpa %s118, 0
    loop: start=0, step=1, limit=4
    $region2: #{run.1} parent=1 // loop_pre_header
      _
    $region3: #{run.1} parent=1 // loop_header
      %s121 = sphi 0, %s125
      %p122 = scmp.ge.s32.totalorder %s121, 4
      %s131 = sphi 0, %s133
      %s134 = sphi 0, %s131
      %s135 = sphi 0, %s134
      %s151 = sphi 0, %s135
      %s157 = sphi 0, %s159
      %s160 = sphi 0, %s157
      %s161 = sphi 0, %s160
      %s177 = sphi 0, %s161
      %s181 = sphi 0, %s181
      %s183 = sphi 0, %s181
      %s184 = sphi 0, %s183
      %s198 = sphi 0, %s184
      %s202 = sphi 0, %s202
      %s204 = sphi 0, %s202
      %s205 = sphi 0, %s204
      %s219 = sphi 0, %s205
      %s223 = sphi 0, %s223
      %s225 = sphi 0, %s223
      %s226 = sphi 0, %s225
      %s240 = sphi 0, %s226
      %s244 = sphi 0, %s244
      %s246 = sphi 0, %s244
      %s247 = sphi 0, %s246
      %s261 = sphi 0, %s247
      %s265 = sphi 0, %s265
      %s267 = sphi 0, %s265
      %s268 = sphi 0, %s267
      %s282 = sphi 0, %s268
      %s286 = sphi 0, %s286
      %s288 = sphi 0, %s286
      %s289 = sphi 0, %s288
      %s303 = sphi 0, %s289
      %s307 = sphi 0, %s307
      %s309 = sphi 0, %s307
      %s310 = sphi 0, %s309
      %s324 = sphi 0, %s310
      %s328 = sphi 0, %s328
      %s330 = sphi 0, %s328
      %s331 = sphi 0, %s330
      %s345 = sphi 0, %s331
      %s349 = sphi 0, %s349
      %s351 = sphi 0, %s349
      %s352 = sphi 0, %s351
      %s366 = sphi 0, %s352
      %s370 = sphi 0, %s370
      %s372 = sphi 0, %s370
      %s373 = sphi 0, %s372
      %s387 = sphi 0, %s373
      %s391 = sphi 0, %s391
      %s393 = sphi 0, %s391
      %s394 = sphi 0, %s393
      %s408 = sphi 0, %s394
      %s412 = sphi 0, %s412
      %s414 = sphi 0, %s412
      %s415 = sphi 0, %s414
      %s429 = sphi 0, %s415
      %s433 = sphi 0, %s433
      %s435 = sphi 0, %s433
      %s436 = sphi 0, %s435
      %s450 = sphi 0, %s436
      %s454 = sphi 0, %s454
      %s456 = sphi 0, %s454
      %s457 = sphi 0, %s456
      %s471 = sphi 0, %s457
      %s475 = sphi 0, %s475
      %s477 = sphi 0, %s475
      %s478 = sphi 0, %s477
      %s492 = sphi 0, %s478
      %s496 = sphi 0, %s496
      %s498 = sphi 0, %s496
      %s499 = sphi 0, %s498
      %s513 = sphi 0, %s499
      %s517 = sphi 0, %s517
      %s519 = sphi 0, %s517
      %s520 = sphi 0, %s519
      %s534 = sphi 0, %s520
      %s538 = sphi 0, %s538
      %s540 = sphi 0, %s538
      %s541 = sphi 0, %s540
      %s555 = sphi 0, %s541
      %s559 = sphi 0, %s559
      %s561 = sphi 0, %s559
      %s562 = sphi 0, %s561
      %s576 = sphi 0, %s562
      %s580 = sphi 0, %s580
      %s582 = sphi 0, %s580
      %s583 = sphi 0, %s582
      %s597 = sphi 0, %s583
      %s601 = sphi 0, %s601
      %s603 = sphi 0, %s601
      %s604 = sphi 0, %s603
      %s618 = sphi 0, %s604
      %s622 = sphi 0, %s622
      %s624 = sphi 0, %s622
      %s625 = sphi 0, %s624
      %s639 = sphi 0, %s625
      %s643 = sphi 0, %s643
      %s645 = sphi 0, %s643
      %s646 = sphi 0, %s645
      %s660 = sphi 0, %s646
      %s664 = sphi 0, %s664
      %s666 = sphi 0, %s664
      %s667 = sphi 0, %s666
      %s681 = sphi 0, %s667
      %s685 = sphi 0, %s685
      %s687 = sphi 0, %s685
      %s688 = sphi 0, %s687
      %s702 = sphi 0, %s688
      %s706 = sphi 0, %s706
      %s708 = sphi 0, %s706
      %s709 = sphi 0, %s708
      %s723 = sphi 0, %s709
      %s727 = sphi 0, %s727
      %s729 = sphi 0, %s727
      %s730 = sphi 0, %s729
      %s744 = sphi 0, %s730
      %s748 = sphi 0, %s748
      %s750 = sphi 0, %s748
      %s751 = sphi 0, %s750
      %s765 = sphi 0, %s751
      %s769 = sphi 0, %s769
      %s771 = sphi 0, %s769
      %s772 = sphi 0, %s771
      %s786 = sphi 0, %s772
      %s790 = sphi 0, %s790
      %s792 = sphi 0, %s790
      %s793 = sphi 0, %s792
      %s807 = sphi 0, %s793
      %s811 = sphi 0, %s811
      %s813 = sphi 0, %s811
      %s814 = sphi 0, %s813
      %s828 = sphi 0, %s814
      %s832 = sphi 0, %s832
      %s834 = sphi 0, %s832
      %s835 = sphi 0, %s834
      %s849 = sphi 0, %s835
      %s853 = sphi 0, %s853
      %s855 = sphi 0, %s853
      %s856 = sphi 0, %s855
      %s870 = sphi 0, %s856
      %s874 = sphi 0, %s874
      %s876 = sphi 0, %s874
      %s877 = sphi 0, %s876
      %s891 = sphi 0, %s877
      %s895 = sphi 0, %s895
      %s897 = sphi 0, %s895
      %s898 = sphi 0, %s897
      %s912 = sphi 0, %s898
      %s916 = sphi 0, %s916
      %s918 = sphi 0, %s916
      %s919 = sphi 0, %s918
      %s933 = sphi 0, %s919
      %s937 = sphi 0, %s937
      %s939 = sphi 0, %s937
      %s940 = sphi 0, %s939
      %s954 = sphi 0, %s940
      %s958 = sphi 0, %s958
      %s960 = sphi 0, %s958
      %s961 = sphi 0, %s960
      %s975 = sphi 0, %s961
      %s979 = sphi 0, %s979
      %s981 = sphi 0, %s979
      %s982 = sphi 0, %s981
      %s996 = sphi 0, %s982
      %s1000 = sphi 0, %s1000
      %s1002 = sphi 0, %s1000
      %s1003 = sphi 0, %s1002
      %s1017 = sphi 0, %s1003
      %s1021 = sphi 0, %s1021
      %s1023 = sphi 0, %s1021
      %s1024 = sphi 0, %s1023
      %s1038 = sphi 0, %s1024
      %s1044 = sphi 0, %s1046
      %s1047 = sphi 0, %s1044
      %s1048 = sphi 0, %s1047
      %s1064 = sphi 0, %s1048
    $region4: #{run.1} parent=1 // loop_header_branch
      %124 = sbr.rel (%p122) target = $region8
    $region5: #{run.1} parent=1 // loop_body
      %s126 = ssub.s32 %s121, 1
      %s127 = ssub.s32 %s121, 2
      %s128 = sadd.s32 %s121, 1
      %s129 = ssub.s32 %s121, %s128
      %p130 = scmp.eq.s32.totalorder %s129, 0
      %s132 = sadd.s32 %s131, 1
      %s133 = scalar_select %p130, %s131, %s132
      %p136 = pneg %p130
      %p137 = scmp.eq.s32.totalorder %s121, 1
      %p138 = por %p136, %p137
      %p139 = scmp.ne.s32.totalorder %s131, %s134
      %p140 = scmp.eq.s32.totalorder %s121, 0
      %p141 = por %p139, %p140
      %p142 = scmp.ne.s32.totalorder %s131, %s134
      %p143 = scmp.eq.s32.totalorder %s126, 1
      %p144 = por %p142, %p143
      %p145 = scmp.ne.s32.totalorder %s134, %s135
      %p146 = scmp.eq.s32.totalorder %s126, 0
      %p147 = por %p145, %p146
      %p148 = scmp.ne.s32.totalorder %s134, %s135
      %p149 = scmp.eq.s32.totalorder %s127, 1
      %p150 = por %p148, %p149
      %p152 = scmp.ne.s32.totalorder %s135, %s151
      %p153 = scmp.eq.s32.totalorder %s127, 0
      %p154 = por %p152, %p153
      %s155 = ssub.s32 %s121, %s128
      %p156 = scmp.eq.s32.totalorder %s155, 0
      %s158 = sadd.s32 %s157, 1
      %s159 = scalar_select %p156, %s157, %s158
      %p162 = pneg %p156
      %p163 = scmp.eq.s32.totalorder %s121, 1
      %p164 = por %p162, %p163
      %p165 = scmp.ne.s32.totalorder %s157, %s160
      %p166 = scmp.eq.s32.totalorder %s121, 0
      %p167 = por %p165, %p166
      %p168 = scmp.ne.s32.totalorder %s157, %s160
      %p169 = scmp.eq.s32.totalorder %s126, 1
      %p170 = por %p168, %p169
      %p171 = scmp.ne.s32.totalorder %s160, %s161
      %p172 = scmp.eq.s32.totalorder %s126, 0
      %p173 = por %p171, %p172
      %p174 = scmp.ne.s32.totalorder %s160, %s161
      %p175 = scmp.eq.s32.totalorder %s127, 1
      %p176 = por %p174, %p175
      %p178 = scmp.ne.s32.totalorder %s161, %s177
      %p179 = scmp.eq.s32.totalorder %s127, 0
      %p180 = por %p178, %p179
      %s182 = sadd.s32 %s181, 1
      %p185 = scmp.eq.s32.totalorder %s121, 1
      %p186 = scmp.ne.s32.totalorder %s181, %s183
      %p187 = scmp.eq.s32.totalorder %s121, 0
      %p188 = por %p186, %p187
      %p189 = scmp.ne.s32.totalorder %s181, %s183
      %p190 = scmp.eq.s32.totalorder %s126, 1
      %p191 = por %p189, %p190
      %p192 = scmp.ne.s32.totalorder %s183, %s184
      %p193 = scmp.eq.s32.totalorder %s126, 0
      %p194 = por %p192, %p193
      %p195 = scmp.ne.s32.totalorder %s183, %s184
      %p196 = scmp.eq.s32.totalorder %s127, 1
      %p197 = por %p195, %p196
      %p199 = scmp.ne.s32.totalorder %s184, %s198
      %p200 = scmp.eq.s32.totalorder %s127, 0
      %p201 = por %p199, %p200
      %s203 = sadd.s32 %s202, 1
      %p206 = scmp.eq.s32.totalorder %s121, 1
      %p207 = scmp.ne.s32.totalorder %s202, %s204
      %p208 = scmp.eq.s32.totalorder %s121, 0
      %p209 = por %p207, %p208
      %p210 = scmp.ne.s32.totalorder %s202, %s204
      %p211 = scmp.eq.s32.totalorder %s126, 1
      %p212 = por %p210, %p211
      %p213 = scmp.ne.s32.totalorder %s204, %s205
      %p214 = scmp.eq.s32.totalorder %s126, 0
      %p215 = por %p213, %p214
      %p216 = scmp.ne.s32.totalorder %s204, %s205
      %p217 = scmp.eq.s32.totalorder %s127, 1
      %p218 = por %p216, %p217
      %p220 = scmp.ne.s32.totalorder %s205, %s219
      %p221 = scmp.eq.s32.totalorder %s127, 0
      %p222 = por %p220, %p221
      %s224 = sadd.s32 %s223, 1
      %p227 = scmp.eq.s32.totalorder %s121, 1
      %p228 = scmp.ne.s32.totalorder %s223, %s225
      %p229 = scmp.eq.s32.totalorder %s121, 0
      %p230 = por %p228, %p229
      %p231 = scmp.ne.s32.totalorder %s223, %s225
      %p232 = scmp.eq.s32.totalorder %s126, 1
      %p233 = por %p231, %p232
      %p234 = scmp.ne.s32.totalorder %s225, %s226
      %p235 = scmp.eq.s32.totalorder %s126, 0
      %p236 = por %p234, %p235
      %p237 = scmp.ne.s32.totalorder %s225, %s226
      %p238 = scmp.eq.s32.totalorder %s127, 1
      %p239 = por %p237, %p238
      %p241 = scmp.ne.s32.totalorder %s226, %s240
      %p242 = scmp.eq.s32.totalorder %s127, 0
      %p243 = por %p241, %p242
      %s245 = sadd.s32 %s244, 1
      %p248 = scmp.eq.s32.totalorder %s121, 1
      %p249 = scmp.ne.s32.totalorder %s244, %s246
      %p250 = scmp.eq.s32.totalorder %s121, 0
      %p251 = por %p249, %p250
      %p252 = scmp.ne.s32.totalorder %s244, %s246
      %p253 = scmp.eq.s32.totalorder %s126, 1
      %p254 = por %p252, %p253
      %p255 = scmp.ne.s32.totalorder %s246, %s247
      %p256 = scmp.eq.s32.totalorder %s126, 0
      %p257 = por %p255, %p256
      %p258 = scmp.ne.s32.totalorder %s246, %s247
      %p259 = scmp.eq.s32.totalorder %s127, 1
      %p260 = por %p258, %p259
      %p262 = scmp.ne.s32.totalorder %s247, %s261
      %p263 = scmp.eq.s32.totalorder %s127, 0
      %p264 = por %p262, %p263
      %s266 = sadd.s32 %s265, 1
      %p269 = scmp.eq.s32.totalorder %s121, 1
      %p270 = scmp.ne.s32.totalorder %s265, %s267
      %p271 = scmp.eq.s32.totalorder %s121, 0
      %p272 = por %p270, %p271
      %p273 = scmp.ne.s32.totalorder %s265, %s267
      %p274 = scmp.eq.s32.totalorder %s126, 1
      %p275 = por %p273, %p274
      %p276 = scmp.ne.s32.totalorder %s267, %s268
      %p277 = scmp.eq.s32.totalorder %s126, 0
      %p278 = por %p276, %p277
      %p279 = scmp.ne.s32.totalorder %s267, %s268
      %p280 = scmp.eq.s32.totalorder %s127, 1
      %p281 = por %p279, %p280
      %p283 = scmp.ne.s32.totalorder %s268, %s282
      %p284 = scmp.eq.s32.totalorder %s127, 0
      %p285 = por %p283, %p284
      %s287 = sadd.s32 %s286, 1
      %p290 = scmp.eq.s32.totalorder %s121, 1
      %p291 = scmp.ne.s32.totalorder %s286, %s288
      %p292 = scmp.eq.s32.totalorder %s121, 0
      %p293 = por %p291, %p292
      %p294 = scmp.ne.s32.totalorder %s286, %s288
      %p295 = scmp.eq.s32.totalorder %s126, 1
      %p296 = por %p294, %p295
      %p297 = scmp.ne.s32.totalorder %s288, %s289
      %p298 = scmp.eq.s32.totalorder %s126, 0
      %p299 = por %p297, %p298
      %p300 = scmp.ne.s32.totalorder %s288, %s289
      %p301 = scmp.eq.s32.totalorder %s127, 1
      %p302 = por %p300, %p301
      %p304 = scmp.ne.s32.totalorder %s289, %s303
      %p305 = scmp.eq.s32.totalorder %s127, 0
      %p306 = por %p304, %p305
      %s308 = sadd.s32 %s307, 1
      %p311 = scmp.eq.s32.totalorder %s121, 1
      %p312 = scmp.ne.s32.totalorder %s307, %s309
      %p313 = scmp.eq.s32.totalorder %s121, 0
      %p314 = por %p312, %p313
      %p315 = scmp.ne.s32.totalorder %s307, %s309
      %p316 = scmp.eq.s32.totalorder %s126, 1
      %p317 = por %p315, %p316
      %p318 = scmp.ne.s32.totalorder %s309, %s310
      %p319 = scmp.eq.s32.totalorder %s126, 0
      %p320 = por %p318, %p319
      %p321 = scmp.ne.s32.totalorder %s309, %s310
      %p322 = scmp.eq.s32.totalorder %s127, 1
      %p323 = por %p321, %p322
      %p325 = scmp.ne.s32.totalorder %s310, %s324
      %p326 = scmp.eq.s32.totalorder %s127, 0
      %p327 = por %p325, %p326
      %s329 = sadd.s32 %s328, 1
      %p332 = scmp.eq.s32.totalorder %s121, 1
      %p333 = scmp.ne.s32.totalorder %s328, %s330
      %p334 = scmp.eq.s32.totalorder %s121, 0
      %p335 = por %p333, %p334
      %p336 = scmp.ne.s32.totalorder %s328, %s330
      %p337 = scmp.eq.s32.totalorder %s126, 1
      %p338 = por %p336, %p337
      %p339 = scmp.ne.s32.totalorder %s330, %s331
      %p340 = scmp.eq.s32.totalorder %s126, 0
      %p341 = por %p339, %p340
      %p342 = scmp.ne.s32.totalorder %s330, %s331
      %p343 = scmp.eq.s32.totalorder %s127, 1
      %p344 = por %p342, %p343
      %p346 = scmp.ne.s32.totalorder %s331, %s345
      %p347 = scmp.eq.s32.totalorder %s127, 0
      %p348 = por %p346, %p347
      %s350 = sadd.s32 %s349, 1
      %p353 = scmp.eq.s32.totalorder %s121, 1
      %p354 = scmp.ne.s32.totalorder %s349, %s351
      %p355 = scmp.eq.s32.totalorder %s121, 0
      %p356 = por %p354, %p355
      %p357 = scmp.ne.s32.totalorder %s349, %s351
      %p358 = scmp.eq.s32.totalorder %s126, 1
      %p359 = por %p357, %p358
      %p360 = scmp.ne.s32.totalorder %s351, %s352
      %p361 = scmp.eq.s32.totalorder %s126, 0
      %p362 = por %p360, %p361
      %p363 = scmp.ne.s32.totalorder %s351, %s352
      %p364 = scmp.eq.s32.totalorder %s127, 1
      %p365 = por %p363, %p364
      %p367 = scmp.ne.s32.totalorder %s352, %s366
      %p368 = scmp.eq.s32.totalorder %s127, 0
      %p369 = por %p367, %p368
      %s371 = sadd.s32 %s370, 1
      %p374 = scmp.eq.s32.totalorder %s121, 1
      %p375 = scmp.ne.s32.totalorder %s370, %s372
      %p376 = scmp.eq.s32.totalorder %s121, 0
      %p377 = por %p375, %p376
      %p378 = scmp.ne.s32.totalorder %s370, %s372
      %p379 = scmp.eq.s32.totalorder %s126, 1
      %p380 = por %p378, %p379
      %p381 = scmp.ne.s32.totalorder %s372, %s373
      %p382 = scmp.eq.s32.totalorder %s126, 0
      %p383 = por %p381, %p382
      %p384 = scmp.ne.s32.totalorder %s372, %s373
      %p385 = scmp.eq.s32.totalorder %s127, 1
      %p386 = por %p384, %p385
      %p388 = scmp.ne.s32.totalorder %s373, %s387
      %p389 = scmp.eq.s32.totalorder %s127, 0
      %p390 = por %p388, %p389
      %s392 = sadd.s32 %s391, 1
      %p395 = scmp.eq.s32.totalorder %s121, 1
      %p396 = scmp.ne.s32.totalorder %s391, %s393
      %p397 = scmp.eq.s32.totalorder %s121, 0
      %p398 = por %p396, %p397
      %p399 = scmp.ne.s32.totalorder %s391, %s393
      %p400 = scmp.eq.s32.totalorder %s126, 1
      %p401 = por %p399, %p400
      %p402 = scmp.ne.s32.totalorder %s393, %s394
      %p403 = scmp.eq.s32.totalorder %s126, 0
      %p404 = por %p402, %p403
      %p405 = scmp.ne.s32.totalorder %s393, %s394
      %p406 = scmp.eq.s32.totalorder %s127, 1
      %p407 = por %p405, %p406
      %p409 = scmp.ne.s32.totalorder %s394, %s408
      %p410 = scmp.eq.s32.totalorder %s127, 0
      %p411 = por %p409, %p410
      %s413 = sadd.s32 %s412, 1
      %p416 = scmp.eq.s32.totalorder %s121, 1
      %p417 = scmp.ne.s32.totalorder %s412, %s414
      %p418 = scmp.eq.s32.totalorder %s121, 0
      %p419 = por %p417, %p418
      %p420 = scmp.ne.s32.totalorder %s412, %s414
      %p421 = scmp.eq.s32.totalorder %s126, 1
      %p422 = por %p420, %p421
      %p423 = scmp.ne.s32.totalorder %s414, %s415
      %p424 = scmp.eq.s32.totalorder %s126, 0
      %p425 = por %p423, %p424
      %p426 = scmp.ne.s32.totalorder %s414, %s415
      %p427 = scmp.eq.s32.totalorder %s127, 1
      %p428 = por %p426, %p427
      %p430 = scmp.ne.s32.totalorder %s415, %s429
      %p431 = scmp.eq.s32.totalorder %s127, 0
      %p432 = por %p430, %p431
      %s434 = sadd.s32 %s433, 1
      %p437 = scmp.eq.s32.totalorder %s121, 1
      %p438 = scmp.ne.s32.totalorder %s433, %s435
      %p439 = scmp.eq.s32.totalorder %s121, 0
      %p440 = por %p438, %p439
      %p441 = scmp.ne.s32.totalorder %s433, %s435
      %p442 = scmp.eq.s32.totalorder %s126, 1
      %p443 = por %p441, %p442
      %p444 = scmp.ne.s32.totalorder %s435, %s436
      %p445 = scmp.eq.s32.totalorder %s126, 0
      %p446 = por %p444, %p445
      %p447 = scmp.ne.s32.totalorder %s435, %s436
      %p448 = scmp.eq.s32.totalorder %s127, 1
      %p449 = por %p447, %p448
      %p451 = scmp.ne.s32.totalorder %s436, %s450
      %p452 = scmp.eq.s32.totalorder %s127, 0
      %p453 = por %p451, %p452
      %s455 = sadd.s32 %s454, 1
      %p458 = scmp.eq.s32.totalorder %s121, 1
      %p459 = scmp.ne.s32.totalorder %s454, %s456
      %p460 = scmp.eq.s32.totalorder %s121, 0
      %p461 = por %p459, %p460
      %p462 = scmp.ne.s32.totalorder %s454, %s456
      %p463 = scmp.eq.s32.totalorder %s126, 1
      %p464 = por %p462, %p463
      %p465 = scmp.ne.s32.totalorder %s456, %s457
      %p466 = scmp.eq.s32.totalorder %s126, 0
      %p467 = por %p465, %p466
      %p468 = scmp.ne.s32.totalorder %s456, %s457
      %p469 = scmp.eq.s32.totalorder %s127, 1
      %p470 = por %p468, %p469
      %p472 = scmp.ne.s32.totalorder %s457, %s471
      %p473 = scmp.eq.s32.totalorder %s127, 0
      %p474 = por %p472, %p473
      %s476 = sadd.s32 %s475, 1
      %p479 = scmp.eq.s32.totalorder %s121, 1
      %p480 = scmp.ne.s32.totalorder %s475, %s477
      %p481 = scmp.eq.s32.totalorder %s121, 0
      %p482 = por %p480, %p481
      %p483 = scmp.ne.s32.totalorder %s475, %s477
      %p484 = scmp.eq.s32.totalorder %s126, 1
      %p485 = por %p483, %p484
      %p486 = scmp.ne.s32.totalorder %s477, %s478
      %p487 = scmp.eq.s32.totalorder %s126, 0
      %p488 = por %p486, %p487
      %p489 = scmp.ne.s32.totalorder %s477, %s478
      %p490 = scmp.eq.s32.totalorder %s127, 1
      %p491 = por %p489, %p490
      %p493 = scmp.ne.s32.totalorder %s478, %s492
      %p494 = scmp.eq.s32.totalorder %s127, 0
      %p495 = por %p493, %p494
      %s497 = sadd.s32 %s496, 1
      %p500 = scmp.eq.s32.totalorder %s121, 1
      %p501 = scmp.ne.s32.totalorder %s496, %s498
      %p502 = scmp.eq.s32.totalorder %s121, 0
      %p503 = por %p501, %p502
      %p504 = scmp.ne.s32.totalorder %s496, %s498
      %p505 = scmp.eq.s32.totalorder %s126, 1
      %p506 = por %p504, %p505
      %p507 = scmp.ne.s32.totalorder %s498, %s499
      %p508 = scmp.eq.s32.totalorder %s126, 0
      %p509 = por %p507, %p508
      %p510 = scmp.ne.s32.totalorder %s498, %s499
      %p511 = scmp.eq.s32.totalorder %s127, 1
      %p512 = por %p510, %p511
      %p514 = scmp.ne.s32.totalorder %s499, %s513
      %p515 = scmp.eq.s32.totalorder %s127, 0
      %p516 = por %p514, %p515
      %s518 = sadd.s32 %s517, 1
      %p521 = scmp.eq.s32.totalorder %s121, 1
      %p522 = scmp.ne.s32.totalorder %s517, %s519
      %p523 = scmp.eq.s32.totalorder %s121, 0
      %p524 = por %p522, %p523
      %p525 = scmp.ne.s32.totalorder %s517, %s519
      %p526 = scmp.eq.s32.totalorder %s126, 1
      %p527 = por %p525, %p526
      %p528 = scmp.ne.s32.totalorder %s519, %s520
      %p529 = scmp.eq.s32.totalorder %s126, 0
      %p530 = por %p528, %p529
      %p531 = scmp.ne.s32.totalorder %s519, %s520
      %p532 = scmp.eq.s32.totalorder %s127, 1
      %p533 = por %p531, %p532
      %p535 = scmp.ne.s32.totalorder %s520, %s534
      %p536 = scmp.eq.s32.totalorder %s127, 0
      %p537 = por %p535, %p536
      %s539 = sadd.s32 %s538, 1
      %p542 = scmp.eq.s32.totalorder %s121, 1
      %p543 = scmp.ne.s32.totalorder %s538, %s540
      %p544 = scmp.eq.s32.totalorder %s121, 0
      %p545 = por %p543, %p544
      %p546 = scmp.ne.s32.totalorder %s538, %s540
      %p547 = scmp.eq.s32.totalorder %s126, 1
      %p548 = por %p546, %p547
      %p549 = scmp.ne.s32.totalorder %s540, %s541
      %p550 = scmp.eq.s32.totalorder %s126, 0
      %p551 = por %p549, %p550
      %p552 = scmp.ne.s32.totalorder %s540, %s541
      %p553 = scmp.eq.s32.totalorder %s127, 1
      %p554 = por %p552, %p553
      %p556 = scmp.ne.s32.totalorder %s541, %s555
      %p557 = scmp.eq.s32.totalorder %s127, 0
      %p558 = por %p556, %p557
      %s560 = sadd.s32 %s559, 1
      %p563 = scmp.eq.s32.totalorder %s121, 1
      %p564 = scmp.ne.s32.totalorder %s559, %s561
      %p565 = scmp.eq.s32.totalorder %s121, 0
      %p566 = por %p564, %p565
      %p567 = scmp.ne.s32.totalorder %s559, %s561
      %p568 = scmp.eq.s32.totalorder %s126, 1
      %p569 = por %p567, %p568
      %p570 = scmp.ne.s32.totalorder %s561, %s562
      %p571 = scmp.eq.s32.totalorder %s126, 0
      %p572 = por %p570, %p571
      %p573 = scmp.ne.s32.totalorder %s561, %s562
      %p574 = scmp.eq.s32.totalorder %s127, 1
      %p575 = por %p573, %p574
      %p577 = scmp.ne.s32.totalorder %s562, %s576
      %p578 = scmp.eq.s32.totalorder %s127, 0
      %p579 = por %p577, %p578
      %s581 = sadd.s32 %s580, 1
      %p584 = scmp.eq.s32.totalorder %s121, 1
      %p585 = scmp.ne.s32.totalorder %s580, %s582
      %p586 = scmp.eq.s32.totalorder %s121, 0
      %p587 = por %p585, %p586
      %p588 = scmp.ne.s32.totalorder %s580, %s582
      %p589 = scmp.eq.s32.totalorder %s126, 1
      %p590 = por %p588, %p589
      %p591 = scmp.ne.s32.totalorder %s582, %s583
      %p592 = scmp.eq.s32.totalorder %s126, 0
      %p593 = por %p591, %p592
      %p594 = scmp.ne.s32.totalorder %s582, %s583
      %p595 = scmp.eq.s32.totalorder %s127, 1
      %p596 = por %p594, %p595
      %p598 = scmp.ne.s32.totalorder %s583, %s597
      %p599 = scmp.eq.s32.totalorder %s127, 0
      %p600 = por %p598, %p599
      %s602 = sadd.s32 %s601, 1
      %p605 = scmp.eq.s32.totalorder %s121, 1
      %p606 = scmp.ne.s32.totalorder %s601, %s603
      %p607 = scmp.eq.s32.totalorder %s121, 0
      %p608 = por %p606, %p607
      %p609 = scmp.ne.s32.totalorder %s601, %s603
      %p610 = scmp.eq.s32.totalorder %s126, 1
      %p611 = por %p609, %p610
      %p612 = scmp.ne.s32.totalorder %s603, %s604
      %p613 = scmp.eq.s32.totalorder %s126, 0
      %p614 = por %p612, %p613
      %p615 = scmp.ne.s32.totalorder %s603, %s604
      %p616 = scmp.eq.s32.totalorder %s127, 1
      %p617 = por %p615, %p616
      %p619 = scmp.ne.s32.totalorder %s604, %s618
      %p620 = scmp.eq.s32.totalorder %s127, 0
      %p621 = por %p619, %p620
      %s623 = sadd.s32 %s622, 1
      %p626 = scmp.eq.s32.totalorder %s121, 1
      %p627 = scmp.ne.s32.totalorder %s622, %s624
      %p628 = scmp.eq.s32.totalorder %s121, 0
      %p629 = por %p627, %p628
      %p630 = scmp.ne.s32.totalorder %s622, %s624
      %p631 = scmp.eq.s32.totalorder %s126, 1
      %p632 = por %p630, %p631
      %p633 = scmp.ne.s32.totalorder %s624, %s625
      %p634 = scmp.eq.s32.totalorder %s126, 0
      %p635 = por %p633, %p634
      %p636 = scmp.ne.s32.totalorder %s624, %s625
      %p637 = scmp.eq.s32.totalorder %s127, 1
      %p638 = por %p636, %p637
      %p640 = scmp.ne.s32.totalorder %s625, %s639
      %p641 = scmp.eq.s32.totalorder %s127, 0
      %p642 = por %p640, %p641
      %s644 = sadd.s32 %s643, 1
      %p647 = scmp.eq.s32.totalorder %s121, 1
      %p648 = scmp.ne.s32.totalorder %s643, %s645
      %p649 = scmp.eq.s32.totalorder %s121, 0
      %p650 = por %p648, %p649
      %p651 = scmp.ne.s32.totalorder %s643, %s645
      %p652 = scmp.eq.s32.totalorder %s126, 1
      %p653 = por %p651, %p652
      %p654 = scmp.ne.s32.totalorder %s645, %s646
      %p655 = scmp.eq.s32.totalorder %s126, 0
      %p656 = por %p654, %p655
      %p657 = scmp.ne.s32.totalorder %s645, %s646
      %p658 = scmp.eq.s32.totalorder %s127, 1
      %p659 = por %p657, %p658
      %p661 = scmp.ne.s32.totalorder %s646, %s660
      %p662 = scmp.eq.s32.totalorder %s127, 0
      %p663 = por %p661, %p662
      %s665 = sadd.s32 %s664, 1
      %p668 = scmp.eq.s32.totalorder %s121, 1
      %p669 = scmp.ne.s32.totalorder %s664, %s666
      %p670 = scmp.eq.s32.totalorder %s121, 0
      %p671 = por %p669, %p670
      %p672 = scmp.ne.s32.totalorder %s664, %s666
      %p673 = scmp.eq.s32.totalorder %s126, 1
      %p674 = por %p672, %p673
      %p675 = scmp.ne.s32.totalorder %s666, %s667
      %p676 = scmp.eq.s32.totalorder %s126, 0
      %p677 = por %p675, %p676
      %p678 = scmp.ne.s32.totalorder %s666, %s667
      %p679 = scmp.eq.s32.totalorder %s127, 1
      %p680 = por %p678, %p679
      %p682 = scmp.ne.s32.totalorder %s667, %s681
      %p683 = scmp.eq.s32.totalorder %s127, 0
      %p684 = por %p682, %p683
      %s686 = sadd.s32 %s685, 1
      %p689 = scmp.eq.s32.totalorder %s121, 1
      %p690 = scmp.ne.s32.totalorder %s685, %s687
      %p691 = scmp.eq.s32.totalorder %s121, 0
      %p692 = por %p690, %p691
      %p693 = scmp.ne.s32.totalorder %s685, %s687
      %p694 = scmp.eq.s32.totalorder %s126, 1
      %p695 = por %p693, %p694
      %p696 = scmp.ne.s32.totalorder %s687, %s688
      %p697 = scmp.eq.s32.totalorder %s126, 0
      %p698 = por %p696, %p697
      %p699 = scmp.ne.s32.totalorder %s687, %s688
      %p700 = scmp.eq.s32.totalorder %s127, 1
      %p701 = por %p699, %p700
      %p703 = scmp.ne.s32.totalorder %s688, %s702
      %p704 = scmp.eq.s32.totalorder %s127, 0
      %p705 = por %p703, %p704
      %s707 = sadd.s32 %s706, 1
      %p710 = scmp.eq.s32.totalorder %s121, 1
      %p711 = scmp.ne.s32.totalorder %s706, %s708
      %p712 = scmp.eq.s32.totalorder %s121, 0
      %p713 = por %p711, %p712
      %p714 = scmp.ne.s32.totalorder %s706, %s708
      %p715 = scmp.eq.s32.totalorder %s126, 1
      %p716 = por %p714, %p715
      %p717 = scmp.ne.s32.totalorder %s708, %s709
      %p718 = scmp.eq.s32.totalorder %s126, 0
      %p719 = por %p717, %p718
      %p720 = scmp.ne.s32.totalorder %s708, %s709
      %p721 = scmp.eq.s32.totalorder %s127, 1
      %p722 = por %p720, %p721
      %p724 = scmp.ne.s32.totalorder %s709, %s723
      %p725 = scmp.eq.s32.totalorder %s127, 0
      %p726 = por %p724, %p725
      %s728 = sadd.s32 %s727, 1
      %p731 = scmp.eq.s32.totalorder %s121, 1
      %p732 = scmp.ne.s32.totalorder %s727, %s729
      %p733 = scmp.eq.s32.totalorder %s121, 0
      %p734 = por %p732, %p733
      %p735 = scmp.ne.s32.totalorder %s727, %s729
      %p736 = scmp.eq.s32.totalorder %s126, 1
      %p737 = por %p735, %p736
      %p738 = scmp.ne.s32.totalorder %s729, %s730
      %p739 = scmp.eq.s32.totalorder %s126, 0
      %p740 = por %p738, %p739
      %p741 = scmp.ne.s32.totalorder %s729, %s730
      %p742 = scmp.eq.s32.totalorder %s127, 1
      %p743 = por %p741, %p742
      %p745 = scmp.ne.s32.totalorder %s730, %s744
      %p746 = scmp.eq.s32.totalorder %s127, 0
      %p747 = por %p745, %p746
      %s749 = sadd.s32 %s748, 1
      %p752 = scmp.eq.s32.totalorder %s121, 1
      %p753 = scmp.ne.s32.totalorder %s748, %s750
      %p754 = scmp.eq.s32.totalorder %s121, 0
      %p755 = por %p753, %p754
      %p756 = scmp.ne.s32.totalorder %s748, %s750
      %p757 = scmp.eq.s32.totalorder %s126, 1
      %p758 = por %p756, %p757
      %p759 = scmp.ne.s32.totalorder %s750, %s751
      %p760 = scmp.eq.s32.totalorder %s126, 0
      %p761 = por %p759, %p760
      %p762 = scmp.ne.s32.totalorder %s750, %s751
      %p763 = scmp.eq.s32.totalorder %s127, 1
      %p764 = por %p762, %p763
      %p766 = scmp.ne.s32.totalorder %s751, %s765
      %p767 = scmp.eq.s32.totalorder %s127, 0
      %p768 = por %p766, %p767
      %s770 = sadd.s32 %s769, 1
      %p773 = scmp.eq.s32.totalorder %s121, 1
      %p774 = scmp.ne.s32.totalorder %s769, %s771
      %p775 = scmp.eq.s32.totalorder %s121, 0
      %p776 = por %p774, %p775
      %p777 = scmp.ne.s32.totalorder %s769, %s771
      %p778 = scmp.eq.s32.totalorder %s126, 1
      %p779 = por %p777, %p778
      %p780 = scmp.ne.s32.totalorder %s771, %s772
      %p781 = scmp.eq.s32.totalorder %s126, 0
      %p782 = por %p780, %p781
      %p783 = scmp.ne.s32.totalorder %s771, %s772
      %p784 = scmp.eq.s32.totalorder %s127, 1
      %p785 = por %p783, %p784
      %p787 = scmp.ne.s32.totalorder %s772, %s786
      %p788 = scmp.eq.s32.totalorder %s127, 0
      %p789 = por %p787, %p788
      %s791 = sadd.s32 %s790, 1
      %p794 = scmp.eq.s32.totalorder %s121, 1
      %p795 = scmp.ne.s32.totalorder %s790, %s792
      %p796 = scmp.eq.s32.totalorder %s121, 0
      %p797 = por %p795, %p796
      %p798 = scmp.ne.s32.totalorder %s790, %s792
      %p799 = scmp.eq.s32.totalorder %s126, 1
      %p800 = por %p798, %p799
      %p801 = scmp.ne.s32.totalorder %s792, %s793
      %p802 = scmp.eq.s32.totalorder %s126, 0
      %p803 = por %p801, %p802
      %p804 = scmp.ne.s32.totalorder %s792, %s793
      %p805 = scmp.eq.s32.totalorder %s127, 1
      %p806 = por %p804, %p805
      %p808 = scmp.ne.s32.totalorder %s793, %s807
      %p809 = scmp.eq.s32.totalorder %s127, 0
      %p810 = por %p808, %p809
      %s812 = sadd.s32 %s811, 1
      %p815 = scmp.eq.s32.totalorder %s121, 1
      %p816 = scmp.ne.s32.totalorder %s811, %s813
      %p817 = scmp.eq.s32.totalorder %s121, 0
      %p818 = por %p816, %p817
      %p819 = scmp.ne.s32.totalorder %s811, %s813
      %p820 = scmp.eq.s32.totalorder %s126, 1
      %p821 = por %p819, %p820
      %p822 = scmp.ne.s32.totalorder %s813, %s814
      %p823 = scmp.eq.s32.totalorder %s126, 0
      %p824 = por %p822, %p823
      %p825 = scmp.ne.s32.totalorder %s813, %s814
      %p826 = scmp.eq.s32.totalorder %s127, 1
      %p827 = por %p825, %p826
      %p829 = scmp.ne.s32.totalorder %s814, %s828
      %p830 = scmp.eq.s32.totalorder %s127, 0
      %p831 = por %p829, %p830
      %s833 = sadd.s32 %s832, 1
      %p836 = scmp.eq.s32.totalorder %s121, 1
      %p837 = scmp.ne.s32.totalorder %s832, %s834
      %p838 = scmp.eq.s32.totalorder %s121, 0
      %p839 = por %p837, %p838
      %p840 = scmp.ne.s32.totalorder %s832, %s834
      %p841 = scmp.eq.s32.totalorder %s126, 1
      %p842 = por %p840, %p841
      %p843 = scmp.ne.s32.totalorder %s834, %s835
      %p844 = scmp.eq.s32.totalorder %s126, 0
      %p845 = por %p843, %p844
      %p846 = scmp.ne.s32.totalorder %s834, %s835
      %p847 = scmp.eq.s32.totalorder %s127, 1
      %p848 = por %p846, %p847
      %p850 = scmp.ne.s32.totalorder %s835, %s849
      %p851 = scmp.eq.s32.totalorder %s127, 0
      %p852 = por %p850, %p851
      %s854 = sadd.s32 %s853, 1
      %p857 = scmp.eq.s32.totalorder %s121, 1
      %p858 = scmp.ne.s32.totalorder %s853, %s855
      %p859 = scmp.eq.s32.totalorder %s121, 0
      %p860 = por %p858, %p859
      %p861 = scmp.ne.s32.totalorder %s853, %s855
      %p862 = scmp.eq.s32.totalorder %s126, 1
      %p863 = por %p861, %p862
      %p864 = scmp.ne.s32.totalorder %s855, %s856
      %p865 = scmp.eq.s32.totalorder %s126, 0
      %p866 = por %p864, %p865
      %p867 = scmp.ne.s32.totalorder %s855, %s856
      %p868 = scmp.eq.s32.totalorder %s127, 1
      %p869 = por %p867, %p868
      %p871 = scmp.ne.s32.totalorder %s856, %s870
      %p872 = scmp.eq.s32.totalorder %s127, 0
      %p873 = por %p871, %p872
      %s875 = sadd.s32 %s874, 1
      %p878 = scmp.eq.s32.totalorder %s121, 1
      %p879 = scmp.ne.s32.totalorder %s874, %s876
      %p880 = scmp.eq.s32.totalorder %s121, 0
      %p881 = por %p879, %p880
      %p882 = scmp.ne.s32.totalorder %s874, %s876
      %p883 = scmp.eq.s32.totalorder %s126, 1
      %p884 = por %p882, %p883
      %p885 = scmp.ne.s32.totalorder %s876, %s877
      %p886 = scmp.eq.s32.totalorder %s126, 0
      %p887 = por %p885, %p886
      %p888 = scmp.ne.s32.totalorder %s876, %s877
      %p889 = scmp.eq.s32.totalorder %s127, 1
      %p890 = por %p888, %p889
      %p892 = scmp.ne.s32.totalorder %s877, %s891
      %p893 = scmp.eq.s32.totalorder %s127, 0
      %p894 = por %p892, %p893
      %s896 = sadd.s32 %s895, 1
      %p899 = scmp.eq.s32.totalorder %s121, 1
      %p900 = scmp.ne.s32.totalorder %s895, %s897
      %p901 = scmp.eq.s32.totalorder %s121, 0
      %p902 = por %p900, %p901
      %p903 = scmp.ne.s32.totalorder %s895, %s897
      %p904 = scmp.eq.s32.totalorder %s126, 1
      %p905 = por %p903, %p904
      %p906 = scmp.ne.s32.totalorder %s897, %s898
      %p907 = scmp.eq.s32.totalorder %s126, 0
      %p908 = por %p906, %p907
      %p909 = scmp.ne.s32.totalorder %s897, %s898
      %p910 = scmp.eq.s32.totalorder %s127, 1
      %p911 = por %p909, %p910
      %p913 = scmp.ne.s32.totalorder %s898, %s912
      %p914 = scmp.eq.s32.totalorder %s127, 0
      %p915 = por %p913, %p914
      %s917 = sadd.s32 %s916, 1
      %p920 = scmp.eq.s32.totalorder %s121, 1
      %p921 = scmp.ne.s32.totalorder %s916, %s918
      %p922 = scmp.eq.s32.totalorder %s121, 0
      %p923 = por %p921, %p922
      %p924 = scmp.ne.s32.totalorder %s916, %s918
      %p925 = scmp.eq.s32.totalorder %s126, 1
      %p926 = por %p924, %p925
      %p927 = scmp.ne.s32.totalorder %s918, %s919
      %p928 = scmp.eq.s32.totalorder %s126, 0
      %p929 = por %p927, %p928
      %p930 = scmp.ne.s32.totalorder %s918, %s919
      %p931 = scmp.eq.s32.totalorder %s127, 1
      %p932 = por %p930, %p931
      %p934 = scmp.ne.s32.totalorder %s919, %s933
      %p935 = scmp.eq.s32.totalorder %s127, 0
      %p936 = por %p934, %p935
      %s938 = sadd.s32 %s937, 1
      %p941 = scmp.eq.s32.totalorder %s121, 1
      %p942 = scmp.ne.s32.totalorder %s937, %s939
      %p943 = scmp.eq.s32.totalorder %s121, 0
      %p944 = por %p942, %p943
      %p945 = scmp.ne.s32.totalorder %s937, %s939
      %p946 = scmp.eq.s32.totalorder %s126, 1
      %p947 = por %p945, %p946
      %p948 = scmp.ne.s32.totalorder %s939, %s940
      %p949 = scmp.eq.s32.totalorder %s126, 0
      %p950 = por %p948, %p949
      %p951 = scmp.ne.s32.totalorder %s939, %s940
      %p952 = scmp.eq.s32.totalorder %s127, 1
      %p953 = por %p951, %p952
      %p955 = scmp.ne.s32.totalorder %s940, %s954
      %p956 = scmp.eq.s32.totalorder %s127, 0
      %p957 = por %p955, %p956
      %s959 = sadd.s32 %s958, 1
      %p962 = scmp.eq.s32.totalorder %s121, 1
      %p963 = scmp.ne.s32.totalorder %s958, %s960
      %p964 = scmp.eq.s32.totalorder %s121, 0
      %p965 = por %p963, %p964
      %p966 = scmp.ne.s32.totalorder %s958, %s960
      %p967 = scmp.eq.s32.totalorder %s126, 1
      %p968 = por %p966, %p967
      %p969 = scmp.ne.s32.totalorder %s960, %s961
      %p970 = scmp.eq.s32.totalorder %s126, 0
      %p971 = por %p969, %p970
      %p972 = scmp.ne.s32.totalorder %s960, %s961
      %p973 = scmp.eq.s32.totalorder %s127, 1
      %p974 = por %p972, %p973
      %p976 = scmp.ne.s32.totalorder %s961, %s975
      %p977 = scmp.eq.s32.totalorder %s127, 0
      %p978 = por %p976, %p977
      %s980 = sadd.s32 %s979, 1
      %p983 = scmp.eq.s32.totalorder %s121, 1
      %p984 = scmp.ne.s32.totalorder %s979, %s981
      %p985 = scmp.eq.s32.totalorder %s121, 0
      %p986 = por %p984, %p985
      %p987 = scmp.ne.s32.totalorder %s979, %s981
      %p988 = scmp.eq.s32.totalorder %s126, 1
      %p989 = por %p987, %p988
      %p990 = scmp.ne.s32.totalorder %s981, %s982
      %p991 = scmp.eq.s32.totalorder %s126, 0
      %p992 = por %p990, %p991
      %p993 = scmp.ne.s32.totalorder %s981, %s982
      %p994 = scmp.eq.s32.totalorder %s127, 1
      %p995 = por %p993, %p994
      %p997 = scmp.ne.s32.totalorder %s982, %s996
      %p998 = scmp.eq.s32.totalorder %s127, 0
      %p999 = por %p997, %p998
      %s1001 = sadd.s32 %s1000, 1
      %p1004 = scmp.eq.s32.totalorder %s121, 1
      %p1005 = scmp.ne.s32.totalorder %s1000, %s1002
      %p1006 = scmp.eq.s32.totalorder %s121, 0
      %p1007 = por %p1005, %p1006
      %p1008 = scmp.ne.s32.totalorder %s1000, %s1002
      %p1009 = scmp.eq.s32.totalorder %s126, 1
      %p1010 = por %p1008, %p1009
      %p1011 = scmp.ne.s32.totalorder %s1002, %s1003
      %p1012 = scmp.eq.s32.totalorder %s126, 0
      %p1013 = por %p1011, %p1012
      %p1014 = scmp.ne.s32.totalorder %s1002, %s1003
      %p1015 = scmp.eq.s32.totalorder %s127, 1
      %p1016 = por %p1014, %p1015
      %p1018 = scmp.ne.s32.totalorder %s1003, %s1017
      %p1019 = scmp.eq.s32.totalorder %s127, 0
      %p1020 = por %p1018, %p1019
      %s1022 = sadd.s32 %s1021, 1
      %p1025 = scmp.eq.s32.totalorder %s121, 1
      %p1026 = scmp.ne.s32.totalorder %s1021, %s1023
      %p1027 = scmp.eq.s32.totalorder %s121, 0
      %p1028 = por %p1026, %p1027
      %p1029 = scmp.ne.s32.totalorder %s1021, %s1023
      %p1030 = scmp.eq.s32.totalorder %s126, 1
      %p1031 = por %p1029, %p1030
      %p1032 = scmp.ne.s32.totalorder %s1023, %s1024
      %p1033 = scmp.eq.s32.totalorder %s126, 0
      %p1034 = por %p1032, %p1033
      %p1035 = scmp.ne.s32.totalorder %s1023, %s1024
      %p1036 = scmp.eq.s32.totalorder %s127, 1
      %p1037 = por %p1035, %p1036
      %p1039 = scmp.ne.s32.totalorder %s1024, %s1038
      %p1040 = scmp.eq.s32.totalorder %s127, 0
      %p1041 = por %p1039, %p1040
      %s1042 = ssub.s32 %s121, %s128
      %p1043 = scmp.eq.s32.totalorder %s1042, 0
      %s1045 = sadd.s32 %s1044, 1
      %s1046 = scalar_select %p1043, %s1044, %s1045
      %p1049 = pneg %p1043
      %p1050 = scmp.eq.s32.totalorder %s121, 1
      %p1051 = por %p1049, %p1050
      %p1052 = scmp.ne.s32.totalorder %s1044, %s1047
      %p1053 = scmp.eq.s32.totalorder %s121, 0
      %p1054 = por %p1052, %p1053
      %p1055 = scmp.ne.s32.totalorder %s1044, %s1047
      %p1056 = scmp.eq.s32.totalorder %s126, 1
      %p1057 = por %p1055, %p1056
      %p1058 = scmp.ne.s32.totalorder %s1047, %s1048
      %p1059 = scmp.eq.s32.totalorder %s126, 0
      %p1060 = por %p1058, %p1059
      %p1061 = scmp.ne.s32.totalorder %s1047, %s1048
      %p1062 = scmp.eq.s32.totalorder %s127, 1
      %p1063 = por %p1061, %p1062
      %p1065 = scmp.ne.s32.totalorder %s1048, %s1064
      %p1066 = scmp.eq.s32.totalorder %s127, 0
      %p1067 = por %p1065, %p1066
      %p1068 = scmp.le.s32.totalorder 1, %s121
      %p1069 = scmp.lt.s32.totalorder %s121, 3
      %p1070 = pnand %p1068, %p1069
      %p1071 = pneg %p1070
      // Predicated region
      $region9: #{run.1} parent=5 // pred_check
        _
      $region10: #{run.1} parent=5 // pred_check_branch
        %1073 = sbr.rel (%p1070) target = $region12
      $region11: #{run.1} parent=5 // pred_region
        %s1074 = ssub.s32 %s121, 1
        // Predicated region
        $region13: #{run.1} parent=11 // pred_check
          %p1075 = pneg %p194
        $region14: #{run.1} parent=11 // pred_check_branch
          %1077 = sbr.rel (%p1075) target = $region16
        $region15: #{run.1} parent=11 // pred_region
          _
        $region16: #{run.1} parent=11 // pred_fallthru
          _
        // Predicated region
        $region17: #{run.1} parent=11 // pred_check
          %p1078 = pneg %p215
        $region18: #{run.1} parent=11 // pred_check_branch
          %1080 = sbr.rel (%p1078) target = $region20
        $region19: #{run.1} parent=11 // pred_region
          %1082 = vsyncadd [#allocation6], 0
          %s1083 = sshll.u32 %s7, 4
          %s1084 = int_to_ptr.hbm [resolvable:$true] %s1083
          %s1085 = sshll.u32 [#allocation7], 4
          %s1086 = int_to_ptr.vmem [resolvable:$true] %s1085
          %1091 = dma.hbm_to_vmem [thread:$0]  %s1084, 256, %s1086, [#allocation6], 128, 128, 8
        $region20: #{run.1} parent=11 // pred_fallthru
          _
        // Predicated region
        $region21: #{run.1} parent=11 // pred_check
          %p1092 = pneg %p236
        $region22: #{run.1} parent=11 // pred_check_branch
          %1094 = sbr.rel (%p1092) target = $region24
        $region23: #{run.1} parent=11 // pred_region
          %1096 = vsyncadd [#allocation9], 0
          %s1097 = sshll.u32 %s9, 4
          %s1098 = int_to_ptr.hbm [resolvable:$true] %s1097
          %s1099 = sshll.u32 [#allocation8], 4
          %s1100 = int_to_ptr.vmem [resolvable:$true] %s1099
          %1105 = dma.hbm_to_vmem [thread:$0]  %s1098, 256, %s1100, [#allocation9], 128, 128, 8
        $region24: #{run.1} parent=11 // pred_fallthru
          _
        // Predicated region
        $region25: #{run.1} parent=11 // pred_check
          %p1106 = pneg %p257
        $region26: #{run.1} parent=11 // pred_check_branch
          %1108 = sbr.rel (%p1106) target = $region28
        $region27: #{run.1} parent=11 // pred_region
          %1110 = vsyncadd [#allocation9], 0
          %s1112 = sshll.u32 %s11, 4
          %s1113 = int_to_ptr.hbm [resolvable:$true] %s1112
          %s1114 = sshll.u32 [#allocation10], 4
          %s1115 = int_to_ptr.vmem [resolvable:$true] %s1114
          %1117 = dma.hbm_to_vmem [thread:$0]  %s1113, 128, %s1115, [#allocation9]
        $region28: #{run.1} parent=11 // pred_fallthru
          _
        // Predicated region
        $region29: #{run.1} parent=11 // pred_check
          %p1118 = pneg %p278
        $region30: #{run.1} parent=11 // pred_check_branch
          %1120 = sbr.rel (%p1118) target = $region32
        $region31: #{run.1} parent=11 // pred_region
          %1122 = vsyncadd [#allocation12], 0
          %s1124 = sshll.u32 %s13, 4
          %s1125 = int_to_ptr.hbm [resolvable:$true] %s1124
          %s1126 = sshll.u32 [#allocation11], 4
          %s1127 = int_to_ptr.vmem [resolvable:$true] %s1126
          %1129 = dma.hbm_to_vmem [thread:$0]  %s1125, 128, %s1127, [#allocation12]
        $region32: #{run.1} parent=11 // pred_fallthru
          _
        // Predicated region
        $region33: #{run.1} parent=11 // pred_check
          %p1130 = pneg %p299
        $region34: #{run.1} parent=11 // pred_check_branch
          %1132 = sbr.rel (%p1130) target = $region36
        $region35: #{run.1} parent=11 // pred_region
          %1134 = vsyncadd [#allocation12], 0
          %s1136 = sshll.u32 %s15, 4
          %s1137 = int_to_ptr.hbm [resolvable:$true] %s1136
          %s1138 = sshll.u32 [#allocation13], 4
          %s1139 = int_to_ptr.vmem [resolvable:$true] %s1138
          %1141 = dma.hbm_to_vmem [thread:$0]  %s1137, 128, %s1139, [#allocation12]
        $region36: #{run.1} parent=11 // pred_fallthru
          _
        // Predicated region
        $region37: #{run.1} parent=11 // pred_check
          %p1142 = pneg %p320
        $region38: #{run.1} parent=11 // pred_check_branch
          %1144 = sbr.rel (%p1142) target = $region40
        $region39: #{run.1} parent=11 // pred_region
          %1146 = vsyncadd [#allocation15], 0
          %s1148 = sshll.u32 %s17, 4
          %s1149 = int_to_ptr.hbm [resolvable:$true] %s1148
          %s1150 = sshll.u32 [#allocation14], 4
          %s1151 = int_to_ptr.vmem [resolvable:$true] %s1150
          %1153 = dma.hbm_to_vmem [thread:$0]  %s1149, 128, %s1151, [#allocation15]
        $region40: #{run.1} parent=11 // pred_fallthru
          _
        // Predicated region
        $region41: #{run.1} parent=11 // pred_check
          %p1154 = pneg %p341
        $region42: #{run.1} parent=11 // pred_check_branch
          %1156 = sbr.rel (%p1154) target = $region44
        $region43: #{run.1} parent=11 // pred_region
          %1158 = vsyncadd [#allocation15], 0
          %s1160 = sshll.u32 %s19, 4
          %s1161 = int_to_ptr.hbm [resolvable:$true] %s1160
          %s1162 = sshll.u32 [#allocation16], 4
          %s1163 = int_to_ptr.vmem [resolvable:$true] %s1162
          %1165 = dma.hbm_to_vmem [thread:$0]  %s1161, 64, %s1163, [#allocation15]
        $region44: #{run.1} parent=11 // pred_fallthru
          _
        // Predicated region
        $region45: #{run.1} parent=11 // pred_check
          %p1166 = pneg %p362
        $region46: #{run.1} parent=11 // pred_check_branch
          %1168 = sbr.rel (%p1166) target = $region48
        $region47: #{run.1} parent=11 // pred_region
          %1170 = vsyncadd [#allocation18], 0
          %s1172 = sshll.u32 %s21, 4
          %s1173 = int_to_ptr.hbm [resolvable:$true] %s1172
          %s1174 = sshll.u32 [#allocation17], 4
          %s1175 = int_to_ptr.vmem [resolvable:$true] %s1174
          %1177 = dma.hbm_to_vmem [thread:$0]  %s1173, 64, %s1175, [#allocation18]
        $region48: #{run.1} parent=11 // pred_fallthru
          _
        // Predicated region
        $region49: #{run.1} parent=11 // pred_check
          %p1178 = pneg %p383
        $region50: #{run.1} parent=11 // pred_check_branch
          %1180 = sbr.rel (%p1178) target = $region52
        $region51: #{run.1} parent=11 // pred_region
          %1182 = vsyncadd [#allocation18], 0
          %s1184 = sshll.u32 %s23, 4
          %s1185 = int_to_ptr.hbm [resolvable:$true] %s1184
          %s1186 = sshll.u32 [#allocation19], 4
          %s1187 = int_to_ptr.vmem [resolvable:$true] %s1186
          %1189 = dma.hbm_to_vmem [thread:$0]  %s1185, 64, %s1187, [#allocation18]
        $region52: #{run.1} parent=11 // pred_fallthru
          _
        // Predicated region
        $region53: #{run.1} parent=11 // pred_check
          %p1190 = pneg %p404
        $region54: #{run.1} parent=11 // pred_check_branch
          %1192 = sbr.rel (%p1190) target = $region56
        $region55: #{run.1} parent=11 // pred_region
          %1194 = vsyncadd [#allocation21], 0
          %s1196 = sshll.u32 %s25, 4
          %s1197 = int_to_ptr.hbm [resolvable:$true] %s1196
          %s1198 = sshll.u32 [#allocation20], 4
          %s1199 = int_to_ptr.vmem [resolvable:$true] %s1198
          %1201 = dma.hbm_to_vmem [thread:$0]  %s1197, 64, %s1199, [#allocation21]
        $region56: #{run.1} parent=11 // pred_fallthru
          _
        // Predicated region
        $region57: #{run.1} parent=11 // pred_check
          %p1202 = pneg %p425
        $region58: #{run.1} parent=11 // pred_check_branch
          %1204 = sbr.rel (%p1202) target = $region60
        $region59: #{run.1} parent=11 // pred_region
          %1206 = vsyncadd [#allocation21], 0
          %s1208 = sshll.u32 %s27, 4
          %s1209 = int_to_ptr.hbm [resolvable:$true] %s1208
          %s1210 = sshll.u32 [#allocation22], 4
          %s1211 = int_to_ptr.vmem [resolvable:$true] %s1210
          %1213 = dma.hbm_to_vmem [thread:$0]  %s1209, 128, %s1211, [#allocation21]
        $region60: #{run.1} parent=11 // pred_fallthru
          _
        // Predicated region
        $region61: #{run.1} parent=11 // pred_check
          %p1214 = pneg %p446
        $region62: #{run.1} parent=11 // pred_check_branch
          %1216 = sbr.rel (%p1214) target = $region64
        $region63: #{run.1} parent=11 // pred_region
          %1218 = vsyncadd [#allocation24], 0
          %s1220 = sshll.u32 %s29, 4
          %s1221 = int_to_ptr.hbm [resolvable:$true] %s1220
          %s1222 = sshll.u32 [#allocation23], 4
          %s1223 = int_to_ptr.vmem [resolvable:$true] %s1222
          %1225 = dma.hbm_to_vmem [thread:$0]  %s1221, 128, %s1223, [#allocation24]
        $region64: #{run.1} parent=11 // pred_fallthru
          _
        // Predicated region
        $region65: #{run.1} parent=11 // pred_check
          %p1226 = pneg %p467
        $region66: #{run.1} parent=11 // pred_check_branch
          %1228 = sbr.rel (%p1226) target = $region68
        $region67: #{run.1} parent=11 // pred_region
          %1230 = vsyncadd [#allocation24], 0
          %s1232 = sshll.u32 %s31, 4
          %s1233 = int_to_ptr.hbm [resolvable:$true] %s1232
          %s1234 = sshll.u32 [#allocation25], 4
          %s1235 = int_to_ptr.vmem [resolvable:$true] %s1234
          %1237 = dma.hbm_to_vmem [thread:$0]  %s1233, 128, %s1235, [#allocation24]
        $region68: #{run.1} parent=11 // pred_fallthru
          _
        // Predicated region
        $region69: #{run.1} parent=11 // pred_check
          %p1238 = pneg %p488
        $region70: #{run.1} parent=11 // pred_check_branch
          %1240 = sbr.rel (%p1238) target = $region72
        $region71: #{run.1} parent=11 // pred_region
          %1242 = vsyncadd [#allocation27], 0
          %s1244 = sshll.u32 %s33, 4
          %s1245 = int_to_ptr.hbm [resolvable:$true] %s1244
          %s1246 = sshll.u32 [#allocation26], 4
          %s1247 = int_to_ptr.vmem [resolvable:$true] %s1246
          %1249 = dma.hbm_to_vmem [thread:$0]  %s1245, 64, %s1247, [#allocation27]
        $region72: #{run.1} parent=11 // pred_fallthru
          _
        // Predicated region
        $region73: #{run.1} parent=11 // pred_check
          %p1250 = pneg %p509
        $region74: #{run.1} parent=11 // pred_check_branch
          %1252 = sbr.rel (%p1250) target = $region76
        $region75: #{run.1} parent=11 // pred_region
          %1254 = vsyncadd [#allocation27], 0
          %s1256 = sshll.u32 %s35, 4
          %s1257 = int_to_ptr.hbm [resolvable:$true] %s1256
          %s1258 = sshll.u32 [#allocation28], 4
          %s1259 = int_to_ptr.vmem [resolvable:$true] %s1258
          %1261 = dma.hbm_to_vmem [thread:$0]  %s1257, 64, %s1259, [#allocation27]
        $region76: #{run.1} parent=11 // pred_fallthru
          _
        // Predicated region
        $region77: #{run.1} parent=11 // pred_check
          %p1262 = pneg %p530
        $region78: #{run.1} parent=11 // pred_check_branch
          %1264 = sbr.rel (%p1262) target = $region80
        $region79: #{run.1} parent=11 // pred_region
          %1266 = vsyncadd [#allocation30], 0
          %s1268 = sshll.u32 %s37, 4
          %s1269 = int_to_ptr.hbm [resolvable:$true] %s1268
          %s1270 = sshll.u32 [#allocation29], 4
          %s1271 = int_to_ptr.vmem [resolvable:$true] %s1270
          %1273 = dma.hbm_to_vmem [thread:$0]  %s1269, 64, %s1271, [#allocation30]
        $region80: #{run.1} parent=11 // pred_fallthru
          _
        // Predicated region
        $region81: #{run.1} parent=11 // pred_check
          %p1274 = pneg %p551
        $region82: #{run.1} parent=11 // pred_check_branch
          %1276 = sbr.rel (%p1274) target = $region84
        $region83: #{run.1} parent=11 // pred_region
          %1278 = vsyncadd [#allocation30], 0
          %s1280 = sshll.u32 %s39, 4
          %s1281 = int_to_ptr.hbm [resolvable:$true] %s1280
          %s1282 = sshll.u32 [#allocation31], 4
          %s1283 = int_to_ptr.vmem [resolvable:$true] %s1282
          %1285 = dma.hbm_to_vmem [thread:$0]  %s1281, 64, %s1283, [#allocation30]
        $region84: #{run.1} parent=11 // pred_fallthru
          _
        // Predicated region
        $region85: #{run.1} parent=11 // pred_check
          %p1286 = pneg %p572
        $region86: #{run.1} parent=11 // pred_check_branch
          %1288 = sbr.rel (%p1286) target = $region88
        $region87: #{run.1} parent=11 // pred_region
          %1290 = vsyncadd [#allocation33], 0
          %s1292 = sshll.u32 %s41, 4
          %s1293 = int_to_ptr.hbm [resolvable:$true] %s1292
          %s1294 = sshll.u32 [#allocation32], 4
          %s1295 = int_to_ptr.vmem [resolvable:$true] %s1294
          %1297 = dma.hbm_to_vmem [thread:$0]  %s1293, 64, %s1295, [#allocation33]
        $region88: #{run.1} parent=11 // pred_fallthru
          _
        // Predicated region
        $region89: #{run.1} parent=11 // pred_check
          %p1298 = pneg %p593
        $region90: #{run.1} parent=11 // pred_check_branch
          %1300 = sbr.rel (%p1298) target = $region92
        $region91: #{run.1} parent=11 // pred_region
          %1302 = vsyncadd [#allocation33], 0
          %s1303 = sshll.u32 %s43, 4
          %s1304 = int_to_ptr.hbm [resolvable:$true] %s1303
          %s1305 = sshll.u32 [#allocation34], 4
          %s1306 = int_to_ptr.vmem [resolvable:$true] %s1305
          %1311 = dma.hbm_to_vmem [thread:$0]  %s1304, 256, %s1306, [#allocation33], 128, 128, 8
        $region92: #{run.1} parent=11 // pred_fallthru
          _
        // Predicated region
        $region93: #{run.1} parent=11 // pred_check
          %p1312 = pneg %p614
        $region94: #{run.1} parent=11 // pred_check_branch
          %1314 = sbr.rel (%p1312) target = $region96
        $region95: #{run.1} parent=11 // pred_region
          %1316 = vsyncadd [#allocation36], 0
          %s1317 = sshll.u32 %s45, 4
          %s1318 = int_to_ptr.hbm [resolvable:$true] %s1317
          %s1319 = sshll.u32 [#allocation35], 4
          %s1320 = int_to_ptr.vmem [resolvable:$true] %s1319
          %1325 = dma.hbm_to_vmem [thread:$0]  %s1318, 256, %s1320, [#allocation36], 128, 128, 8
        $region96: #{run.1} parent=11 // pred_fallthru
          _
        // Predicated region
        $region97: #{run.1} parent=11 // pred_check
          %p1326 = pneg %p635
        $region98: #{run.1} parent=11 // pred_check_branch
          %1328 = sbr.rel (%p1326) target = $region100
        $region99: #{run.1} parent=11 // pred_region
          %1330 = vsyncadd [#allocation36], 0
          %s1331 = sshll.u32 %s47, 4
          %s1332 = int_to_ptr.hbm [resolvable:$true] %s1331
          %s1333 = sshll.u32 [#allocation37], 4
          %s1334 = int_to_ptr.vmem [resolvable:$true] %s1333
          %1339 = dma.hbm_to_vmem [thread:$0]  %s1332, 512, %s1334, [#allocation36], 128, 128, 8
        $region100: #{run.1} parent=11 // pred_fallthru
          _
        // Predicated region
        $region101: #{run.1} parent=11 // pred_check
          %p1340 = pneg %p656
        $region102: #{run.1} parent=11 // pred_check_branch
          %1342 = sbr.rel (%p1340) target = $region104
        $region103: #{run.1} parent=11 // pred_region
          %1344 = vsyncadd [#allocation39], 0
          %s1345 = sshll.u32 %s49, 4
          %s1346 = int_to_ptr.hbm [resolvable:$true] %s1345
          %s1347 = sshll.u32 [#allocation38], 4
          %s1348 = int_to_ptr.vmem [resolvable:$true] %s1347
          %1353 = dma.hbm_to_vmem [thread:$0]  %s1346, 512, %s1348, [#allocation39], 128, 128, 8
        $region104: #{run.1} parent=11 // pred_fallthru
          _
        // Predicated region
        $region105: #{run.1} parent=11 // pred_check
          %p1354 = pneg %p677
        $region106: #{run.1} parent=11 // pred_check_branch
          %1356 = sbr.rel (%p1354) target = $region108
        $region107: #{run.1} parent=11 // pred_region
          %1358 = vsyncadd [#allocation39], 0
          %s1359 = sshll.u32 %s51, 4
          %s1360 = int_to_ptr.hbm [resolvable:$true] %s1359
          %s1361 = sshll.u32 [#allocation40], 4
          %s1362 = int_to_ptr.vmem [resolvable:$true] %s1361
          %1367 = dma.hbm_to_vmem [thread:$0]  %s1360, 512, %s1362, [#allocation39], 128, 128, 8
        $region108: #{run.1} parent=11 // pred_fallthru
          _
        // Predicated region
        $region109: #{run.1} parent=11 // pred_check
          %p1368 = pneg %p698
        $region110: #{run.1} parent=11 // pred_check_branch
          %1370 = sbr.rel (%p1368) target = $region112
        $region111: #{run.1} parent=11 // pred_region
          %1372 = vsyncadd [#allocation42], 0
          %s1373 = sshll.u32 %s53, 4
          %s1374 = int_to_ptr.hbm [resolvable:$true] %s1373
          %s1375 = sshll.u32 [#allocation41], 4
          %s1376 = int_to_ptr.vmem [resolvable:$true] %s1375
          %1381 = dma.hbm_to_vmem [thread:$0]  %s1374, 512, %s1376, [#allocation42], 128, 128, 8
        $region112: #{run.1} parent=11 // pred_fallthru
          _
        // Predicated region
        $region113: #{run.1} parent=11 // pred_check
          %p1382 = pneg %p719
        $region114: #{run.1} parent=11 // pred_check_branch
          %1384 = sbr.rel (%p1382) target = $region116
        $region115: #{run.1} parent=11 // pred_region
          %1386 = vsyncadd [#allocation42], 0
          %s1387 = sshll.u32 %s55, 4
          %s1388 = int_to_ptr.hbm [resolvable:$true] %s1387
          %s1389 = sshll.u32 [#allocation43], 4
          %s1390 = int_to_ptr.vmem [resolvable:$true] %s1389
          %1395 = dma.hbm_to_vmem [thread:$0]  %s1388, 512, %s1390, [#allocation42], 128, 128, 8
        $region116: #{run.1} parent=11 // pred_fallthru
          _
        // Predicated region
        $region117: #{run.1} parent=11 // pred_check
          %p1396 = pneg %p740
        $region118: #{run.1} parent=11 // pred_check_branch
          %1398 = sbr.rel (%p1396) target = $region120
        $region119: #{run.1} parent=11 // pred_region
          %1400 = vsyncadd [#allocation45], 0
          %s1401 = sshll.u32 %s57, 4
          %s1402 = int_to_ptr.hbm [resolvable:$true] %s1401
          %s1403 = sshll.u32 [#allocation44], 4
          %s1404 = int_to_ptr.vmem [resolvable:$true] %s1403
          %1409 = dma.hbm_to_vmem [thread:$0]  %s1402, 256, %s1404, [#allocation45], 128, 128, 8
        $region120: #{run.1} parent=11 // pred_fallthru
          _
        // Predicated region
        $region121: #{run.1} parent=11 // pred_check
          %p1410 = pneg %p761
        $region122: #{run.1} parent=11 // pred_check_branch
          %1412 = sbr.rel (%p1410) target = $region124
        $region123: #{run.1} parent=11 // pred_region
          %1414 = vsyncadd [#allocation45], 0
          %s1415 = sshll.u32 %s59, 4
          %s1416 = int_to_ptr.hbm [resolvable:$true] %s1415
          %s1417 = sshll.u32 [#allocation46], 4
          %s1418 = int_to_ptr.vmem [resolvable:$true] %s1417
          %1423 = dma.hbm_to_vmem [thread:$0]  %s1416, 512, %s1418, [#allocation45], 128, 128, 8
        $region124: #{run.1} parent=11 // pred_fallthru
          _
        // Predicated region
        $region125: #{run.1} parent=11 // pred_check
          %p1424 = pneg %p782
        $region126: #{run.1} parent=11 // pred_check_branch
          %1426 = sbr.rel (%p1424) target = $region128
        $region127: #{run.1} parent=11 // pred_region
          %1428 = vsyncadd [#allocation48], 0
          %s1429 = sshll.u32 %s61, 4
          %s1430 = int_to_ptr.hbm [resolvable:$true] %s1429
          %s1431 = sshll.u32 [#allocation47], 4
          %s1432 = int_to_ptr.vmem [resolvable:$true] %s1431
          %1437 = dma.hbm_to_vmem [thread:$0]  %s1430, 256, %s1432, [#allocation48], 128, 128, 8
        $region128: #{run.1} parent=11 // pred_fallthru
          _
        // Predicated region
        $region129: #{run.1} parent=11 // pred_check
          %p1438 = pneg %p803
        $region130: #{run.1} parent=11 // pred_check_branch
          %1440 = sbr.rel (%p1438) target = $region132
        $region131: #{run.1} parent=11 // pred_region
          %1442 = vsyncadd [#allocation48], 0
          %s1444 = sshll.u32 %s63, 4
          %s1445 = int_to_ptr.hbm [resolvable:$true] %s1444
          %s1446 = sshll.u32 [#allocation49], 4
          %s1447 = int_to_ptr.vmem [resolvable:$true] %s1446
          %1449 = dma.hbm_to_vmem [thread:$0]  %s1445, 64, %s1447, [#allocation48]
        $region132: #{run.1} parent=11 // pred_fallthru
          _
        // Predicated region
        $region133: #{run.1} parent=11 // pred_check
          %p1450 = pneg %p824
        $region134: #{run.1} parent=11 // pred_check_branch
          %1452 = sbr.rel (%p1450) target = $region136
        $region135: #{run.1} parent=11 // pred_region
          _
        $region136: #{run.1} parent=11 // pred_fallthru
          _
        // Predicated region
        $region137: #{run.1} parent=11 // pred_check
          %p1453 = pneg %p845
        $region138: #{run.1} parent=11 // pred_check_branch
          %1455 = sbr.rel (%p1453) target = $region140
        $region139: #{run.1} parent=11 // pred_region
          %1457 = vsyncadd [#allocation51], 0
          %s1458 = sshll.u32 %s67, 4
          %s1459 = int_to_ptr.hbm [resolvable:$true] %s1458
          %s1460 = sshll.u32 [#allocation50], 4
          %s1461 = int_to_ptr.vmem [resolvable:$true] %s1460
          %1466 = dma.hbm_to_vmem [thread:$0]  %s1459, 256, %s1461, [#allocation51], 128, 128, 8
        $region140: #{run.1} parent=11 // pred_fallthru
          _
        // Predicated region
        $region141: #{run.1} parent=11 // pred_check
          %p1467 = pneg %p866
        $region142: #{run.1} parent=11 // pred_check_branch
          %1469 = sbr.rel (%p1467) target = $region144
        $region143: #{run.1} parent=11 // pred_region
          %1471 = vsyncadd [#allocation51], 0
          %s1472 = sshll.u32 %s69, 4
          %s1473 = int_to_ptr.hbm [resolvable:$true] %s1472
          %s1474 = sshll.u32 [#allocation52], 4
          %s1475 = int_to_ptr.vmem [resolvable:$true] %s1474
          %1480 = dma.hbm_to_vmem [thread:$0]  %s1473, 256, %s1475, [#allocation51], 128, 128, 8
        $region144: #{run.1} parent=11 // pred_fallthru
          _
        // Predicated region
        $region145: #{run.1} parent=11 // pred_check
          %p1481 = pneg %p887
        $region146: #{run.1} parent=11 // pred_check_branch
          %1483 = sbr.rel (%p1481) target = $region148
        $region147: #{run.1} parent=11 // pred_region
          %1485 = vsyncadd [#allocation54], 0
          %s1486 = sshll.u32 %s71, 4
          %s1487 = int_to_ptr.hbm [resolvable:$true] %s1486
          %s1488 = sshll.u32 [#allocation53], 4
          %s1489 = int_to_ptr.vmem [resolvable:$true] %s1488
          %1494 = dma.hbm_to_vmem [thread:$0]  %s1487, 512, %s1489, [#allocation54], 128, 128, 8
        $region148: #{run.1} parent=11 // pred_fallthru
          _
        // Predicated region
        $region149: #{run.1} parent=11 // pred_check
          %p1495 = pneg %p908
        $region150: #{run.1} parent=11 // pred_check_branch
          %1497 = sbr.rel (%p1495) target = $region152
        $region151: #{run.1} parent=11 // pred_region
          %1499 = vsyncadd [#allocation54], 0
          %s1500 = sshll.u32 %s73, 4
          %s1501 = int_to_ptr.hbm [resolvable:$true] %s1500
          %s1502 = sshll.u32 [#allocation55], 4
          %s1503 = int_to_ptr.vmem [resolvable:$true] %s1502
          %1508 = dma.hbm_to_vmem [thread:$0]  %s1501, 512, %s1503, [#allocation54], 128, 128, 8
        $region152: #{run.1} parent=11 // pred_fallthru
          _
        // Predicated region
        $region153: #{run.1} parent=11 // pred_check
          %p1509 = pneg %p929
        $region154: #{run.1} parent=11 // pred_check_branch
          %1511 = sbr.rel (%p1509) target = $region156
        $region155: #{run.1} parent=11 // pred_region
          %1513 = vsyncadd [#allocation57], 0
          %s1514 = sshll.u32 %s75, 4
          %s1515 = int_to_ptr.hbm [resolvable:$true] %s1514
          %s1516 = sshll.u32 [#allocation56], 4
          %s1517 = int_to_ptr.vmem [resolvable:$true] %s1516
          %1522 = dma.hbm_to_vmem [thread:$0]  %s1515, 512, %s1517, [#allocation57], 128, 128, 8
        $region156: #{run.1} parent=11 // pred_fallthru
          _
        // Predicated region
        $region157: #{run.1} parent=11 // pred_check
          %p1523 = pneg %p950
        $region158: #{run.1} parent=11 // pred_check_branch
          %1525 = sbr.rel (%p1523) target = $region160
        $region159: #{run.1} parent=11 // pred_region
          %1527 = vsyncadd [#allocation57], 0
          %s1528 = sshll.u32 %s77, 4
          %s1529 = int_to_ptr.hbm [resolvable:$true] %s1528
          %s1530 = sshll.u32 [#allocation58], 4
          %s1531 = int_to_ptr.vmem [resolvable:$true] %s1530
          %1536 = dma.hbm_to_vmem [thread:$0]  %s1529, 512, %s1531, [#allocation57], 128, 128, 8
        $region160: #{run.1} parent=11 // pred_fallthru
          _
        // Predicated region
        $region161: #{run.1} parent=11 // pred_check
          %p1537 = pneg %p971
        $region162: #{run.1} parent=11 // pred_check_branch
          %1539 = sbr.rel (%p1537) target = $region164
        $region163: #{run.1} parent=11 // pred_region
          %1541 = vsyncadd [#allocation60], 0
          %s1542 = sshll.u32 %s79, 4
          %s1543 = int_to_ptr.hbm [resolvable:$true] %s1542
          %s1544 = sshll.u32 [#allocation59], 4
          %s1545 = int_to_ptr.vmem [resolvable:$true] %s1544
          %1550 = dma.hbm_to_vmem [thread:$0]  %s1543, 512, %s1545, [#allocation60], 128, 128, 8
        $region164: #{run.1} parent=11 // pred_fallthru
          _
        // Predicated region
        $region165: #{run.1} parent=11 // pred_check
          %p1551 = pneg %p992
        $region166: #{run.1} parent=11 // pred_check_branch
          %1553 = sbr.rel (%p1551) target = $region168
        $region167: #{run.1} parent=11 // pred_region
          %1555 = vsyncadd [#allocation60], 0
          %s1556 = sshll.u32 %s81, 4
          %s1557 = int_to_ptr.hbm [resolvable:$true] %s1556
          %s1558 = sshll.u32 [#allocation61], 4
          %s1559 = int_to_ptr.vmem [resolvable:$true] %s1558
          %1564 = dma.hbm_to_vmem [thread:$0]  %s1557, 256, %s1559, [#allocation60], 128, 128, 8
        $region168: #{run.1} parent=11 // pred_fallthru
          _
        // Predicated region
        $region169: #{run.1} parent=11 // pred_check
          %p1565 = pneg %p1013
        $region170: #{run.1} parent=11 // pred_check_branch
          %1567 = sbr.rel (%p1565) target = $region172
        $region171: #{run.1} parent=11 // pred_region
          _
        $region172: #{run.1} parent=11 // pred_fallthru
          _
        // Predicated region
        $region173: #{run.1} parent=11 // pred_check
          %p1568 = pneg %p1034
        $region174: #{run.1} parent=11 // pred_check_branch
          %1570 = sbr.rel (%p1568) target = $region176
        $region175: #{run.1} parent=11 // pred_region
          %1572 = vsyncadd [#allocation63], 0
          %s1573 = sshll.u32 %s85, 4
          %s1574 = int_to_ptr.hbm [resolvable:$true] %s1573
          %s1575 = sshll.u32 [#allocation62], 4
          %s1576 = int_to_ptr.vmem [resolvable:$true] %s1575
          %1581 = dma.hbm_to_vmem [thread:$0]  %s1574, 256, %s1576, [#allocation63], 128, 128, 8
        $region176: #{run.1} parent=11 // pred_fallthru
          _
      $region12: #{run.1} parent=5 // pred_fallthru
        _
      %p1582 = scmp.lt.s32.totalorder %s121, 2
      // Predicated region
      $region177: #{run.1} parent=5 // pred_check
        %p1583 = pneg %p1582
      $region178: #{run.1} parent=5 // pred_check_branch
        %1585 = sbr.rel (%p1583) target = $region180
      $region179: #{run.1} parent=5 // pred_region
        // Predicated region
        $region181: #{run.1} parent=179 // pred_check
          %p1586 = pneg %p141
        $region182: #{run.1} parent=179 // pred_check_branch
          %1588 = sbr.rel (%p1586) target = $region184
        $region183: #{run.1} parent=179 // pred_region
          %s1589 = sand.u32 %s131, 1
          %s1590 = scalar_lea.sflag [#allocation3], %s1589
          %s1591 = sand.u32 %s131, 1
          %s1592 = smul.addr %s1591, 8
          %s1593 = scalar_lea.vmem [#allocation2], %s1592
          %1595 = vsyncadd %s1590, 0
          %s1596 = smul.addr %s121, 8
          %s1597 = scalar_lea.hbm %s1, %s1596
          %s1599 = sshll.u32 %s1597, 4
          %s1600 = int_to_ptr.hbm [resolvable:$true] %s1599
          %s1601 = sshll.u32 %s1593, 4
          %s1602 = int_to_ptr.vmem [resolvable:$true] %s1601
          %1604 = dma.hbm_to_vmem [thread:$0]  %s1600, 128, %s1602, %s1590
        $region184: #{run.1} parent=179 // pred_fallthru
          _
        // Predicated region
        $region185: #{run.1} parent=179 // pred_check
          %p1605 = pneg %p167
        $region186: #{run.1} parent=179 // pred_check_branch
          %1607 = sbr.rel (%p1605) target = $region188
        $region187: #{run.1} parent=179 // pred_region
          %s1608 = sand.u32 %s121, 1
          %s1609 = scalar_lea.sflag [#allocation6], %s1608
          %s1610 = sand.u32 %s157, 1
          %s1611 = scalar_lea.vmem [#allocation5], %s1610
          %1613 = vsyncadd %s1609, 0
          %s1614 = scalar_lea.hbm %s3, %s121
          %s1616 = sshll.u32 %s1614, 4
          %s1617 = int_to_ptr.hbm [resolvable:$true] %s1616
          %s1618 = sshll.u32 %s1611, 4
          %s1619 = int_to_ptr.vmem [resolvable:$true] %s1618
          %1621 = dma.hbm_to_vmem [thread:$0]  %s1617, 16, %s1619, %s1609
        $region188: #{run.1} parent=179 // pred_fallthru
          _
      $region180: #{run.1} parent=5 // pred_fallthru
        _
      %p1622 = scmp.le.s32.totalorder 1, %s121
      %p1623 = scmp.lt.s32.totalorder %s121, 3
      %p1624 = pnand %p1622, %p1623
      %p1625 = pneg %p1624
      // Predicated region
      $region189: #{run.1} parent=5 // pred_check
        _
      $region190: #{run.1} parent=5 // pred_check_branch
        %1627 = sbr.rel (%p1624) target = $region192
      $region191: #{run.1} parent=5 // pred_region
        %s1628 = ssub.s32 %s121, 1
        %s1629 = sand.u32 %s134, 1
        %s1630 = scalar_lea.sflag [#allocation3], %s1629
        %s1631 = sand.u32 %s134, 1
        %s1632 = smul.addr %s1631, 8
        %s1633 = scalar_lea.vmem [#allocation2], %s1632
        // Predicated region
        $region193: #{run.1} parent=191 // pred_check
          %p1634 = pneg %p147
        $region194: #{run.1} parent=191 // pred_check_branch
          %1636 = sbr.rel (%p1634) target = $region196
        $region195: #{run.1} parent=191 // pred_region
          %1638 = dma.done %s1630, 128
        $region196: #{run.1} parent=191 // pred_fallthru
          _
        %s1639 = sand.u32 %s126, 1
        %s1640 = scalar_lea.sflag [#allocation6], %s1639
        %s1641 = sand.u32 %s160, 1
        %s1642 = scalar_lea.vmem [#allocation5], %s1641
        // Predicated region
        $region197: #{run.1} parent=191 // pred_check
          %p1643 = pneg %p173
        $region198: #{run.1} parent=191 // pred_check_branch
          %1645 = sbr.rel (%p1643) target = $region200
        $region199: #{run.1} parent=191 // pred_region
          %1647 = dma.done %s1640, 16
        $region200: #{run.1} parent=191 // pred_fallthru
          _
        // Predicated region
        $region201: #{run.1} parent=191 // pred_check
          %p1648 = pneg %p215
        $region202: #{run.1} parent=191 // pred_check_branch
          %1650 = sbr.rel (%p1648) target = $region204
        $region203: #{run.1} parent=191 // pred_region
          %1652 = dma.done [#allocation6], 256
        $region204: #{run.1} parent=191 // pred_fallthru
          _
        // Predicated region
        $region205: #{run.1} parent=191 // pred_check
          %p1653 = pneg %p236
        $region206: #{run.1} parent=191 // pred_check_branch
          %1655 = sbr.rel (%p1653) target = $region208
        $region207: #{run.1} parent=191 // pred_region
          %1657 = dma.done [#allocation9], 256
        $region208: #{run.1} parent=191 // pred_fallthru
          _
        // Predicated region
        $region209: #{run.1} parent=191 // pred_check
          %p1658 = pneg %p257
        $region210: #{run.1} parent=191 // pred_check_branch
          %1660 = sbr.rel (%p1658) target = $region212
        $region211: #{run.1} parent=191 // pred_region
          %1662 = dma.done [#allocation9], 128
        $region212: #{run.1} parent=191 // pred_fallthru
          _
        // Predicated region
        $region213: #{run.1} parent=191 // pred_check
          %p1663 = pneg %p278
        $region214: #{run.1} parent=191 // pred_check_branch
          %1665 = sbr.rel (%p1663) target = $region216
        $region215: #{run.1} parent=191 // pred_region
          %1667 = dma.done [#allocation12], 128
        $region216: #{run.1} parent=191 // pred_fallthru
          _
        // Predicated region
        $region217: #{run.1} parent=191 // pred_check
          %p1668 = pneg %p299
        $region218: #{run.1} parent=191 // pred_check_branch
          %1670 = sbr.rel (%p1668) target = $region220
        $region219: #{run.1} parent=191 // pred_region
          %1672 = dma.done [#allocation12], 128
        $region220: #{run.1} parent=191 // pred_fallthru
          _
        // Predicated region
        $region221: #{run.1} parent=191 // pred_check
          %p1673 = pneg %p320
        $region222: #{run.1} parent=191 // pred_check_branch
          %1675 = sbr.rel (%p1673) target = $region224
        $region223: #{run.1} parent=191 // pred_region
          %1677 = dma.done [#allocation15], 128
        $region224: #{run.1} parent=191 // pred_fallthru
          _
        // Predicated region
        $region225: #{run.1} parent=191 // pred_check
          %p1678 = pneg %p341
        $region226: #{run.1} parent=191 // pred_check_branch
          %1680 = sbr.rel (%p1678) target = $region228
        $region227: #{run.1} parent=191 // pred_region
          %1682 = dma.done [#allocation15], 64
        $region228: #{run.1} parent=191 // pred_fallthru
          _
        // Predicated region
        $region229: #{run.1} parent=191 // pred_check
          %p1683 = pneg %p362
        $region230: #{run.1} parent=191 // pred_check_branch
          %1685 = sbr.rel (%p1683) target = $region232
        $region231: #{run.1} parent=191 // pred_region
          %1687 = dma.done [#allocation18], 64
        $region232: #{run.1} parent=191 // pred_fallthru
          _
        // Predicated region
        $region233: #{run.1} parent=191 // pred_check
          %p1688 = pneg %p383
        $region234: #{run.1} parent=191 // pred_check_branch
          %1690 = sbr.rel (%p1688) target = $region236
        $region235: #{run.1} parent=191 // pred_region
          %1692 = dma.done [#allocation18], 64
        $region236: #{run.1} parent=191 // pred_fallthru
          _
        // Predicated region
        $region237: #{run.1} parent=191 // pred_check
          %p1693 = pneg %p404
        $region238: #{run.1} parent=191 // pred_check_branch
          %1695 = sbr.rel (%p1693) target = $region240
        $region239: #{run.1} parent=191 // pred_region
          %1697 = dma.done [#allocation21], 64
        $region240: #{run.1} parent=191 // pred_fallthru
          _
        // Predicated region
        $region241: #{run.1} parent=191 // pred_check
          %p1698 = pneg %p425
        $region242: #{run.1} parent=191 // pred_check_branch
          %1700 = sbr.rel (%p1698) target = $region244
        $region243: #{run.1} parent=191 // pred_region
          %1702 = dma.done [#allocation21], 128
        $region244: #{run.1} parent=191 // pred_fallthru
          _
        // Predicated region
        $region245: #{run.1} parent=191 // pred_check
          %p1703 = pneg %p446
        $region246: #{run.1} parent=191 // pred_check_branch
          %1705 = sbr.rel (%p1703) target = $region248
        $region247: #{run.1} parent=191 // pred_region
          %1707 = dma.done [#allocation24], 128
        $region248: #{run.1} parent=191 // pred_fallthru
          _
        // Predicated region
        $region249: #{run.1} parent=191 // pred_check
          %p1708 = pneg %p467
        $region250: #{run.1} parent=191 // pred_check_branch
          %1710 = sbr.rel (%p1708) target = $region252
        $region251: #{run.1} parent=191 // pred_region
          %1712 = dma.done [#allocation24], 128
        $region252: #{run.1} parent=191 // pred_fallthru
          _
        // Predicated region
        $region253: #{run.1} parent=191 // pred_check
          %p1713 = pneg %p488
        $region254: #{run.1} parent=191 // pred_check_branch
          %1715 = sbr.rel (%p1713) target = $region256
        $region255: #{run.1} parent=191 // pred_region
          %1717 = dma.done [#allocation27], 64
        $region256: #{run.1} parent=191 // pred_fallthru
          _
        // Predicated region
        $region257: #{run.1} parent=191 // pred_check
          %p1718 = pneg %p509
        $region258: #{run.1} parent=191 // pred_check_branch
          %1720 = sbr.rel (%p1718) target = $region260
        $region259: #{run.1} parent=191 // pred_region
          %1722 = dma.done [#allocation27], 64
        $region260: #{run.1} parent=191 // pred_fallthru
          _
        // Predicated region
        $region261: #{run.1} parent=191 // pred_check
          %p1723 = pneg %p530
        $region262: #{run.1} parent=191 // pred_check_branch
          %1725 = sbr.rel (%p1723) target = $region264
        $region263: #{run.1} parent=191 // pred_region
          %1727 = dma.done [#allocation30], 64
        $region264: #{run.1} parent=191 // pred_fallthru
          _
        // Predicated region
        $region265: #{run.1} parent=191 // pred_check
          %p1728 = pneg %p551
        $region266: #{run.1} parent=191 // pred_check_branch
          %1730 = sbr.rel (%p1728) target = $region268
        $region267: #{run.1} parent=191 // pred_region
          %1732 = dma.done [#allocation30], 64
        $region268: #{run.1} parent=191 // pred_fallthru
          _
        // Predicated region
        $region269: #{run.1} parent=191 // pred_check
          %p1733 = pneg %p572
        $region270: #{run.1} parent=191 // pred_check_branch
          %1735 = sbr.rel (%p1733) target = $region272
        $region271: #{run.1} parent=191 // pred_region
          %1737 = dma.done [#allocation33], 64
        $region272: #{run.1} parent=191 // pred_fallthru
          _
        // Predicated region
        $region273: #{run.1} parent=191 // pred_check
          %p1738 = pneg %p593
        $region274: #{run.1} parent=191 // pred_check_branch
          %1740 = sbr.rel (%p1738) target = $region276
        $region275: #{run.1} parent=191 // pred_region
          %1742 = dma.done [#allocation33], 256
        $region276: #{run.1} parent=191 // pred_fallthru
          _
        // Predicated region
        $region277: #{run.1} parent=191 // pred_check
          %p1743 = pneg %p614
        $region278: #{run.1} parent=191 // pred_check_branch
          %1745 = sbr.rel (%p1743) target = $region280
        $region279: #{run.1} parent=191 // pred_region
          %1747 = dma.done [#allocation36], 256
        $region280: #{run.1} parent=191 // pred_fallthru
          _
        // Predicated region
        $region281: #{run.1} parent=191 // pred_check
          %p1748 = pneg %p635
        $region282: #{run.1} parent=191 // pred_check_branch
          %1750 = sbr.rel (%p1748) target = $region284
        $region283: #{run.1} parent=191 // pred_region
          %1752 = dma.done [#allocation36], 512
        $region284: #{run.1} parent=191 // pred_fallthru
          _
        // Predicated region
        $region285: #{run.1} parent=191 // pred_check
          %p1753 = pneg %p656
        $region286: #{run.1} parent=191 // pred_check_branch
          %1755 = sbr.rel (%p1753) target = $region288
        $region287: #{run.1} parent=191 // pred_region
          %1757 = dma.done [#allocation39], 512
        $region288: #{run.1} parent=191 // pred_fallthru
          _
        // Predicated region
        $region289: #{run.1} parent=191 // pred_check
          %p1758 = pneg %p677
        $region290: #{run.1} parent=191 // pred_check_branch
          %1760 = sbr.rel (%p1758) target = $region292
        $region291: #{run.1} parent=191 // pred_region
          %1762 = dma.done [#allocation39], 512
        $region292: #{run.1} parent=191 // pred_fallthru
          _
        // Predicated region
        $region293: #{run.1} parent=191 // pred_check
          %p1763 = pneg %p698
        $region294: #{run.1} parent=191 // pred_check_branch
          %1765 = sbr.rel (%p1763) target = $region296
        $region295: #{run.1} parent=191 // pred_region
          %1767 = dma.done [#allocation42], 512
        $region296: #{run.1} parent=191 // pred_fallthru
          _
        // Predicated region
        $region297: #{run.1} parent=191 // pred_check
          %p1768 = pneg %p719
        $region298: #{run.1} parent=191 // pred_check_branch
          %1770 = sbr.rel (%p1768) target = $region300
        $region299: #{run.1} parent=191 // pred_region
          %1772 = dma.done [#allocation42], 512
        $region300: #{run.1} parent=191 // pred_fallthru
          _
        // Predicated region
        $region301: #{run.1} parent=191 // pred_check
          %p1773 = pneg %p740
        $region302: #{run.1} parent=191 // pred_check_branch
          %1775 = sbr.rel (%p1773) target = $region304
        $region303: #{run.1} parent=191 // pred_region
          %1777 = dma.done [#allocation45], 256
        $region304: #{run.1} parent=191 // pred_fallthru
          _
        // Predicated region
        $region305: #{run.1} parent=191 // pred_check
          %p1778 = pneg %p761
        $region306: #{run.1} parent=191 // pred_check_branch
          %1780 = sbr.rel (%p1778) target = $region308
        $region307: #{run.1} parent=191 // pred_region
          %1782 = dma.done [#allocation45], 512
        $region308: #{run.1} parent=191 // pred_fallthru
          _
        // Predicated region
        $region309: #{run.1} parent=191 // pred_check
          %p1783 = pneg %p782
        $region310: #{run.1} parent=191 // pred_check_branch
          %1785 = sbr.rel (%p1783) target = $region312
        $region311: #{run.1} parent=191 // pred_region
          %1787 = dma.done [#allocation48], 256
        $region312: #{run.1} parent=191 // pred_fallthru
          _
        // Predicated region
        $region313: #{run.1} parent=191 // pred_check
          %p1788 = pneg %p803
        $region314: #{run.1} parent=191 // pred_check_branch
          %1790 = sbr.rel (%p1788) target = $region316
        $region315: #{run.1} parent=191 // pred_region
          %1792 = dma.done [#allocation48], 64
        $region316: #{run.1} parent=191 // pred_fallthru
          _
        // Predicated region
        $region317: #{run.1} parent=191 // pred_check
          %p1793 = pneg %p845
        $region318: #{run.1} parent=191 // pred_check_branch
          %1795 = sbr.rel (%p1793) target = $region320
        $region319: #{run.1} parent=191 // pred_region
          %1797 = dma.done [#allocation51], 256
        $region320: #{run.1} parent=191 // pred_fallthru
          _
        // Predicated region
        $region321: #{run.1} parent=191 // pred_check
          %p1798 = pneg %p866
        $region322: #{run.1} parent=191 // pred_check_branch
          %1800 = sbr.rel (%p1798) target = $region324
        $region323: #{run.1} parent=191 // pred_region
          %1802 = dma.done [#allocation51], 256
        $region324: #{run.1} parent=191 // pred_fallthru
          _
        // Predicated region
        $region325: #{run.1} parent=191 // pred_check
          %p1803 = pneg %p887
        $region326: #{run.1} parent=191 // pred_check_branch
          %1805 = sbr.rel (%p1803) target = $region328
        $region327: #{run.1} parent=191 // pred_region
          %1807 = dma.done [#allocation54], 512
        $region328: #{run.1} parent=191 // pred_fallthru
          _
        // Predicated region
        $region329: #{run.1} parent=191 // pred_check
          %p1808 = pneg %p908
        $region330: #{run.1} parent=191 // pred_check_branch
          %1810 = sbr.rel (%p1808) target = $region332
        $region331: #{run.1} parent=191 // pred_region
          %1812 = dma.done [#allocation54], 512
        $region332: #{run.1} parent=191 // pred_fallthru
          _
        // Predicated region
        $region333: #{run.1} parent=191 // pred_check
          %p1813 = pneg %p929
        $region334: #{run.1} parent=191 // pred_check_branch
          %1815 = sbr.rel (%p1813) target = $region336
        $region335: #{run.1} parent=191 // pred_region
          %1817 = dma.done [#allocation57], 512
        $region336: #{run.1} parent=191 // pred_fallthru
          _
        // Predicated region
        $region337: #{run.1} parent=191 // pred_check
          %p1818 = pneg %p950
        $region338: #{run.1} parent=191 // pred_check_branch
          %1820 = sbr.rel (%p1818) target = $region340
        $region339: #{run.1} parent=191 // pred_region
          %1822 = dma.done [#allocation57], 512
        $region340: #{run.1} parent=191 // pred_fallthru
          _
        // Predicated region
        $region341: #{run.1} parent=191 // pred_check
          %p1823 = pneg %p971
        $region342: #{run.1} parent=191 // pred_check_branch
          %1825 = sbr.rel (%p1823) target = $region344
        $region343: #{run.1} parent=191 // pred_region
          %1827 = dma.done [#allocation60], 512
        $region344: #{run.1} parent=191 // pred_fallthru
          _
        // Predicated region
        $region345: #{run.1} parent=191 // pred_check
          %p1828 = pneg %p992
        $region346: #{run.1} parent=191 // pred_check_branch
          %1830 = sbr.rel (%p1828) target = $region348
        $region347: #{run.1} parent=191 // pred_region
          %1832 = dma.done [#allocation60], 256
        $region348: #{run.1} parent=191 // pred_fallthru
          _
        // Predicated region
        $region349: #{run.1} parent=191 // pred_check
          %p1833 = pneg %p1034
        $region350: #{run.1} parent=191 // pred_check_branch
          %1835 = sbr.rel (%p1833) target = $region352
        $region351: #{run.1} parent=191 // pred_region
          %1837 = dma.done [#allocation63], 256
        $region352: #{run.1} parent=191 // pred_fallthru
          _
        %s1838 = sand.u32 %s134, 1
        %s1839 = scalar_lea.sflag [#allocation3], %s1838
        %s1840 = sand.u32 %s134, 1
        %s1841 = smul.addr %s1840, 8
        %s1842 = scalar_lea.vmem [#allocation2], %s1841
        %p1843 = pneg %p147
        %p1844 = pneg %p144
        %s1845 = sand.u32 %s126, 1
        %s1846 = scalar_lea.sflag [#allocation6], %s1845
        %s1847 = sand.u32 %s160, 1
        %s1848 = scalar_lea.vmem [#allocation5], %s1847
        %p1849 = pneg %p173
        %p1850 = pneg %p170
        %p1851 = pneg %p194
        %p1852 = pneg %p191
        %p1853 = pneg %p215
        %p1854 = pneg %p212
        %p1855 = pneg %p236
        %p1856 = pneg %p233
        %p1857 = pneg %p257
        %p1858 = pneg %p254
        %p1859 = pneg %p278
        %p1860 = pneg %p275
        %p1861 = pneg %p299
        %p1862 = pneg %p296
        %p1863 = pneg %p320
        %p1864 = pneg %p317
        %p1865 = pneg %p341
        %p1866 = pneg %p338
        %p1867 = pneg %p362
        %p1868 = pneg %p359
        %p1869 = pneg %p383
        %p1870 = pneg %p380
        %p1871 = pneg %p404
        %p1872 = pneg %p401
        %p1873 = pneg %p425
        %p1874 = pneg %p422
        %p1875 = pneg %p446
        %p1876 = pneg %p443
        %p1877 = pneg %p467
        %p1878 = pneg %p464
        %p1879 = pneg %p488
        %p1880 = pneg %p485
        %p1881 = pneg %p509
        %p1882 = pneg %p506
        %p1883 = pneg %p530
        %p1884 = pneg %p527
        %p1885 = pneg %p551
        %p1886 = pneg %p548
        %p1887 = pneg %p572
        %p1888 = pneg %p569
        %p1889 = pneg %p593
        %p1890 = pneg %p590
        %p1891 = pneg %p614
        %p1892 = pneg %p611
        %p1893 = pneg %p635
        %p1894 = pneg %p632
        %p1895 = pneg %p656
        %p1896 = pneg %p653
        %p1897 = pneg %p677
        %p1898 = pneg %p674
        %p1899 = pneg %p698
        %p1900 = pneg %p695
        %p1901 = pneg %p719
        %p1902 = pneg %p716
        %p1903 = pneg %p740
        %p1904 = pneg %p737
        %p1905 = pneg %p761
        %p1906 = pneg %p758
        %p1907 = pneg %p782
        %p1908 = pneg %p779
        %p1909 = pneg %p803
        %p1910 = pneg %p800
        %p1911 = pneg %p824
        %p1912 = pneg %p821
        %p1913 = pneg %p845
        %p1914 = pneg %p842
        %p1915 = pneg %p866
        %p1916 = pneg %p863
        %p1917 = pneg %p887
        %p1918 = pneg %p884
        %p1919 = pneg %p908
        %p1920 = pneg %p905
        %p1921 = pneg %p929
        %p1922 = pneg %p926
        %p1923 = pneg %p950
        %p1924 = pneg %p947
        %p1925 = pneg %p971
        %p1926 = pneg %p968
        %p1927 = pneg %p992
        %p1928 = pneg %p989
        %p1929 = pneg %p1013
        %p1930 = pneg %p1010
        %p1931 = pneg %p1034
        %p1932 = pneg %p1031
        %p1933 = pneg %p1060
        %p1934 = pneg %p1057
        %s1935 = sand.u32 %s1047, 1
        %s1936 = scalar_lea.sflag [#allocation4], %s1935
        %s1937 = sand.u32 %s1047, 1
        %s1938 = scalar_lea.vmem [#allocation64], %s1937
        %v1939 = vld [vmem:[%s5] sm:$0x1]
        %v1940 = vld [vmem:[#allocation7] sm:$0xff]
        %v1941 = vld [vmem:[#allocation7 + $0x8] sm:$0xff]
        %v1942 = vld [vmem:[#allocation8] sm:$0xff]
        %v1943 = vld [vmem:[#allocation8 + $0x8] sm:$0xff]
        %v1944 = vld [vmem:[#allocation10] sm:$0xff]
        %v1945 = vld [vmem:[#allocation11] sm:$0xff]
        %v1946 = vld [vmem:[#allocation13] sm:$0xff]
        %v1947 = vld [vmem:[#allocation14] sm:$0xff]
        %v1948 = vld [vmem:[#allocation16] sm:$0xf]
        %v1949 = vld [vmem:[#allocation17] sm:$0xf]
        %v1950 = vld [vmem:[#allocation19] sm:$0xf]
        %v1951 = vld [vmem:[#allocation20] sm:$0xf]
        %v1952 = vld [vmem:[#allocation22] sm:$0xff]
        %v1953 = vld [vmem:[#allocation23] sm:$0xff]
        %v1954 = vld [vmem:[#allocation25] sm:$0xff]
        %v1955 = vld [vmem:[#allocation26] sm:$0xf]
        %v1956 = vld [vmem:[#allocation28] sm:$0xf]
        %v1957 = vld [vmem:[#allocation29] sm:$0xf]
        %v1958 = vld [vmem:[#allocation31] sm:$0xf]
        %v1959 = vld [vmem:[#allocation32] sm:$0xf]
        %v1960 = vld [vmem:[#allocation34] sm:$0xff]
        %v1961 = vld [vmem:[#allocation34 + $0x8] sm:$0xff]
        %v1962 = vld [vmem:[#allocation35] sm:$0xff]
        %v1963 = vld [vmem:[#allocation35 + $0x8] sm:$0xff]
        %v1964 = vld [vmem:[#allocation37] sm:$0xff]
        %v1965 = vld [vmem:[#allocation37 + $0x8] sm:$0xff]
        %v1966 = vld [vmem:[#allocation37 + $0x10] sm:$0xff]
        %v1967 = vld [vmem:[#allocation37 + $0x18] sm:$0xff]
        %v1968 = vld [vmem:[#allocation38] sm:$0xff]
        %v1969 = vld [vmem:[#allocation38 + $0x8] sm:$0xff]
        %v1970 = vld [vmem:[#allocation38 + $0x10] sm:$0xff]
        %v1971 = vld [vmem:[#allocation38 + $0x18] sm:$0xff]
        %v1972 = vld [vmem:[#allocation40] sm:$0xff]
        %v1973 = vld [vmem:[#allocation40 + $0x8] sm:$0xff]
        %v1974 = vld [vmem:[#allocation40 + $0x10] sm:$0xff]
        %v1975 = vld [vmem:[#allocation40 + $0x18] sm:$0xff]
        %v1976 = vld [vmem:[#allocation41] sm:$0xff]
        %v1977 = vld [vmem:[#allocation41 + $0x8] sm:$0xff]
        %v1978 = vld [vmem:[#allocation41 + $0x10] sm:$0xff]
        %v1979 = vld [vmem:[#allocation41 + $0x18] sm:$0xff]
        %v1980 = vld [vmem:[#allocation43] sm:$0xff]
        %v1981 = vld [vmem:[#allocation43 + $0x8] sm:$0xff]
        %v1982 = vld [vmem:[#allocation43 + $0x10] sm:$0xff]
        %v1983 = vld [vmem:[#allocation43 + $0x18] sm:$0xff]
        %v1984 = vld [vmem:[#allocation44] sm:$0xff]
        %v1985 = vld [vmem:[#allocation44 + $0x8] sm:$0xff]
        %v1986 = vld [vmem:[#allocation46] sm:$0xff]
        %v1987 = vld [vmem:[#allocation46 + $0x8] sm:$0xff]
        %v1988 = vld [vmem:[#allocation46 + $0x10] sm:$0xff]
        %v1989 = vld [vmem:[#allocation46 + $0x18] sm:$0xff]
        %v1990 = vld [vmem:[#allocation47] sm:$0xff]
        %v1991 = vld [vmem:[#allocation47 + $0x8] sm:$0xff]
        %v1992 = vld [vmem:[#allocation49] sm:$0xf]
        %v1993 = vld [vmem:[%s65] sm:$0xf]
        %v1994 = vld [vmem:[#allocation50] sm:$0xff]
        %v1995 = vld [vmem:[#allocation50 + $0x8] sm:$0xff]
        %v1996 = vld [vmem:[#allocation52] sm:$0xff]
        %v1997 = vld [vmem:[#allocation52 + $0x8] sm:$0xff]
        %v1998 = vld [vmem:[#allocation53] sm:$0xff]
        %v1999 = vld [vmem:[#allocation53 + $0x8] sm:$0xff]
        %v2000 = vld [vmem:[#allocation53 + $0x10] sm:$0xff]
        %v2001 = vld [vmem:[#allocation53 + $0x18] sm:$0xff]
        %v2002 = vld [vmem:[#allocation55] sm:$0xff]
        %v2003 = vld [vmem:[#allocation55 + $0x8] sm:$0xff]
        %v2004 = vld [vmem:[#allocation55 + $0x10] sm:$0xff]
        %v2005 = vld [vmem:[#allocation55 + $0x18] sm:$0xff]
        %v2006 = vld [vmem:[#allocation56] sm:$0xff]
        %v2007 = vld [vmem:[#allocation56 + $0x8] sm:$0xff]
        %v2008 = vld [vmem:[#allocation56 + $0x10] sm:$0xff]
        %v2009 = vld [vmem:[#allocation56 + $0x18] sm:$0xff]
        %v2010 = vld [vmem:[#allocation58] sm:$0xff]
        %v2011 = vld [vmem:[#allocation58 + $0x8] sm:$0xff]
        %v2012 = vld [vmem:[#allocation58 + $0x10] sm:$0xff]
        %v2013 = vld [vmem:[#allocation58 + $0x18] sm:$0xff]
        %v2014 = vld [vmem:[#allocation59] sm:$0xff]
        %v2015 = vld [vmem:[#allocation59 + $0x8] sm:$0xff]
        %v2016 = vld [vmem:[#allocation59 + $0x10] sm:$0xff]
        %v2017 = vld [vmem:[#allocation59 + $0x18] sm:$0xff]
        %v2018 = vld [vmem:[#allocation61] sm:$0xff]
        %v2019 = vld [vmem:[#allocation61 + $0x8] sm:$0xff]
        %v2020 = vld [vmem:[%s83] sm:$0xff]
        %v2021 = vld [vmem:[%s83 + $0x8] sm:$0xff]
        %v2022 = vld [vmem:[%s83 + $0x10] sm:$0xff]
        %v2023 = vld [vmem:[%s83 + $0x18] sm:$0xff]
        %v2024 = vld [vmem:[#allocation62] sm:$0xff]
        %v2025 = vld [vmem:[#allocation62 + $0x8] sm:$0xff]
        %v2026 = vld [vmem:[%s1633] sm:$0xff]
        %v2027 = vld [vmem:[%s1642] sm:$0x1]
        %v2028 = vlaneseq
        %v2029 = vshrl.u32 %v2028, 7
        %v2030 = vlaneseq
        %v2031 = vand.u32 %v2030, 127
        %v2032 = vsub.s32 7, %v2029
        %vm2033 = vcmp.eq.s32.totalorder %v2031, %v2032
        %v2034 = vsel %vm2033, 1, 0
        %v2035 = vcvt.s32.f32 %v2034
        %v2036 = vsub.s32 3, %v2029
        %vm2037 = vcmp.eq.s32.totalorder %v2031, %v2036
        %v2038 = vsel %vm2037, 1, 0
        %v2039 = vcvt.s32.f32 %v2038
        %vm2040 = vcmask 64512
        %v2042 = vsel %vm2040, %v2035, 0
        %2044 = vmatpush.msra.mxu0 0.0
        %2045 = vmatpush.msra.mxu0 0.0
        %2046 = vmatpush.msra.mxu0 0.0
        %2047 = vmatpush.msra.mxu0 0.0
        %2048 = vmatpush.msra.mxu0 0.0
        %2049 = vmatpush.msra.mxu0 0.0
        %2050 = vmatpush.msra.mxu0 0.0
        %2051 = vmatpush.msra.mxu0 0.0
        %2052 = vmatpush.msra.mxu0 0.0
        %2053 = vmatpush.msra.mxu0 0.0
        %2054 = vmatpush.msra.mxu0 0.0
        %2055 = vmatpush.msra.mxu0 0.0
        %2056 = vmatpush.msra.mxu0 0.0
        %2057 = vmatpush.msra.mxu0 0.0
        %2058 = vmatpush.msra.mxu0 0.0
        %2059 = vmatpush.msra.mxu0 %v2026
        %2060 = vmatmul.f32.gmra.mxu0 %v2042
        %v2061 = vpop.f32.mrf.mxu0
        %v2062 = vadd.f32 0.0, %v2061
        %2063 = vdwg.mxu0
        %v2065 = vsel %vm2040, %v2039, 0
        %2067 = vmatpush.msra.mxu0 0.0
        %2068 = vmatpush.msra.mxu0 0.0
        %2069 = vmatpush.msra.mxu0 0.0
        %2070 = vmatpush.msra.mxu0 0.0
        %2071 = vmatpush.msra.mxu0 0.0
        %2072 = vmatpush.msra.mxu0 0.0
        %2073 = vmatpush.msra.mxu0 0.0
        %2074 = vmatpush.msra.mxu0 0.0
        %2075 = vmatpush.msra.mxu0 0.0
        %2076 = vmatpush.msra.mxu0 0.0
        %2077 = vmatpush.msra.mxu0 0.0
        %2078 = vmatpush.msra.mxu0 0.0
        %2079 = vmatpush.msra.mxu0 0.0
        %2080 = vmatpush.msra.mxu0 0.0
        %2081 = vmatpush.msra.mxu0 0.0
        %2082 = vmatpush.msra.mxu0 %v2026
        %2083 = vmatmul.f32.gmra.mxu0 %v2065
        %v2084 = vpop.f32.mrf.mxu0
        %v2085 = vadd.f32 0.0, %v2084
        %2086 = vdwg.mxu0
        %2088 = vset.pattern.permute.xlu0 0
        %2089 = vperm.xlu0 %2088, %v1994
        %v2090 = vpop.permute.xlu0 %2089
        %2093 = vset.pattern.permute.xlu0 0
        %2094 = vperm.xlu0 %2093, %v1995
        %v2095 = vpop.permute.xlu0 %2094
        %vm2097 = vcmask 31744
        %v2099 = vsel %vm2097, %v1996, 0
        %v2102 = vsel %vm2097, %v1997, 0
        %vm2104 = vcmask 1043456
        %v2106 = vsel %vm2104, %v2062, 0
        %2108 = vmatpush.msra.mxu0 0.0
        %2109 = vmatpush.msra.mxu0 0.0
        %2110 = vmatpush.msra.mxu0 0.0
        %2111 = vmatpush.msra.mxu0 0.0
        %2112 = vmatpush.msra.mxu0 0.0
        %2113 = vmatpush.msra.mxu0 0.0
        %2114 = vmatpush.msra.mxu0 0.0
        %2115 = vmatpush.msra.mxu0 0.0
        %2116 = vmatpush.msra.mxu0 0.0
        %2117 = vmatpush.msra.mxu0 0.0
        %2118 = vmatpush.msra.mxu0 0.0
        %2119 = vmatpush.msra.mxu0 0.0
        %2120 = vmatpush.msra.mxu0 0.0
        %2121 = vmatpush.msra.mxu0 0.0
        %2122 = vmatpush.msra.mxu0 0.0
        %2123 = vmatpush.msra.mxu0 %v2106
        %2124 = vmatmul.f32.gmra.mxu0 %v2099
        %v2125 = vpop.f32.mrf.mxu0
        %v2126 = vadd.f32 %v2090, %v2125
        %2127 = vmatmul.f32.gmra.mxu0 %v2102
        %v2128 = vpop.f32.mrf.mxu0
        %v2129 = vadd.f32 %v2095, %v2128
        %2130 = vdwg.mxu0
        %v2132 = vperm.slane %v2027, 0
        %v2134 = vmul.f32 %v2126, %v2132
        %v2135 = vmul.f32 %v2129, %v2132
        %2138 = vrot.lane.b32.xlu0 %v2134, 2
        %v2139 = vpop.permute.xlu0 %2138
        %2140 = vrot.lane.b32.xlu0 %v2135, 2
        %v2141 = vpop.permute.xlu0 %2140
        %vm2144 = vcmask 15360
        %v2145 = vsel %vm2144, 0.0, %v2139
        %v2146 = vsel %vm2144, 0.0, %v2141
        %vm2147 = vcmask 146432
        %v2148 = vsel %vm2147, %v2145, 0.0
        %v2149 = vsel %vm2147, %v2146, 0.0
        %2154 = vrot.lane.b32.xlu0 %v2006, 112
        %v2155 = vpop.permute.xlu0 %2154
        %2156 = vrot.lane.b32.xlu0 %v2007, 112
        %v2157 = vpop.permute.xlu0 %2156
        %2158 = vrot.lane.b32.xlu0 %v2008, 112
        %v2159 = vpop.permute.xlu0 %2158
        %2160 = vrot.lane.b32.xlu0 %v2009, 112
        %v2161 = vpop.permute.xlu0 %2160
        %2164 = vrot.lane.b32.xlu0 %v2148, 127
        %v2165 = vpop.permute.xlu0 %2164
        %2166 = vrot.lane.b32.xlu0 %v2149, 127
        %v2167 = vpop.permute.xlu0 %2166
        %vm2170 = vcmask 130048
        %v2171 = vsel %vm2170, %v2155, 0
        %v2173 = vsel %vm2170, %v2157, 0
        %v2175 = vsel %vm2170, %v2159, 0
        %v2177 = vsel %vm2170, %v2161, 0
        %2179 = vmatpush.msra.mxu0 0.0
        %2180 = vmatpush.msra.mxu0 0.0
        %2181 = vmatpush.msra.mxu0 0.0
        %2182 = vmatpush.msra.mxu0 0.0
        %2183 = vmatpush.msra.mxu0 0.0
        %2184 = vmatpush.msra.mxu0 0.0
        %2185 = vmatpush.msra.mxu0 0.0
        %2186 = vmatpush.msra.mxu0 0.0
        %2187 = vmatpush.msra.mxu0 0.0
        %2188 = vmatpush.msra.mxu0 0.0
        %2189 = vmatpush.msra.mxu0 0.0
        %2190 = vmatpush.msra.mxu0 0.0
        %2191 = vmatpush.msra.mxu0 0.0
        %2192 = vmatpush.msra.mxu0 0.0
        %2193 = vmatpush.msra.mxu0 %v2167
        %2194 = vmatpush.msra.mxu0 %v2165
        %2195 = vmatmul.f32.gmra.mxu0 %v2171
        %v2196 = vpop.f32.mrf.mxu0
        %v2197 = vadd.f32 0.0, %v2196
        %2198 = vmatmul.f32.gmra.mxu0 %v2173
        %v2199 = vpop.f32.mrf.mxu0
        %v2200 = vadd.f32 0.0, %v2199
        %2201 = vmatmul.f32.gmra.mxu0 %v2175
        %v2202 = vpop.f32.mrf.mxu0
        %v2203 = vadd.f32 0.0, %v2202
        %2204 = vmatmul.f32.gmra.mxu0 %v2177
        %v2205 = vpop.f32.mrf.mxu0
        %v2206 = vadd.f32 0.0, %v2205
        %2207 = vdwg.mxu0
        %v2208 = vsel %vm2170, %v2006, 0
        %v2210 = vsel %vm2170, %v2007, 0
        %v2212 = vsel %vm2170, %v2008, 0
        %v2214 = vsel %vm2170, %v2009, 0
        %2216 = vmatpush.msra.mxu0 0.0
        %2217 = vmatpush.msra.mxu0 0.0
        %2218 = vmatpush.msra.mxu0 0.0
        %2219 = vmatpush.msra.mxu0 0.0
        %2220 = vmatpush.msra.mxu0 0.0
        %2221 = vmatpush.msra.mxu0 0.0
        %2222 = vmatpush.msra.mxu0 0.0
        %2223 = vmatpush.msra.mxu0 0.0
        %2224 = vmatpush.msra.mxu0 0.0
        %2225 = vmatpush.msra.mxu0 0.0
        %2226 = vmatpush.msra.mxu0 0.0
        %2227 = vmatpush.msra.mxu0 0.0
        %2228 = vmatpush.msra.mxu0 0.0
        %2229 = vmatpush.msra.mxu0 0.0
        %2230 = vmatpush.msra.mxu0 %v2149
        %2231 = vmatpush.msra.mxu0 %v2148
        %2232 = vmatmul.f32.gmra.mxu0 %v2208
        %v2233 = vpop.f32.mrf.mxu0
        %v2234 = vadd.f32 %v2197, %v2233
        %2235 = vmatmul.f32.gmra.mxu0 %v2210
        %v2236 = vpop.f32.mrf.mxu0
        %v2237 = vadd.f32 %v2200, %v2236
        %2238 = vmatmul.f32.gmra.mxu0 %v2212
        %v2239 = vpop.f32.mrf.mxu0
        %v2240 = vadd.f32 %v2203, %v2239
        %2241 = vmatmul.f32.gmra.mxu0 %v2214
        %v2242 = vpop.f32.mrf.mxu0
        %v2243 = vadd.f32 %v2206, %v2242
        %2244 = vdwg.mxu0
        %2245 = vrot.lane.b32.xlu0 %v2006, 96
        %v2246 = vpop.permute.xlu0 %2245
        %2247 = vrot.lane.b32.xlu0 %v2007, 96
        %v2248 = vpop.permute.xlu0 %2247
        %2249 = vrot.lane.b32.xlu0 %v2008, 96
        %v2250 = vpop.permute.xlu0 %2249
        %2251 = vrot.lane.b32.xlu0 %v2009, 96
        %v2252 = vpop.permute.xlu0 %2251
        %2253 = vrot.lane.b32.xlu0 %v2148, 126
        %v2254 = vpop.permute.xlu0 %2253
        %2255 = vrot.lane.b32.xlu0 %v2149, 126
        %v2256 = vpop.permute.xlu0 %2255
        %v2259 = vsel %vm2170, %v2246, 0
        %v2261 = vsel %vm2170, %v2248, 0
        %v2263 = vsel %vm2170, %v2250, 0
        %v2265 = vsel %vm2170, %v2252, 0
        %2267 = vmatpush.msra.mxu0 0.0
        %2268 = vmatpush.msra.mxu0 0.0
        %2269 = vmatpush.msra.mxu0 0.0
        %2270 = vmatpush.msra.mxu0 0.0
        %2271 = vmatpush.msra.mxu0 0.0
        %2272 = vmatpush.msra.mxu0 0.0
        %2273 = vmatpush.msra.mxu0 0.0
        %2274 = vmatpush.msra.mxu0 0.0
        %2275 = vmatpush.msra.mxu0 0.0
        %2276 = vmatpush.msra.mxu0 0.0
        %2277 = vmatpush.msra.mxu0 0.0
        %2278 = vmatpush.msra.mxu0 0.0
        %2279 = vmatpush.msra.mxu0 0.0
        %2280 = vmatpush.msra.mxu0 0.0
        %2281 = vmatpush.msra.mxu0 %v2256
        %2282 = vmatpush.msra.mxu0 %v2254
        %2283 = vmatmul.f32.gmra.mxu0 %v2259
        %v2284 = vpop.f32.mrf.mxu0
        %v2285 = vadd.f32 0.0, %v2284
        %2286 = vmatmul.f32.gmra.mxu0 %v2261
        %v2287 = vpop.f32.mrf.mxu0
        %v2288 = vadd.f32 0.0, %v2287
        %2289 = vmatmul.f32.gmra.mxu0 %v2263
        %v2290 = vpop.f32.mrf.mxu0
        %v2291 = vadd.f32 0.0, %v2290
        %2292 = vmatmul.f32.gmra.mxu0 %v2265
        %v2293 = vpop.f32.mrf.mxu0
        %v2294 = vadd.f32 0.0, %v2293
        %2295 = vdwg.mxu0
        %v2296 = vadd.f32 %v2234, %v2285
        %v2297 = vadd.f32 %v2237, %v2288
        %v2298 = vadd.f32 %v2240, %v2291
        %v2299 = vadd.f32 %v2243, %v2294
        %2300 = vrot.lane.b32.xlu0 %v2006, 80
        %v2301 = vpop.permute.xlu0 %2300
        %2302 = vrot.lane.b32.xlu0 %v2007, 80
        %v2303 = vpop.permute.xlu0 %2302
        %2304 = vrot.lane.b32.xlu0 %v2008, 80
        %v2305 = vpop.permute.xlu0 %2304
        %2306 = vrot.lane.b32.xlu0 %v2009, 80
        %v2307 = vpop.permute.xlu0 %2306
        %2308 = vrot.lane.b32.xlu0 %v2148, 125
        %v2309 = vpop.permute.xlu0 %2308
        %2310 = vrot.lane.b32.xlu0 %v2149, 125
        %v2311 = vpop.permute.xlu0 %2310
        %v2314 = vsel %vm2170, %v2301, 0
        %v2316 = vsel %vm2170, %v2303, 0
        %v2318 = vsel %vm2170, %v2305, 0
        %v2320 = vsel %vm2170, %v2307, 0
        %2322 = vmatpush.msra.mxu0 0.0
        %2323 = vmatpush.msra.mxu0 0.0
        %2324 = vmatpush.msra.mxu0 0.0
        %2325 = vmatpush.msra.mxu0 0.0
        %2326 = vmatpush.msra.mxu0 0.0
        %2327 = vmatpush.msra.mxu0 0.0
        %2328 = vmatpush.msra.mxu0 0.0
        %2329 = vmatpush.msra.mxu0 0.0
        %2330 = vmatpush.msra.mxu0 0.0
        %2331 = vmatpush.msra.mxu0 0.0
        %2332 = vmatpush.msra.mxu0 0.0
        %2333 = vmatpush.msra.mxu0 0.0
        %2334 = vmatpush.msra.mxu0 0.0
        %2335 = vmatpush.msra.mxu0 0.0
        %2336 = vmatpush.msra.mxu0 %v2311
        %2337 = vmatpush.msra.mxu0 %v2309
        %2338 = vmatmul.f32.gmra.mxu0 %v2314
        %v2339 = vpop.f32.mrf.mxu0
        %v2340 = vadd.f32 0.0, %v2339
        %2341 = vmatmul.f32.gmra.mxu0 %v2316
        %v2342 = vpop.f32.mrf.mxu0
        %v2343 = vadd.f32 0.0, %v2342
        %2344 = vmatmul.f32.gmra.mxu0 %v2318
        %v2345 = vpop.f32.mrf.mxu0
        %v2346 = vadd.f32 0.0, %v2345
        %2347 = vmatmul.f32.gmra.mxu0 %v2320
        %v2348 = vpop.f32.mrf.mxu0
        %v2349 = vadd.f32 0.0, %v2348
        %2350 = vdwg.mxu0
        %v2351 = vadd.f32 %v2296, %v2340
        %v2352 = vadd.f32 %v2297, %v2343
        %v2353 = vadd.f32 %v2298, %v2346
        %v2354 = vadd.f32 %v2299, %v2349
        %2355 = vrot.lane.b32.xlu0 %v2006, 64
        %v2356 = vpop.permute.xlu0 %2355
        %2357 = vrot.lane.b32.xlu0 %v2007, 64
        %v2358 = vpop.permute.xlu0 %2357
        %2359 = vrot.lane.b32.xlu0 %v2008, 64
        %v2360 = vpop.permute.xlu0 %2359
        %2361 = vrot.lane.b32.xlu0 %v2009, 64
        %v2362 = vpop.permute.xlu0 %2361
        %2363 = vrot.lane.b32.xlu0 %v2148, 124
        %v2364 = vpop.permute.xlu0 %2363
        %2365 = vrot.lane.b32.xlu0 %v2149, 124
        %v2366 = vpop.permute.xlu0 %2365
        %v2369 = vsel %vm2170, %v2356, 0
        %v2371 = vsel %vm2170, %v2358, 0
        %v2373 = vsel %vm2170, %v2360, 0
        %v2375 = vsel %vm2170, %v2362, 0
        %2377 = vmatpush.msra.mxu0 0.0
        %2378 = vmatpush.msra.mxu0 0.0
        %2379 = vmatpush.msra.mxu0 0.0
        %2380 = vmatpush.msra.mxu0 0.0
        %2381 = vmatpush.msra.mxu0 0.0
        %2382 = vmatpush.msra.mxu0 0.0
        %2383 = vmatpush.msra.mxu0 0.0
        %2384 = vmatpush.msra.mxu0 0.0
        %2385 = vmatpush.msra.mxu0 0.0
        %2386 = vmatpush.msra.mxu0 0.0
        %2387 = vmatpush.msra.mxu0 0.0
        %2388 = vmatpush.msra.mxu0 0.0
        %2389 = vmatpush.msra.mxu0 0.0
        %2390 = vmatpush.msra.mxu0 0.0
        %2391 = vmatpush.msra.mxu0 %v2366
        %2392 = vmatpush.msra.mxu0 %v2364
        %2393 = vmatmul.f32.gmra.mxu0 %v2369
        %v2394 = vpop.f32.mrf.mxu0
        %v2395 = vadd.f32 0.0, %v2394
        %2396 = vmatmul.f32.gmra.mxu0 %v2371
        %v2397 = vpop.f32.mrf.mxu0
        %v2398 = vadd.f32 0.0, %v2397
        %2399 = vmatmul.f32.gmra.mxu0 %v2373
        %v2400 = vpop.f32.mrf.mxu0
        %v2401 = vadd.f32 0.0, %v2400
        %2402 = vmatmul.f32.gmra.mxu0 %v2375
        %v2403 = vpop.f32.mrf.mxu0
        %v2404 = vadd.f32 0.0, %v2403
        %2405 = vdwg.mxu0
        %v2406 = vadd.f32 %v2351, %v2395
        %v2407 = vadd.f32 %v2352, %v2398
        %v2408 = vadd.f32 %v2353, %v2401
        %v2409 = vadd.f32 %v2354, %v2404
        %2411 = vset.pattern.permute.xlu0 0
        %2412 = vperm.xlu0 %2411, %v1998
        %v2413 = vpop.permute.xlu0 %2412
        %2416 = vset.pattern.permute.xlu0 0
        %2417 = vperm.xlu0 %2416, %v1999
        %v2418 = vpop.permute.xlu0 %2417
        %2421 = vset.pattern.permute.xlu0 0
        %2422 = vperm.xlu0 %2421, %v2000
        %v2423 = vpop.permute.xlu0 %2422
        %2426 = vset.pattern.permute.xlu0 0
        %2427 = vperm.xlu0 %2426, %v2001
        %v2428 = vpop.permute.xlu0 %2427
        %v2430 = vadd.f32 %v2406, %v2413
        %v2431 = vadd.f32 %v2407, %v2418
        %v2432 = vadd.f32 %v2408, %v2423
        %v2433 = vadd.f32 %v2409, %v2428
        %v2434 = vtanh.pop %v2430
        %v2435 = vtanh.pop %v2431
        %v2436 = vxor.u32 %v2432, 2147483648
        %v2437 = vxor.u32 %v2433, 2147483648
        %v2438 = vmul.f32 %v2436, 1.442695
        %v2439 = vpow.pop %v2438
        %v2440 = vmul.f32 %v2437, 1.442695
        %v2441 = vpow.pop %v2440
        %v2442 = vadd.f32 %v2439, 1.0
        %v2443 = vadd.f32 %v2441, 1.0
        %v2444 = vrcp.pop %v2442
        %v2445 = vmul.f32 %v2442, %v2444
        %v2446 = vsub.f32 1.0, %v2445
        %v2447 = vmul.f32 %v2444, %v2446
        %v2448 = vadd.f32 %v2444, %v2447
        %vm2449 = vweird.f32 %v2442
        %vm2450 = vweird.f32 %v2444
        %vm2451 = vmor %vm2449, %vm2450
        %v2452 = vsel %vm2451, %v2444, %v2448
        %v2453 = vand.u32 2147483647, %v2442
        %vm2454 = vcmp.eq.f32.partialorder %v2453, 8.507059e+37
        %v2455 = vand.u32 %v2442, 2147483648
        %v2456 = vor.u32 1.1754944e-38, %v2455
        %v2457 = vsel %vm2454, %v2456, %v2452
        %v2458 = vmul.f32 1.0, %v2457
        %v2459 = vrcp.pop %v2443
        %v2460 = vmul.f32 %v2443, %v2459
        %v2461 = vsub.f32 1.0, %v2460
        %v2462 = vmul.f32 %v2459, %v2461
        %v2463 = vadd.f32 %v2459, %v2462
        %vm2464 = vweird.f32 %v2443
        %vm2465 = vweird.f32 %v2459
        %vm2466 = vmor %vm2464, %vm2465
        %v2467 = vsel %vm2466, %v2459, %v2463
        %v2468 = vand.u32 2147483647, %v2443
        %vm2469 = vcmp.eq.f32.partialorder %v2468, 8.507059e+37
        %v2470 = vand.u32 %v2443, 2147483648
        %v2471 = vor.u32 1.1754944e-38, %v2470
        %v2472 = vsel %vm2469, %v2471, %v2467
        %v2473 = vmul.f32 1.0, %v2472
        %v2474 = vmul.f32 %v2434, %v2458
        %v2475 = vmul.f32 %v2435, %v2473
        %v2476 = vmul.f32 %v2474, %v2132
        %v2477 = vmul.f32 %v2475, %v2132
        %2479 = vset.pattern.permute.xlu0 0
        %2480 = vperm.xlu0 %2479, %v2014
        %v2481 = vpop.permute.xlu0 %2480
        %2484 = vset.pattern.permute.xlu0 0
        %2485 = vperm.xlu0 %2484, %v2015
        %v2486 = vpop.permute.xlu0 %2485
        %2489 = vset.pattern.permute.xlu0 0
        %2490 = vperm.xlu0 %2489, %v2016
        %v2491 = vpop.permute.xlu0 %2490
        %2494 = vset.pattern.permute.xlu0 0
        %2495 = vperm.xlu0 %2494, %v2017
        %v2496 = vpop.permute.xlu0 %2495
        %v2499 = vsel %vm2170, %v2020, 0
        %v2502 = vsel %vm2170, %v2021, 0
        %v2505 = vsel %vm2170, %v2022, 0
        %v2508 = vsel %vm2170, %v2023, 0
        %2510 = vmatpush.msra.mxu0 0.0
        %2511 = vmatpush.msra.mxu0 0.0
        %2512 = vmatpush.msra.mxu0 0.0
        %2513 = vmatpush.msra.mxu0 0.0
        %2514 = vmatpush.msra.mxu0 0.0
        %2515 = vmatpush.msra.mxu0 0.0
        %2516 = vmatpush.msra.mxu0 0.0
        %2517 = vmatpush.msra.mxu0 0.0
        %2518 = vmatpush.msra.mxu0 0.0
        %2519 = vmatpush.msra.mxu0 0.0
        %2520 = vmatpush.msra.mxu0 0.0
        %2521 = vmatpush.msra.mxu0 0.0
        %2522 = vmatpush.msra.mxu0 0.0
        %2523 = vmatpush.msra.mxu0 0.0
        %2524 = vmatpush.msra.mxu0 %v2477
        %2525 = vmatpush.msra.mxu0 %v2476
        %2526 = vmatmul.f32.gmra.mxu0 %v2499
        %v2527 = vpop.f32.mrf.mxu0
        %v2528 = vadd.f32 %v2481, %v2527
        %2529 = vmatmul.f32.gmra.mxu0 %v2502
        %v2530 = vpop.f32.mrf.mxu0
        %v2531 = vadd.f32 %v2486, %v2530
        %2532 = vmatmul.f32.gmra.mxu0 %v2505
        %v2533 = vpop.f32.mrf.mxu0
        %v2534 = vadd.f32 %v2491, %v2533
        %2535 = vmatmul.f32.gmra.mxu0 %v2508
        %v2536 = vpop.f32.mrf.mxu0
        %v2537 = vadd.f32 %v2496, %v2536
        %2538 = vdwg.mxu0
        %v2539 = vadd.f32 %v2134, %v2528
        %v2540 = vadd.f32 %v2135, %v2531
        %v2541 = vmul.f32 %v2539, %v2132
        %v2542 = vmul.f32 %v2540, %v2132
        %v2543 = vadd.f32 %v2534, 0.0
        %v2544 = vadd.f32 %v2537, 0.0
        %2547 = vrot.lane.b32.xlu0 %v2541, 2
        %v2548 = vpop.permute.xlu0 %2547
        %2549 = vrot.lane.b32.xlu0 %v2542, 2
        %v2550 = vpop.permute.xlu0 %2549
        %v2553 = vsel %vm2144, 0.0, %v2548
        %v2554 = vsel %vm2144, 0.0, %v2550
        %v2555 = vsel %vm2147, %v2553, 0.0
        %v2556 = vsel %vm2147, %v2554, 0.0
        %2561 = vrot.lane.b32.xlu0 %v2010, 112
        %v2562 = vpop.permute.xlu0 %2561
        %2563 = vrot.lane.b32.xlu0 %v2011, 112
        %v2564 = vpop.permute.xlu0 %2563
        %2565 = vrot.lane.b32.xlu0 %v2012, 112
        %v2566 = vpop.permute.xlu0 %2565
        %2567 = vrot.lane.b32.xlu0 %v2013, 112
        %v2568 = vpop.permute.xlu0 %2567
        %2571 = vrot.lane.b32.xlu0 %v2555, 127
        %v2572 = vpop.permute.xlu0 %2571
        %2573 = vrot.lane.b32.xlu0 %v2556, 127
        %v2574 = vpop.permute.xlu0 %2573
        %v2577 = vsel %vm2170, %v2562, 0
        %v2579 = vsel %vm2170, %v2564, 0
        %v2581 = vsel %vm2170, %v2566, 0
        %v2583 = vsel %vm2170, %v2568, 0
        %2585 = vmatpush.msra.mxu0 0.0
        %2586 = vmatpush.msra.mxu0 0.0
        %2587 = vmatpush.msra.mxu0 0.0
        %2588 = vmatpush.msra.mxu0 0.0
        %2589 = vmatpush.msra.mxu0 0.0
        %2590 = vmatpush.msra.mxu0 0.0
        %2591 = vmatpush.msra.mxu0 0.0
        %2592 = vmatpush.msra.mxu0 0.0
        %2593 = vmatpush.msra.mxu0 0.0
        %2594 = vmatpush.msra.mxu0 0.0
        %2595 = vmatpush.msra.mxu0 0.0
        %2596 = vmatpush.msra.mxu0 0.0
        %2597 = vmatpush.msra.mxu0 0.0
        %2598 = vmatpush.msra.mxu0 0.0
        %2599 = vmatpush.msra.mxu0 %v2574
        %2600 = vmatpush.msra.mxu0 %v2572
        %2601 = vmatmul.f32.gmra.mxu0 %v2577
        %v2602 = vpop.f32.mrf.mxu0
        %v2603 = vadd.f32 0.0, %v2602
        %2604 = vmatmul.f32.gmra.mxu0 %v2579
        %v2605 = vpop.f32.mrf.mxu0
        %v2606 = vadd.f32 0.0, %v2605
        %2607 = vmatmul.f32.gmra.mxu0 %v2581
        %v2608 = vpop.f32.mrf.mxu0
        %v2609 = vadd.f32 0.0, %v2608
        %2610 = vmatmul.f32.gmra.mxu0 %v2583
        %v2611 = vpop.f32.mrf.mxu0
        %v2612 = vadd.f32 0.0, %v2611
        %2613 = vdwg.mxu0
        %v2614 = vsel %vm2170, %v2010, 0
        %v2616 = vsel %vm2170, %v2011, 0
        %v2618 = vsel %vm2170, %v2012, 0
        %v2620 = vsel %vm2170, %v2013, 0
        %2622 = vmatpush.msra.mxu0 0.0
        %2623 = vmatpush.msra.mxu0 0.0
        %2624 = vmatpush.msra.mxu0 0.0
        %2625 = vmatpush.msra.mxu0 0.0
        %2626 = vmatpush.msra.mxu0 0.0
        %2627 = vmatpush.msra.mxu0 0.0
        %2628 = vmatpush.msra.mxu0 0.0
        %2629 = vmatpush.msra.mxu0 0.0
        %2630 = vmatpush.msra.mxu0 0.0
        %2631 = vmatpush.msra.mxu0 0.0
        %2632 = vmatpush.msra.mxu0 0.0
        %2633 = vmatpush.msra.mxu0 0.0
        %2634 = vmatpush.msra.mxu0 0.0
        %2635 = vmatpush.msra.mxu0 0.0
        %2636 = vmatpush.msra.mxu0 %v2556
        %2637 = vmatpush.msra.mxu0 %v2555
        %2638 = vmatmul.f32.gmra.mxu0 %v2614
        %v2639 = vpop.f32.mrf.mxu0
        %v2640 = vadd.f32 %v2603, %v2639
        %2641 = vmatmul.f32.gmra.mxu0 %v2616
        %v2642 = vpop.f32.mrf.mxu0
        %v2643 = vadd.f32 %v2606, %v2642
        %2644 = vmatmul.f32.gmra.mxu0 %v2618
        %v2645 = vpop.f32.mrf.mxu0
        %v2646 = vadd.f32 %v2609, %v2645
        %2647 = vmatmul.f32.gmra.mxu0 %v2620
        %v2648 = vpop.f32.mrf.mxu0
        %v2649 = vadd.f32 %v2612, %v2648
        %2650 = vdwg.mxu0
        %2651 = vrot.lane.b32.xlu0 %v2010, 96
        %v2652 = vpop.permute.xlu0 %2651
        %2653 = vrot.lane.b32.xlu0 %v2011, 96
        %v2654 = vpop.permute.xlu0 %2653
        %2655 = vrot.lane.b32.xlu0 %v2012, 96
        %v2656 = vpop.permute.xlu0 %2655
        %2657 = vrot.lane.b32.xlu0 %v2013, 96
        %v2658 = vpop.permute.xlu0 %2657
        %2659 = vrot.lane.b32.xlu0 %v2555, 126
        %v2660 = vpop.permute.xlu0 %2659
        %2661 = vrot.lane.b32.xlu0 %v2556, 126
        %v2662 = vpop.permute.xlu0 %2661
        %v2665 = vsel %vm2170, %v2652, 0
        %v2667 = vsel %vm2170, %v2654, 0
        %v2669 = vsel %vm2170, %v2656, 0
        %v2671 = vsel %vm2170, %v2658, 0
        %2673 = vmatpush.msra.mxu0 0.0
        %2674 = vmatpush.msra.mxu0 0.0
        %2675 = vmatpush.msra.mxu0 0.0
        %2676 = vmatpush.msra.mxu0 0.0
        %2677 = vmatpush.msra.mxu0 0.0
        %2678 = vmatpush.msra.mxu0 0.0
        %2679 = vmatpush.msra.mxu0 0.0
        %2680 = vmatpush.msra.mxu0 0.0
        %2681 = vmatpush.msra.mxu0 0.0
        %2682 = vmatpush.msra.mxu0 0.0
        %2683 = vmatpush.msra.mxu0 0.0
        %2684 = vmatpush.msra.mxu0 0.0
        %2685 = vmatpush.msra.mxu0 0.0
        %2686 = vmatpush.msra.mxu0 0.0
        %2687 = vmatpush.msra.mxu0 %v2662
        %2688 = vmatpush.msra.mxu0 %v2660
        %2689 = vmatmul.f32.gmra.mxu0 %v2665
        %v2690 = vpop.f32.mrf.mxu0
        %v2691 = vadd.f32 0.0, %v2690
        %2692 = vmatmul.f32.gmra.mxu0 %v2667
        %v2693 = vpop.f32.mrf.mxu0
        %v2694 = vadd.f32 0.0, %v2693
        %2695 = vmatmul.f32.gmra.mxu0 %v2669
        %v2696 = vpop.f32.mrf.mxu0
        %v2697 = vadd.f32 0.0, %v2696
        %2698 = vmatmul.f32.gmra.mxu0 %v2671
        %v2699 = vpop.f32.mrf.mxu0
        %v2700 = vadd.f32 0.0, %v2699
        %2701 = vdwg.mxu0
        %v2702 = vadd.f32 %v2640, %v2691
        %v2703 = vadd.f32 %v2643, %v2694
        %v2704 = vadd.f32 %v2646, %v2697
        %v2705 = vadd.f32 %v2649, %v2700
        %2706 = vrot.lane.b32.xlu0 %v2010, 80
        %v2707 = vpop.permute.xlu0 %2706
        %2708 = vrot.lane.b32.xlu0 %v2011, 80
        %v2709 = vpop.permute.xlu0 %2708
        %2710 = vrot.lane.b32.xlu0 %v2012, 80
        %v2711 = vpop.permute.xlu0 %2710
        %2712 = vrot.lane.b32.xlu0 %v2013, 80
        %v2713 = vpop.permute.xlu0 %2712
        %2714 = vrot.lane.b32.xlu0 %v2555, 125
        %v2715 = vpop.permute.xlu0 %2714
        %2716 = vrot.lane.b32.xlu0 %v2556, 125
        %v2717 = vpop.permute.xlu0 %2716
        %v2720 = vsel %vm2170, %v2707, 0
        %v2722 = vsel %vm2170, %v2709, 0
        %v2724 = vsel %vm2170, %v2711, 0
        %v2726 = vsel %vm2170, %v2713, 0
        %2728 = vmatpush.msra.mxu0 0.0
        %2729 = vmatpush.msra.mxu0 0.0
        %2730 = vmatpush.msra.mxu0 0.0
        %2731 = vmatpush.msra.mxu0 0.0
        %2732 = vmatpush.msra.mxu0 0.0
        %2733 = vmatpush.msra.mxu0 0.0
        %2734 = vmatpush.msra.mxu0 0.0
        %2735 = vmatpush.msra.mxu0 0.0
        %2736 = vmatpush.msra.mxu0 0.0
        %2737 = vmatpush.msra.mxu0 0.0
        %2738 = vmatpush.msra.mxu0 0.0
        %2739 = vmatpush.msra.mxu0 0.0
        %2740 = vmatpush.msra.mxu0 0.0
        %2741 = vmatpush.msra.mxu0 0.0
        %2742 = vmatpush.msra.mxu0 %v2717
        %2743 = vmatpush.msra.mxu0 %v2715
        %2744 = vmatmul.f32.gmra.mxu0 %v2720
        %v2745 = vpop.f32.mrf.mxu0
        %v2746 = vadd.f32 0.0, %v2745
        %2747 = vmatmul.f32.gmra.mxu0 %v2722
        %v2748 = vpop.f32.mrf.mxu0
        %v2749 = vadd.f32 0.0, %v2748
        %2750 = vmatmul.f32.gmra.mxu0 %v2724
        %v2751 = vpop.f32.mrf.mxu0
        %v2752 = vadd.f32 0.0, %v2751
        %2753 = vmatmul.f32.gmra.mxu0 %v2726
        %v2754 = vpop.f32.mrf.mxu0
        %v2755 = vadd.f32 0.0, %v2754
        %2756 = vdwg.mxu0
        %v2757 = vadd.f32 %v2702, %v2746
        %v2758 = vadd.f32 %v2703, %v2749
        %v2759 = vadd.f32 %v2704, %v2752
        %v2760 = vadd.f32 %v2705, %v2755
        %2761 = vrot.lane.b32.xlu0 %v2010, 64
        %v2762 = vpop.permute.xlu0 %2761
        %2763 = vrot.lane.b32.xlu0 %v2011, 64
        %v2764 = vpop.permute.xlu0 %2763
        %2765 = vrot.lane.b32.xlu0 %v2012, 64
        %v2766 = vpop.permute.xlu0 %2765
        %2767 = vrot.lane.b32.xlu0 %v2013, 64
        %v2768 = vpop.permute.xlu0 %2767
        %2769 = vrot.lane.b32.xlu0 %v2555, 124
        %v2770 = vpop.permute.xlu0 %2769
        %2771 = vrot.lane.b32.xlu0 %v2556, 124
        %v2772 = vpop.permute.xlu0 %2771
        %v2775 = vsel %vm2170, %v2762, 0
        %v2777 = vsel %vm2170, %v2764, 0
        %v2779 = vsel %vm2170, %v2766, 0
        %v2781 = vsel %vm2170, %v2768, 0
        %2783 = vmatpush.msra.mxu0 0.0
        %2784 = vmatpush.msra.mxu0 0.0
        %2785 = vmatpush.msra.mxu0 0.0
        %2786 = vmatpush.msra.mxu0 0.0
        %2787 = vmatpush.msra.mxu0 0.0
        %2788 = vmatpush.msra.mxu0 0.0
        %2789 = vmatpush.msra.mxu0 0.0
        %2790 = vmatpush.msra.mxu0 0.0
        %2791 = vmatpush.msra.mxu0 0.0
        %2792 = vmatpush.msra.mxu0 0.0
        %2793 = vmatpush.msra.mxu0 0.0
        %2794 = vmatpush.msra.mxu0 0.0
        %2795 = vmatpush.msra.mxu0 0.0
        %2796 = vmatpush.msra.mxu0 0.0
        %2797 = vmatpush.msra.mxu0 %v2772
        %2798 = vmatpush.msra.mxu0 %v2770
        %2799 = vmatmul.f32.gmra.mxu0 %v2775
        %v2800 = vpop.f32.mrf.mxu0
        %v2801 = vadd.f32 0.0, %v2800
        %2802 = vmatmul.f32.gmra.mxu0 %v2777
        %v2803 = vpop.f32.mrf.mxu0
        %v2804 = vadd.f32 0.0, %v2803
        %2805 = vmatmul.f32.gmra.mxu0 %v2779
        %v2806 = vpop.f32.mrf.mxu0
        %v2807 = vadd.f32 0.0, %v2806
        %2808 = vmatmul.f32.gmra.mxu0 %v2781
        %v2809 = vpop.f32.mrf.mxu0
        %v2810 = vadd.f32 0.0, %v2809
        %2811 = vdwg.mxu0
        %v2812 = vadd.f32 %v2757, %v2801
        %v2813 = vadd.f32 %v2758, %v2804
        %v2814 = vadd.f32 %v2759, %v2807
        %v2815 = vadd.f32 %v2760, %v2810
        %2817 = vset.pattern.permute.xlu0 0
        %2818 = vperm.xlu0 %2817, %v2002
        %v2819 = vpop.permute.xlu0 %2818
        %2822 = vset.pattern.permute.xlu0 0
        %2823 = vperm.xlu0 %2822, %v2003
        %v2824 = vpop.permute.xlu0 %2823
        %2827 = vset.pattern.permute.xlu0 0
        %2828 = vperm.xlu0 %2827, %v2004
        %v2829 = vpop.permute.xlu0 %2828
        %2832 = vset.pattern.permute.xlu0 0
        %2833 = vperm.xlu0 %2832, %v2005
        %v2834 = vpop.permute.xlu0 %2833
        %v2836 = vadd.f32 %v2812, %v2819
        %v2837 = vadd.f32 %v2813, %v2824
        %v2838 = vadd.f32 %v2814, %v2829
        %v2839 = vadd.f32 %v2815, %v2834
        %v2840 = vtanh.pop %v2836
        %v2841 = vtanh.pop %v2837
        %v2842 = vxor.u32 %v2838, 2147483648
        %v2843 = vxor.u32 %v2839, 2147483648
        %v2844 = vmul.f32 %v2842, 1.442695
        %v2845 = vpow.pop %v2844
        %v2846 = vmul.f32 %v2843, 1.442695
        %v2847 = vpow.pop %v2846
        %v2848 = vadd.f32 %v2845, 1.0
        %v2849 = vadd.f32 %v2847, 1.0
        %v2850 = vrcp.pop %v2848
        %v2851 = vmul.f32 %v2848, %v2850
        %v2852 = vsub.f32 1.0, %v2851
        %v2853 = vmul.f32 %v2850, %v2852
        %v2854 = vadd.f32 %v2850, %v2853
        %vm2855 = vweird.f32 %v2848
        %vm2856 = vweird.f32 %v2850
        %vm2857 = vmor %vm2855, %vm2856
        %v2858 = vsel %vm2857, %v2850, %v2854
        %v2859 = vand.u32 2147483647, %v2848
        %vm2860 = vcmp.eq.f32.partialorder %v2859, 8.507059e+37
        %v2861 = vand.u32 %v2848, 2147483648
        %v2862 = vor.u32 1.1754944e-38, %v2861
        %v2863 = vsel %vm2860, %v2862, %v2858
        %v2864 = vmul.f32 1.0, %v2863
        %v2865 = vrcp.pop %v2849
        %v2866 = vmul.f32 %v2849, %v2865
        %v2867 = vsub.f32 1.0, %v2866
        %v2868 = vmul.f32 %v2865, %v2867
        %v2869 = vadd.f32 %v2865, %v2868
        %vm2870 = vweird.f32 %v2849
        %vm2871 = vweird.f32 %v2865
        %vm2872 = vmor %vm2870, %vm2871
        %v2873 = vsel %vm2872, %v2865, %v2869
        %v2874 = vand.u32 2147483647, %v2849
        %vm2875 = vcmp.eq.f32.partialorder %v2874, 8.507059e+37
        %v2876 = vand.u32 %v2849, 2147483648
        %v2877 = vor.u32 1.1754944e-38, %v2876
        %v2878 = vsel %vm2875, %v2877, %v2873
        %v2879 = vmul.f32 1.0, %v2878
        %v2880 = vmul.f32 %v2840, %v2864
        %v2881 = vmul.f32 %v2841, %v2879
        %v2882 = vmul.f32 %v2880, %v2132
        %v2883 = vmul.f32 %v2881, %v2132
        %2885 = vset.pattern.permute.xlu0 0
        %2886 = vperm.xlu0 %2885, %v2018
        %v2887 = vpop.permute.xlu0 %2886
        %2890 = vset.pattern.permute.xlu0 0
        %2891 = vperm.xlu0 %2890, %v2019
        %v2892 = vpop.permute.xlu0 %2891
        %v2895 = vsel %vm2170, %v2024, 0
        %v2898 = vsel %vm2170, %v2025, 0
        %2900 = vmatpush.msra.mxu0 0.0
        %2901 = vmatpush.msra.mxu0 0.0
        %2902 = vmatpush.msra.mxu0 0.0
        %2903 = vmatpush.msra.mxu0 0.0
        %2904 = vmatpush.msra.mxu0 0.0
        %2905 = vmatpush.msra.mxu0 0.0
        %2906 = vmatpush.msra.mxu0 0.0
        %2907 = vmatpush.msra.mxu0 0.0
        %2908 = vmatpush.msra.mxu0 0.0
        %2909 = vmatpush.msra.mxu0 0.0
        %2910 = vmatpush.msra.mxu0 0.0
        %2911 = vmatpush.msra.mxu0 0.0
        %2912 = vmatpush.msra.mxu0 0.0
        %2913 = vmatpush.msra.mxu0 0.0
        %2914 = vmatpush.msra.mxu0 %v2883
        %2915 = vmatpush.msra.mxu0 %v2882
        %2916 = vmatmul.f32.gmra.mxu0 %v2895
        %v2917 = vpop.f32.mrf.mxu0
        %v2918 = vadd.f32 %v2887, %v2917
        %2919 = vmatmul.f32.gmra.mxu0 %v2898
        %v2920 = vpop.f32.mrf.mxu0
        %v2921 = vadd.f32 %v2892, %v2920
        %2922 = vdwg.mxu0
        %v2923 = vadd.f32 %v2543, %v2918
        %v2924 = vadd.f32 %v2544, %v2921
        %v2925 = vmul.f32 %v2923, %v2132
        %v2926 = vmul.f32 %v2924, %v2132
        %2928 = vset.pattern.permute.xlu0 0
        %2929 = vperm.xlu0 %2928, %v1992
        %v2930 = vpop.permute.xlu0 %2929
        %v2933 = vsel %vm2170, %v1993, 0
        %2935 = vmatpush.msra.mxu0 0.0
        %2936 = vmatpush.msra.mxu0 0.0
        %2937 = vmatpush.msra.mxu0 0.0
        %2938 = vmatpush.msra.mxu0 0.0
        %2939 = vmatpush.msra.mxu0 0.0
        %2940 = vmatpush.msra.mxu0 0.0
        %2941 = vmatpush.msra.mxu0 0.0
        %2942 = vmatpush.msra.mxu0 0.0
        %2943 = vmatpush.msra.mxu0 0.0
        %2944 = vmatpush.msra.mxu0 0.0
        %2945 = vmatpush.msra.mxu0 0.0
        %2946 = vmatpush.msra.mxu0 0.0
        %2947 = vmatpush.msra.mxu0 0.0
        %2948 = vmatpush.msra.mxu0 0.0
        %2949 = vmatpush.msra.mxu0 %v2926
        %2950 = vmatpush.msra.mxu0 %v2925
        %2951 = vmatmul.f32.gmra.mxu0 %v2933
        %v2952 = vpop.f32.mrf.mxu0
        %v2953 = vadd.f32 %v2930, %v2952
        %2954 = vdwg.mxu0
        %v2955 = vmul.f32 %v2953, %v2132
        %v2956 = vsub.f32 %v2085, %v2955
        %v2957 = vmul.f32 %v2956, %v2132
        %vm2958 = vcmp.eq.s32.totalorder %v2029, %v2031
        %v2959 = vsel %vm2958, 1, 0
        %v2960 = vcvt.s32.f32 %v2959
        %v2961 = vadd.s32 %v2031, 4
        %vm2962 = vcmp.eq.s32.totalorder %v2029, %v2961
        %v2963 = vsel %vm2962, 1, 0
        %v2964 = vcvt.s32.f32 %v2963
        %v2966 = vsel %vm2097, %v2964, 0
        %v2969 = vsel %vm2104, %v2957, 0
        %2971 = vmatpush.msra.mxu0 0.0
        %2972 = vmatpush.msra.mxu0 0.0
        %2973 = vmatpush.msra.mxu0 0.0
        %2974 = vmatpush.msra.mxu0 0.0
        %2975 = vmatpush.msra.mxu0 0.0
        %2976 = vmatpush.msra.mxu0 0.0
        %2977 = vmatpush.msra.mxu0 0.0
        %2978 = vmatpush.msra.mxu0 0.0
        %2979 = vmatpush.msra.mxu0 0.0
        %2980 = vmatpush.msra.mxu0 0.0
        %2981 = vmatpush.msra.mxu0 0.0
        %2982 = vmatpush.msra.mxu0 0.0
        %2983 = vmatpush.msra.mxu0 0.0
        %2984 = vmatpush.msra.mxu0 0.0
        %2985 = vmatpush.msra.mxu0 0.0
        %2986 = vmatpush.msra.mxu0 %v2969
        %2987 = vmatmul.f32.gmra.mxu0 %v2966
        %v2988 = vpop.f32.mrf.mxu0
        %v2989 = vadd.f32 0.0, %v2988
        %2990 = vdwg.mxu0
        %v2992 = vsel %vm2097, %v2960, 0
        %2994 = vmatpush.msra.mxu0 0.0
        %2995 = vmatpush.msra.mxu0 0.0
        %2996 = vmatpush.msra.mxu0 0.0
        %2997 = vmatpush.msra.mxu0 0.0
        %2998 = vmatpush.msra.mxu0 0.0
        %2999 = vmatpush.msra.mxu0 0.0
        %3000 = vmatpush.msra.mxu0 0.0
        %3001 = vmatpush.msra.mxu0 0.0
        %3002 = vmatpush.msra.mxu0 0.0
        %3003 = vmatpush.msra.mxu0 0.0
        %3004 = vmatpush.msra.mxu0 0.0
        %3005 = vmatpush.msra.mxu0 0.0
        %3006 = vmatpush.msra.mxu0 0.0
        %3007 = vmatpush.msra.mxu0 0.0
        %3008 = vmatpush.msra.mxu0 0.0
        %3009 = vmatpush.msra.mxu0 %v2106
        %3010 = vmatmul.f32.gmra.mxu0 %v2992
        %v3011 = vpop.f32.mrf.mxu0
        %v3012 = vadd.f32 %v2989, %v3011
        %3013 = vdwg.mxu0
        %3014 = vmatpush.msra.mxu0 0.0
        %3015 = vmatpush.msra.mxu0 0.0
        %3016 = vmatpush.msra.mxu0 0.0
        %3017 = vmatpush.msra.mxu0 0.0
        %3018 = vmatpush.msra.mxu0 0.0
        %3019 = vmatpush.msra.mxu0 0.0
        %3020 = vmatpush.msra.mxu0 0.0
        %3021 = vmatpush.msra.mxu0 0.0
        %3022 = vmatpush.msra.mxu0 0.0
        %3023 = vmatpush.msra.mxu0 0.0
        %3024 = vmatpush.msra.mxu0 0.0
        %3025 = vmatpush.msra.mxu0 0.0
        %3026 = vmatpush.msra.mxu0 0.0
        %3027 = vmatpush.msra.mxu0 0.0
        %3028 = vmatpush.msra.mxu0 0.0
        %3029 = vmatpush.msra.mxu0 %v3012
        %3030 = vmatmul.f32.gmra.mxu0 %v2042
        %v3031 = vpop.f32.mrf.mxu0
        %v3032 = vadd.f32 0.0, %v3031
        %3033 = vdwg.mxu0
        %3034 = vmatpush.msra.mxu0 0.0
        %3035 = vmatpush.msra.mxu0 0.0
        %3036 = vmatpush.msra.mxu0 0.0
        %3037 = vmatpush.msra.mxu0 0.0
        %3038 = vmatpush.msra.mxu0 0.0
        %3039 = vmatpush.msra.mxu0 0.0
        %3040 = vmatpush.msra.mxu0 0.0
        %3041 = vmatpush.msra.mxu0 0.0
        %3042 = vmatpush.msra.mxu0 0.0
        %3043 = vmatpush.msra.mxu0 0.0
        %3044 = vmatpush.msra.mxu0 0.0
        %3045 = vmatpush.msra.mxu0 0.0
        %3046 = vmatpush.msra.mxu0 0.0
        %3047 = vmatpush.msra.mxu0 0.0
        %3048 = vmatpush.msra.mxu0 0.0
        %3049 = vmatpush.msra.mxu0 %v3012
        %3050 = vmatmul.f32.gmra.mxu0 %v2065
        %v3051 = vpop.f32.mrf.mxu0
        %v3052 = vadd.f32 0.0, %v3051
        %3053 = vdwg.mxu0
        %3055 = vset.pattern.permute.xlu0 0
        %3056 = vperm.xlu0 %3055, %v1960
        %v3057 = vpop.permute.xlu0 %3056
        %3060 = vset.pattern.permute.xlu0 0
        %3061 = vperm.xlu0 %3060, %v1961
        %v3062 = vpop.permute.xlu0 %3061
        %v3065 = vsel %vm2097, %v1962, 0
        %v3068 = vsel %vm2097, %v1963, 0
        %v3071 = vsel %vm2104, %v3032, 0
        %3073 = vmatpush.msra.mxu0 0.0
        %3074 = vmatpush.msra.mxu0 0.0
        %3075 = vmatpush.msra.mxu0 0.0
        %3076 = vmatpush.msra.mxu0 0.0
        %3077 = vmatpush.msra.mxu0 0.0
        %3078 = vmatpush.msra.mxu0 0.0
        %3079 = vmatpush.msra.mxu0 0.0
        %3080 = vmatpush.msra.mxu0 0.0
        %3081 = vmatpush.msra.mxu0 0.0
        %3082 = vmatpush.msra.mxu0 0.0
        %3083 = vmatpush.msra.mxu0 0.0
        %3084 = vmatpush.msra.mxu0 0.0
        %3085 = vmatpush.msra.mxu0 0.0
        %3086 = vmatpush.msra.mxu0 0.0
        %3087 = vmatpush.msra.mxu0 0.0
        %3088 = vmatpush.msra.mxu0 %v3071
        %3089 = vmatmul.f32.gmra.mxu0 %v3065
        %v3090 = vpop.f32.mrf.mxu0
        %v3091 = vadd.f32 %v3057, %v3090
        %3092 = vmatmul.f32.gmra.mxu0 %v3068
        %v3093 = vpop.f32.mrf.mxu0
        %v3094 = vadd.f32 %v3062, %v3093
        %3095 = vdwg.mxu0
        %v3096 = vmul.f32 %v3091, %v2132
        %v3097 = vmul.f32 %v3094, %v2132
        %3100 = vrot.lane.b32.xlu0 %v3096, 2
        %v3101 = vpop.permute.xlu0 %3100
        %3102 = vrot.lane.b32.xlu0 %v3097, 2
        %v3103 = vpop.permute.xlu0 %3102
        %v3106 = vsel %vm2144, 0.0, %v3101
        %v3107 = vsel %vm2144, 0.0, %v3103
        %v3108 = vsel %vm2147, %v3106, 0.0
        %v3109 = vsel %vm2147, %v3107, 0.0
        %3114 = vrot.lane.b32.xlu0 %v1972, 112
        %v3115 = vpop.permute.xlu0 %3114
        %3116 = vrot.lane.b32.xlu0 %v1973, 112
        %v3117 = vpop.permute.xlu0 %3116
        %3118 = vrot.lane.b32.xlu0 %v1974, 112
        %v3119 = vpop.permute.xlu0 %3118
        %3120 = vrot.lane.b32.xlu0 %v1975, 112
        %v3121 = vpop.permute.xlu0 %3120
        %3124 = vrot.lane.b32.xlu0 %v3108, 127
        %v3125 = vpop.permute.xlu0 %3124
        %3126 = vrot.lane.b32.xlu0 %v3109, 127
        %v3127 = vpop.permute.xlu0 %3126
        %v3130 = vsel %vm2170, %v3115, 0
        %v3132 = vsel %vm2170, %v3117, 0
        %v3134 = vsel %vm2170, %v3119, 0
        %v3136 = vsel %vm2170, %v3121, 0
        %3138 = vmatpush.msra.mxu0 0.0
        %3139 = vmatpush.msra.mxu0 0.0
        %3140 = vmatpush.msra.mxu0 0.0
        %3141 = vmatpush.msra.mxu0 0.0
        %3142 = vmatpush.msra.mxu0 0.0
        %3143 = vmatpush.msra.mxu0 0.0
        %3144 = vmatpush.msra.mxu0 0.0
        %3145 = vmatpush.msra.mxu0 0.0
        %3146 = vmatpush.msra.mxu0 0.0
        %3147 = vmatpush.msra.mxu0 0.0
        %3148 = vmatpush.msra.mxu0 0.0
        %3149 = vmatpush.msra.mxu0 0.0
        %3150 = vmatpush.msra.mxu0 0.0
        %3151 = vmatpush.msra.mxu0 0.0
        %3152 = vmatpush.msra.mxu0 %v3127
        %3153 = vmatpush.msra.mxu0 %v3125
        %3154 = vmatmul.f32.gmra.mxu0 %v3130
        %v3155 = vpop.f32.mrf.mxu0
        %v3156 = vadd.f32 0.0, %v3155
        %3157 = vmatmul.f32.gmra.mxu0 %v3132
        %v3158 = vpop.f32.mrf.mxu0
        %v3159 = vadd.f32 0.0, %v3158
        %3160 = vmatmul.f32.gmra.mxu0 %v3134
        %v3161 = vpop.f32.mrf.mxu0
        %v3162 = vadd.f32 0.0, %v3161
        %3163 = vmatmul.f32.gmra.mxu0 %v3136
        %v3164 = vpop.f32.mrf.mxu0
        %v3165 = vadd.f32 0.0, %v3164
        %3166 = vdwg.mxu0
        %v3167 = vsel %vm2170, %v1972, 0
        %v3169 = vsel %vm2170, %v1973, 0
        %v3171 = vsel %vm2170, %v1974, 0
        %v3173 = vsel %vm2170, %v1975, 0
        %3175 = vmatpush.msra.mxu0 0.0
        %3176 = vmatpush.msra.mxu0 0.0
        %3177 = vmatpush.msra.mxu0 0.0
        %3178 = vmatpush.msra.mxu0 0.0
        %3179 = vmatpush.msra.mxu0 0.0
        %3180 = vmatpush.msra.mxu0 0.0
        %3181 = vmatpush.msra.mxu0 0.0
        %3182 = vmatpush.msra.mxu0 0.0
        %3183 = vmatpush.msra.mxu0 0.0
        %3184 = vmatpush.msra.mxu0 0.0
        %3185 = vmatpush.msra.mxu0 0.0
        %3186 = vmatpush.msra.mxu0 0.0
        %3187 = vmatpush.msra.mxu0 0.0
        %3188 = vmatpush.msra.mxu0 0.0
        %3189 = vmatpush.msra.mxu0 %v3109
        %3190 = vmatpush.msra.mxu0 %v3108
        %3191 = vmatmul.f32.gmra.mxu0 %v3167
        %v3192 = vpop.f32.mrf.mxu0
        %v3193 = vadd.f32 %v3156, %v3192
        %3194 = vmatmul.f32.gmra.mxu0 %v3169
        %v3195 = vpop.f32.mrf.mxu0
        %v3196 = vadd.f32 %v3159, %v3195
        %3197 = vmatmul.f32.gmra.mxu0 %v3171
        %v3198 = vpop.f32.mrf.mxu0
        %v3199 = vadd.f32 %v3162, %v3198
        %3200 = vmatmul.f32.gmra.mxu0 %v3173
        %v3201 = vpop.f32.mrf.mxu0
        %v3202 = vadd.f32 %v3165, %v3201
        %3203 = vdwg.mxu0
        %3204 = vrot.lane.b32.xlu0 %v1972, 96
        %v3205 = vpop.permute.xlu0 %3204
        %3206 = vrot.lane.b32.xlu0 %v1973, 96
        %v3207 = vpop.permute.xlu0 %3206
        %3208 = vrot.lane.b32.xlu0 %v1974, 96
        %v3209 = vpop.permute.xlu0 %3208
        %3210 = vrot.lane.b32.xlu0 %v1975, 96
        %v3211 = vpop.permute.xlu0 %3210
        %3212 = vrot.lane.b32.xlu0 %v3108, 126
        %v3213 = vpop.permute.xlu0 %3212
        %3214 = vrot.lane.b32.xlu0 %v3109, 126
        %v3215 = vpop.permute.xlu0 %3214
        %v3218 = vsel %vm2170, %v3205, 0
        %v3220 = vsel %vm2170, %v3207, 0
        %v3222 = vsel %vm2170, %v3209, 0
        %v3224 = vsel %vm2170, %v3211, 0
        %3226 = vmatpush.msra.mxu0 0.0
        %3227 = vmatpush.msra.mxu0 0.0
        %3228 = vmatpush.msra.mxu0 0.0
        %3229 = vmatpush.msra.mxu0 0.0
        %3230 = vmatpush.msra.mxu0 0.0
        %3231 = vmatpush.msra.mxu0 0.0
        %3232 = vmatpush.msra.mxu0 0.0
        %3233 = vmatpush.msra.mxu0 0.0
        %3234 = vmatpush.msra.mxu0 0.0
        %3235 = vmatpush.msra.mxu0 0.0
        %3236 = vmatpush.msra.mxu0 0.0
        %3237 = vmatpush.msra.mxu0 0.0
        %3238 = vmatpush.msra.mxu0 0.0
        %3239 = vmatpush.msra.mxu0 0.0
        %3240 = vmatpush.msra.mxu0 %v3215
        %3241 = vmatpush.msra.mxu0 %v3213
        %3242 = vmatmul.f32.gmra.mxu0 %v3218
        %v3243 = vpop.f32.mrf.mxu0
        %v3244 = vadd.f32 0.0, %v3243
        %3245 = vmatmul.f32.gmra.mxu0 %v3220
        %v3246 = vpop.f32.mrf.mxu0
        %v3247 = vadd.f32 0.0, %v3246
        %3248 = vmatmul.f32.gmra.mxu0 %v3222
        %v3249 = vpop.f32.mrf.mxu0
        %v3250 = vadd.f32 0.0, %v3249
        %3251 = vmatmul.f32.gmra.mxu0 %v3224
        %v3252 = vpop.f32.mrf.mxu0
        %v3253 = vadd.f32 0.0, %v3252
        %3254 = vdwg.mxu0
        %v3255 = vadd.f32 %v3193, %v3244
        %v3256 = vadd.f32 %v3196, %v3247
        %v3257 = vadd.f32 %v3199, %v3250
        %v3258 = vadd.f32 %v3202, %v3253
        %3259 = vrot.lane.b32.xlu0 %v1972, 80
        %v3260 = vpop.permute.xlu0 %3259
        %3261 = vrot.lane.b32.xlu0 %v1973, 80
        %v3262 = vpop.permute.xlu0 %3261
        %3263 = vrot.lane.b32.xlu0 %v1974, 80
        %v3264 = vpop.permute.xlu0 %3263
        %3265 = vrot.lane.b32.xlu0 %v1975, 80
        %v3266 = vpop.permute.xlu0 %3265
        %3267 = vrot.lane.b32.xlu0 %v3108, 125
        %v3268 = vpop.permute.xlu0 %3267
        %3269 = vrot.lane.b32.xlu0 %v3109, 125
        %v3270 = vpop.permute.xlu0 %3269
        %v3273 = vsel %vm2170, %v3260, 0
        %v3275 = vsel %vm2170, %v3262, 0
        %v3277 = vsel %vm2170, %v3264, 0
        %v3279 = vsel %vm2170, %v3266, 0
        %3281 = vmatpush.msra.mxu0 0.0
        %3282 = vmatpush.msra.mxu0 0.0
        %3283 = vmatpush.msra.mxu0 0.0
        %3284 = vmatpush.msra.mxu0 0.0
        %3285 = vmatpush.msra.mxu0 0.0
        %3286 = vmatpush.msra.mxu0 0.0
        %3287 = vmatpush.msra.mxu0 0.0
        %3288 = vmatpush.msra.mxu0 0.0
        %3289 = vmatpush.msra.mxu0 0.0
        %3290 = vmatpush.msra.mxu0 0.0
        %3291 = vmatpush.msra.mxu0 0.0
        %3292 = vmatpush.msra.mxu0 0.0
        %3293 = vmatpush.msra.mxu0 0.0
        %3294 = vmatpush.msra.mxu0 0.0
        %3295 = vmatpush.msra.mxu0 %v3270
        %3296 = vmatpush.msra.mxu0 %v3268
        %3297 = vmatmul.f32.gmra.mxu0 %v3273
        %v3298 = vpop.f32.mrf.mxu0
        %v3299 = vadd.f32 0.0, %v3298
        %3300 = vmatmul.f32.gmra.mxu0 %v3275
        %v3301 = vpop.f32.mrf.mxu0
        %v3302 = vadd.f32 0.0, %v3301
        %3303 = vmatmul.f32.gmra.mxu0 %v3277
        %v3304 = vpop.f32.mrf.mxu0
        %v3305 = vadd.f32 0.0, %v3304
        %3306 = vmatmul.f32.gmra.mxu0 %v3279
        %v3307 = vpop.f32.mrf.mxu0
        %v3308 = vadd.f32 0.0, %v3307
        %3309 = vdwg.mxu0
        %v3310 = vadd.f32 %v3255, %v3299
        %v3311 = vadd.f32 %v3256, %v3302
        %v3312 = vadd.f32 %v3257, %v3305
        %v3313 = vadd.f32 %v3258, %v3308
        %3314 = vrot.lane.b32.xlu0 %v1972, 64
        %v3315 = vpop.permute.xlu0 %3314
        %3316 = vrot.lane.b32.xlu0 %v1973, 64
        %v3317 = vpop.permute.xlu0 %3316
        %3318 = vrot.lane.b32.xlu0 %v1974, 64
        %v3319 = vpop.permute.xlu0 %3318
        %3320 = vrot.lane.b32.xlu0 %v1975, 64
        %v3321 = vpop.permute.xlu0 %3320
        %3322 = vrot.lane.b32.xlu0 %v3108, 124
        %v3323 = vpop.permute.xlu0 %3322
        %3324 = vrot.lane.b32.xlu0 %v3109, 124
        %v3325 = vpop.permute.xlu0 %3324
        %v3328 = vsel %vm2170, %v3315, 0
        %v3330 = vsel %vm2170, %v3317, 0
        %v3332 = vsel %vm2170, %v3319, 0
        %v3334 = vsel %vm2170, %v3321, 0
        %3336 = vmatpush.msra.mxu0 0.0
        %3337 = vmatpush.msra.mxu0 0.0
        %3338 = vmatpush.msra.mxu0 0.0
        %3339 = vmatpush.msra.mxu0 0.0
        %3340 = vmatpush.msra.mxu0 0.0
        %3341 = vmatpush.msra.mxu0 0.0
        %3342 = vmatpush.msra.mxu0 0.0
        %3343 = vmatpush.msra.mxu0 0.0
        %3344 = vmatpush.msra.mxu0 0.0
        %3345 = vmatpush.msra.mxu0 0.0
        %3346 = vmatpush.msra.mxu0 0.0
        %3347 = vmatpush.msra.mxu0 0.0
        %3348 = vmatpush.msra.mxu0 0.0
        %3349 = vmatpush.msra.mxu0 0.0
        %3350 = vmatpush.msra.mxu0 %v3325
        %3351 = vmatpush.msra.mxu0 %v3323
        %3352 = vmatmul.f32.gmra.mxu0 %v3328
        %v3353 = vpop.f32.mrf.mxu0
        %v3354 = vadd.f32 0.0, %v3353
        %3355 = vmatmul.f32.gmra.mxu0 %v3330
        %v3356 = vpop.f32.mrf.mxu0
        %v3357 = vadd.f32 0.0, %v3356
        %3358 = vmatmul.f32.gmra.mxu0 %v3332
        %v3359 = vpop.f32.mrf.mxu0
        %v3360 = vadd.f32 0.0, %v3359
        %3361 = vmatmul.f32.gmra.mxu0 %v3334
        %v3362 = vpop.f32.mrf.mxu0
        %v3363 = vadd.f32 0.0, %v3362
        %3364 = vdwg.mxu0
        %v3365 = vadd.f32 %v3310, %v3354
        %v3366 = vadd.f32 %v3311, %v3357
        %v3367 = vadd.f32 %v3312, %v3360
        %v3368 = vadd.f32 %v3313, %v3363
        %3370 = vset.pattern.permute.xlu0 0
        %3371 = vperm.xlu0 %3370, %v1964
        %v3372 = vpop.permute.xlu0 %3371
        %3375 = vset.pattern.permute.xlu0 0
        %3376 = vperm.xlu0 %3375, %v1965
        %v3377 = vpop.permute.xlu0 %3376
        %3380 = vset.pattern.permute.xlu0 0
        %3381 = vperm.xlu0 %3380, %v1966
        %v3382 = vpop.permute.xlu0 %3381
        %3385 = vset.pattern.permute.xlu0 0
        %3386 = vperm.xlu0 %3385, %v1967
        %v3387 = vpop.permute.xlu0 %3386
        %v3389 = vadd.f32 %v3365, %v3372
        %v3390 = vadd.f32 %v3366, %v3377
        %v3391 = vadd.f32 %v3367, %v3382
        %v3392 = vadd.f32 %v3368, %v3387
        %v3393 = vtanh.pop %v3389
        %v3394 = vtanh.pop %v3390
        %v3395 = vxor.u32 %v3391, 2147483648
        %v3396 = vxor.u32 %v3392, 2147483648
        %v3397 = vmul.f32 %v3395, 1.442695
        %v3398 = vpow.pop %v3397
        %v3399 = vmul.f32 %v3396, 1.442695
        %v3400 = vpow.pop %v3399
        %v3401 = vadd.f32 %v3398, 1.0
        %v3402 = vadd.f32 %v3400, 1.0
        %v3403 = vrcp.pop %v3401
        %v3404 = vmul.f32 %v3401, %v3403
        %v3405 = vsub.f32 1.0, %v3404
        %v3406 = vmul.f32 %v3403, %v3405
        %v3407 = vadd.f32 %v3403, %v3406
        %vm3408 = vweird.f32 %v3401
        %vm3409 = vweird.f32 %v3403
        %vm3410 = vmor %vm3408, %vm3409
        %v3411 = vsel %vm3410, %v3403, %v3407
        %v3412 = vand.u32 2147483647, %v3401
        %vm3413 = vcmp.eq.f32.partialorder %v3412, 8.507059e+37
        %v3414 = vand.u32 %v3401, 2147483648
        %v3415 = vor.u32 1.1754944e-38, %v3414
        %v3416 = vsel %vm3413, %v3415, %v3411
        %v3417 = vmul.f32 1.0, %v3416
        %v3418 = vrcp.pop %v3402
        %v3419 = vmul.f32 %v3402, %v3418
        %v3420 = vsub.f32 1.0, %v3419
        %v3421 = vmul.f32 %v3418, %v3420
        %v3422 = vadd.f32 %v3418, %v3421
        %vm3423 = vweird.f32 %v3402
        %vm3424 = vweird.f32 %v3418
        %vm3425 = vmor %vm3423, %vm3424
        %v3426 = vsel %vm3425, %v3418, %v3422
        %v3427 = vand.u32 2147483647, %v3402
        %vm3428 = vcmp.eq.f32.partialorder %v3427, 8.507059e+37
        %v3429 = vand.u32 %v3402, 2147483648
        %v3430 = vor.u32 1.1754944e-38, %v3429
        %v3431 = vsel %vm3428, %v3430, %v3426
        %v3432 = vmul.f32 1.0, %v3431
        %v3433 = vmul.f32 %v3393, %v3417
        %v3434 = vmul.f32 %v3394, %v3432
        %v3435 = vmul.f32 %v3433, %v2132
        %v3436 = vmul.f32 %v3434, %v2132
        %3438 = vset.pattern.permute.xlu0 0
        %3439 = vperm.xlu0 %3438, %v1980
        %v3440 = vpop.permute.xlu0 %3439
        %3443 = vset.pattern.permute.xlu0 0
        %3444 = vperm.xlu0 %3443, %v1981
        %v3445 = vpop.permute.xlu0 %3444
        %3448 = vset.pattern.permute.xlu0 0
        %3449 = vperm.xlu0 %3448, %v1982
        %v3450 = vpop.permute.xlu0 %3449
        %3453 = vset.pattern.permute.xlu0 0
        %3454 = vperm.xlu0 %3453, %v1983
        %v3455 = vpop.permute.xlu0 %3454
        %v3458 = vsel %vm2170, %v1986, 0
        %v3461 = vsel %vm2170, %v1987, 0
        %v3464 = vsel %vm2170, %v1988, 0
        %v3467 = vsel %vm2170, %v1989, 0
        %3469 = vmatpush.msra.mxu0 0.0
        %3470 = vmatpush.msra.mxu0 0.0
        %3471 = vmatpush.msra.mxu0 0.0
        %3472 = vmatpush.msra.mxu0 0.0
        %3473 = vmatpush.msra.mxu0 0.0
        %3474 = vmatpush.msra.mxu0 0.0
        %3475 = vmatpush.msra.mxu0 0.0
        %3476 = vmatpush.msra.mxu0 0.0
        %3477 = vmatpush.msra.mxu0 0.0
        %3478 = vmatpush.msra.mxu0 0.0
        %3479 = vmatpush.msra.mxu0 0.0
        %3480 = vmatpush.msra.mxu0 0.0
        %3481 = vmatpush.msra.mxu0 0.0
        %3482 = vmatpush.msra.mxu0 0.0
        %3483 = vmatpush.msra.mxu0 %v3436
        %3484 = vmatpush.msra.mxu0 %v3435
        %3485 = vmatmul.f32.gmra.mxu0 %v3458
        %v3486 = vpop.f32.mrf.mxu0
        %v3487 = vadd.f32 %v3440, %v3486
        %3488 = vmatmul.f32.gmra.mxu0 %v3461
        %v3489 = vpop.f32.mrf.mxu0
        %v3490 = vadd.f32 %v3445, %v3489
        %3491 = vmatmul.f32.gmra.mxu0 %v3464
        %v3492 = vpop.f32.mrf.mxu0
        %v3493 = vadd.f32 %v3450, %v3492
        %3494 = vmatmul.f32.gmra.mxu0 %v3467
        %v3495 = vpop.f32.mrf.mxu0
        %v3496 = vadd.f32 %v3455, %v3495
        %3497 = vdwg.mxu0
        %v3498 = vadd.f32 %v3096, %v3487
        %v3499 = vadd.f32 %v3097, %v3490
        %v3500 = vmul.f32 %v3498, %v2132
        %v3501 = vmul.f32 %v3499, %v2132
        %v3502 = vadd.f32 %v3493, 0.0
        %v3503 = vadd.f32 %v3496, 0.0
        %3506 = vrot.lane.b32.xlu0 %v3500, 2
        %v3507 = vpop.permute.xlu0 %3506
        %3508 = vrot.lane.b32.xlu0 %v3501, 2
        %v3509 = vpop.permute.xlu0 %3508
        %v3512 = vsel %vm2144, 0.0, %v3507
        %v3513 = vsel %vm2144, 0.0, %v3509
        %v3514 = vsel %vm2147, %v3512, 0.0
        %v3515 = vsel %vm2147, %v3513, 0.0
        %3520 = vrot.lane.b32.xlu0 %v1976, 112
        %v3521 = vpop.permute.xlu0 %3520
        %3522 = vrot.lane.b32.xlu0 %v1977, 112
        %v3523 = vpop.permute.xlu0 %3522
        %3524 = vrot.lane.b32.xlu0 %v1978, 112
        %v3525 = vpop.permute.xlu0 %3524
        %3526 = vrot.lane.b32.xlu0 %v1979, 112
        %v3527 = vpop.permute.xlu0 %3526
        %3530 = vrot.lane.b32.xlu0 %v3514, 127
        %v3531 = vpop.permute.xlu0 %3530
        %3532 = vrot.lane.b32.xlu0 %v3515, 127
        %v3533 = vpop.permute.xlu0 %3532
        %v3536 = vsel %vm2170, %v3521, 0
        %v3538 = vsel %vm2170, %v3523, 0
        %v3540 = vsel %vm2170, %v3525, 0
        %v3542 = vsel %vm2170, %v3527, 0
        %3544 = vmatpush.msra.mxu0 0.0
        %3545 = vmatpush.msra.mxu0 0.0
        %3546 = vmatpush.msra.mxu0 0.0
        %3547 = vmatpush.msra.mxu0 0.0
        %3548 = vmatpush.msra.mxu0 0.0
        %3549 = vmatpush.msra.mxu0 0.0
        %3550 = vmatpush.msra.mxu0 0.0
        %3551 = vmatpush.msra.mxu0 0.0
        %3552 = vmatpush.msra.mxu0 0.0
        %3553 = vmatpush.msra.mxu0 0.0
        %3554 = vmatpush.msra.mxu0 0.0
        %3555 = vmatpush.msra.mxu0 0.0
        %3556 = vmatpush.msra.mxu0 0.0
        %3557 = vmatpush.msra.mxu0 0.0
        %3558 = vmatpush.msra.mxu0 %v3533
        %3559 = vmatpush.msra.mxu0 %v3531
        %3560 = vmatmul.f32.gmra.mxu0 %v3536
        %v3561 = vpop.f32.mrf.mxu0
        %v3562 = vadd.f32 0.0, %v3561
        %3563 = vmatmul.f32.gmra.mxu0 %v3538
        %v3564 = vpop.f32.mrf.mxu0
        %v3565 = vadd.f32 0.0, %v3564
        %3566 = vmatmul.f32.gmra.mxu0 %v3540
        %v3567 = vpop.f32.mrf.mxu0
        %v3568 = vadd.f32 0.0, %v3567
        %3569 = vmatmul.f32.gmra.mxu0 %v3542
        %v3570 = vpop.f32.mrf.mxu0
        %v3571 = vadd.f32 0.0, %v3570
        %3572 = vdwg.mxu0
        %v3573 = vsel %vm2170, %v1976, 0
        %v3575 = vsel %vm2170, %v1977, 0
        %v3577 = vsel %vm2170, %v1978, 0
        %v3579 = vsel %vm2170, %v1979, 0
        %3581 = vmatpush.msra.mxu0 0.0
        %3582 = vmatpush.msra.mxu0 0.0
        %3583 = vmatpush.msra.mxu0 0.0
        %3584 = vmatpush.msra.mxu0 0.0
        %3585 = vmatpush.msra.mxu0 0.0
        %3586 = vmatpush.msra.mxu0 0.0
        %3587 = vmatpush.msra.mxu0 0.0
        %3588 = vmatpush.msra.mxu0 0.0
        %3589 = vmatpush.msra.mxu0 0.0
        %3590 = vmatpush.msra.mxu0 0.0
        %3591 = vmatpush.msra.mxu0 0.0
        %3592 = vmatpush.msra.mxu0 0.0
        %3593 = vmatpush.msra.mxu0 0.0
        %3594 = vmatpush.msra.mxu0 0.0
        %3595 = vmatpush.msra.mxu0 %v3515
        %3596 = vmatpush.msra.mxu0 %v3514
        %3597 = vmatmul.f32.gmra.mxu0 %v3573
        %v3598 = vpop.f32.mrf.mxu0
        %v3599 = vadd.f32 %v3562, %v3598
        %3600 = vmatmul.f32.gmra.mxu0 %v3575
        %v3601 = vpop.f32.mrf.mxu0
        %v3602 = vadd.f32 %v3565, %v3601
        %3603 = vmatmul.f32.gmra.mxu0 %v3577
        %v3604 = vpop.f32.mrf.mxu0
        %v3605 = vadd.f32 %v3568, %v3604
        %3606 = vmatmul.f32.gmra.mxu0 %v3579
        %v3607 = vpop.f32.mrf.mxu0
        %v3608 = vadd.f32 %v3571, %v3607
        %3609 = vdwg.mxu0
        %3610 = vrot.lane.b32.xlu0 %v1976, 96
        %v3611 = vpop.permute.xlu0 %3610
        %3612 = vrot.lane.b32.xlu0 %v1977, 96
        %v3613 = vpop.permute.xlu0 %3612
        %3614 = vrot.lane.b32.xlu0 %v1978, 96
        %v3615 = vpop.permute.xlu0 %3614
        %3616 = vrot.lane.b32.xlu0 %v1979, 96
        %v3617 = vpop.permute.xlu0 %3616
        %3618 = vrot.lane.b32.xlu0 %v3514, 126
        %v3619 = vpop.permute.xlu0 %3618
        %3620 = vrot.lane.b32.xlu0 %v3515, 126
        %v3621 = vpop.permute.xlu0 %3620
        %v3624 = vsel %vm2170, %v3611, 0
        %v3626 = vsel %vm2170, %v3613, 0
        %v3628 = vsel %vm2170, %v3615, 0
        %v3630 = vsel %vm2170, %v3617, 0
        %3632 = vmatpush.msra.mxu0 0.0
        %3633 = vmatpush.msra.mxu0 0.0
        %3634 = vmatpush.msra.mxu0 0.0
        %3635 = vmatpush.msra.mxu0 0.0
        %3636 = vmatpush.msra.mxu0 0.0
        %3637 = vmatpush.msra.mxu0 0.0
        %3638 = vmatpush.msra.mxu0 0.0
        %3639 = vmatpush.msra.mxu0 0.0
        %3640 = vmatpush.msra.mxu0 0.0
        %3641 = vmatpush.msra.mxu0 0.0
        %3642 = vmatpush.msra.mxu0 0.0
        %3643 = vmatpush.msra.mxu0 0.0
        %3644 = vmatpush.msra.mxu0 0.0
        %3645 = vmatpush.msra.mxu0 0.0
        %3646 = vmatpush.msra.mxu0 %v3621
        %3647 = vmatpush.msra.mxu0 %v3619
        %3648 = vmatmul.f32.gmra.mxu0 %v3624
        %v3649 = vpop.f32.mrf.mxu0
        %v3650 = vadd.f32 0.0, %v3649
        %3651 = vmatmul.f32.gmra.mxu0 %v3626
        %v3652 = vpop.f32.mrf.mxu0
        %v3653 = vadd.f32 0.0, %v3652
        %3654 = vmatmul.f32.gmra.mxu0 %v3628
        %v3655 = vpop.f32.mrf.mxu0
        %v3656 = vadd.f32 0.0, %v3655
        %3657 = vmatmul.f32.gmra.mxu0 %v3630
        %v3658 = vpop.f32.mrf.mxu0
        %v3659 = vadd.f32 0.0, %v3658
        %3660 = vdwg.mxu0
        %v3661 = vadd.f32 %v3599, %v3650
        %v3662 = vadd.f32 %v3602, %v3653
        %v3663 = vadd.f32 %v3605, %v3656
        %v3664 = vadd.f32 %v3608, %v3659
        %3665 = vrot.lane.b32.xlu0 %v1976, 80
        %v3666 = vpop.permute.xlu0 %3665
        %3667 = vrot.lane.b32.xlu0 %v1977, 80
        %v3668 = vpop.permute.xlu0 %3667
        %3669 = vrot.lane.b32.xlu0 %v1978, 80
        %v3670 = vpop.permute.xlu0 %3669
        %3671 = vrot.lane.b32.xlu0 %v1979, 80
        %v3672 = vpop.permute.xlu0 %3671
        %3673 = vrot.lane.b32.xlu0 %v3514, 125
        %v3674 = vpop.permute.xlu0 %3673
        %3675 = vrot.lane.b32.xlu0 %v3515, 125
        %v3676 = vpop.permute.xlu0 %3675
        %v3679 = vsel %vm2170, %v3666, 0
        %v3681 = vsel %vm2170, %v3668, 0
        %v3683 = vsel %vm2170, %v3670, 0
        %v3685 = vsel %vm2170, %v3672, 0
        %3687 = vmatpush.msra.mxu0 0.0
        %3688 = vmatpush.msra.mxu0 0.0
        %3689 = vmatpush.msra.mxu0 0.0
        %3690 = vmatpush.msra.mxu0 0.0
        %3691 = vmatpush.msra.mxu0 0.0
        %3692 = vmatpush.msra.mxu0 0.0
        %3693 = vmatpush.msra.mxu0 0.0
        %3694 = vmatpush.msra.mxu0 0.0
        %3695 = vmatpush.msra.mxu0 0.0
        %3696 = vmatpush.msra.mxu0 0.0
        %3697 = vmatpush.msra.mxu0 0.0
        %3698 = vmatpush.msra.mxu0 0.0
        %3699 = vmatpush.msra.mxu0 0.0
        %3700 = vmatpush.msra.mxu0 0.0
        %3701 = vmatpush.msra.mxu0 %v3676
        %3702 = vmatpush.msra.mxu0 %v3674
        %3703 = vmatmul.f32.gmra.mxu0 %v3679
        %v3704 = vpop.f32.mrf.mxu0
        %v3705 = vadd.f32 0.0, %v3704
        %3706 = vmatmul.f32.gmra.mxu0 %v3681
        %v3707 = vpop.f32.mrf.mxu0
        %v3708 = vadd.f32 0.0, %v3707
        %3709 = vmatmul.f32.gmra.mxu0 %v3683
        %v3710 = vpop.f32.mrf.mxu0
        %v3711 = vadd.f32 0.0, %v3710
        %3712 = vmatmul.f32.gmra.mxu0 %v3685
        %v3713 = vpop.f32.mrf.mxu0
        %v3714 = vadd.f32 0.0, %v3713
        %3715 = vdwg.mxu0
        %v3716 = vadd.f32 %v3661, %v3705
        %v3717 = vadd.f32 %v3662, %v3708
        %v3718 = vadd.f32 %v3663, %v3711
        %v3719 = vadd.f32 %v3664, %v3714
        %3720 = vrot.lane.b32.xlu0 %v1976, 64
        %v3721 = vpop.permute.xlu0 %3720
        %3722 = vrot.lane.b32.xlu0 %v1977, 64
        %v3723 = vpop.permute.xlu0 %3722
        %3724 = vrot.lane.b32.xlu0 %v1978, 64
        %v3725 = vpop.permute.xlu0 %3724
        %3726 = vrot.lane.b32.xlu0 %v1979, 64
        %v3727 = vpop.permute.xlu0 %3726
        %3728 = vrot.lane.b32.xlu0 %v3514, 124
        %v3729 = vpop.permute.xlu0 %3728
        %3730 = vrot.lane.b32.xlu0 %v3515, 124
        %v3731 = vpop.permute.xlu0 %3730
        %v3734 = vsel %vm2170, %v3721, 0
        %v3736 = vsel %vm2170, %v3723, 0
        %v3738 = vsel %vm2170, %v3725, 0
        %v3740 = vsel %vm2170, %v3727, 0
        %3742 = vmatpush.msra.mxu0 0.0
        %3743 = vmatpush.msra.mxu0 0.0
        %3744 = vmatpush.msra.mxu0 0.0
        %3745 = vmatpush.msra.mxu0 0.0
        %3746 = vmatpush.msra.mxu0 0.0
        %3747 = vmatpush.msra.mxu0 0.0
        %3748 = vmatpush.msra.mxu0 0.0
        %3749 = vmatpush.msra.mxu0 0.0
        %3750 = vmatpush.msra.mxu0 0.0
        %3751 = vmatpush.msra.mxu0 0.0
        %3752 = vmatpush.msra.mxu0 0.0
        %3753 = vmatpush.msra.mxu0 0.0
        %3754 = vmatpush.msra.mxu0 0.0
        %3755 = vmatpush.msra.mxu0 0.0
        %3756 = vmatpush.msra.mxu0 %v3731
        %3757 = vmatpush.msra.mxu0 %v3729
        %3758 = vmatmul.f32.gmra.mxu0 %v3734
        %v3759 = vpop.f32.mrf.mxu0
        %v3760 = vadd.f32 0.0, %v3759
        %3761 = vmatmul.f32.gmra.mxu0 %v3736
        %v3762 = vpop.f32.mrf.mxu0
        %v3763 = vadd.f32 0.0, %v3762
        %3764 = vmatmul.f32.gmra.mxu0 %v3738
        %v3765 = vpop.f32.mrf.mxu0
        %v3766 = vadd.f32 0.0, %v3765
        %3767 = vmatmul.f32.gmra.mxu0 %v3740
        %v3768 = vpop.f32.mrf.mxu0
        %v3769 = vadd.f32 0.0, %v3768
        %3770 = vdwg.mxu0
        %v3771 = vadd.f32 %v3716, %v3760
        %v3772 = vadd.f32 %v3717, %v3763
        %v3773 = vadd.f32 %v3718, %v3766
        %v3774 = vadd.f32 %v3719, %v3769
        %3776 = vset.pattern.permute.xlu0 0
        %3777 = vperm.xlu0 %3776, %v1968
        %v3778 = vpop.permute.xlu0 %3777
        %3781 = vset.pattern.permute.xlu0 0
        %3782 = vperm.xlu0 %3781, %v1969
        %v3783 = vpop.permute.xlu0 %3782
        %3786 = vset.pattern.permute.xlu0 0
        %3787 = vperm.xlu0 %3786, %v1970
        %v3788 = vpop.permute.xlu0 %3787
        %3791 = vset.pattern.permute.xlu0 0
        %3792 = vperm.xlu0 %3791, %v1971
        %v3793 = vpop.permute.xlu0 %3792
        %v3795 = vadd.f32 %v3771, %v3778
        %v3796 = vadd.f32 %v3772, %v3783
        %v3797 = vadd.f32 %v3773, %v3788
        %v3798 = vadd.f32 %v3774, %v3793
        %v3799 = vtanh.pop %v3795
        %v3800 = vtanh.pop %v3796
        %v3801 = vxor.u32 %v3797, 2147483648
        %v3802 = vxor.u32 %v3798, 2147483648
        %v3803 = vmul.f32 %v3801, 1.442695
        %v3804 = vpow.pop %v3803
        %v3805 = vmul.f32 %v3802, 1.442695
        %v3806 = vpow.pop %v3805
        %v3807 = vadd.f32 %v3804, 1.0
        %v3808 = vadd.f32 %v3806, 1.0
        %v3809 = vrcp.pop %v3807
        %v3810 = vmul.f32 %v3807, %v3809
        %v3811 = vsub.f32 1.0, %v3810
        %v3812 = vmul.f32 %v3809, %v3811
        %v3813 = vadd.f32 %v3809, %v3812
        %vm3814 = vweird.f32 %v3807
        %vm3815 = vweird.f32 %v3809
        %vm3816 = vmor %vm3814, %vm3815
        %v3817 = vsel %vm3816, %v3809, %v3813
        %v3818 = vand.u32 2147483647, %v3807
        %vm3819 = vcmp.eq.f32.partialorder %v3818, 8.507059e+37
        %v3820 = vand.u32 %v3807, 2147483648
        %v3821 = vor.u32 1.1754944e-38, %v3820
        %v3822 = vsel %vm3819, %v3821, %v3817
        %v3823 = vmul.f32 1.0, %v3822
        %v3824 = vrcp.pop %v3808
        %v3825 = vmul.f32 %v3808, %v3824
        %v3826 = vsub.f32 1.0, %v3825
        %v3827 = vmul.f32 %v3824, %v3826
        %v3828 = vadd.f32 %v3824, %v3827
        %vm3829 = vweird.f32 %v3808
        %vm3830 = vweird.f32 %v3824
        %vm3831 = vmor %vm3829, %vm3830
        %v3832 = vsel %vm3831, %v3824, %v3828
        %v3833 = vand.u32 2147483647, %v3808
        %vm3834 = vcmp.eq.f32.partialorder %v3833, 8.507059e+37
        %v3835 = vand.u32 %v3808, 2147483648
        %v3836 = vor.u32 1.1754944e-38, %v3835
        %v3837 = vsel %vm3834, %v3836, %v3832
        %v3838 = vmul.f32 1.0, %v3837
        %v3839 = vmul.f32 %v3799, %v3823
        %v3840 = vmul.f32 %v3800, %v3838
        %v3841 = vmul.f32 %v3839, %v2132
        %v3842 = vmul.f32 %v3840, %v2132
        %3844 = vset.pattern.permute.xlu0 0
        %3845 = vperm.xlu0 %3844, %v1984
        %v3846 = vpop.permute.xlu0 %3845
        %3849 = vset.pattern.permute.xlu0 0
        %3850 = vperm.xlu0 %3849, %v1985
        %v3851 = vpop.permute.xlu0 %3850
        %v3854 = vsel %vm2170, %v1990, 0
        %v3857 = vsel %vm2170, %v1991, 0
        %3859 = vmatpush.msra.mxu0 0.0
        %3860 = vmatpush.msra.mxu0 0.0
        %3861 = vmatpush.msra.mxu0 0.0
        %3862 = vmatpush.msra.mxu0 0.0
        %3863 = vmatpush.msra.mxu0 0.0
        %3864 = vmatpush.msra.mxu0 0.0
        %3865 = vmatpush.msra.mxu0 0.0
        %3866 = vmatpush.msra.mxu0 0.0
        %3867 = vmatpush.msra.mxu0 0.0
        %3868 = vmatpush.msra.mxu0 0.0
        %3869 = vmatpush.msra.mxu0 0.0
        %3870 = vmatpush.msra.mxu0 0.0
        %3871 = vmatpush.msra.mxu0 0.0
        %3872 = vmatpush.msra.mxu0 0.0
        %3873 = vmatpush.msra.mxu0 %v3842
        %3874 = vmatpush.msra.mxu0 %v3841
        %3875 = vmatmul.f32.gmra.mxu0 %v3854
        %v3876 = vpop.f32.mrf.mxu0
        %v3877 = vadd.f32 %v3846, %v3876
        %3878 = vmatmul.f32.gmra.mxu0 %v3857
        %v3879 = vpop.f32.mrf.mxu0
        %v3880 = vadd.f32 %v3851, %v3879
        %3881 = vdwg.mxu0
        %v3882 = vadd.f32 %v3502, %v3877
        %v3883 = vadd.f32 %v3503, %v3880
        %v3884 = vmul.f32 %v3882, %v2132
        %v3885 = vmul.f32 %v3883, %v2132
        %3887 = vset.pattern.permute.xlu0 0
        %3888 = vperm.xlu0 %3887, %v1958
        %v3889 = vpop.permute.xlu0 %3888
        %v3892 = vsel %vm2170, %v1959, 0
        %3894 = vmatpush.msra.mxu0 0.0
        %3895 = vmatpush.msra.mxu0 0.0
        %3896 = vmatpush.msra.mxu0 0.0
        %3897 = vmatpush.msra.mxu0 0.0
        %3898 = vmatpush.msra.mxu0 0.0
        %3899 = vmatpush.msra.mxu0 0.0
        %3900 = vmatpush.msra.mxu0 0.0
        %3901 = vmatpush.msra.mxu0 0.0
        %3902 = vmatpush.msra.mxu0 0.0
        %3903 = vmatpush.msra.mxu0 0.0
        %3904 = vmatpush.msra.mxu0 0.0
        %3905 = vmatpush.msra.mxu0 0.0
        %3906 = vmatpush.msra.mxu0 0.0
        %3907 = vmatpush.msra.mxu0 0.0
        %3908 = vmatpush.msra.mxu0 %v3885
        %3909 = vmatpush.msra.mxu0 %v3884
        %3910 = vmatmul.f32.gmra.mxu0 %v3892
        %v3911 = vpop.f32.mrf.mxu0
        %v3912 = vadd.f32 %v3889, %v3911
        %3913 = vdwg.mxu0
        %v3914 = vmul.f32 %v3912, %v2132
        %v3915 = vsub.f32 %v3052, %v3914
        %v3916 = vmul.f32 %v3915, %v2132
        %v3918 = vsel %vm2104, %v3916, 0
        %3920 = vmatpush.msra.mxu0 0.0
        %3921 = vmatpush.msra.mxu0 0.0
        %3922 = vmatpush.msra.mxu0 0.0
        %3923 = vmatpush.msra.mxu0 0.0
        %3924 = vmatpush.msra.mxu0 0.0
        %3925 = vmatpush.msra.mxu0 0.0
        %3926 = vmatpush.msra.mxu0 0.0
        %3927 = vmatpush.msra.mxu0 0.0
        %3928 = vmatpush.msra.mxu0 0.0
        %3929 = vmatpush.msra.mxu0 0.0
        %3930 = vmatpush.msra.mxu0 0.0
        %3931 = vmatpush.msra.mxu0 0.0
        %3932 = vmatpush.msra.mxu0 0.0
        %3933 = vmatpush.msra.mxu0 0.0
        %3934 = vmatpush.msra.mxu0 0.0
        %3935 = vmatpush.msra.mxu0 %v3918
        %3936 = vmatmul.f32.gmra.mxu0 %v2966
        %v3937 = vpop.f32.mrf.mxu0
        %v3938 = vadd.f32 0.0, %v3937
        %3939 = vdwg.mxu0
        %3940 = vmatpush.msra.mxu0 0.0
        %3941 = vmatpush.msra.mxu0 0.0
        %3942 = vmatpush.msra.mxu0 0.0
        %3943 = vmatpush.msra.mxu0 0.0
        %3944 = vmatpush.msra.mxu0 0.0
        %3945 = vmatpush.msra.mxu0 0.0
        %3946 = vmatpush.msra.mxu0 0.0
        %3947 = vmatpush.msra.mxu0 0.0
        %3948 = vmatpush.msra.mxu0 0.0
        %3949 = vmatpush.msra.mxu0 0.0
        %3950 = vmatpush.msra.mxu0 0.0
        %3951 = vmatpush.msra.mxu0 0.0
        %3952 = vmatpush.msra.mxu0 0.0
        %3953 = vmatpush.msra.mxu0 0.0
        %3954 = vmatpush.msra.mxu0 0.0
        %3955 = vmatpush.msra.mxu0 %v3071
        %3956 = vmatmul.f32.gmra.mxu0 %v2992
        %v3957 = vpop.f32.mrf.mxu0
        %v3958 = vadd.f32 %v3938, %v3957
        %3959 = vdwg.mxu0
        %v3960 = vmul.f32 %v3958, %v2132
        %3962 = vrot.lane.b32.xlu0 %v3960, 3
        %v3963 = vpop.permute.xlu0 %3962
        %vm3965 = vcmask 23552
        %v3966 = vsel %vm3965, 0.0, %v3963
        %vm3967 = vcmask 154624
        %v3968 = vsel %vm3967, %v3966, 0.0
        %3971 = vrot.lane.b32.xlu0 %v1942, 120
        %v3972 = vpop.permute.xlu0 %3971
        %3973 = vrot.lane.b32.xlu0 %v1943, 120
        %v3974 = vpop.permute.xlu0 %3973
        %3976 = vrot.lane.b32.xlu0 %v3968, 127
        %v3977 = vpop.permute.xlu0 %3976
        %v3979 = vsel %vm2040, %v3972, 0
        %v3981 = vsel %vm2040, %v3974, 0
        %3983 = vmatpush.msra.mxu0 0.0
        %3984 = vmatpush.msra.mxu0 0.0
        %3985 = vmatpush.msra.mxu0 0.0
        %3986 = vmatpush.msra.mxu0 0.0
        %3987 = vmatpush.msra.mxu0 0.0
        %3988 = vmatpush.msra.mxu0 0.0
        %3989 = vmatpush.msra.mxu0 0.0
        %3990 = vmatpush.msra.mxu0 0.0
        %3991 = vmatpush.msra.mxu0 0.0
        %3992 = vmatpush.msra.mxu0 0.0
        %3993 = vmatpush.msra.mxu0 0.0
        %3994 = vmatpush.msra.mxu0 0.0
        %3995 = vmatpush.msra.mxu0 0.0
        %3996 = vmatpush.msra.mxu0 0.0
        %3997 = vmatpush.msra.mxu0 0.0
        %3998 = vmatpush.msra.mxu0 %v3977
        %3999 = vmatmul.f32.gmra.mxu0 %v3979
        %v4000 = vpop.f32.mrf.mxu0
        %v4001 = vadd.f32 0.0, %v4000
        %4002 = vmatmul.f32.gmra.mxu0 %v3981
        %v4003 = vpop.f32.mrf.mxu0
        %v4004 = vadd.f32 0.0, %v4003
        %4005 = vdwg.mxu0
        %v4006 = vsel %vm2040, %v1942, 0
        %v4008 = vsel %vm2040, %v1943, 0
        %4010 = vmatpush.msra.mxu0 0.0
        %4011 = vmatpush.msra.mxu0 0.0
        %4012 = vmatpush.msra.mxu0 0.0
        %4013 = vmatpush.msra.mxu0 0.0
        %4014 = vmatpush.msra.mxu0 0.0
        %4015 = vmatpush.msra.mxu0 0.0
        %4016 = vmatpush.msra.mxu0 0.0
        %4017 = vmatpush.msra.mxu0 0.0
        %4018 = vmatpush.msra.mxu0 0.0
        %4019 = vmatpush.msra.mxu0 0.0
        %4020 = vmatpush.msra.mxu0 0.0
        %4021 = vmatpush.msra.mxu0 0.0
        %4022 = vmatpush.msra.mxu0 0.0
        %4023 = vmatpush.msra.mxu0 0.0
        %4024 = vmatpush.msra.mxu0 0.0
        %4025 = vmatpush.msra.mxu0 %v3968
        %4026 = vmatmul.f32.gmra.mxu0 %v4006
        %v4027 = vpop.f32.mrf.mxu0
        %v4028 = vadd.f32 %v4001, %v4027
        %4029 = vmatmul.f32.gmra.mxu0 %v4008
        %v4030 = vpop.f32.mrf.mxu0
        %v4031 = vadd.f32 %v4004, %v4030
        %4032 = vdwg.mxu0
        %4033 = vrot.lane.b32.xlu0 %v1942, 112
        %v4034 = vpop.permute.xlu0 %4033
        %4035 = vrot.lane.b32.xlu0 %v1943, 112
        %v4036 = vpop.permute.xlu0 %4035
        %4037 = vrot.lane.b32.xlu0 %v3968, 126
        %v4038 = vpop.permute.xlu0 %4037
        %v4040 = vsel %vm2040, %v4034, 0
        %v4042 = vsel %vm2040, %v4036, 0
        %4044 = vmatpush.msra.mxu0 0.0
        %4045 = vmatpush.msra.mxu0 0.0
        %4046 = vmatpush.msra.mxu0 0.0
        %4047 = vmatpush.msra.mxu0 0.0
        %4048 = vmatpush.msra.mxu0 0.0
        %4049 = vmatpush.msra.mxu0 0.0
        %4050 = vmatpush.msra.mxu0 0.0
        %4051 = vmatpush.msra.mxu0 0.0
        %4052 = vmatpush.msra.mxu0 0.0
        %4053 = vmatpush.msra.mxu0 0.0
        %4054 = vmatpush.msra.mxu0 0.0
        %4055 = vmatpush.msra.mxu0 0.0
        %4056 = vmatpush.msra.mxu0 0.0
        %4057 = vmatpush.msra.mxu0 0.0
        %4058 = vmatpush.msra.mxu0 0.0
        %4059 = vmatpush.msra.mxu0 %v4038
        %4060 = vmatmul.f32.gmra.mxu0 %v4040
        %v4061 = vpop.f32.mrf.mxu0
        %v4062 = vadd.f32 0.0, %v4061
        %4063 = vmatmul.f32.gmra.mxu0 %v4042
        %v4064 = vpop.f32.mrf.mxu0
        %v4065 = vadd.f32 0.0, %v4064
        %4066 = vdwg.mxu0
        %v4067 = vadd.f32 %v4028, %v4062
        %v4068 = vadd.f32 %v4031, %v4065
        %4069 = vrot.lane.b32.xlu0 %v1942, 104
        %v4070 = vpop.permute.xlu0 %4069
        %4071 = vrot.lane.b32.xlu0 %v1943, 104
        %v4072 = vpop.permute.xlu0 %4071
        %4073 = vrot.lane.b32.xlu0 %v3968, 125
        %v4074 = vpop.permute.xlu0 %4073
        %v4076 = vsel %vm2040, %v4070, 0
        %v4078 = vsel %vm2040, %v4072, 0
        %4080 = vmatpush.msra.mxu0 0.0
        %4081 = vmatpush.msra.mxu0 0.0
        %4082 = vmatpush.msra.mxu0 0.0
        %4083 = vmatpush.msra.mxu0 0.0
        %4084 = vmatpush.msra.mxu0 0.0
        %4085 = vmatpush.msra.mxu0 0.0
        %4086 = vmatpush.msra.mxu0 0.0
        %4087 = vmatpush.msra.mxu0 0.0
        %4088 = vmatpush.msra.mxu0 0.0
        %4089 = vmatpush.msra.mxu0 0.0
        %4090 = vmatpush.msra.mxu0 0.0
        %4091 = vmatpush.msra.mxu0 0.0
        %4092 = vmatpush.msra.mxu0 0.0
        %4093 = vmatpush.msra.mxu0 0.0
        %4094 = vmatpush.msra.mxu0 0.0
        %4095 = vmatpush.msra.mxu0 %v4074
        %4096 = vmatmul.f32.gmra.mxu0 %v4076
        %v4097 = vpop.f32.mrf.mxu0
        %v4098 = vadd.f32 0.0, %v4097
        %4099 = vmatmul.f32.gmra.mxu0 %v4078
        %v4100 = vpop.f32.mrf.mxu0
        %v4101 = vadd.f32 0.0, %v4100
        %4102 = vdwg.mxu0
        %v4103 = vadd.f32 %v4067, %v4098
        %v4104 = vadd.f32 %v4068, %v4101
        %4105 = vrot.lane.b32.xlu0 %v1942, 96
        %v4106 = vpop.permute.xlu0 %4105
        %4107 = vrot.lane.b32.xlu0 %v1943, 96
        %v4108 = vpop.permute.xlu0 %4107
        %4109 = vrot.lane.b32.xlu0 %v3968, 124
        %v4110 = vpop.permute.xlu0 %4109
        %v4112 = vsel %vm2040, %v4106, 0
        %v4114 = vsel %vm2040, %v4108, 0
        %4116 = vmatpush.msra.mxu0 0.0
        %4117 = vmatpush.msra.mxu0 0.0
        %4118 = vmatpush.msra.mxu0 0.0
        %4119 = vmatpush.msra.mxu0 0.0
        %4120 = vmatpush.msra.mxu0 0.0
        %4121 = vmatpush.msra.mxu0 0.0
        %4122 = vmatpush.msra.mxu0 0.0
        %4123 = vmatpush.msra.mxu0 0.0
        %4124 = vmatpush.msra.mxu0 0.0
        %4125 = vmatpush.msra.mxu0 0.0
        %4126 = vmatpush.msra.mxu0 0.0
        %4127 = vmatpush.msra.mxu0 0.0
        %4128 = vmatpush.msra.mxu0 0.0
        %4129 = vmatpush.msra.mxu0 0.0
        %4130 = vmatpush.msra.mxu0 0.0
        %4131 = vmatpush.msra.mxu0 %v4110
        %4132 = vmatmul.f32.gmra.mxu0 %v4112
        %v4133 = vpop.f32.mrf.mxu0
        %v4134 = vadd.f32 0.0, %v4133
        %4135 = vmatmul.f32.gmra.mxu0 %v4114
        %v4136 = vpop.f32.mrf.mxu0
        %v4137 = vadd.f32 0.0, %v4136
        %4138 = vdwg.mxu0
        %v4139 = vadd.f32 %v4103, %v4134
        %v4140 = vadd.f32 %v4104, %v4137
        %4141 = vrot.lane.b32.xlu0 %v1942, 88
        %v4142 = vpop.permute.xlu0 %4141
        %4143 = vrot.lane.b32.xlu0 %v1943, 88
        %v4144 = vpop.permute.xlu0 %4143
        %4145 = vrot.lane.b32.xlu0 %v3968, 123
        %v4146 = vpop.permute.xlu0 %4145
        %v4148 = vsel %vm2040, %v4142, 0
        %v4150 = vsel %vm2040, %v4144, 0
        %4152 = vmatpush.msra.mxu0 0.0
        %4153 = vmatpush.msra.mxu0 0.0
        %4154 = vmatpush.msra.mxu0 0.0
        %4155 = vmatpush.msra.mxu0 0.0
        %4156 = vmatpush.msra.mxu0 0.0
        %4157 = vmatpush.msra.mxu0 0.0
        %4158 = vmatpush.msra.mxu0 0.0
        %4159 = vmatpush.msra.mxu0 0.0
        %4160 = vmatpush.msra.mxu0 0.0
        %4161 = vmatpush.msra.mxu0 0.0
        %4162 = vmatpush.msra.mxu0 0.0
        %4163 = vmatpush.msra.mxu0 0.0
        %4164 = vmatpush.msra.mxu0 0.0
        %4165 = vmatpush.msra.mxu0 0.0
        %4166 = vmatpush.msra.mxu0 0.0
        %4167 = vmatpush.msra.mxu0 %v4146
        %4168 = vmatmul.f32.gmra.mxu0 %v4148
        %v4169 = vpop.f32.mrf.mxu0
        %v4170 = vadd.f32 0.0, %v4169
        %4171 = vmatmul.f32.gmra.mxu0 %v4150
        %v4172 = vpop.f32.mrf.mxu0
        %v4173 = vadd.f32 0.0, %v4172
        %4174 = vdwg.mxu0
        %v4175 = vadd.f32 %v4139, %v4170
        %v4176 = vadd.f32 %v4140, %v4173
        %4177 = vrot.lane.b32.xlu0 %v1942, 80
        %v4178 = vpop.permute.xlu0 %4177
        %4179 = vrot.lane.b32.xlu0 %v1943, 80
        %v4180 = vpop.permute.xlu0 %4179
        %4181 = vrot.lane.b32.xlu0 %v3968, 122
        %v4182 = vpop.permute.xlu0 %4181
        %v4184 = vsel %vm2040, %v4178, 0
        %v4186 = vsel %vm2040, %v4180, 0
        %4188 = vmatpush.msra.mxu0 0.0
        %4189 = vmatpush.msra.mxu0 0.0
        %4190 = vmatpush.msra.mxu0 0.0
        %4191 = vmatpush.msra.mxu0 0.0
        %4192 = vmatpush.msra.mxu0 0.0
        %4193 = vmatpush.msra.mxu0 0.0
        %4194 = vmatpush.msra.mxu0 0.0
        %4195 = vmatpush.msra.mxu0 0.0
        %4196 = vmatpush.msra.mxu0 0.0
        %4197 = vmatpush.msra.mxu0 0.0
        %4198 = vmatpush.msra.mxu0 0.0
        %4199 = vmatpush.msra.mxu0 0.0
        %4200 = vmatpush.msra.mxu0 0.0
        %4201 = vmatpush.msra.mxu0 0.0
        %4202 = vmatpush.msra.mxu0 0.0
        %4203 = vmatpush.msra.mxu0 %v4182
        %4204 = vmatmul.f32.gmra.mxu0 %v4184
        %v4205 = vpop.f32.mrf.mxu0
        %v4206 = vadd.f32 0.0, %v4205
        %4207 = vmatmul.f32.gmra.mxu0 %v4186
        %v4208 = vpop.f32.mrf.mxu0
        %v4209 = vadd.f32 0.0, %v4208
        %4210 = vdwg.mxu0
        %v4211 = vadd.f32 %v4175, %v4206
        %v4212 = vadd.f32 %v4176, %v4209
        %4214 = vset.pattern.permute.xlu0 0
        %4215 = vperm.xlu0 %4214, %v1940
        %v4216 = vpop.permute.xlu0 %4215
        %4219 = vset.pattern.permute.xlu0 0
        %4220 = vperm.xlu0 %4219, %v1941
        %v4221 = vpop.permute.xlu0 %4220
        %v4223 = vadd.f32 %v4211, %v4216
        %v4224 = vadd.f32 %v4212, %v4221
        %vm4225 = vcmp.gt.f32.partialorder %v4223, 0.0
        %vm4226 = vcmp.gt.f32.partialorder %v4224, 0.0
        %v4227 = vmul.f32 %v4223, 0.1
        %v4228 = vmul.f32 %v4224, 0.1
        %v4229 = vsel %vm4225, %v4223, %v4227
        %v4230 = vsel %vm4226, %v4224, %v4228
        %v4231 = vadd.s32 %v2029, 8
        %4234 = vrot.lane.b32.xlu0 %v4229, 1
        %v4235 = vpop.permute.xlu0 %4234
        %4236 = vrot.lane.b32.xlu0 %v4230, 1
        %v4237 = vpop.permute.xlu0 %4236
        %vm4240 = vcmask 7168
        %v4241 = vsel %vm4240, 0.0, %v4235
        %v4242 = vsel %vm4240, 0.0, %v4237
        %4244 = vrot.lane.b32.xlu0 %v1953, 112
        %v4245 = vpop.permute.xlu0 %4244
        %v4246 = vsel %vm2170, %v4245, 0
        %4248 = vmatpush.msra.mxu0 0.0
        %4249 = vmatpush.msra.mxu0 0.0
        %4250 = vmatpush.msra.mxu0 0.0
        %4251 = vmatpush.msra.mxu0 0.0
        %4252 = vmatpush.msra.mxu0 0.0
        %4253 = vmatpush.msra.mxu0 0.0
        %4254 = vmatpush.msra.mxu0 0.0
        %4255 = vmatpush.msra.mxu0 0.0
        %4256 = vmatpush.msra.mxu0 0.0
        %4257 = vmatpush.msra.mxu0 0.0
        %4258 = vmatpush.msra.mxu0 0.0
        %4259 = vmatpush.msra.mxu0 0.0
        %4260 = vmatpush.msra.mxu0 0.0
        %4261 = vmatpush.msra.mxu0 0.0
        %4262 = vmatpush.msra.mxu0 %v4242
        %4263 = vmatpush.msra.mxu0 %v4241
        %4264 = vmatmul.f32.gmra.mxu0 %v4246
        %v4265 = vpop.f32.mrf.mxu0
        %v4266 = vadd.f32 0.0, %v4265
        %4267 = vdwg.mxu0
        %v4268 = vsel %vm2170, %v1953, 0
        %4270 = vmatpush.msra.mxu0 0.0
        %4271 = vmatpush.msra.mxu0 0.0
        %4272 = vmatpush.msra.mxu0 0.0
        %4273 = vmatpush.msra.mxu0 0.0
        %4274 = vmatpush.msra.mxu0 0.0
        %4275 = vmatpush.msra.mxu0 0.0
        %4276 = vmatpush.msra.mxu0 0.0
        %4277 = vmatpush.msra.mxu0 0.0
        %4278 = vmatpush.msra.mxu0 0.0
        %4279 = vmatpush.msra.mxu0 0.0
        %4280 = vmatpush.msra.mxu0 0.0
        %4281 = vmatpush.msra.mxu0 0.0
        %4282 = vmatpush.msra.mxu0 0.0
        %4283 = vmatpush.msra.mxu0 0.0
        %4284 = vmatpush.msra.mxu0 %v4230
        %4285 = vmatpush.msra.mxu0 %v4229
        %4286 = vmatmul.f32.gmra.mxu0 %v4268
        %v4287 = vpop.f32.mrf.mxu0
        %v4288 = vadd.f32 %v4266, %v4287
        %4289 = vdwg.mxu0
        %v4290 = vmul.u32 %v2029, 2
        %v4291 = vmul.u32 %v4231, 2
        %vm4292 = vcmp.eq.s32.totalorder %v2031, %v4290
        %vm4293 = vcmp.eq.s32.totalorder %v2031, %v4291
        %v4294 = vsel %vm4292, 1, 0
        %v4295 = vsel %vm4293, 1, 0
        %v4296 = vcvt.s32.f32 %v4294
        %v4297 = vcvt.s32.f32 %v4295
        %4298 = vrot.lane.b32.xlu0 %v4229, 127
        %v4299 = vpop.permute.xlu0 %4298
        %4300 = vrot.lane.b32.xlu0 %v4230, 127
        %v4301 = vpop.permute.xlu0 %4300
        %vm4304 = vcmask 121856
        %v4305 = vsel %vm4304, %v4299, 0.0
        %v4306 = vsel %vm4304, %v4301, 0.0
        %4308 = vrot.lane.b32.xlu0 %v1954, 112
        %v4309 = vpop.permute.xlu0 %4308
        %v4310 = vsel %vm2170, %v4309, 0
        %4312 = vmatpush.msra.mxu0 0.0
        %4313 = vmatpush.msra.mxu0 0.0
        %4314 = vmatpush.msra.mxu0 0.0
        %4315 = vmatpush.msra.mxu0 0.0
        %4316 = vmatpush.msra.mxu0 0.0
        %4317 = vmatpush.msra.mxu0 0.0
        %4318 = vmatpush.msra.mxu0 0.0
        %4319 = vmatpush.msra.mxu0 0.0
        %4320 = vmatpush.msra.mxu0 0.0
        %4321 = vmatpush.msra.mxu0 0.0
        %4322 = vmatpush.msra.mxu0 0.0
        %4323 = vmatpush.msra.mxu0 0.0
        %4324 = vmatpush.msra.mxu0 0.0
        %4325 = vmatpush.msra.mxu0 0.0
        %4326 = vmatpush.msra.mxu0 %v4230
        %4327 = vmatpush.msra.mxu0 %v4229
        %4328 = vmatmul.f32.gmra.mxu0 %v4310
        %v4329 = vpop.f32.mrf.mxu0
        %v4330 = vadd.f32 0.0, %v4329
        %4331 = vdwg.mxu0
        %v4332 = vsel %vm2170, %v1954, 0
        %4334 = vmatpush.msra.mxu0 0.0
        %4335 = vmatpush.msra.mxu0 0.0
        %4336 = vmatpush.msra.mxu0 0.0
        %4337 = vmatpush.msra.mxu0 0.0
        %4338 = vmatpush.msra.mxu0 0.0
        %4339 = vmatpush.msra.mxu0 0.0
        %4340 = vmatpush.msra.mxu0 0.0
        %4341 = vmatpush.msra.mxu0 0.0
        %4342 = vmatpush.msra.mxu0 0.0
        %4343 = vmatpush.msra.mxu0 0.0
        %4344 = vmatpush.msra.mxu0 0.0
        %4345 = vmatpush.msra.mxu0 0.0
        %4346 = vmatpush.msra.mxu0 0.0
        %4347 = vmatpush.msra.mxu0 0.0
        %4348 = vmatpush.msra.mxu0 %v4306
        %4349 = vmatpush.msra.mxu0 %v4305
        %4350 = vmatmul.f32.gmra.mxu0 %v4332
        %v4351 = vpop.f32.mrf.mxu0
        %v4352 = vadd.f32 %v4330, %v4351
        %4353 = vdwg.mxu0
        %v4354 = vadd.s32 %v4290, 1
        %v4355 = vadd.s32 %v4291, 1
        %vm4356 = vcmp.eq.s32.totalorder %v2031, %v4354
        %vm4357 = vcmp.eq.s32.totalorder %v2031, %v4355
        %v4358 = vsel %vm4356, 1, 0
        %v4359 = vsel %vm4357, 1, 0
        %v4360 = vcvt.s32.f32 %v4358
        %v4361 = vcvt.s32.f32 %v4359
        %v4363 = vsel %vm2170, %v4352, 0
        %4365 = vmatpush.msra.mxu0 0.0
        %4366 = vmatpush.msra.mxu0 0.0
        %4367 = vmatpush.msra.mxu0 0.0
        %4368 = vmatpush.msra.mxu0 0.0
        %4369 = vmatpush.msra.mxu0 0.0
        %4370 = vmatpush.msra.mxu0 0.0
        %4371 = vmatpush.msra.mxu0 0.0
        %4372 = vmatpush.msra.mxu0 0.0
        %4373 = vmatpush.msra.mxu0 0.0
        %4374 = vmatpush.msra.mxu0 0.0
        %4375 = vmatpush.msra.mxu0 0.0
        %4376 = vmatpush.msra.mxu0 0.0
        %4377 = vmatpush.msra.mxu0 0.0
        %4378 = vmatpush.msra.mxu0 0.0
        %4379 = vmatpush.msra.mxu0 %v4361
        %4380 = vmatpush.msra.mxu0 %v4360
        %4381 = vmatmul.f32.gmra.mxu0 %v4363
        %v4382 = vpop.f32.mrf.mxu0
        %v4383 = vadd.f32 0.0, %v4382
        %4384 = vdwg.mxu0
        %v4386 = vsel %vm2170, %v4288, 0
        %4388 = vmatpush.msra.mxu0 0.0
        %4389 = vmatpush.msra.mxu0 0.0
        %4390 = vmatpush.msra.mxu0 0.0
        %4391 = vmatpush.msra.mxu0 0.0
        %4392 = vmatpush.msra.mxu0 0.0
        %4393 = vmatpush.msra.mxu0 0.0
        %4394 = vmatpush.msra.mxu0 0.0
        %4395 = vmatpush.msra.mxu0 0.0
        %4396 = vmatpush.msra.mxu0 0.0
        %4397 = vmatpush.msra.mxu0 0.0
        %4398 = vmatpush.msra.mxu0 0.0
        %4399 = vmatpush.msra.mxu0 0.0
        %4400 = vmatpush.msra.mxu0 0.0
        %4401 = vmatpush.msra.mxu0 0.0
        %4402 = vmatpush.msra.mxu0 %v4297
        %4403 = vmatpush.msra.mxu0 %v4296
        %4404 = vmatmul.f32.gmra.mxu0 %v4386
        %v4405 = vpop.f32.mrf.mxu0
        %v4406 = vadd.f32 %v4383, %v4405
        %4407 = vdwg.mxu0
        %4409 = vset.pattern.permute.xlu0 0
        %4410 = vperm.xlu0 %4409, %v1952
        %v4411 = vpop.permute.xlu0 %4410
        %v4413 = vadd.f32 %v4406, %v4411
        %vm4414 = vcmp.gt.f32.partialorder %v4413, 0.0
        %v4415 = vmul.f32 %v4413, 0.1
        %v4416 = vsel %vm4414, %v4413, %v4415
        %4418 = vrot.lane.b32.xlu0 %v4416, 1
        %v4419 = vpop.permute.xlu0 %4418
        %v4421 = vsel %vm4240, 0.0, %v4419
        %vm4422 = vcmask 269312
        %v4423 = vsel %vm4422, %v4421, 0.0
        %4425 = vrot.lane.b32.xlu0 %v1946, 120
        %v4426 = vpop.permute.xlu0 %4425
        %4428 = vrot.lane.b32.xlu0 %v4423, 127
        %v4429 = vpop.permute.xlu0 %4428
        %v4431 = vsel %vm2040, %v4426, 0
        %4433 = vmatpush.msra.mxu0 0.0
        %4434 = vmatpush.msra.mxu0 0.0
        %4435 = vmatpush.msra.mxu0 0.0
        %4436 = vmatpush.msra.mxu0 0.0
        %4437 = vmatpush.msra.mxu0 0.0
        %4438 = vmatpush.msra.mxu0 0.0
        %4439 = vmatpush.msra.mxu0 0.0
        %4440 = vmatpush.msra.mxu0 0.0
        %4441 = vmatpush.msra.mxu0 0.0
        %4442 = vmatpush.msra.mxu0 0.0
        %4443 = vmatpush.msra.mxu0 0.0
        %4444 = vmatpush.msra.mxu0 0.0
        %4445 = vmatpush.msra.mxu0 0.0
        %4446 = vmatpush.msra.mxu0 0.0
        %4447 = vmatpush.msra.mxu0 0.0
        %4448 = vmatpush.msra.mxu0 %v4429
        %4449 = vmatmul.f32.gmra.mxu0 %v4431
        %v4450 = vpop.f32.mrf.mxu0
        %v4451 = vadd.f32 0.0, %v4450
        %4452 = vdwg.mxu0
        %v4453 = vsel %vm2040, %v1946, 0
        %4455 = vmatpush.msra.mxu0 0.0
        %4456 = vmatpush.msra.mxu0 0.0
        %4457 = vmatpush.msra.mxu0 0.0
        %4458 = vmatpush.msra.mxu0 0.0
        %4459 = vmatpush.msra.mxu0 0.0
        %4460 = vmatpush.msra.mxu0 0.0
        %4461 = vmatpush.msra.mxu0 0.0
        %4462 = vmatpush.msra.mxu0 0.0
        %4463 = vmatpush.msra.mxu0 0.0
        %4464 = vmatpush.msra.mxu0 0.0
        %4465 = vmatpush.msra.mxu0 0.0
        %4466 = vmatpush.msra.mxu0 0.0
        %4467 = vmatpush.msra.mxu0 0.0
        %4468 = vmatpush.msra.mxu0 0.0
        %4469 = vmatpush.msra.mxu0 0.0
        %4470 = vmatpush.msra.mxu0 %v4423
        %4471 = vmatmul.f32.gmra.mxu0 %v4453
        %v4472 = vpop.f32.mrf.mxu0
        %v4473 = vadd.f32 %v4451, %v4472
        %4474 = vdwg.mxu0
        %4475 = vrot.lane.b32.xlu0 %v1946, 112
        %v4476 = vpop.permute.xlu0 %4475
        %4477 = vrot.lane.b32.xlu0 %v4423, 126
        %v4478 = vpop.permute.xlu0 %4477
        %v4480 = vsel %vm2040, %v4476, 0
        %4482 = vmatpush.msra.mxu0 0.0
        %4483 = vmatpush.msra.mxu0 0.0
        %4484 = vmatpush.msra.mxu0 0.0
        %4485 = vmatpush.msra.mxu0 0.0
        %4486 = vmatpush.msra.mxu0 0.0
        %4487 = vmatpush.msra.mxu0 0.0
        %4488 = vmatpush.msra.mxu0 0.0
        %4489 = vmatpush.msra.mxu0 0.0
        %4490 = vmatpush.msra.mxu0 0.0
        %4491 = vmatpush.msra.mxu0 0.0
        %4492 = vmatpush.msra.mxu0 0.0
        %4493 = vmatpush.msra.mxu0 0.0
        %4494 = vmatpush.msra.mxu0 0.0
        %4495 = vmatpush.msra.mxu0 0.0
        %4496 = vmatpush.msra.mxu0 0.0
        %4497 = vmatpush.msra.mxu0 %v4478
        %4498 = vmatmul.f32.gmra.mxu0 %v4480
        %v4499 = vpop.f32.mrf.mxu0
        %v4500 = vadd.f32 0.0, %v4499
        %4501 = vdwg.mxu0
        %v4502 = vadd.f32 %v4473, %v4500
        %4504 = vset.pattern.permute.xlu0 0
        %4505 = vperm.xlu0 %4504, %v1944
        %v4506 = vpop.permute.xlu0 %4505
        %v4508 = vadd.f32 %v4502, %v4506
        %v4509 = vadd.f32 %v4508, %v4413
        %vm4510 = vcmp.gt.f32.partialorder %v4509, 0.0
        %v4511 = vmul.f32 %v4509, 0.1
        %v4512 = vsel %vm4510, %v4509, %v4511
        %4514 = vrot.lane.b32.xlu0 %v4512, 3
        %v4515 = vpop.permute.xlu0 %4514
        %v4517 = vsel %vm3965, 0.0, %v4515
        %vm4518 = vcmask 285696
        %v4519 = vsel %vm4518, %v4517, 0.0
        %4521 = vrot.lane.b32.xlu0 %v1947, 120
        %v4522 = vpop.permute.xlu0 %4521
        %4524 = vrot.lane.b32.xlu0 %v4519, 125
        %v4525 = vpop.permute.xlu0 %4524
        %v4527 = vsel %vm2040, %v4522, 0
        %4529 = vmatpush.msra.mxu0 0.0
        %4530 = vmatpush.msra.mxu0 0.0
        %4531 = vmatpush.msra.mxu0 0.0
        %4532 = vmatpush.msra.mxu0 0.0
        %4533 = vmatpush.msra.mxu0 0.0
        %4534 = vmatpush.msra.mxu0 0.0
        %4535 = vmatpush.msra.mxu0 0.0
        %4536 = vmatpush.msra.mxu0 0.0
        %4537 = vmatpush.msra.mxu0 0.0
        %4538 = vmatpush.msra.mxu0 0.0
        %4539 = vmatpush.msra.mxu0 0.0
        %4540 = vmatpush.msra.mxu0 0.0
        %4541 = vmatpush.msra.mxu0 0.0
        %4542 = vmatpush.msra.mxu0 0.0
        %4543 = vmatpush.msra.mxu0 0.0
        %4544 = vmatpush.msra.mxu0 %v4525
        %4545 = vmatmul.f32.gmra.mxu0 %v4527
        %v4546 = vpop.f32.mrf.mxu0
        %v4547 = vadd.f32 0.0, %v4546
        %4548 = vdwg.mxu0
        %v4549 = vsel %vm2040, %v1947, 0
        %4551 = vmatpush.msra.mxu0 0.0
        %4552 = vmatpush.msra.mxu0 0.0
        %4553 = vmatpush.msra.mxu0 0.0
        %4554 = vmatpush.msra.mxu0 0.0
        %4555 = vmatpush.msra.mxu0 0.0
        %4556 = vmatpush.msra.mxu0 0.0
        %4557 = vmatpush.msra.mxu0 0.0
        %4558 = vmatpush.msra.mxu0 0.0
        %4559 = vmatpush.msra.mxu0 0.0
        %4560 = vmatpush.msra.mxu0 0.0
        %4561 = vmatpush.msra.mxu0 0.0
        %4562 = vmatpush.msra.mxu0 0.0
        %4563 = vmatpush.msra.mxu0 0.0
        %4564 = vmatpush.msra.mxu0 0.0
        %4565 = vmatpush.msra.mxu0 0.0
        %4566 = vmatpush.msra.mxu0 %v4519
        %4567 = vmatmul.f32.gmra.mxu0 %v4549
        %v4568 = vpop.f32.mrf.mxu0
        %v4569 = vadd.f32 %v4547, %v4568
        %4570 = vdwg.mxu0
        %4571 = vrot.lane.b32.xlu0 %v1947, 112
        %v4572 = vpop.permute.xlu0 %4571
        %4573 = vrot.lane.b32.xlu0 %v4519, 122
        %v4574 = vpop.permute.xlu0 %4573
        %v4576 = vsel %vm2040, %v4572, 0
        %4578 = vmatpush.msra.mxu0 0.0
        %4579 = vmatpush.msra.mxu0 0.0
        %4580 = vmatpush.msra.mxu0 0.0
        %4581 = vmatpush.msra.mxu0 0.0
        %4582 = vmatpush.msra.mxu0 0.0
        %4583 = vmatpush.msra.mxu0 0.0
        %4584 = vmatpush.msra.mxu0 0.0
        %4585 = vmatpush.msra.mxu0 0.0
        %4586 = vmatpush.msra.mxu0 0.0
        %4587 = vmatpush.msra.mxu0 0.0
        %4588 = vmatpush.msra.mxu0 0.0
        %4589 = vmatpush.msra.mxu0 0.0
        %4590 = vmatpush.msra.mxu0 0.0
        %4591 = vmatpush.msra.mxu0 0.0
        %4592 = vmatpush.msra.mxu0 0.0
        %4593 = vmatpush.msra.mxu0 %v4574
        %4594 = vmatmul.f32.gmra.mxu0 %v4576
        %v4595 = vpop.f32.mrf.mxu0
        %v4596 = vadd.f32 0.0, %v4595
        %4597 = vdwg.mxu0
        %v4598 = vadd.f32 %v4569, %v4596
        %4600 = vset.pattern.permute.xlu0 0
        %4601 = vperm.xlu0 %4600, %v1945
        %v4602 = vpop.permute.xlu0 %4601
        %v4604 = vadd.f32 %v4598, %v4602
        %v4605 = vadd.f32 %v4604, %v4509
        %vm4606 = vcmp.gt.f32.partialorder %v4605, 0.0
        %v4607 = vmul.f32 %v4605, 0.1
        %v4608 = vsel %vm4606, %v4605, %v4607
        %v4609 = vadd.s32 %v2029, 16
        %v4610 = vadd.s32 %v2029, 24
        %4612 = vrot.lane.b32.xlu0 %v4608, 1
        %v4613 = vpop.permute.xlu0 %4612
        %v4615 = vsel %vm4240, 0.0, %v4613
        %4617 = vrot.lane.b32.xlu0 %v1956, 120
        %v4618 = vpop.permute.xlu0 %4617
        %v4619 = vsel %vm2040, %v4618, 0
        %4621 = vmatpush.msra.mxu0 0.0
        %4622 = vmatpush.msra.mxu0 0.0
        %4623 = vmatpush.msra.mxu0 0.0
        %4624 = vmatpush.msra.mxu0 0.0
        %4625 = vmatpush.msra.mxu0 0.0
        %4626 = vmatpush.msra.mxu0 0.0
        %4627 = vmatpush.msra.mxu0 0.0
        %4628 = vmatpush.msra.mxu0 0.0
        %4629 = vmatpush.msra.mxu0 0.0
        %4630 = vmatpush.msra.mxu0 0.0
        %4631 = vmatpush.msra.mxu0 0.0
        %4632 = vmatpush.msra.mxu0 0.0
        %4633 = vmatpush.msra.mxu0 0.0
        %4634 = vmatpush.msra.mxu0 0.0
        %4635 = vmatpush.msra.mxu0 0.0
        %4636 = vmatpush.msra.mxu0 %v4615
        %4637 = vmatmul.f32.gmra.mxu0 %v4619
        %v4638 = vpop.f32.mrf.mxu0
        %v4639 = vadd.f32 0.0, %v4638
        %4640 = vdwg.mxu0
        %v4641 = vsel %vm2040, %v1956, 0
        %4643 = vmatpush.msra.mxu0 0.0
        %4644 = vmatpush.msra.mxu0 0.0
        %4645 = vmatpush.msra.mxu0 0.0
        %4646 = vmatpush.msra.mxu0 0.0
        %4647 = vmatpush.msra.mxu0 0.0
        %4648 = vmatpush.msra.mxu0 0.0
        %4649 = vmatpush.msra.mxu0 0.0
        %4650 = vmatpush.msra.mxu0 0.0
        %4651 = vmatpush.msra.mxu0 0.0
        %4652 = vmatpush.msra.mxu0 0.0
        %4653 = vmatpush.msra.mxu0 0.0
        %4654 = vmatpush.msra.mxu0 0.0
        %4655 = vmatpush.msra.mxu0 0.0
        %4656 = vmatpush.msra.mxu0 0.0
        %4657 = vmatpush.msra.mxu0 0.0
        %4658 = vmatpush.msra.mxu0 %v4608
        %4659 = vmatmul.f32.gmra.mxu0 %v4641
        %v4660 = vpop.f32.mrf.mxu0
        %v4661 = vadd.f32 %v4639, %v4660
        %4662 = vdwg.mxu0
        %v4663 = vmul.u32 %v4609, 2
        %v4664 = vmul.u32 %v4610, 2
        %vm4665 = vcmp.eq.s32.totalorder %v2031, %v4663
        %vm4666 = vcmp.eq.s32.totalorder %v2031, %v4664
        %v4667 = vsel %vm4665, 1, 0
        %v4668 = vsel %vm4666, 1, 0
        %v4669 = vcvt.s32.f32 %v4667
        %v4670 = vcvt.s32.f32 %v4668
        %4671 = vrot.lane.b32.xlu0 %v4608, 127
        %v4672 = vpop.permute.xlu0 %4671
        %vm4674 = vcmask 252928
        %v4675 = vsel %vm4674, %v4672, 0.0
        %4677 = vrot.lane.b32.xlu0 %v1957, 120
        %v4678 = vpop.permute.xlu0 %4677
        %v4679 = vsel %vm2040, %v4678, 0
        %4681 = vmatpush.msra.mxu0 0.0
        %4682 = vmatpush.msra.mxu0 0.0
        %4683 = vmatpush.msra.mxu0 0.0
        %4684 = vmatpush.msra.mxu0 0.0
        %4685 = vmatpush.msra.mxu0 0.0
        %4686 = vmatpush.msra.mxu0 0.0
        %4687 = vmatpush.msra.mxu0 0.0
        %4688 = vmatpush.msra.mxu0 0.0
        %4689 = vmatpush.msra.mxu0 0.0
        %4690 = vmatpush.msra.mxu0 0.0
        %4691 = vmatpush.msra.mxu0 0.0
        %4692 = vmatpush.msra.mxu0 0.0
        %4693 = vmatpush.msra.mxu0 0.0
        %4694 = vmatpush.msra.mxu0 0.0
        %4695 = vmatpush.msra.mxu0 0.0
        %4696 = vmatpush.msra.mxu0 %v4608
        %4697 = vmatmul.f32.gmra.mxu0 %v4679
        %v4698 = vpop.f32.mrf.mxu0
        %v4699 = vadd.f32 0.0, %v4698
        %4700 = vdwg.mxu0
        %v4701 = vsel %vm2040, %v1957, 0
        %4703 = vmatpush.msra.mxu0 0.0
        %4704 = vmatpush.msra.mxu0 0.0
        %4705 = vmatpush.msra.mxu0 0.0
        %4706 = vmatpush.msra.mxu0 0.0
        %4707 = vmatpush.msra.mxu0 0.0
        %4708 = vmatpush.msra.mxu0 0.0
        %4709 = vmatpush.msra.mxu0 0.0
        %4710 = vmatpush.msra.mxu0 0.0
        %4711 = vmatpush.msra.mxu0 0.0
        %4712 = vmatpush.msra.mxu0 0.0
        %4713 = vmatpush.msra.mxu0 0.0
        %4714 = vmatpush.msra.mxu0 0.0
        %4715 = vmatpush.msra.mxu0 0.0
        %4716 = vmatpush.msra.mxu0 0.0
        %4717 = vmatpush.msra.mxu0 0.0
        %4718 = vmatpush.msra.mxu0 %v4675
        %4719 = vmatmul.f32.gmra.mxu0 %v4701
        %v4720 = vpop.f32.mrf.mxu0
        %v4721 = vadd.f32 %v4699, %v4720
        %4722 = vdwg.mxu0
        %v4723 = vadd.s32 %v4663, 1
        %v4724 = vadd.s32 %v4664, 1
        %vm4725 = vcmp.eq.s32.totalorder %v2031, %v4723
        %vm4726 = vcmp.eq.s32.totalorder %v2031, %v4724
        %v4727 = vsel %vm4725, 1, 0
        %v4728 = vsel %vm4726, 1, 0
        %v4729 = vcvt.s32.f32 %v4727
        %v4730 = vcvt.s32.f32 %v4728
        %vm4731 = vcmask 261120
        %v4733 = vsel %vm4731, %v4721, 0
        %4735 = vmatpush.msra.mxu0 0.0
        %4736 = vmatpush.msra.mxu0 0.0
        %4737 = vmatpush.msra.mxu0 0.0
        %4738 = vmatpush.msra.mxu0 0.0
        %4739 = vmatpush.msra.mxu0 0.0
        %4740 = vmatpush.msra.mxu0 0.0
        %4741 = vmatpush.msra.mxu0 0.0
        %4742 = vmatpush.msra.mxu0 0.0
        %4743 = vmatpush.msra.mxu0 0.0
        %4744 = vmatpush.msra.mxu0 0.0
        %4745 = vmatpush.msra.mxu0 0.0
        %4746 = vmatpush.msra.mxu0 0.0
        %4747 = vmatpush.msra.mxu0 %v4730
        %4748 = vmatpush.msra.mxu0 %v4729
        %4749 = vmatpush.msra.mxu0 %v4361
        %4750 = vmatpush.msra.mxu0 %v4360
        %4751 = vmatmul.f32.gmra.mxu0 %v4733
        %v4752 = vpop.f32.mrf.mxu0
        %v4753 = vadd.f32 0.0, %v4752
        %4754 = vdwg.mxu0
        %v4756 = vsel %vm4731, %v4661, 0
        %4758 = vmatpush.msra.mxu0 0.0
        %4759 = vmatpush.msra.mxu0 0.0
        %4760 = vmatpush.msra.mxu0 0.0
        %4761 = vmatpush.msra.mxu0 0.0
        %4762 = vmatpush.msra.mxu0 0.0
        %4763 = vmatpush.msra.mxu0 0.0
        %4764 = vmatpush.msra.mxu0 0.0
        %4765 = vmatpush.msra.mxu0 0.0
        %4766 = vmatpush.msra.mxu0 0.0
        %4767 = vmatpush.msra.mxu0 0.0
        %4768 = vmatpush.msra.mxu0 0.0
        %4769 = vmatpush.msra.mxu0 0.0
        %4770 = vmatpush.msra.mxu0 %v4670
        %4771 = vmatpush.msra.mxu0 %v4669
        %4772 = vmatpush.msra.mxu0 %v4297
        %4773 = vmatpush.msra.mxu0 %v4296
        %4774 = vmatmul.f32.gmra.mxu0 %v4756
        %v4775 = vpop.f32.mrf.mxu0
        %v4776 = vadd.f32 %v4753, %v4775
        %4777 = vdwg.mxu0
        %4779 = vset.pattern.permute.xlu0 0
        %4780 = vperm.xlu0 %4779, %v1955
        %v4781 = vpop.permute.xlu0 %4780
        %v4783 = vadd.f32 %v4776, %v4781
        %vm4784 = vcmp.gt.f32.partialorder %v4783, 0.0
        %v4785 = vmul.f32 %v4783, 0.1
        %v4786 = vsel %vm4784, %v4783, %v4785
        %4788 = vrot.lane.b32.xlu0 %v4786, 1
        %v4789 = vpop.permute.xlu0 %4788
        %v4791 = vsel %vm4240, 0.0, %v4789
        %vm4792 = vcmask 531456
        %v4793 = vsel %vm4792, %v4791, 0.0
        %4795 = vrot.lane.b32.xlu0 %v1950, 124
        %v4796 = vpop.permute.xlu0 %4795
        %4798 = vrot.lane.b32.xlu0 %v4793, 127
        %v4799 = vpop.permute.xlu0 %4798
        %v4800 = vsel %vm2097, %v4796, 0
        %v4802 = vsel %vm2104, %v4799, 0
        %4804 = vmatpush.msra.mxu0 0.0
        %4805 = vmatpush.msra.mxu0 0.0
        %4806 = vmatpush.msra.mxu0 0.0
        %4807 = vmatpush.msra.mxu0 0.0
        %4808 = vmatpush.msra.mxu0 0.0
        %4809 = vmatpush.msra.mxu0 0.0
        %4810 = vmatpush.msra.mxu0 0.0
        %4811 = vmatpush.msra.mxu0 0.0
        %4812 = vmatpush.msra.mxu0 0.0
        %4813 = vmatpush.msra.mxu0 0.0
        %4814 = vmatpush.msra.mxu0 0.0
        %4815 = vmatpush.msra.mxu0 0.0
        %4816 = vmatpush.msra.mxu0 0.0
        %4817 = vmatpush.msra.mxu0 0.0
        %4818 = vmatpush.msra.mxu0 0.0
        %4819 = vmatpush.msra.mxu0 %v4802
        %4820 = vmatmul.f32.gmra.mxu0 %v4800
        %v4821 = vpop.f32.mrf.mxu0
        %v4822 = vadd.f32 0.0, %v4821
        %4823 = vdwg.mxu0
        %v4824 = vsel %vm2097, %v1950, 0
        %v4826 = vsel %vm2104, %v4793, 0
        %4828 = vmatpush.msra.mxu0 0.0
        %4829 = vmatpush.msra.mxu0 0.0
        %4830 = vmatpush.msra.mxu0 0.0
        %4831 = vmatpush.msra.mxu0 0.0
        %4832 = vmatpush.msra.mxu0 0.0
        %4833 = vmatpush.msra.mxu0 0.0
        %4834 = vmatpush.msra.mxu0 0.0
        %4835 = vmatpush.msra.mxu0 0.0
        %4836 = vmatpush.msra.mxu0 0.0
        %4837 = vmatpush.msra.mxu0 0.0
        %4838 = vmatpush.msra.mxu0 0.0
        %4839 = vmatpush.msra.mxu0 0.0
        %4840 = vmatpush.msra.mxu0 0.0
        %4841 = vmatpush.msra.mxu0 0.0
        %4842 = vmatpush.msra.mxu0 0.0
        %4843 = vmatpush.msra.mxu0 %v4826
        %4844 = vmatmul.f32.gmra.mxu0 %v4824
        %v4845 = vpop.f32.mrf.mxu0
        %v4846 = vadd.f32 %v4822, %v4845
        %4847 = vdwg.mxu0
        %4848 = vrot.lane.b32.xlu0 %v1950, 120
        %v4849 = vpop.permute.xlu0 %4848
        %4850 = vrot.lane.b32.xlu0 %v4793, 126
        %v4851 = vpop.permute.xlu0 %4850
        %v4852 = vsel %vm2097, %v4849, 0
        %v4854 = vsel %vm2104, %v4851, 0
        %4856 = vmatpush.msra.mxu0 0.0
        %4857 = vmatpush.msra.mxu0 0.0
        %4858 = vmatpush.msra.mxu0 0.0
        %4859 = vmatpush.msra.mxu0 0.0
        %4860 = vmatpush.msra.mxu0 0.0
        %4861 = vmatpush.msra.mxu0 0.0
        %4862 = vmatpush.msra.mxu0 0.0
        %4863 = vmatpush.msra.mxu0 0.0
        %4864 = vmatpush.msra.mxu0 0.0
        %4865 = vmatpush.msra.mxu0 0.0
        %4866 = vmatpush.msra.mxu0 0.0
        %4867 = vmatpush.msra.mxu0 0.0
        %4868 = vmatpush.msra.mxu0 0.0
        %4869 = vmatpush.msra.mxu0 0.0
        %4870 = vmatpush.msra.mxu0 0.0
        %4871 = vmatpush.msra.mxu0 %v4854
        %4872 = vmatmul.f32.gmra.mxu0 %v4852
        %v4873 = vpop.f32.mrf.mxu0
        %v4874 = vadd.f32 0.0, %v4873
        %4875 = vdwg.mxu0
        %v4876 = vadd.f32 %v4846, %v4874
        %4878 = vset.pattern.permute.xlu0 0
        %4879 = vperm.xlu0 %4878, %v1948
        %v4880 = vpop.permute.xlu0 %4879
        %v4882 = vadd.f32 %v4876, %v4880
        %v4883 = vadd.f32 %v4882, %v4783
        %vm4884 = vcmp.gt.f32.partialorder %v4883, 0.0
        %v4885 = vmul.f32 %v4883, 0.1
        %v4886 = vsel %vm4884, %v4883, %v4885
        %4888 = vrot.lane.b32.xlu0 %v4886, 3
        %v4889 = vpop.permute.xlu0 %4888
        %v4891 = vsel %vm3965, 0.0, %v4889
        %vm4892 = vcmask 547840
        %v4893 = vsel %vm4892, %v4891, 0.0
        %4895 = vrot.lane.b32.xlu0 %v1951, 124
        %v4896 = vpop.permute.xlu0 %4895
        %4898 = vrot.lane.b32.xlu0 %v4893, 125
        %v4899 = vpop.permute.xlu0 %4898
        %v4900 = vsel %vm2097, %v4896, 0
        %v4902 = vsel %vm2104, %v4899, 0
        %4904 = vmatpush.msra.mxu0 0.0
        %4905 = vmatpush.msra.mxu0 0.0
        %4906 = vmatpush.msra.mxu0 0.0
        %4907 = vmatpush.msra.mxu0 0.0
        %4908 = vmatpush.msra.mxu0 0.0
        %4909 = vmatpush.msra.mxu0 0.0
        %4910 = vmatpush.msra.mxu0 0.0
        %4911 = vmatpush.msra.mxu0 0.0
        %4912 = vmatpush.msra.mxu0 0.0
        %4913 = vmatpush.msra.mxu0 0.0
        %4914 = vmatpush.msra.mxu0 0.0
        %4915 = vmatpush.msra.mxu0 0.0
        %4916 = vmatpush.msra.mxu0 0.0
        %4917 = vmatpush.msra.mxu0 0.0
        %4918 = vmatpush.msra.mxu0 0.0
        %4919 = vmatpush.msra.mxu0 %v4902
        %4920 = vmatmul.f32.gmra.mxu0 %v4900
        %v4921 = vpop.f32.mrf.mxu0
        %v4922 = vadd.f32 0.0, %v4921
        %4923 = vdwg.mxu0
        %v4924 = vsel %vm2097, %v1951, 0
        %v4926 = vsel %vm2104, %v4893, 0
        %4928 = vmatpush.msra.mxu0 0.0
        %4929 = vmatpush.msra.mxu0 0.0
        %4930 = vmatpush.msra.mxu0 0.0
        %4931 = vmatpush.msra.mxu0 0.0
        %4932 = vmatpush.msra.mxu0 0.0
        %4933 = vmatpush.msra.mxu0 0.0
        %4934 = vmatpush.msra.mxu0 0.0
        %4935 = vmatpush.msra.mxu0 0.0
        %4936 = vmatpush.msra.mxu0 0.0
        %4937 = vmatpush.msra.mxu0 0.0
        %4938 = vmatpush.msra.mxu0 0.0
        %4939 = vmatpush.msra.mxu0 0.0
        %4940 = vmatpush.msra.mxu0 0.0
        %4941 = vmatpush.msra.mxu0 0.0
        %4942 = vmatpush.msra.mxu0 0.0
        %4943 = vmatpush.msra.mxu0 %v4926
        %4944 = vmatmul.f32.gmra.mxu0 %v4924
        %v4945 = vpop.f32.mrf.mxu0
        %v4946 = vadd.f32 %v4922, %v4945
        %4947 = vdwg.mxu0
        %4948 = vrot.lane.b32.xlu0 %v1951, 120
        %v4949 = vpop.permute.xlu0 %4948
        %4950 = vrot.lane.b32.xlu0 %v4893, 122
        %v4951 = vpop.permute.xlu0 %4950
        %v4952 = vsel %vm2097, %v4949, 0
        %v4954 = vsel %vm2104, %v4951, 0
        %4956 = vmatpush.msra.mxu0 0.0
        %4957 = vmatpush.msra.mxu0 0.0
        %4958 = vmatpush.msra.mxu0 0.0
        %4959 = vmatpush.msra.mxu0 0.0
        %4960 = vmatpush.msra.mxu0 0.0
        %4961 = vmatpush.msra.mxu0 0.0
        %4962 = vmatpush.msra.mxu0 0.0
        %4963 = vmatpush.msra.mxu0 0.0
        %4964 = vmatpush.msra.mxu0 0.0
        %4965 = vmatpush.msra.mxu0 0.0
        %4966 = vmatpush.msra.mxu0 0.0
        %4967 = vmatpush.msra.mxu0 0.0
        %4968 = vmatpush.msra.mxu0 0.0
        %4969 = vmatpush.msra.mxu0 0.0
        %4970 = vmatpush.msra.mxu0 0.0
        %4971 = vmatpush.msra.mxu0 %v4954
        %4972 = vmatmul.f32.gmra.mxu0 %v4952
        %v4973 = vpop.f32.mrf.mxu0
        %v4974 = vadd.f32 0.0, %v4973
        %4975 = vdwg.mxu0
        %v4976 = vadd.f32 %v4946, %v4974
        %4978 = vset.pattern.permute.xlu0 0
        %4979 = vperm.xlu0 %4978, %v1949
        %v4980 = vpop.permute.xlu0 %4979
        %v4982 = vadd.f32 %v4976, %v4980
        %v4983 = vadd.f32 %v4982, %v4883
        %vm4984 = vcmp.gt.f32.partialorder %v4983, 0.0
        %v4985 = vmul.f32 %v4983, 0.01
        %v4986 = vsel %vm4984, %v4983, %v4985
        %4988 = vrot.lane.b32.xlu0 %v4986, 3
        %v4989 = vpop.permute.xlu0 %4988
        %v4991 = vsel %vm3965, 0.0, %v4989
        %v4992 = vsel %vm4892, %v4991, 0.0
        %v4994 = vperm.slane %v1939, 0
        %4995 = vrot.lane.b32.xlu0 %v4994, 124
        %v4996 = vpop.permute.xlu0 %4995
        %4998 = vrot.lane.b32.xlu0 %v4992, 127
        %v4999 = vpop.permute.xlu0 %4998
        %v5000 = vsel %vm2097, %v4996, 0
        %v5002 = vsel %vm2104, %v4999, 0
        %5004 = vmatpush.msra.mxu0 0.0
        %5005 = vmatpush.msra.mxu0 0.0
        %5006 = vmatpush.msra.mxu0 0.0
        %5007 = vmatpush.msra.mxu0 0.0
        %5008 = vmatpush.msra.mxu0 0.0
        %5009 = vmatpush.msra.mxu0 0.0
        %5010 = vmatpush.msra.mxu0 0.0
        %5011 = vmatpush.msra.mxu0 0.0
        %5012 = vmatpush.msra.mxu0 0.0
        %5013 = vmatpush.msra.mxu0 0.0
        %5014 = vmatpush.msra.mxu0 0.0
        %5015 = vmatpush.msra.mxu0 0.0
        %5016 = vmatpush.msra.mxu0 0.0
        %5017 = vmatpush.msra.mxu0 0.0
        %5018 = vmatpush.msra.mxu0 0.0
        %5019 = vmatpush.msra.mxu0 %v5002
        %5020 = vmatmul.f32.gmra.mxu0 %v5000
        %v5021 = vpop.f32.mrf.mxu0
        %v5022 = vadd.f32 0.0, %v5021
        %5023 = vdwg.mxu0
        %v5024 = vsel %vm2097, %v1939, 0
        %v5026 = vsel %vm2104, %v4992, 0
        %5028 = vmatpush.msra.mxu0 0.0
        %5029 = vmatpush.msra.mxu0 0.0
        %5030 = vmatpush.msra.mxu0 0.0
        %5031 = vmatpush.msra.mxu0 0.0
        %5032 = vmatpush.msra.mxu0 0.0
        %5033 = vmatpush.msra.mxu0 0.0
        %5034 = vmatpush.msra.mxu0 0.0
        %5035 = vmatpush.msra.mxu0 0.0
        %5036 = vmatpush.msra.mxu0 0.0
        %5037 = vmatpush.msra.mxu0 0.0
        %5038 = vmatpush.msra.mxu0 0.0
        %5039 = vmatpush.msra.mxu0 0.0
        %5040 = vmatpush.msra.mxu0 0.0
        %5041 = vmatpush.msra.mxu0 0.0
        %5042 = vmatpush.msra.mxu0 0.0
        %5043 = vmatpush.msra.mxu0 %v5026
        %5044 = vmatmul.f32.gmra.mxu0 %v5024
        %v5045 = vpop.f32.mrf.mxu0
        %v5046 = vadd.f32 %v5022, %v5045
        %5047 = vdwg.mxu0
        %5048 = vrot.lane.b32.xlu0 %v4994, 120
        %v5049 = vpop.permute.xlu0 %5048
        %5050 = vrot.lane.b32.xlu0 %v4992, 126
        %v5051 = vpop.permute.xlu0 %5050
        %v5052 = vsel %vm2097, %v5049, 0
        %v5054 = vsel %vm2104, %v5051, 0
        %5056 = vmatpush.msra.mxu0 0.0
        %5057 = vmatpush.msra.mxu0 0.0
        %5058 = vmatpush.msra.mxu0 0.0
        %5059 = vmatpush.msra.mxu0 0.0
        %5060 = vmatpush.msra.mxu0 0.0
        %5061 = vmatpush.msra.mxu0 0.0
        %5062 = vmatpush.msra.mxu0 0.0
        %5063 = vmatpush.msra.mxu0 0.0
        %5064 = vmatpush.msra.mxu0 0.0
        %5065 = vmatpush.msra.mxu0 0.0
        %5066 = vmatpush.msra.mxu0 0.0
        %5067 = vmatpush.msra.mxu0 0.0
        %5068 = vmatpush.msra.mxu0 0.0
        %5069 = vmatpush.msra.mxu0 0.0
        %5070 = vmatpush.msra.mxu0 0.0
        %5071 = vmatpush.msra.mxu0 %v5054
        %5072 = vmatmul.f32.gmra.mxu0 %v5052
        %v5073 = vpop.f32.mrf.mxu0
        %v5074 = vadd.f32 0.0, %v5073
        %5075 = vdwg.mxu0
        %v5076 = vadd.f32 %v5046, %v5074
        %5077 = vrot.lane.b32.xlu0 %v4994, 116
        %v5078 = vpop.permute.xlu0 %5077
        %5079 = vrot.lane.b32.xlu0 %v4992, 125
        %v5080 = vpop.permute.xlu0 %5079
        %v5081 = vsel %vm2097, %v5078, 0
        %v5083 = vsel %vm2104, %v5080, 0
        %5085 = vmatpush.msra.mxu0 0.0
        %5086 = vmatpush.msra.mxu0 0.0
        %5087 = vmatpush.msra.mxu0 0.0
        %5088 = vmatpush.msra.mxu0 0.0
        %5089 = vmatpush.msra.mxu0 0.0
        %5090 = vmatpush.msra.mxu0 0.0
        %5091 = vmatpush.msra.mxu0 0.0
        %5092 = vmatpush.msra.mxu0 0.0
        %5093 = vmatpush.msra.mxu0 0.0
        %5094 = vmatpush.msra.mxu0 0.0
        %5095 = vmatpush.msra.mxu0 0.0
        %5096 = vmatpush.msra.mxu0 0.0
        %5097 = vmatpush.msra.mxu0 0.0
        %5098 = vmatpush.msra.mxu0 0.0
        %5099 = vmatpush.msra.mxu0 0.0
        %5100 = vmatpush.msra.mxu0 %v5083
        %5101 = vmatmul.f32.gmra.mxu0 %v5081
        %v5102 = vpop.f32.mrf.mxu0
        %v5103 = vadd.f32 0.0, %v5102
        %5104 = vdwg.mxu0
        %v5105 = vadd.f32 %v5076, %v5103
        %5106 = vrot.lane.b32.xlu0 %v4994, 112
        %v5107 = vpop.permute.xlu0 %5106
        %5108 = vrot.lane.b32.xlu0 %v4992, 124
        %v5109 = vpop.permute.xlu0 %5108
        %v5110 = vsel %vm2097, %v5107, 0
        %v5112 = vsel %vm2104, %v5109, 0
        %5114 = vmatpush.msra.mxu0 0.0
        %5115 = vmatpush.msra.mxu0 0.0
        %5116 = vmatpush.msra.mxu0 0.0
        %5117 = vmatpush.msra.mxu0 0.0
        %5118 = vmatpush.msra.mxu0 0.0
        %5119 = vmatpush.msra.mxu0 0.0
        %5120 = vmatpush.msra.mxu0 0.0
        %5121 = vmatpush.msra.mxu0 0.0
        %5122 = vmatpush.msra.mxu0 0.0
        %5123 = vmatpush.msra.mxu0 0.0
        %5124 = vmatpush.msra.mxu0 0.0
        %5125 = vmatpush.msra.mxu0 0.0
        %5126 = vmatpush.msra.mxu0 0.0
        %5127 = vmatpush.msra.mxu0 0.0
        %5128 = vmatpush.msra.mxu0 0.0
        %5129 = vmatpush.msra.mxu0 %v5112
        %5130 = vmatmul.f32.gmra.mxu0 %v5110
        %v5131 = vpop.f32.mrf.mxu0
        %v5132 = vadd.f32 0.0, %v5131
        %5133 = vdwg.mxu0
        %v5134 = vadd.f32 %v5105, %v5132
        %5135 = vrot.lane.b32.xlu0 %v4994, 108
        %v5136 = vpop.permute.xlu0 %5135
        %5137 = vrot.lane.b32.xlu0 %v4992, 123
        %v5138 = vpop.permute.xlu0 %5137
        %v5139 = vsel %vm2097, %v5136, 0
        %v5141 = vsel %vm2104, %v5138, 0
        %5143 = vmatpush.msra.mxu0 0.0
        %5144 = vmatpush.msra.mxu0 0.0
        %5145 = vmatpush.msra.mxu0 0.0
        %5146 = vmatpush.msra.mxu0 0.0
        %5147 = vmatpush.msra.mxu0 0.0
        %5148 = vmatpush.msra.mxu0 0.0
        %5149 = vmatpush.msra.mxu0 0.0
        %5150 = vmatpush.msra.mxu0 0.0
        %5151 = vmatpush.msra.mxu0 0.0
        %5152 = vmatpush.msra.mxu0 0.0
        %5153 = vmatpush.msra.mxu0 0.0
        %5154 = vmatpush.msra.mxu0 0.0
        %5155 = vmatpush.msra.mxu0 0.0
        %5156 = vmatpush.msra.mxu0 0.0
        %5157 = vmatpush.msra.mxu0 0.0
        %5158 = vmatpush.msra.mxu0 %v5141
        %5159 = vmatmul.f32.gmra.mxu0 %v5139
        %v5160 = vpop.f32.mrf.mxu0
        %v5161 = vadd.f32 0.0, %v5160
        %5162 = vdwg.mxu0
        %v5163 = vadd.f32 %v5134, %v5161
        %5164 = vrot.lane.b32.xlu0 %v4994, 104
        %v5165 = vpop.permute.xlu0 %5164
        %5166 = vrot.lane.b32.xlu0 %v4992, 122
        %v5167 = vpop.permute.xlu0 %5166
        %v5168 = vsel %vm2097, %v5165, 0
        %v5170 = vsel %vm2104, %v5167, 0
        %5172 = vmatpush.msra.mxu0 0.0
        %5173 = vmatpush.msra.mxu0 0.0
        %5174 = vmatpush.msra.mxu0 0.0
        %5175 = vmatpush.msra.mxu0 0.0
        %5176 = vmatpush.msra.mxu0 0.0
        %5177 = vmatpush.msra.mxu0 0.0
        %5178 = vmatpush.msra.mxu0 0.0
        %5179 = vmatpush.msra.mxu0 0.0
        %5180 = vmatpush.msra.mxu0 0.0
        %5181 = vmatpush.msra.mxu0 0.0
        %5182 = vmatpush.msra.mxu0 0.0
        %5183 = vmatpush.msra.mxu0 0.0
        %5184 = vmatpush.msra.mxu0 0.0
        %5185 = vmatpush.msra.mxu0 0.0
        %5186 = vmatpush.msra.mxu0 0.0
        %5187 = vmatpush.msra.mxu0 %v5170
        %5188 = vmatmul.f32.gmra.mxu0 %v5168
        %v5189 = vpop.f32.mrf.mxu0
        %v5190 = vadd.f32 0.0, %v5189
        %5191 = vdwg.mxu0
        %v5192 = vadd.f32 %v5163, %v5190
        %v5193 = vtanh.pop %v5192
        %vm5194 = vcmask 516096
        %5195 = vst.msk [vmem:[%s1938] sm:$0x1] %vm5194, %v5193
        %s5196 = sand.u32 %s1047, 1
        %s5197 = scalar_lea.sflag [#allocation4], %s5196
        %s5198 = sand.u32 %s1047, 1
        %s5199 = scalar_lea.vmem [#allocation64], %s5198
        // Predicated region
        $region353: #{run.1} parent=191 // pred_check
          %p5200 = pneg %p1057
        $region354: #{run.1} parent=191 // pred_check_branch
          %5202 = sbr.rel (%p5200) target = $region356
        $region355: #{run.1} parent=191 // pred_region
          %5204 = vsyncadd %s5197, 0
          %s5205 = scalar_lea.hbm %s87, %s126
          %s5207 = sshll.u32 %s5199, 4
          %s5208 = int_to_ptr.vmem [resolvable:$true] %s5207
          %s5209 = sshll.u32 %s5205, 4
          %s5210 = int_to_ptr.hbm [resolvable:$true] %s5209
          %5212 = dma.vmem_to_hbm [thread:$0]  %s5208, 16, %s5210, %s5197
        $region356: #{run.1} parent=191 // pred_fallthru
          _
      $region192: #{run.1} parent=5 // pred_fallthru
        _
      %p5213 = scmp.le.s32.totalorder 2, %s121
      // Predicated region
      $region357: #{run.1} parent=5 // pred_check
        %p5214 = pneg %p5213
      $region358: #{run.1} parent=5 // pred_check_branch
        %5216 = sbr.rel (%p5214) target = $region360
      $region359: #{run.1} parent=5 // pred_region
        %s5217 = ssub.s32 %s121, 2
        // Predicated region
        $region361: #{run.1} parent=359 // pred_check
          %p5218 = pneg %p1063
        $region362: #{run.1} parent=359 // pred_check_branch
          %5220 = sbr.rel (%p5218) target = $region364
        $region363: #{run.1} parent=359 // pred_region
          %s5221 = sand.u32 %s1048, 1
          %s5222 = scalar_lea.sflag [#allocation4], %s5221
          %s5223 = sand.u32 %s1048, 1
          %s5224 = scalar_lea.vmem [#allocation64], %s5223
          %5226 = dma.done %s5222, 16
        $region364: #{run.1} parent=359 // pred_fallthru
          _
      $region360: #{run.1} parent=5 // pred_fallthru
        _
    $region6: #{run.1} parent=1 // loop_footer
      %s125 = sadd.s32 1, %s121
    $region7: #{run.1} parent=1 // loop_footer_branch
      %120 = sbr.rel target = $region3
    $region8: #{run.1} parent=1 // loop_exit
      _
    %5227 = vsyncpa [#allocation3], 1
    %s5228 = scalar_lea.sflag [#allocation3], 1
    %5229 = vsyncpa %s5228, 1
    %5230 = vsyncpa [#allocation6], 1
    %s5231 = scalar_lea.sflag [#allocation6], 1
    %5232 = vsyncpa %s5231, 1
    %5233 = vsyncpa [#allocation9], 1
    %5234 = vsyncpa [#allocation12], 1
    %5235 = vsyncpa [#allocation15], 1
    %5236 = vsyncpa [#allocation18], 1
    %5237 = vsyncpa [#allocation21], 1
    %5238 = vsyncpa [#allocation24], 1
    %5239 = vsyncpa [#allocation27], 1
    %5240 = vsyncpa [#allocation30], 1
    %5241 = vsyncpa [#allocation33], 1
    %5242 = vsyncpa [#allocation36], 1
    %5243 = vsyncpa [#allocation39], 1
    %5244 = vsyncpa [#allocation42], 1
    %5245 = vsyncpa [#allocation45], 1
    %5246 = vsyncpa [#allocation48], 1
    %5247 = vsyncpa [#allocation51], 1
    %5248 = vsyncpa [#allocation54], 1
    %5249 = vsyncpa [#allocation57], 1
    %5250 = vsyncpa [#allocation60], 1
    %5251 = vsyncpa [#allocation63], 1
    %5252 = vsyncpa [#allocation4], 1
    %s5253 = scalar_lea.sflag [#allocation4], 1
    %5254 = vsyncpa %s5253, 1

</llo_original>
